<compile_context>
chip_gen: v7x
topology: tpu7x:2x2x1
jax: 0.10.0
libtpu: 0.0.40
codegen_flags: <defaults>
</compile_context>

<pallas_src>
import jax
import jax.numpy as jnp
from jax.experimental import pallas as pl
from jax.experimental.pallas import tpu as pltpu


# Static geometry implied by the module (GTSRB-style 48x48 RGB input):
#   48 -> conv11(3) -> 46 -> pool(3,3) -> 15 -> conv21(3) -> 13 -> pool(3,3)
#      -> 4 -> conv31(4) -> 1  -> ip1 -> ip2
K11 = 32          # conv11 GEMM contraction depth (3*3*3 = 27, padded to 32)
CPAD = 128        # channel padding for conv11/conv21 outputs and the ip layers
NCLS = 43


def _pad_axis(x, axis, size):
    pad = size - x.shape[axis]
    if pad <= 0:
        return x
    widths = [(0, 0)] * x.ndim
    widths[axis] = (0, pad)
    return jnp.pad(x, widths)


# ----------------------------- the fused kernel ------------------------------

def _net_kernel(p_ref, w11_ref, s11_ref, b11_ref,
                w21_ref, s21_ref, b21_ref,
                w31_ref, b31_ref, w1_ref, b1_ref, w2_ref, b2_ref,
                o_ref, y1_ref):
    # ---- conv11 GEMM + BN affine + ReLU, pool #1 fused as max over 9 slabs --
    # p_ref[0, j] holds the conv11 patches of pool-window offset j = dy*3+dx,
    # rows indexed by pooled position q = py*15 + px.
    pooled = None
    for j in range(9):
        a = jnp.dot(p_ref[0, j], w11_ref[...],
                    preferred_element_type=jnp.float32)          # (225, 128)
        a = jnp.maximum(a * s11_ref[...] + b11_ref[...], 0.0)
        pooled = a if pooled is None else jnp.maximum(pooled, a)
    # Channels >= 64 are exactly zero (zero weight cols + zero affine).
    y1_ref[...] = pooled                                          # (225, 128) f32

    # ---- conv21: 9 in-kernel shifted taps on the VMEM-resident activation ---
    # Conv output (h, w) (h, w in [0, 12)) maps to row r = 15*h + w of the big
    # tap GEMM below; rows with w in {13, 14} are cross-row garbage, never read.
    acc = jnp.zeros((178, 128), jnp.float32)
    for ky in range(3):
        for kx in range(3):
            s0 = 15 * ky + kx
            lhs = y1_ref[s0:s0 + 178, :].astype(jnp.bfloat16)     # contiguous slice
            acc = acc + jnp.dot(lhs, w21_ref[ky * 3 + kx],
                                preferred_element_type=jnp.float32)
    act = jnp.maximum(acc * s21_ref[...] + b21_ref[...], 0.0)     # BN + ReLU

    # ---- pool #2 (3x3 stride 3, floor) + conv31 (per-position dots) ---------
    acc31 = b31_ref[...]                                          # (1, 128)
    for py in range(4):
        r0 = 45 * py
        rowmax = jnp.maximum(jnp.maximum(act[r0:r0 + 13],
                                         act[r0 + 15:r0 + 28]),
                             act[r0 + 30:r0 + 43])                # (13, 128)
        for px in range(4):
            c0 = 3 * px
            v = jnp.maximum(jnp.maximum(rowmax[c0:c0 + 1],
                                        rowmax[c0 + 1:c0 + 2]),
                            rowmax[c0 + 2:c0 + 3])                # (1, 128)
            acc31 = acc31 + jnp.dot(v.astype(jnp.bfloat16),
                                    w31_ref[py * 4 + px],
                                    preferred_element_type=jnp.float32)

    # ---- ip1 + ReLU + ip2 ----------------------------------------------------
    h = jnp.dot(acc31.astype(jnp.bfloat16), w1_ref[...],
                preferred_element_type=jnp.float32) + b1_ref[...]
    h = jnp.maximum(h, 0.0)
    out = jnp.dot(h.astype(jnp.bfloat16), w2_ref[...],
                  preferred_element_type=jnp.float32) + b2_ref[...]
    o_ref[0] = out                                                # (1, 128)


# ----------------------------- weight preparation (one-time) -----------------

def prepare_params(p, eps=1e-5):
    """Fold BN, pad phantom channels, transpose, cast to bf16.  Run ONCE outside
    the per-inference jit (review item: hoist weight preprocessing)."""
    def bn_affine(conv_bias, bn, cpad):
        gamma, beta, mean, var = bn
        scale = gamma * jax.lax.rsqrt(var + eps)
        shift = (conv_bias - mean) * scale + beta
        return (_pad_axis(scale, 0, cpad).reshape(1, cpad).astype(jnp.float32),
                _pad_axis(shift, 0, cpad).reshape(1, cpad).astype(jnp.float32))

    # conv11: (64, 3, 3, 3) -> [K11, 128], feature order (ky, kx, cin).
    w11, b11c = p["conv11"]
    w11m = jnp.transpose(w11, (2, 3, 1, 0)).reshape(27, 64)
    w11m = _pad_axis(_pad_axis(w11m, 0, K11), 1, CPAD)
    s11, b11 = bn_affine(b11c, p["n11"], CPAD)

    # conv21: (96, 64, 3, 3) -> 9 taps of [128, 128] (cin, cout).
    w21, b21c = p["conv21"]
    taps = [jnp.transpose(w21[:, :, ky, kx], (1, 0))
            for ky in range(3) for kx in range(3)]
    w21t = jnp.stack([_pad_axis(_pad_axis(t, 0, CPAD), 1, CPAD) for t in taps], 0)
    s21, b21 = bn_affine(b21c, p["n21"], CPAD)

    # conv31: (128, 96, 4, 4) -> 16 positional [128, 128] (cin, cout) slabs,
    # position order p = py*4 + px matching the pooled raster order.
    w31, b31 = p["conv31"]
    slabs = [jnp.transpose(w31[:, :, py, px], (1, 0))
             for py in range(4) for px in range(4)]
    w31t = jnp.stack([_pad_axis(s, 0, CPAD) for s in slabs], 0)

    # ip1 / ip2: PyTorch Linear weights are (out, in) -> transpose to (in, out).
    w1, b1 = p["ip1"]
    w2, b2 = p["ip2"]
    return {
        "w11": w11m.astype(jnp.bfloat16), "s11": s11, "b11": b11,
        "w21": w21t.astype(jnp.bfloat16), "s21": s21, "b21": b21,
        "w31": w31t.astype(jnp.bfloat16),
        "b31": b31.reshape(1, CPAD).astype(jnp.float32),
        "w1": jnp.transpose(w1).astype(jnp.bfloat16),
        "b1": b1.reshape(1, CPAD).astype(jnp.float32),
        "w2": _pad_axis(jnp.transpose(w2), 1, CPAD).astype(jnp.bfloat16),
        "b2": _pad_axis(b2, 0, CPAD).reshape(1, CPAD).astype(jnp.float32),
    }


# ----------------------------- forward pass ----------------------------------

def net_forward(x_nchw, pp):
    """x_nchw: (N, 3, 48, 48) f32.  pp: prepare_params(...) output."""
    N = x_nchw.shape[0]
    assert x_nchw.shape[1:] == (3, 48, 48), x_nchw.shape

    xh = jnp.transpose(x_nchw, (0, 2, 3, 1)).astype(jnp.bfloat16)   # NHWC bf16

    # conv11 im2col (feature order ky,kx,cin; K padded 27->32), then grouped by
    # the 3x3 pool-window offset so pool #1 becomes an in-kernel max over 9
    # lane-aligned GEMM outputs.  Tiny (~260 KB at N=2) XLA glue.
    cols = [xh[:, ky:ky + 46, kx:kx + 46, :] for ky in range(3) for kx in range(3)]
    full = _pad_axis(jnp.concatenate(cols, axis=-1), 3, K11)        # (N,46,46,32)
    g = full[:, :45, :45, :].reshape(N, 15, 3, 15, 3, K11)
    g = g.transpose(0, 2, 4, 1, 3, 5).reshape(N, 9, 225, K11)       # (N,9,225,32)

    const2 = lambda i: (0, 0)
    const3 = lambda i: (0, 0, 0)
    out = pl.pallas_call(
        _net_kernel,
        out_shape=jax.ShapeDtypeStruct((N, 1, CPAD), jnp.float32),
        grid=(N,),
        in_specs=[
            pl.BlockSpec((1, 9, 225, K11), lambda i: (i, 0, 0, 0)),   # patches
            pl.BlockSpec((K11, CPAD), const2),                        # w11
            pl.BlockSpec((1, CPAD), const2),                          # s11
            pl.BlockSpec((1, CPAD), const2),                          # b11
            pl.BlockSpec((9, CPAD, CPAD), const3),                    # w21 taps
            pl.BlockSpec((1, CPAD), const2),                          # s21
            pl.BlockSpec((1, CPAD), const2),                          # b21
            pl.BlockSpec((16, CPAD, CPAD), const3),                   # w31 slabs
            pl.BlockSpec((1, CPAD), const2),                          # b31
            pl.BlockSpec((CPAD, CPAD), const2),                       # w1
            pl.BlockSpec((1, CPAD), const2),                          # b1
            pl.BlockSpec((CPAD, CPAD), const2),                       # w2 (padded)
            pl.BlockSpec((1, CPAD), const2),                          # b2 (padded)
        ],
        out_specs=pl.BlockSpec((1, 1, CPAD), lambda i: (i, 0, 0)),
        scratch_shapes=[pltpu.VMEM((225, CPAD), jnp.float32)],        # pooled conv11
        compiler_params=pltpu.CompilerParams(
            dimension_semantics=("parallel",)),
    )(g, pp["w11"], pp["s11"], pp["b11"],
      pp["w21"], pp["s21"], pp["b21"],
      pp["w31"], pp["b31"], pp["w1"], pp["b1"], pp["w2"], pp["b2"])

    return out[:, 0, :NCLS]


# ----------------------------- parameters ------------------------------------

def init_params(key):
    ks = jax.random.split(key, 12)

    def conv(kw, kb, cout, cin, ksz):
        w = 0.05 * jax.random.normal(kw, (cout, cin, ksz, ksz), jnp.float32)
        b = 0.05 * jax.random.normal(kb, (cout,), jnp.float32)
        return w, b

    def bn(k, c):
        k1, k2, k3, k4 = jax.random.split(k, 4)
        gamma = 1.0 + 0.1 * jax.random.normal(k1, (c,), jnp.float32)
        beta = 0.1 * jax.random.normal(k2, (c,), jnp.float32)
        mean = 0.1 * jax.random.normal(k3, (c,), jnp.float32)
        var = jax.random.uniform(k4, (c,), jnp.float32, minval=0.5, maxval=1.5)
        return gamma, beta, mean, var

    return {
        "conv11": conv(ks[0], ks[1], 64, 3, 3),
        "n11": bn(ks[2], 64),
        "conv21": conv(ks[3], ks[4], 96, 64, 3),
        "n21": bn(ks[5], 96),
        "conv31": conv(ks[6], ks[7], 128, 96, 4),
        "ip1": (0.05 * jax.random.normal(ks[8], (128, 128), jnp.float32),
                0.05 * jax.random.normal(ks[9], (128,), jnp.float32)),
        "ip2": (0.05 * jax.random.normal(ks[10], (43, 128), jnp.float32),
                0.05 * jax.random.normal(ks[11], (43,), jnp.float32)),
    }


if __name__ == "__main__":
    key = jax.random.PRNGKey(0)
    kx, kp = jax.random.split(key)
    x = jax.random.normal(kx, (2, 3, 48, 48), jnp.float32)   # NCHW, like PyTorch
    params = init_params(kp)

    prepped = prepare_params(params)          # one-time weight folding (not jitted)
    fwd = jax.jit(net_forward)

    out = jax.block_until_ready(fwd(x, prepped))

    assert out.shape == (2, 43), out.shape
    assert bool(jnp.all(jnp.isfinite(out)))
    print("KERNEL_OK")
</pallas_src>

<mosaic_0001>
module attributes {stable_mosaic.version = 11 : i64} {
  func.func @_net_kernel(%arg0: i32, %arg1: memref<1x9x225x32xbf16, #tpu.memory_space<vmem>>, %arg2: memref<32x128xbf16, #tpu.memory_space<vmem>>, %arg3: memref<1x128xf32, #tpu.memory_space<vmem>>, %arg4: memref<1x128xf32, #tpu.memory_space<vmem>>, %arg5: memref<9x128x128xbf16, #tpu.memory_space<vmem>>, %arg6: memref<1x128xf32, #tpu.memory_space<vmem>>, %arg7: memref<1x128xf32, #tpu.memory_space<vmem>>, %arg8: memref<16x128x128xbf16, #tpu.memory_space<vmem>>, %arg9: memref<1x128xf32, #tpu.memory_space<vmem>>, %arg10: memref<128x128xbf16, #tpu.memory_space<vmem>>, %arg11: memref<1x128xf32, #tpu.memory_space<vmem>>, %arg12: memref<128x128xbf16, #tpu.memory_space<vmem>>, %arg13: memref<1x128xf32, #tpu.memory_space<vmem>>, %arg14: memref<1x1x128xf32, #tpu.memory_space<vmem>>, %arg15: memref<225x128xf32, #tpu.memory_space<vmem>>) attributes {dimension_semantics = [#tpu.dimension_semantics<parallel>], iteration_bounds = array<i64: 2>, scalar_prefetch = 0 : i64, scratch_operands = 1 : i64, tpu.core_type = #tpu.core_type<tc>, window_params = [{transform_indices = @transform_0, window_bounds = array<i64: 1, 9, 225, 32>}, {pipeline_mode = #tpu.pipeline_mode<synchronous>, transform_indices = @transform_1, window_bounds = array<i64: 32, 128>}, {pipeline_mode = #tpu.pipeline_mode<synchronous>, transform_indices = @transform_2, window_bounds = array<i64: 1, 128>}, {pipeline_mode = #tpu.pipeline_mode<synchronous>, transform_indices = @transform_3, window_bounds = array<i64: 1, 128>}, {pipeline_mode = #tpu.pipeline_mode<synchronous>, transform_indices = @transform_4, window_bounds = array<i64: 9, 128, 128>}, {pipeline_mode = #tpu.pipeline_mode<synchronous>, transform_indices = @transform_5, window_bounds = array<i64: 1, 128>}, {pipeline_mode = #tpu.pipeline_mode<synchronous>, transform_indices = @transform_6, window_bounds = array<i64: 1, 128>}, {pipeline_mode = #tpu.pipeline_mode<synchronous>, transform_indices = @transform_7, window_bounds = array<i64: 16, 128, 128>}, {pipeline_mode = #tpu.pipeline_mode<synchronous>, transform_indices = @transform_8, window_bounds = array<i64: 1, 128>}, {pipeline_mode = #tpu.pipeline_mode<synchronous>, transform_indices = @transform_9, window_bounds = array<i64: 128, 128>}, {pipeline_mode = #tpu.pipeline_mode<synchronous>, transform_indices = @transform_10, window_bounds = array<i64: 1, 128>}, {pipeline_mode = #tpu.pipeline_mode<synchronous>, transform_indices = @transform_11, window_bounds = array<i64: 128, 128>}, {pipeline_mode = #tpu.pipeline_mode<synchronous>, transform_indices = @transform_12, window_bounds = array<i64: 1, 128>}, {transform_indices = @transform_13, window_bounds = array<i64: 1, 1, 128>}]} {
    %c0 = arith.constant 0 : index
    %c0_0 = arith.constant 0 : index
    %c0_1 = arith.constant 0 : index
    %c0_2 = arith.constant 0 : index
    %0 = vector.load %arg1[%c0, %c0_0, %c0_1, %c0_2] : memref<1x9x225x32xbf16, #tpu.memory_space<vmem>>, vector<1x1x225x32xbf16>
    %1 = vector.shape_cast %0 : vector<1x1x225x32xbf16> to vector<225x32xbf16>
    %c0_3 = arith.constant 0 : index
    %c0_4 = arith.constant 0 : index
    %2 = vector.load %arg2[%c0_3, %c0_4] : memref<32x128xbf16, #tpu.memory_space<vmem>>, vector<32x128xbf16>
    %cst = arith.constant dense<0.000000e+00> : vector<225x128xf32>
    %3 = tpu.matmul %1, %2, %cst {dimension_numbers = #tpu.dot_dimension_numbers<[1], [0], [0], [1], [0, 0, 1, 1], [], []>} : vector<225x32xbf16>, vector<32x128xbf16>, vector<225x128xf32> -> vector<225x128xf32>
    %c0_5 = arith.constant 0 : index
    %c0_6 = arith.constant 0 : index
    %4 = vector.load %arg3[%c0_5, %c0_6] : memref<1x128xf32, #tpu.memory_space<vmem>>, vector<1x128xf32>
    %5 = vector.broadcast %4 : vector<1x128xf32> to vector<225x128xf32>
    %6 = arith.mulf %3, %5 : vector<225x128xf32>
    %c0_7 = arith.constant 0 : index
    %c0_8 = arith.constant 0 : index
    %7 = vector.load %arg4[%c0_7, %c0_8] : memref<1x128xf32, #tpu.memory_space<vmem>>, vector<1x128xf32>
    %8 = vector.broadcast %7 : vector<1x128xf32> to vector<225x128xf32>
    %9 = arith.addf %6, %8 : vector<225x128xf32>
    %cst_9 = arith.constant 0.000000e+00 : f32
    %10 = vector.broadcast %cst_9 : f32 to vector<225x128xf32>
    %11 = arith.maximumf %9, %10 : vector<225x128xf32>
    %c0_10 = arith.constant 0 : index
    %c1 = arith.constant 1 : index
    %c0_11 = arith.constant 0 : index
    %c0_12 = arith.constant 0 : index
    %12 = vector.load %arg1[%c0_10, %c1, %c0_11, %c0_12] : memref<1x9x225x32xbf16, #tpu.memory_space<vmem>>, vector<1x1x225x32xbf16>
    %13 = vector.shape_cast %12 : vector<1x1x225x32xbf16> to vector<225x32xbf16>
    %c0_13 = arith.constant 0 : index
    %c0_14 = arith.constant 0 : index
    %14 = vector.load %arg2[%c0_13, %c0_14] : memref<32x128xbf16, #tpu.memory_space<vmem>>, vector<32x128xbf16>
    %cst_15 = arith.constant dense<0.000000e+00> : vector<225x128xf32>
    %15 = tpu.matmul %13, %14, %cst_15 {dimension_numbers = #tpu.dot_dimension_numbers<[1], [0], [0], [1], [0, 0, 1, 1], [], []>} : vector<225x32xbf16>, vector<32x128xbf16>, vector<225x128xf32> -> vector<225x128xf32>
    %c0_16 = arith.constant 0 : index
    %c0_17 = arith.constant 0 : index
    %16 = vector.load %arg3[%c0_16, %c0_17] : memref<1x128xf32, #tpu.memory_space<vmem>>, vector<1x128xf32>
    %17 = vector.broadcast %16 : vector<1x128xf32> to vector<225x128xf32>
    %18 = arith.mulf %15, %17 : vector<225x128xf32>
    %c0_18 = arith.constant 0 : index
    %c0_19 = arith.constant 0 : index
    %19 = vector.load %arg4[%c0_18, %c0_19] : memref<1x128xf32, #tpu.memory_space<vmem>>, vector<1x128xf32>
    %20 = vector.broadcast %19 : vector<1x128xf32> to vector<225x128xf32>
    %21 = arith.addf %18, %20 : vector<225x128xf32>
    %cst_20 = arith.constant 0.000000e+00 : f32
    %22 = vector.broadcast %cst_20 : f32 to vector<225x128xf32>
    %23 = arith.maximumf %21, %22 : vector<225x128xf32>
    %24 = arith.maximumf %11, %23 : vector<225x128xf32>
    %c0_21 = arith.constant 0 : index
    %c2 = arith.constant 2 : index
    %c0_22 = arith.constant 0 : index
    %c0_23 = arith.constant 0 : index
    %25 = vector.load %arg1[%c0_21, %c2, %c0_22, %c0_23] : memref<1x9x225x32xbf16, #tpu.memory_space<vmem>>, vector<1x1x225x32xbf16>
    %26 = vector.shape_cast %25 : vector<1x1x225x32xbf16> to vector<225x32xbf16>
    %c0_24 = arith.constant 0 : index
    %c0_25 = arith.constant 0 : index
    %27 = vector.load %arg2[%c0_24, %c0_25] : memref<32x128xbf16, #tpu.memory_space<vmem>>, vector<32x128xbf16>
    %cst_26 = arith.constant dense<0.000000e+00> : vector<225x128xf32>
    %28 = tpu.matmul %26, %27, %cst_26 {dimension_numbers = #tpu.dot_dimension_numbers<[1], [0], [0], [1], [0, 0, 1, 1], [], []>} : vector<225x32xbf16>, vector<32x128xbf16>, vector<225x128xf32> -> vector<225x128xf32>
    %c0_27 = arith.constant 0 : index
    %c0_28 = arith.constant 0 : index
    %29 = vector.load %arg3[%c0_27, %c0_28] : memref<1x128xf32, #tpu.memory_space<vmem>>, vector<1x128xf32>
    %30 = vector.broadcast %29 : vector<1x128xf32> to vector<225x128xf32>
    %31 = arith.mulf %28, %30 : vector<225x128xf32>
    %c0_29 = arith.constant 0 : index
    %c0_30 = arith.constant 0 : index
    %32 = vector.load %arg4[%c0_29, %c0_30] : memref<1x128xf32, #tpu.memory_space<vmem>>, vector<1x128xf32>
    %33 = vector.broadcast %32 : vector<1x128xf32> to vector<225x128xf32>
    %34 = arith.addf %31, %33 : vector<225x128xf32>
    %cst_31 = arith.constant 0.000000e+00 : f32
    %35 = vector.broadcast %cst_31 : f32 to vector<225x128xf32>
    %36 = arith.maximumf %34, %35 : vector<225x128xf32>
    %37 = arith.maximumf %24, %36 : vector<225x128xf32>
    %c0_32 = arith.constant 0 : index
    %c3 = arith.constant 3 : index
    %c0_33 = arith.constant 0 : index
    %c0_34 = arith.constant 0 : index
    %38 = vector.load %arg1[%c0_32, %c3, %c0_33, %c0_34] : memref<1x9x225x32xbf16, #tpu.memory_space<vmem>>, vector<1x1x225x32xbf16>
    %39 = vector.shape_cast %38 : vector<1x1x225x32xbf16> to vector<225x32xbf16>
    %c0_35 = arith.constant 0 : index
    %c0_36 = arith.constant 0 : index
    %40 = vector.load %arg2[%c0_35, %c0_36] : memref<32x128xbf16, #tpu.memory_space<vmem>>, vector<32x128xbf16>
    %cst_37 = arith.constant dense<0.000000e+00> : vector<225x128xf32>
    %41 = tpu.matmul %39, %40, %cst_37 {dimension_numbers = #tpu.dot_dimension_numbers<[1], [0], [0], [1], [0, 0, 1, 1], [], []>} : vector<225x32xbf16>, vector<32x128xbf16>, vector<225x128xf32> -> vector<225x128xf32>
    %c0_38 = arith.constant 0 : index
    %c0_39 = arith.constant 0 : index
    %42 = vector.load %arg3[%c0_38, %c0_39] : memref<1x128xf32, #tpu.memory_space<vmem>>, vector<1x128xf32>
    %43 = vector.broadcast %42 : vector<1x128xf32> to vector<225x128xf32>
    %44 = arith.mulf %41, %43 : vector<225x128xf32>
    %c0_40 = arith.constant 0 : index
    %c0_41 = arith.constant 0 : index
    %45 = vector.load %arg4[%c0_40, %c0_41] : memref<1x128xf32, #tpu.memory_space<vmem>>, vector<1x128xf32>
    %46 = vector.broadcast %45 : vector<1x128xf32> to vector<225x128xf32>
    %47 = arith.addf %44, %46 : vector<225x128xf32>
    %cst_42 = arith.constant 0.000000e+00 : f32
    %48 = vector.broadcast %cst_42 : f32 to vector<225x128xf32>
    %49 = arith.maximumf %47, %48 : vector<225x128xf32>
    %50 = arith.maximumf %37, %49 : vector<225x128xf32>
    %c0_43 = arith.constant 0 : index
    %c4 = arith.constant 4 : index
    %c0_44 = arith.constant 0 : index
    %c0_45 = arith.constant 0 : index
    %51 = vector.load %arg1[%c0_43, %c4, %c0_44, %c0_45] : memref<1x9x225x32xbf16, #tpu.memory_space<vmem>>, vector<1x1x225x32xbf16>
    %52 = vector.shape_cast %51 : vector<1x1x225x32xbf16> to vector<225x32xbf16>
    %c0_46 = arith.constant 0 : index
    %c0_47 = arith.constant 0 : index
    %53 = vector.load %arg2[%c0_46, %c0_47] : memref<32x128xbf16, #tpu.memory_space<vmem>>, vector<32x128xbf16>
    %cst_48 = arith.constant dense<0.000000e+00> : vector<225x128xf32>
    %54 = tpu.matmul %52, %53, %cst_48 {dimension_numbers = #tpu.dot_dimension_numbers<[1], [0], [0], [1], [0, 0, 1, 1], [], []>} : vector<225x32xbf16>, vector<32x128xbf16>, vector<225x128xf32> -> vector<225x128xf32>
    %c0_49 = arith.constant 0 : index
    %c0_50 = arith.constant 0 : index
    %55 = vector.load %arg3[%c0_49, %c0_50] : memref<1x128xf32, #tpu.memory_space<vmem>>, vector<1x128xf32>
    %56 = vector.broadcast %55 : vector<1x128xf32> to vector<225x128xf32>
    %57 = arith.mulf %54, %56 : vector<225x128xf32>
    %c0_51 = arith.constant 0 : index
    %c0_52 = arith.constant 0 : index
    %58 = vector.load %arg4[%c0_51, %c0_52] : memref<1x128xf32, #tpu.memory_space<vmem>>, vector<1x128xf32>
    %59 = vector.broadcast %58 : vector<1x128xf32> to vector<225x128xf32>
    %60 = arith.addf %57, %59 : vector<225x128xf32>
    %cst_53 = arith.constant 0.000000e+00 : f32
    %61 = vector.broadcast %cst_53 : f32 to vector<225x128xf32>
    %62 = arith.maximumf %60, %61 : vector<225x128xf32>
    %63 = arith.maximumf %50, %62 : vector<225x128xf32>
    %c0_54 = arith.constant 0 : index
    %c5 = arith.constant 5 : index
    %c0_55 = arith.constant 0 : index
    %c0_56 = arith.constant 0 : index
    %64 = vector.load %arg1[%c0_54, %c5, %c0_55, %c0_56] : memref<1x9x225x32xbf16, #tpu.memory_space<vmem>>, vector<1x1x225x32xbf16>
    %65 = vector.shape_cast %64 : vector<1x1x225x32xbf16> to vector<225x32xbf16>
    %c0_57 = arith.constant 0 : index
    %c0_58 = arith.constant 0 : index
    %66 = vector.load %arg2[%c0_57, %c0_58] : memref<32x128xbf16, #tpu.memory_space<vmem>>, vector<32x128xbf16>
    %cst_59 = arith.constant dense<0.000000e+00> : vector<225x128xf32>
    %67 = tpu.matmul %65, %66, %cst_59 {dimension_numbers = #tpu.dot_dimension_numbers<[1], [0], [0], [1], [0, 0, 1, 1], [], []>} : vector<225x32xbf16>, vector<32x128xbf16>, vector<225x128xf32> -> vector<225x128xf32>
    %c0_60 = arith.constant 0 : index
    %c0_61 = arith.constant 0 : index
    %68 = vector.load %arg3[%c0_60, %c0_61] : memref<1x128xf32, #tpu.memory_space<vmem>>, vector<1x128xf32>
    %69 = vector.broadcast %68 : vector<1x128xf32> to vector<225x128xf32>
    %70 = arith.mulf %67, %69 : vector<225x128xf32>
    %c0_62 = arith.constant 0 : index
    %c0_63 = arith.constant 0 : index
    %71 = vector.load %arg4[%c0_62, %c0_63] : memref<1x128xf32, #tpu.memory_space<vmem>>, vector<1x128xf32>
    %72 = vector.broadcast %71 : vector<1x128xf32> to vector<225x128xf32>
    %73 = arith.addf %70, %72 : vector<225x128xf32>
    %cst_64 = arith.constant 0.000000e+00 : f32
    %74 = vector.broadcast %cst_64 : f32 to vector<225x128xf32>
    %75 = arith.maximumf %73, %74 : vector<225x128xf32>
    %76 = arith.maximumf %63, %75 : vector<225x128xf32>
    %c0_65 = arith.constant 0 : index
    %c6 = arith.constant 6 : index
    %c0_66 = arith.constant 0 : index
    %c0_67 = arith.constant 0 : index
    %77 = vector.load %arg1[%c0_65, %c6, %c0_66, %c0_67] : memref<1x9x225x32xbf16, #tpu.memory_space<vmem>>, vector<1x1x225x32xbf16>
    %78 = vector.shape_cast %77 : vector<1x1x225x32xbf16> to vector<225x32xbf16>
    %c0_68 = arith.constant 0 : index
    %c0_69 = arith.constant 0 : index
    %79 = vector.load %arg2[%c0_68, %c0_69] : memref<32x128xbf16, #tpu.memory_space<vmem>>, vector<32x128xbf16>
    %cst_70 = arith.constant dense<0.000000e+00> : vector<225x128xf32>
    %80 = tpu.matmul %78, %79, %cst_70 {dimension_numbers = #tpu.dot_dimension_numbers<[1], [0], [0], [1], [0, 0, 1, 1], [], []>} : vector<225x32xbf16>, vector<32x128xbf16>, vector<225x128xf32> -> vector<225x128xf32>
    %c0_71 = arith.constant 0 : index
    %c0_72 = arith.constant 0 : index
    %81 = vector.load %arg3[%c0_71, %c0_72] : memref<1x128xf32, #tpu.memory_space<vmem>>, vector<1x128xf32>
    %82 = vector.broadcast %81 : vector<1x128xf32> to vector<225x128xf32>
    %83 = arith.mulf %80, %82 : vector<225x128xf32>
    %c0_73 = arith.constant 0 : index
    %c0_74 = arith.constant 0 : index
    %84 = vector.load %arg4[%c0_73, %c0_74] : memref<1x128xf32, #tpu.memory_space<vmem>>, vector<1x128xf32>
    %85 = vector.broadcast %84 : vector<1x128xf32> to vector<225x128xf32>
    %86 = arith.addf %83, %85 : vector<225x128xf32>
    %cst_75 = arith.constant 0.000000e+00 : f32
    %87 = vector.broadcast %cst_75 : f32 to vector<225x128xf32>
    %88 = arith.maximumf %86, %87 : vector<225x128xf32>
    %89 = arith.maximumf %76, %88 : vector<225x128xf32>
    %c0_76 = arith.constant 0 : index
    %c7 = arith.constant 7 : index
    %c0_77 = arith.constant 0 : index
    %c0_78 = arith.constant 0 : index
    %90 = vector.load %arg1[%c0_76, %c7, %c0_77, %c0_78] : memref<1x9x225x32xbf16, #tpu.memory_space<vmem>>, vector<1x1x225x32xbf16>
    %91 = vector.shape_cast %90 : vector<1x1x225x32xbf16> to vector<225x32xbf16>
    %c0_79 = arith.constant 0 : index
    %c0_80 = arith.constant 0 : index
    %92 = vector.load %arg2[%c0_79, %c0_80] : memref<32x128xbf16, #tpu.memory_space<vmem>>, vector<32x128xbf16>
    %cst_81 = arith.constant dense<0.000000e+00> : vector<225x128xf32>
    %93 = tpu.matmul %91, %92, %cst_81 {dimension_numbers = #tpu.dot_dimension_numbers<[1], [0], [0], [1], [0, 0, 1, 1], [], []>} : vector<225x32xbf16>, vector<32x128xbf16>, vector<225x128xf32> -> vector<225x128xf32>
    %c0_82 = arith.constant 0 : index
    %c0_83 = arith.constant 0 : index
    %94 = vector.load %arg3[%c0_82, %c0_83] : memref<1x128xf32, #tpu.memory_space<vmem>>, vector<1x128xf32>
    %95 = vector.broadcast %94 : vector<1x128xf32> to vector<225x128xf32>
    %96 = arith.mulf %93, %95 : vector<225x128xf32>
    %c0_84 = arith.constant 0 : index
    %c0_85 = arith.constant 0 : index
    %97 = vector.load %arg4[%c0_84, %c0_85] : memref<1x128xf32, #tpu.memory_space<vmem>>, vector<1x128xf32>
    %98 = vector.broadcast %97 : vector<1x128xf32> to vector<225x128xf32>
    %99 = arith.addf %96, %98 : vector<225x128xf32>
    %cst_86 = arith.constant 0.000000e+00 : f32
    %100 = vector.broadcast %cst_86 : f32 to vector<225x128xf32>
    %101 = arith.maximumf %99, %100 : vector<225x128xf32>
    %102 = arith.maximumf %89, %101 : vector<225x128xf32>
    %c0_87 = arith.constant 0 : index
    %c8 = arith.constant 8 : index
    %c0_88 = arith.constant 0 : index
    %c0_89 = arith.constant 0 : index
    %103 = vector.load %arg1[%c0_87, %c8, %c0_88, %c0_89] : memref<1x9x225x32xbf16, #tpu.memory_space<vmem>>, vector<1x1x225x32xbf16>
    %104 = vector.shape_cast %103 : vector<1x1x225x32xbf16> to vector<225x32xbf16>
    %c0_90 = arith.constant 0 : index
    %c0_91 = arith.constant 0 : index
    %105 = vector.load %arg2[%c0_90, %c0_91] : memref<32x128xbf16, #tpu.memory_space<vmem>>, vector<32x128xbf16>
    %cst_92 = arith.constant dense<0.000000e+00> : vector<225x128xf32>
    %106 = tpu.matmul %104, %105, %cst_92 {dimension_numbers = #tpu.dot_dimension_numbers<[1], [0], [0], [1], [0, 0, 1, 1], [], []>} : vector<225x32xbf16>, vector<32x128xbf16>, vector<225x128xf32> -> vector<225x128xf32>
    %c0_93 = arith.constant 0 : index
    %c0_94 = arith.constant 0 : index
    %107 = vector.load %arg3[%c0_93, %c0_94] : memref<1x128xf32, #tpu.memory_space<vmem>>, vector<1x128xf32>
    %108 = vector.broadcast %107 : vector<1x128xf32> to vector<225x128xf32>
    %109 = arith.mulf %106, %108 : vector<225x128xf32>
    %c0_95 = arith.constant 0 : index
    %c0_96 = arith.constant 0 : index
    %110 = vector.load %arg4[%c0_95, %c0_96] : memref<1x128xf32, #tpu.memory_space<vmem>>, vector<1x128xf32>
    %111 = vector.broadcast %110 : vector<1x128xf32> to vector<225x128xf32>
    %112 = arith.addf %109, %111 : vector<225x128xf32>
    %cst_97 = arith.constant 0.000000e+00 : f32
    %113 = vector.broadcast %cst_97 : f32 to vector<225x128xf32>
    %114 = arith.maximumf %112, %113 : vector<225x128xf32>
    %115 = arith.maximumf %102, %114 : vector<225x128xf32>
    %c0_98 = arith.constant 0 : index
    %c0_99 = arith.constant 0 : index
    %116 = vector.load %arg15[%c0_98, %c0_99] : memref<225x128xf32, #tpu.memory_space<vmem>>, vector<225x128xf32>
    tpu.vector_store %arg15[%c0_98, %c0_99], %115 {strides = array<i32>} : memref<225x128xf32, #tpu.memory_space<vmem>>, vector<225x128xf32>,
    %cst_100 = arith.constant 0.000000e+00 : f32
    %117 = vector.broadcast %cst_100 : f32 to vector<178x128xf32>
    %c0_101 = arith.constant 0 : index
    %c0_102 = arith.constant 0 : index
    %118 = vector.load %arg15[%c0_101, %c0_102] : memref<225x128xf32, #tpu.memory_space<vmem>>, vector<178x128xf32>
    %119 = arith.truncf %118 : vector<178x128xf32> to vector<178x128xbf16>
    %c0_103 = arith.constant 0 : index
    %c0_104 = arith.constant 0 : index
    %c0_105 = arith.constant 0 : index
    %120 = vector.load %arg5[%c0_103, %c0_104, %c0_105] : memref<9x128x128xbf16, #tpu.memory_space<vmem>>, vector<1x128x128xbf16>
    %121 = vector.shape_cast %120 : vector<1x128x128xbf16> to vector<128x128xbf16>
    %cst_106 = arith.constant dense<0.000000e+00> : vector<178x128xf32>
    %122 = tpu.matmul %119, %121, %cst_106 {dimension_numbers = #tpu.dot_dimension_numbers<[1], [0], [0], [1], [0, 0, 1, 1], [], []>} : vector<178x128xbf16>, vector<128x128xbf16>, vector<178x128xf32> -> vector<178x128xf32>
    %123 = arith.addf %117, %122 : vector<178x128xf32>
    %c1_107 = arith.constant 1 : index
    %c0_108 = arith.constant 0 : index
    %124 = vector.load %arg15[%c1_107, %c0_108] : memref<225x128xf32, #tpu.memory_space<vmem>>, vector<178x128xf32>
    %125 = arith.truncf %124 : vector<178x128xf32> to vector<178x128xbf16>
    %c1_109 = arith.constant 1 : index
    %c0_110 = arith.constant 0 : index
    %c0_111 = arith.constant 0 : index
    %126 = vector.load %arg5[%c1_109, %c0_110, %c0_111] : memref<9x128x128xbf16, #tpu.memory_space<vmem>>, vector<1x128x128xbf16>
    %127 = vector.shape_cast %126 : vector<1x128x128xbf16> to vector<128x128xbf16>
    %cst_112 = arith.constant dense<0.000000e+00> : vector<178x128xf32>
    %128 = tpu.matmul %125, %127, %cst_112 {dimension_numbers = #tpu.dot_dimension_numbers<[1], [0], [0], [1], [0, 0, 1, 1], [], []>} : vector<178x128xbf16>, vector<128x128xbf16>, vector<178x128xf32> -> vector<178x128xf32>
    %129 = arith.addf %123, %128 : vector<178x128xf32>
    %c2_113 = arith.constant 2 : index
    %c0_114 = arith.constant 0 : index
    %130 = vector.load %arg15[%c2_113, %c0_114] : memref<225x128xf32, #tpu.memory_space<vmem>>, vector<178x128xf32>
    %131 = arith.truncf %130 : vector<178x128xf32> to vector<178x128xbf16>
    %c2_115 = arith.constant 2 : index
    %c0_116 = arith.constant 0 : index
    %c0_117 = arith.constant 0 : index
    %132 = vector.load %arg5[%c2_115, %c0_116, %c0_117] : memref<9x128x128xbf16, #tpu.memory_space<vmem>>, vector<1x128x128xbf16>
    %133 = vector.shape_cast %132 : vector<1x128x128xbf16> to vector<128x128xbf16>
    %cst_118 = arith.constant dense<0.000000e+00> : vector<178x128xf32>
    %134 = tpu.matmul %131, %133, %cst_118 {dimension_numbers = #tpu.dot_dimension_numbers<[1], [0], [0], [1], [0, 0, 1, 1], [], []>} : vector<178x128xbf16>, vector<128x128xbf16>, vector<178x128xf32> -> vector<178x128xf32>
    %135 = arith.addf %129, %134 : vector<178x128xf32>
    %c15 = arith.constant 15 : index
    %c0_119 = arith.constant 0 : index
    %136 = vector.load %arg15[%c15, %c0_119] : memref<225x128xf32, #tpu.memory_space<vmem>>, vector<178x128xf32>
    %137 = arith.truncf %136 : vector<178x128xf32> to vector<178x128xbf16>
    %c3_120 = arith.constant 3 : index
    %c0_121 = arith.constant 0 : index
    %c0_122 = arith.constant 0 : index
    %138 = vector.load %arg5[%c3_120, %c0_121, %c0_122] : memref<9x128x128xbf16, #tpu.memory_space<vmem>>, vector<1x128x128xbf16>
    %139 = vector.shape_cast %138 : vector<1x128x128xbf16> to vector<128x128xbf16>
    %cst_123 = arith.constant dense<0.000000e+00> : vector<178x128xf32>
    %140 = tpu.matmul %137, %139, %cst_123 {dimension_numbers = #tpu.dot_dimension_numbers<[1], [0], [0], [1], [0, 0, 1, 1], [], []>} : vector<178x128xbf16>, vector<128x128xbf16>, vector<178x128xf32> -> vector<178x128xf32>
    %141 = arith.addf %135, %140 : vector<178x128xf32>
    %c16 = arith.constant 16 : index
    %c0_124 = arith.constant 0 : index
    %142 = vector.load %arg15[%c16, %c0_124] : memref<225x128xf32, #tpu.memory_space<vmem>>, vector<178x128xf32>
    %143 = arith.truncf %142 : vector<178x128xf32> to vector<178x128xbf16>
    %c4_125 = arith.constant 4 : index
    %c0_126 = arith.constant 0 : index
    %c0_127 = arith.constant 0 : index
    %144 = vector.load %arg5[%c4_125, %c0_126, %c0_127] : memref<9x128x128xbf16, #tpu.memory_space<vmem>>, vector<1x128x128xbf16>
    %145 = vector.shape_cast %144 : vector<1x128x128xbf16> to vector<128x128xbf16>
    %cst_128 = arith.constant dense<0.000000e+00> : vector<178x128xf32>
    %146 = tpu.matmul %143, %145, %cst_128 {dimension_numbers = #tpu.dot_dimension_numbers<[1], [0], [0], [1], [0, 0, 1, 1], [], []>} : vector<178x128xbf16>, vector<128x128xbf16>, vector<178x128xf32> -> vector<178x128xf32>
    %147 = arith.addf %141, %146 : vector<178x128xf32>
    %c17 = arith.constant 17 : index
    %c0_129 = arith.constant 0 : index
    %148 = vector.load %arg15[%c17, %c0_129] : memref<225x128xf32, #tpu.memory_space<vmem>>, vector<178x128xf32>
    %149 = arith.truncf %148 : vector<178x128xf32> to vector<178x128xbf16>
    %c5_130 = arith.constant 5 : index
    %c0_131 = arith.constant 0 : index
    %c0_132 = arith.constant 0 : index
    %150 = vector.load %arg5[%c5_130, %c0_131, %c0_132] : memref<9x128x128xbf16, #tpu.memory_space<vmem>>, vector<1x128x128xbf16>
    %151 = vector.shape_cast %150 : vector<1x128x128xbf16> to vector<128x128xbf16>
    %cst_133 = arith.constant dense<0.000000e+00> : vector<178x128xf32>
    %152 = tpu.matmul %149, %151, %cst_133 {dimension_numbers = #tpu.dot_dimension_numbers<[1], [0], [0], [1], [0, 0, 1, 1], [], []>} : vector<178x128xbf16>, vector<128x128xbf16>, vector<178x128xf32> -> vector<178x128xf32>
    %153 = arith.addf %147, %152 : vector<178x128xf32>
    %c30 = arith.constant 30 : index
    %c0_134 = arith.constant 0 : index
    %154 = vector.load %arg15[%c30, %c0_134] : memref<225x128xf32, #tpu.memory_space<vmem>>, vector<178x128xf32>
    %155 = arith.truncf %154 : vector<178x128xf32> to vector<178x128xbf16>
    %c6_135 = arith.constant 6 : index
    %c0_136 = arith.constant 0 : index
    %c0_137 = arith.constant 0 : index
    %156 = vector.load %arg5[%c6_135, %c0_136, %c0_137] : memref<9x128x128xbf16, #tpu.memory_space<vmem>>, vector<1x128x128xbf16>
    %157 = vector.shape_cast %156 : vector<1x128x128xbf16> to vector<128x128xbf16>
    %cst_138 = arith.constant dense<0.000000e+00> : vector<178x128xf32>
    %158 = tpu.matmul %155, %157, %cst_138 {dimension_numbers = #tpu.dot_dimension_numbers<[1], [0], [0], [1], [0, 0, 1, 1], [], []>} : vector<178x128xbf16>, vector<128x128xbf16>, vector<178x128xf32> -> vector<178x128xf32>
    %159 = arith.addf %153, %158 : vector<178x128xf32>
    %c31 = arith.constant 31 : index
    %c0_139 = arith.constant 0 : index
    %160 = vector.load %arg15[%c31, %c0_139] : memref<225x128xf32, #tpu.memory_space<vmem>>, vector<178x128xf32>
    %161 = arith.truncf %160 : vector<178x128xf32> to vector<178x128xbf16>
    %c7_140 = arith.constant 7 : index
    %c0_141 = arith.constant 0 : index
    %c0_142 = arith.constant 0 : index
    %162 = vector.load %arg5[%c7_140, %c0_141, %c0_142] : memref<9x128x128xbf16, #tpu.memory_space<vmem>>, vector<1x128x128xbf16>
    %163 = vector.shape_cast %162 : vector<1x128x128xbf16> to vector<128x128xbf16>
    %cst_143 = arith.constant dense<0.000000e+00> : vector<178x128xf32>
    %164 = tpu.matmul %161, %163, %cst_143 {dimension_numbers = #tpu.dot_dimension_numbers<[1], [0], [0], [1], [0, 0, 1, 1], [], []>} : vector<178x128xbf16>, vector<128x128xbf16>, vector<178x128xf32> -> vector<178x128xf32>
    %165 = arith.addf %159, %164 : vector<178x128xf32>
    %c32 = arith.constant 32 : index
    %c0_144 = arith.constant 0 : index
    %166 = vector.load %arg15[%c32, %c0_144] : memref<225x128xf32, #tpu.memory_space<vmem>>, vector<178x128xf32>
    %167 = arith.truncf %166 : vector<178x128xf32> to vector<178x128xbf16>
    %c8_145 = arith.constant 8 : index
    %c0_146 = arith.constant 0 : index
    %c0_147 = arith.constant 0 : index
    %168 = vector.load %arg5[%c8_145, %c0_146, %c0_147] : memref<9x128x128xbf16, #tpu.memory_space<vmem>>, vector<1x128x128xbf16>
    %169 = vector.shape_cast %168 : vector<1x128x128xbf16> to vector<128x128xbf16>
    %cst_148 = arith.constant dense<0.000000e+00> : vector<178x128xf32>
    %170 = tpu.matmul %167, %169, %cst_148 {dimension_numbers = #tpu.dot_dimension_numbers<[1], [0], [0], [1], [0, 0, 1, 1], [], []>} : vector<178x128xbf16>, vector<128x128xbf16>, vector<178x128xf32> -> vector<178x128xf32>
    %171 = arith.addf %165, %170 : vector<178x128xf32>
    %c0_149 = arith.constant 0 : index
    %c0_150 = arith.constant 0 : index
    %172 = vector.load %arg6[%c0_149, %c0_150] : memref<1x128xf32, #tpu.memory_space<vmem>>, vector<1x128xf32>
    %173 = vector.broadcast %172 : vector<1x128xf32> to vector<178x128xf32>
    %174 = arith.mulf %171, %173 : vector<178x128xf32>
    %c0_151 = arith.constant 0 : index
    %c0_152 = arith.constant 0 : index
    %175 = vector.load %arg7[%c0_151, %c0_152] : memref<1x128xf32, #tpu.memory_space<vmem>>, vector<1x128xf32>
    %176 = vector.broadcast %175 : vector<1x128xf32> to vector<178x128xf32>
    %177 = arith.addf %174, %176 : vector<178x128xf32>
    %cst_153 = arith.constant 0.000000e+00 : f32
    %178 = vector.broadcast %cst_153 : f32 to vector<178x128xf32>
    %179 = arith.maximumf %177, %178 : vector<178x128xf32>
    %c0_154 = arith.constant 0 : index
    %c0_155 = arith.constant 0 : index
    %180 = vector.load %arg9[%c0_154, %c0_155] : memref<1x128xf32, #tpu.memory_space<vmem>>, vector<1x128xf32>
    %181 = vector.extract_strided_slice %179 {offsets = [0, 0], sizes = [13, 128], strides = [1, 1]} : vector<178x128xf32> to vector<13x128xf32>
    %182 = vector.extract_strided_slice %179 {offsets = [15, 0], sizes = [13, 128], strides = [1, 1]} : vector<178x128xf32> to vector<13x128xf32>
    %183 = arith.maximumf %181, %182 : vector<13x128xf32>
    %184 = vector.extract_strided_slice %179 {offsets = [30, 0], sizes = [13, 128], strides = [1, 1]} : vector<178x128xf32> to vector<13x128xf32>
    %185 = arith.maximumf %183, %184 : vector<13x128xf32>
    %186 = vector.extract_strided_slice %185 {offsets = [0, 0], sizes = [1, 128], strides = [1, 1]} : vector<13x128xf32> to vector<1x128xf32>
    %187 = vector.extract_strided_slice %185 {offsets = [1, 0], sizes = [1, 128], strides = [1, 1]} : vector<13x128xf32> to vector<1x128xf32>
    %188 = arith.maximumf %186, %187 : vector<1x128xf32>
    %189 = vector.extract_strided_slice %185 {offsets = [2, 0], sizes = [1, 128], strides = [1, 1]} : vector<13x128xf32> to vector<1x128xf32>
    %190 = arith.maximumf %188, %189 : vector<1x128xf32>
    %191 = arith.truncf %190 : vector<1x128xf32> to vector<1x128xbf16>
    %c0_156 = arith.constant 0 : index
    %c0_157 = arith.constant 0 : index
    %c0_158 = arith.constant 0 : index
    %192 = vector.load %arg8[%c0_156, %c0_157, %c0_158] : memref<16x128x128xbf16, #tpu.memory_space<vmem>>, vector<1x128x128xbf16>
    %193 = vector.shape_cast %192 : vector<1x128x128xbf16> to vector<128x128xbf16>
    %cst_159 = arith.constant dense<0.000000e+00> : vector<1x128xf32>
    %194 = tpu.matmul %191, %193, %cst_159 {dimension_numbers = #tpu.dot_dimension_numbers<[1], [0], [0], [1], [0, 0, 1, 1], [], []>} : vector<1x128xbf16>, vector<128x128xbf16>, vector<1x128xf32> -> vector<1x128xf32>
    %195 = arith.addf %180, %194 : vector<1x128xf32>
    %196 = vector.extract_strided_slice %185 {offsets = [3, 0], sizes = [1, 128], strides = [1, 1]} : vector<13x128xf32> to vector<1x128xf32>
    %197 = vector.extract_strided_slice %185 {offsets = [4, 0], sizes = [1, 128], strides = [1, 1]} : vector<13x128xf32> to vector<1x128xf32>
    %198 = arith.maximumf %196, %197 : vector<1x128xf32>
    %199 = vector.extract_strided_slice %185 {offsets = [5, 0], sizes = [1, 128], strides = [1, 1]} : vector<13x128xf32> to vector<1x128xf32>
    %200 = arith.maximumf %198, %199 : vector<1x128xf32>
    %201 = arith.truncf %200 : vector<1x128xf32> to vector<1x128xbf16>
    %c1_160 = arith.constant 1 : index
    %c0_161 = arith.constant 0 : index
    %c0_162 = arith.constant 0 : index
    %202 = vector.load %arg8[%c1_160, %c0_161, %c0_162] : memref<16x128x128xbf16, #tpu.memory_space<vmem>>, vector<1x128x128xbf16>
    %203 = vector.shape_cast %202 : vector<1x128x128xbf16> to vector<128x128xbf16>
    %cst_163 = arith.constant dense<0.000000e+00> : vector<1x128xf32>
    %204 = tpu.matmul %201, %203, %cst_163 {dimension_numbers = #tpu.dot_dimension_numbers<[1], [0], [0], [1], [0, 0, 1, 1], [], []>} : vector<1x128xbf16>, vector<128x128xbf16>, vector<1x128xf32> -> vector<1x128xf32>
    %205 = arith.addf %195, %204 : vector<1x128xf32>
    %206 = vector.extract_strided_slice %185 {offsets = [6, 0], sizes = [1, 128], strides = [1, 1]} : vector<13x128xf32> to vector<1x128xf32>
    %207 = vector.extract_strided_slice %185 {offsets = [7, 0], sizes = [1, 128], strides = [1, 1]} : vector<13x128xf32> to vector<1x128xf32>
    %208 = arith.maximumf %206, %207 : vector<1x128xf32>
    %209 = vector.extract_strided_slice %185 {offsets = [8, 0], sizes = [1, 128], strides = [1, 1]} : vector<13x128xf32> to vector<1x128xf32>
    %210 = arith.maximumf %208, %209 : vector<1x128xf32>
    %211 = arith.truncf %210 : vector<1x128xf32> to vector<1x128xbf16>
    %c2_164 = arith.constant 2 : index
    %c0_165 = arith.constant 0 : index
    %c0_166 = arith.constant 0 : index
    %212 = vector.load %arg8[%c2_164, %c0_165, %c0_166] : memref<16x128x128xbf16, #tpu.memory_space<vmem>>, vector<1x128x128xbf16>
    %213 = vector.shape_cast %212 : vector<1x128x128xbf16> to vector<128x128xbf16>
    %cst_167 = arith.constant dense<0.000000e+00> : vector<1x128xf32>
    %214 = tpu.matmul %211, %213, %cst_167 {dimension_numbers = #tpu.dot_dimension_numbers<[1], [0], [0], [1], [0, 0, 1, 1], [], []>} : vector<1x128xbf16>, vector<128x128xbf16>, vector<1x128xf32> -> vector<1x128xf32>
    %215 = arith.addf %205, %214 : vector<1x128xf32>
    %216 = vector.extract_strided_slice %185 {offsets = [9, 0], sizes = [1, 128], strides = [1, 1]} : vector<13x128xf32> to vector<1x128xf32>
    %217 = vector.extract_strided_slice %185 {offsets = [10, 0], sizes = [1, 128], strides = [1, 1]} : vector<13x128xf32> to vector<1x128xf32>
    %218 = arith.maximumf %216, %217 : vector<1x128xf32>
    %219 = vector.extract_strided_slice %185 {offsets = [11, 0], sizes = [1, 128], strides = [1, 1]} : vector<13x128xf32> to vector<1x128xf32>
    %220 = arith.maximumf %218, %219 : vector<1x128xf32>
    %221 = arith.truncf %220 : vector<1x128xf32> to vector<1x128xbf16>
    %c3_168 = arith.constant 3 : index
    %c0_169 = arith.constant 0 : index
    %c0_170 = arith.constant 0 : index
    %222 = vector.load %arg8[%c3_168, %c0_169, %c0_170] : memref<16x128x128xbf16, #tpu.memory_space<vmem>>, vector<1x128x128xbf16>
    %223 = vector.shape_cast %222 : vector<1x128x128xbf16> to vector<128x128xbf16>
    %cst_171 = arith.constant dense<0.000000e+00> : vector<1x128xf32>
    %224 = tpu.matmul %221, %223, %cst_171 {dimension_numbers = #tpu.dot_dimension_numbers<[1], [0], [0], [1], [0, 0, 1, 1], [], []>} : vector<1x128xbf16>, vector<128x128xbf16>, vector<1x128xf32> -> vector<1x128xf32>
    %225 = arith.addf %215, %224 : vector<1x128xf32>
    %226 = vector.extract_strided_slice %179 {offsets = [45, 0], sizes = [13, 128], strides = [1, 1]} : vector<178x128xf32> to vector<13x128xf32>
    %227 = vector.extract_strided_slice %179 {offsets = [60, 0], sizes = [13, 128], strides = [1, 1]} : vector<178x128xf32> to vector<13x128xf32>
    %228 = arith.maximumf %226, %227 : vector<13x128xf32>
    %229 = vector.extract_strided_slice %179 {offsets = [75, 0], sizes = [13, 128], strides = [1, 1]} : vector<178x128xf32> to vector<13x128xf32>
    %230 = arith.maximumf %228, %229 : vector<13x128xf32>
    %231 = vector.extract_strided_slice %230 {offsets = [0, 0], sizes = [1, 128], strides = [1, 1]} : vector<13x128xf32> to vector<1x128xf32>
    %232 = vector.extract_strided_slice %230 {offsets = [1, 0], sizes = [1, 128], strides = [1, 1]} : vector<13x128xf32> to vector<1x128xf32>
    %233 = arith.maximumf %231, %232 : vector<1x128xf32>
    %234 = vector.extract_strided_slice %230 {offsets = [2, 0], sizes = [1, 128], strides = [1, 1]} : vector<13x128xf32> to vector<1x128xf32>
    %235 = arith.maximumf %233, %234 : vector<1x128xf32>
    %236 = arith.truncf %235 : vector<1x128xf32> to vector<1x128xbf16>
    %c4_172 = arith.constant 4 : index
    %c0_173 = arith.constant 0 : index
    %c0_174 = arith.constant 0 : index
    %237 = vector.load %arg8[%c4_172, %c0_173, %c0_174] : memref<16x128x128xbf16, #tpu.memory_space<vmem>>, vector<1x128x128xbf16>
    %238 = vector.shape_cast %237 : vector<1x128x128xbf16> to vector<128x128xbf16>
    %cst_175 = arith.constant dense<0.000000e+00> : vector<1x128xf32>
    %239 = tpu.matmul %236, %238, %cst_175 {dimension_numbers = #tpu.dot_dimension_numbers<[1], [0], [0], [1], [0, 0, 1, 1], [], []>} : vector<1x128xbf16>, vector<128x128xbf16>, vector<1x128xf32> -> vector<1x128xf32>
    %240 = arith.addf %225, %239 : vector<1x128xf32>
    %241 = vector.extract_strided_slice %230 {offsets = [3, 0], sizes = [1, 128], strides = [1, 1]} : vector<13x128xf32> to vector<1x128xf32>
    %242 = vector.extract_strided_slice %230 {offsets = [4, 0], sizes = [1, 128], strides = [1, 1]} : vector<13x128xf32> to vector<1x128xf32>
    %243 = arith.maximumf %241, %242 : vector<1x128xf32>
    %244 = vector.extract_strided_slice %230 {offsets = [5, 0], sizes = [1, 128], strides = [1, 1]} : vector<13x128xf32> to vector<1x128xf32>
    %245 = arith.maximumf %243, %244 : vector<1x128xf32>
    %246 = arith.truncf %245 : vector<1x128xf32> to vector<1x128xbf16>
    %c5_176 = arith.constant 5 : index
    %c0_177 = arith.constant 0 : index
    %c0_178 = arith.constant 0 : index
    %247 = vector.load %arg8[%c5_176, %c0_177, %c0_178] : memref<16x128x128xbf16, #tpu.memory_space<vmem>>, vector<1x128x128xbf16>
    %248 = vector.shape_cast %247 : vector<1x128x128xbf16> to vector<128x128xbf16>
    %cst_179 = arith.constant dense<0.000000e+00> : vector<1x128xf32>
    %249 = tpu.matmul %246, %248, %cst_179 {dimension_numbers = #tpu.dot_dimension_numbers<[1], [0], [0], [1], [0, 0, 1, 1], [], []>} : vector<1x128xbf16>, vector<128x128xbf16>, vector<1x128xf32> -> vector<1x128xf32>
    %250 = arith.addf %240, %249 : vector<1x128xf32>
    %251 = vector.extract_strided_slice %230 {offsets = [6, 0], sizes = [1, 128], strides = [1, 1]} : vector<13x128xf32> to vector<1x128xf32>
    %252 = vector.extract_strided_slice %230 {offsets = [7, 0], sizes = [1, 128], strides = [1, 1]} : vector<13x128xf32> to vector<1x128xf32>
    %253 = arith.maximumf %251, %252 : vector<1x128xf32>
    %254 = vector.extract_strided_slice %230 {offsets = [8, 0], sizes = [1, 128], strides = [1, 1]} : vector<13x128xf32> to vector<1x128xf32>
    %255 = arith.maximumf %253, %254 : vector<1x128xf32>
    %256 = arith.truncf %255 : vector<1x128xf32> to vector<1x128xbf16>
    %c6_180 = arith.constant 6 : index
    %c0_181 = arith.constant 0 : index
    %c0_182 = arith.constant 0 : index
    %257 = vector.load %arg8[%c6_180, %c0_181, %c0_182] : memref<16x128x128xbf16, #tpu.memory_space<vmem>>, vector<1x128x128xbf16>
    %258 = vector.shape_cast %257 : vector<1x128x128xbf16> to vector<128x128xbf16>
    %cst_183 = arith.constant dense<0.000000e+00> : vector<1x128xf32>
    %259 = tpu.matmul %256, %258, %cst_183 {dimension_numbers = #tpu.dot_dimension_numbers<[1], [0], [0], [1], [0, 0, 1, 1], [], []>} : vector<1x128xbf16>, vector<128x128xbf16>, vector<1x128xf32> -> vector<1x128xf32>
    %260 = arith.addf %250, %259 : vector<1x128xf32>
    %261 = vector.extract_strided_slice %230 {offsets = [9, 0], sizes = [1, 128], strides = [1, 1]} : vector<13x128xf32> to vector<1x128xf32>
    %262 = vector.extract_strided_slice %230 {offsets = [10, 0], sizes = [1, 128], strides = [1, 1]} : vector<13x128xf32> to vector<1x128xf32>
    %263 = arith.maximumf %261, %262 : vector<1x128xf32>
    %264 = vector.extract_strided_slice %230 {offsets = [11, 0], sizes = [1, 128], strides = [1, 1]} : vector<13x128xf32> to vector<1x128xf32>
    %265 = arith.maximumf %263, %264 : vector<1x128xf32>
    %266 = arith.truncf %265 : vector<1x128xf32> to vector<1x128xbf16>
    %c7_184 = arith.constant 7 : index
    %c0_185 = arith.constant 0 : index
    %c0_186 = arith.constant 0 : index
    %267 = vector.load %arg8[%c7_184, %c0_185, %c0_186] : memref<16x128x128xbf16, #tpu.memory_space<vmem>>, vector<1x128x128xbf16>
    %268 = vector.shape_cast %267 : vector<1x128x128xbf16> to vector<128x128xbf16>
    %cst_187 = arith.constant dense<0.000000e+00> : vector<1x128xf32>
    %269 = tpu.matmul %266, %268, %cst_187 {dimension_numbers = #tpu.dot_dimension_numbers<[1], [0], [0], [1], [0, 0, 1, 1], [], []>} : vector<1x128xbf16>, vector<128x128xbf16>, vector<1x128xf32> -> vector<1x128xf32>
    %270 = arith.addf %260, %269 : vector<1x128xf32>
    %271 = vector.extract_strided_slice %179 {offsets = [90, 0], sizes = [13, 128], strides = [1, 1]} : vector<178x128xf32> to vector<13x128xf32>
    %272 = vector.extract_strided_slice %179 {offsets = [105, 0], sizes = [13, 128], strides = [1, 1]} : vector<178x128xf32> to vector<13x128xf32>
    %273 = arith.maximumf %271, %272 : vector<13x128xf32>
    %274 = vector.extract_strided_slice %179 {offsets = [120, 0], sizes = [13, 128], strides = [1, 1]} : vector<178x128xf32> to vector<13x128xf32>
    %275 = arith.maximumf %273, %274 : vector<13x128xf32>
    %276 = vector.extract_strided_slice %275 {offsets = [0, 0], sizes = [1, 128], strides = [1, 1]} : vector<13x128xf32> to vector<1x128xf32>
    %277 = vector.extract_strided_slice %275 {offsets = [1, 0], sizes = [1, 128], strides = [1, 1]} : vector<13x128xf32> to vector<1x128xf32>
    %278 = arith.maximumf %276, %277 : vector<1x128xf32>
    %279 = vector.extract_strided_slice %275 {offsets = [2, 0], sizes = [1, 128], strides = [1, 1]} : vector<13x128xf32> to vector<1x128xf32>
    %280 = arith.maximumf %278, %279 : vector<1x128xf32>
    %281 = arith.truncf %280 : vector<1x128xf32> to vector<1x128xbf16>
    %c8_188 = arith.constant 8 : index
    %c0_189 = arith.constant 0 : index
    %c0_190 = arith.constant 0 : index
    %282 = vector.load %arg8[%c8_188, %c0_189, %c0_190] : memref<16x128x128xbf16, #tpu.memory_space<vmem>>, vector<1x128x128xbf16>
    %283 = vector.shape_cast %282 : vector<1x128x128xbf16> to vector<128x128xbf16>
    %cst_191 = arith.constant dense<0.000000e+00> : vector<1x128xf32>
    %284 = tpu.matmul %281, %283, %cst_191 {dimension_numbers = #tpu.dot_dimension_numbers<[1], [0], [0], [1], [0, 0, 1, 1], [], []>} : vector<1x128xbf16>, vector<128x128xbf16>, vector<1x128xf32> -> vector<1x128xf32>
    %285 = arith.addf %270, %284 : vector<1x128xf32>
    %286 = vector.extract_strided_slice %275 {offsets = [3, 0], sizes = [1, 128], strides = [1, 1]} : vector<13x128xf32> to vector<1x128xf32>
    %287 = vector.extract_strided_slice %275 {offsets = [4, 0], sizes = [1, 128], strides = [1, 1]} : vector<13x128xf32> to vector<1x128xf32>
    %288 = arith.maximumf %286, %287 : vector<1x128xf32>
    %289 = vector.extract_strided_slice %275 {offsets = [5, 0], sizes = [1, 128], strides = [1, 1]} : vector<13x128xf32> to vector<1x128xf32>
    %290 = arith.maximumf %288, %289 : vector<1x128xf32>
    %291 = arith.truncf %290 : vector<1x128xf32> to vector<1x128xbf16>
    %c9 = arith.constant 9 : index
    %c0_192 = arith.constant 0 : index
    %c0_193 = arith.constant 0 : index
    %292 = vector.load %arg8[%c9, %c0_192, %c0_193] : memref<16x128x128xbf16, #tpu.memory_space<vmem>>, vector<1x128x128xbf16>
    %293 = vector.shape_cast %292 : vector<1x128x128xbf16> to vector<128x128xbf16>
    %cst_194 = arith.constant dense<0.000000e+00> : vector<1x128xf32>
    %294 = tpu.matmul %291, %293, %cst_194 {dimension_numbers = #tpu.dot_dimension_numbers<[1], [0], [0], [1], [0, 0, 1, 1], [], []>} : vector<1x128xbf16>, vector<128x128xbf16>, vector<1x128xf32> -> vector<1x128xf32>
    %295 = arith.addf %285, %294 : vector<1x128xf32>
    %296 = vector.extract_strided_slice %275 {offsets = [6, 0], sizes = [1, 128], strides = [1, 1]} : vector<13x128xf32> to vector<1x128xf32>
    %297 = vector.extract_strided_slice %275 {offsets = [7, 0], sizes = [1, 128], strides = [1, 1]} : vector<13x128xf32> to vector<1x128xf32>
    %298 = arith.maximumf %296, %297 : vector<1x128xf32>
    %299 = vector.extract_strided_slice %275 {offsets = [8, 0], sizes = [1, 128], strides = [1, 1]} : vector<13x128xf32> to vector<1x128xf32>
    %300 = arith.maximumf %298, %299 : vector<1x128xf32>
    %301 = arith.truncf %300 : vector<1x128xf32> to vector<1x128xbf16>
    %c10 = arith.constant 10 : index
    %c0_195 = arith.constant 0 : index
    %c0_196 = arith.constant 0 : index
    %302 = vector.load %arg8[%c10, %c0_195, %c0_196] : memref<16x128x128xbf16, #tpu.memory_space<vmem>>, vector<1x128x128xbf16>
    %303 = vector.shape_cast %302 : vector<1x128x128xbf16> to vector<128x128xbf16>
    %cst_197 = arith.constant dense<0.000000e+00> : vector<1x128xf32>
    %304 = tpu.matmul %301, %303, %cst_197 {dimension_numbers = #tpu.dot_dimension_numbers<[1], [0], [0], [1], [0, 0, 1, 1], [], []>} : vector<1x128xbf16>, vector<128x128xbf16>, vector<1x128xf32> -> vector<1x128xf32>
    %305 = arith.addf %295, %304 : vector<1x128xf32>
    %306 = vector.extract_strided_slice %275 {offsets = [9, 0], sizes = [1, 128], strides = [1, 1]} : vector<13x128xf32> to vector<1x128xf32>
    %307 = vector.extract_strided_slice %275 {offsets = [10, 0], sizes = [1, 128], strides = [1, 1]} : vector<13x128xf32> to vector<1x128xf32>
    %308 = arith.maximumf %306, %307 : vector<1x128xf32>
    %309 = vector.extract_strided_slice %275 {offsets = [11, 0], sizes = [1, 128], strides = [1, 1]} : vector<13x128xf32> to vector<1x128xf32>
    %310 = arith.maximumf %308, %309 : vector<1x128xf32>
    %311 = arith.truncf %310 : vector<1x128xf32> to vector<1x128xbf16>
    %c11 = arith.constant 11 : index
    %c0_198 = arith.constant 0 : index
    %c0_199 = arith.constant 0 : index
    %312 = vector.load %arg8[%c11, %c0_198, %c0_199] : memref<16x128x128xbf16, #tpu.memory_space<vmem>>, vector<1x128x128xbf16>
    %313 = vector.shape_cast %312 : vector<1x128x128xbf16> to vector<128x128xbf16>
    %cst_200 = arith.constant dense<0.000000e+00> : vector<1x128xf32>
    %314 = tpu.matmul %311, %313, %cst_200 {dimension_numbers = #tpu.dot_dimension_numbers<[1], [0], [0], [1], [0, 0, 1, 1], [], []>} : vector<1x128xbf16>, vector<128x128xbf16>, vector<1x128xf32> -> vector<1x128xf32>
    %315 = arith.addf %305, %314 : vector<1x128xf32>
    %316 = vector.extract_strided_slice %179 {offsets = [135, 0], sizes = [13, 128], strides = [1, 1]} : vector<178x128xf32> to vector<13x128xf32>
    %317 = vector.extract_strided_slice %179 {offsets = [150, 0], sizes = [13, 128], strides = [1, 1]} : vector<178x128xf32> to vector<13x128xf32>
    %318 = arith.maximumf %316, %317 : vector<13x128xf32>
    %319 = vector.extract_strided_slice %179 {offsets = [165, 0], sizes = [13, 128], strides = [1, 1]} : vector<178x128xf32> to vector<13x128xf32>
    %320 = arith.maximumf %318, %319 : vector<13x128xf32>
    %321 = vector.extract_strided_slice %320 {offsets = [0, 0], sizes = [1, 128], strides = [1, 1]} : vector<13x128xf32> to vector<1x128xf32>
    %322 = vector.extract_strided_slice %320 {offsets = [1, 0], sizes = [1, 128], strides = [1, 1]} : vector<13x128xf32> to vector<1x128xf32>
    %323 = arith.maximumf %321, %322 : vector<1x128xf32>
    %324 = vector.extract_strided_slice %320 {offsets = [2, 0], sizes = [1, 128], strides = [1, 1]} : vector<13x128xf32> to vector<1x128xf32>
    %325 = arith.maximumf %323, %324 : vector<1x128xf32>
    %326 = arith.truncf %325 : vector<1x128xf32> to vector<1x128xbf16>
    %c12 = arith.constant 12 : index
    %c0_201 = arith.constant 0 : index
    %c0_202 = arith.constant 0 : index
    %327 = vector.load %arg8[%c12, %c0_201, %c0_202] : memref<16x128x128xbf16, #tpu.memory_space<vmem>>, vector<1x128x128xbf16>
    %328 = vector.shape_cast %327 : vector<1x128x128xbf16> to vector<128x128xbf16>
    %cst_203 = arith.constant dense<0.000000e+00> : vector<1x128xf32>
    %329 = tpu.matmul %326, %328, %cst_203 {dimension_numbers = #tpu.dot_dimension_numbers<[1], [0], [0], [1], [0, 0, 1, 1], [], []>} : vector<1x128xbf16>, vector<128x128xbf16>, vector<1x128xf32> -> vector<1x128xf32>
    %330 = arith.addf %315, %329 : vector<1x128xf32>
    %331 = vector.extract_strided_slice %320 {offsets = [3, 0], sizes = [1, 128], strides = [1, 1]} : vector<13x128xf32> to vector<1x128xf32>
    %332 = vector.extract_strided_slice %320 {offsets = [4, 0], sizes = [1, 128], strides = [1, 1]} : vector<13x128xf32> to vector<1x128xf32>
    %333 = arith.maximumf %331, %332 : vector<1x128xf32>
    %334 = vector.extract_strided_slice %320 {offsets = [5, 0], sizes = [1, 128], strides = [1, 1]} : vector<13x128xf32> to vector<1x128xf32>
    %335 = arith.maximumf %333, %334 : vector<1x128xf32>
    %336 = arith.truncf %335 : vector<1x128xf32> to vector<1x128xbf16>
    %c13 = arith.constant 13 : index
    %c0_204 = arith.constant 0 : index
    %c0_205 = arith.constant 0 : index
    %337 = vector.load %arg8[%c13, %c0_204, %c0_205] : memref<16x128x128xbf16, #tpu.memory_space<vmem>>, vector<1x128x128xbf16>
    %338 = vector.shape_cast %337 : vector<1x128x128xbf16> to vector<128x128xbf16>
    %cst_206 = arith.constant dense<0.000000e+00> : vector<1x128xf32>
    %339 = tpu.matmul %336, %338, %cst_206 {dimension_numbers = #tpu.dot_dimension_numbers<[1], [0], [0], [1], [0, 0, 1, 1], [], []>} : vector<1x128xbf16>, vector<128x128xbf16>, vector<1x128xf32> -> vector<1x128xf32>
    %340 = arith.addf %330, %339 : vector<1x128xf32>
    %341 = vector.extract_strided_slice %320 {offsets = [6, 0], sizes = [1, 128], strides = [1, 1]} : vector<13x128xf32> to vector<1x128xf32>
    %342 = vector.extract_strided_slice %320 {offsets = [7, 0], sizes = [1, 128], strides = [1, 1]} : vector<13x128xf32> to vector<1x128xf32>
    %343 = arith.maximumf %341, %342 : vector<1x128xf32>
    %344 = vector.extract_strided_slice %320 {offsets = [8, 0], sizes = [1, 128], strides = [1, 1]} : vector<13x128xf32> to vector<1x128xf32>
    %345 = arith.maximumf %343, %344 : vector<1x128xf32>
    %346 = arith.truncf %345 : vector<1x128xf32> to vector<1x128xbf16>
    %c14 = arith.constant 14 : index
    %c0_207 = arith.constant 0 : index
    %c0_208 = arith.constant 0 : index
    %347 = vector.load %arg8[%c14, %c0_207, %c0_208] : memref<16x128x128xbf16, #tpu.memory_space<vmem>>, vector<1x128x128xbf16>
    %348 = vector.shape_cast %347 : vector<1x128x128xbf16> to vector<128x128xbf16>
    %cst_209 = arith.constant dense<0.000000e+00> : vector<1x128xf32>
    %349 = tpu.matmul %346, %348, %cst_209 {dimension_numbers = #tpu.dot_dimension_numbers<[1], [0], [0], [1], [0, 0, 1, 1], [], []>} : vector<1x128xbf16>, vector<128x128xbf16>, vector<1x128xf32> -> vector<1x128xf32>
    %350 = arith.addf %340, %349 : vector<1x128xf32>
    %351 = vector.extract_strided_slice %320 {offsets = [9, 0], sizes = [1, 128], strides = [1, 1]} : vector<13x128xf32> to vector<1x128xf32>
    %352 = vector.extract_strided_slice %320 {offsets = [10, 0], sizes = [1, 128], strides = [1, 1]} : vector<13x128xf32> to vector<1x128xf32>
    %353 = arith.maximumf %351, %352 : vector<1x128xf32>
    %354 = vector.extract_strided_slice %320 {offsets = [11, 0], sizes = [1, 128], strides = [1, 1]} : vector<13x128xf32> to vector<1x128xf32>
    %355 = arith.maximumf %353, %354 : vector<1x128xf32>
    %356 = arith.truncf %355 : vector<1x128xf32> to vector<1x128xbf16>
    %c15_210 = arith.constant 15 : index
    %c0_211 = arith.constant 0 : index
    %c0_212 = arith.constant 0 : index
    %357 = vector.load %arg8[%c15_210, %c0_211, %c0_212] : memref<16x128x128xbf16, #tpu.memory_space<vmem>>, vector<1x128x128xbf16>
    %358 = vector.shape_cast %357 : vector<1x128x128xbf16> to vector<128x128xbf16>
    %cst_213 = arith.constant dense<0.000000e+00> : vector<1x128xf32>
    %359 = tpu.matmul %356, %358, %cst_213 {dimension_numbers = #tpu.dot_dimension_numbers<[1], [0], [0], [1], [0, 0, 1, 1], [], []>} : vector<1x128xbf16>, vector<128x128xbf16>, vector<1x128xf32> -> vector<1x128xf32>
    %360 = arith.addf %350, %359 : vector<1x128xf32>
    %361 = arith.truncf %360 : vector<1x128xf32> to vector<1x128xbf16>
    %c0_214 = arith.constant 0 : index
    %c0_215 = arith.constant 0 : index
    %362 = vector.load %arg10[%c0_214, %c0_215] : memref<128x128xbf16, #tpu.memory_space<vmem>>, vector<128x128xbf16>
    %cst_216 = arith.constant dense<0.000000e+00> : vector<1x128xf32>
    %363 = tpu.matmul %361, %362, %cst_216 {dimension_numbers = #tpu.dot_dimension_numbers<[1], [0], [0], [1], [0, 0, 1, 1], [], []>} : vector<1x128xbf16>, vector<128x128xbf16>, vector<1x128xf32> -> vector<1x128xf32>
    %c0_217 = arith.constant 0 : index
    %c0_218 = arith.constant 0 : index
    %364 = vector.load %arg11[%c0_217, %c0_218] : memref<1x128xf32, #tpu.memory_space<vmem>>, vector<1x128xf32>
    %365 = arith.addf %363, %364 : vector<1x128xf32>
    %cst_219 = arith.constant 0.000000e+00 : f32
    %366 = vector.broadcast %cst_219 : f32 to vector<1x128xf32>
    %367 = arith.maximumf %365, %366 : vector<1x128xf32>
    %368 = arith.truncf %367 : vector<1x128xf32> to vector<1x128xbf16>
    %c0_220 = arith.constant 0 : index
    %c0_221 = arith.constant 0 : index
    %369 = vector.load %arg12[%c0_220, %c0_221] : memref<128x128xbf16, #tpu.memory_space<vmem>>, vector<128x128xbf16>
    %cst_222 = arith.constant dense<0.000000e+00> : vector<1x128xf32>
    %370 = tpu.matmul %368, %369, %cst_222 {dimension_numbers = #tpu.dot_dimension_numbers<[1], [0], [0], [1], [0, 0, 1, 1], [], []>} : vector<1x128xbf16>, vector<128x128xbf16>, vector<1x128xf32> -> vector<1x128xf32>
    %c0_223 = arith.constant 0 : index
    %c0_224 = arith.constant 0 : index
    %371 = vector.load %arg13[%c0_223, %c0_224] : memref<1x128xf32, #tpu.memory_space<vmem>>, vector<1x128xf32>
    %372 = arith.addf %370, %371 : vector<1x128xf32>
    %c0_225 = arith.constant 0 : index
    %c0_226 = arith.constant 0 : index
    %c0_227 = arith.constant 0 : index
    %373 = vector.load %arg14[%c0_225, %c0_226, %c0_227] : memref<1x1x128xf32, #tpu.memory_space<vmem>>, vector<1x1x128xf32>
    %374 = vector.shape_cast %373 : vector<1x1x128xf32> to vector<1x128xf32>
    %375 = vector.shape_cast %372 : vector<1x128xf32> to vector<1x1x128xf32>
    tpu.vector_store %arg14[%c0_225, %c0_226, %c0_227], %375 {strides = array<i32>} : memref<1x1x128xf32, #tpu.memory_space<vmem>>, vector<1x1x128xf32>,
    return
  }
  func.func @transform_0(%arg0: i32) -> (i32, i32, i32, i32) {
    %c0_i32 = arith.constant 0 : i32
    %c0_i32_0 = arith.constant 0 : i32
    %c0_i32_1 = arith.constant 0 : i32
    %c0_i32_2 = arith.constant 0 : i32
    return %arg0, %c0_i32, %c0_i32_0, %c0_i32_1 : i32, i32, i32, i32
  }
  func.func @transform_1(%arg0: i32) -> (i32, i32) {
    %c0_i32 = arith.constant 0 : i32
    %c0_i32_0 = arith.constant 0 : i32
    %c0_i32_1 = arith.constant 0 : i32
    return %c0_i32, %c0_i32_0 : i32, i32
  }
  func.func @transform_2(%arg0: i32) -> (i32, i32) {
    %c0_i32 = arith.constant 0 : i32
    %c0_i32_0 = arith.constant 0 : i32
    %c0_i32_1 = arith.constant 0 : i32
    return %c0_i32, %c0_i32_0 : i32, i32
  }
  func.func @transform_3(%arg0: i32) -> (i32, i32) {
    %c0_i32 = arith.constant 0 : i32
    %c0_i32_0 = arith.constant 0 : i32
    %c0_i32_1 = arith.constant 0 : i32
    return %c0_i32, %c0_i32_0 : i32, i32
  }
  func.func @transform_4(%arg0: i32) -> (i32, i32, i32) {
    %c0_i32 = arith.constant 0 : i32
    %c0_i32_0 = arith.constant 0 : i32
    %c0_i32_1 = arith.constant 0 : i32
    %c0_i32_2 = arith.constant 0 : i32
    return %c0_i32, %c0_i32_0, %c0_i32_1 : i32, i32, i32
  }
  func.func @transform_5(%arg0: i32) -> (i32, i32) {
    %c0_i32 = arith.constant 0 : i32
    %c0_i32_0 = arith.constant 0 : i32
    %c0_i32_1 = arith.constant 0 : i32
    return %c0_i32, %c0_i32_0 : i32, i32
  }
  func.func @transform_6(%arg0: i32) -> (i32, i32) {
    %c0_i32 = arith.constant 0 : i32
    %c0_i32_0 = arith.constant 0 : i32
    %c0_i32_1 = arith.constant 0 : i32
    return %c0_i32, %c0_i32_0 : i32, i32
  }
  func.func @transform_7(%arg0: i32) -> (i32, i32, i32) {
    %c0_i32 = arith.constant 0 : i32
    %c0_i32_0 = arith.constant 0 : i32
    %c0_i32_1 = arith.constant 0 : i32
    %c0_i32_2 = arith.constant 0 : i32
    return %c0_i32, %c0_i32_0, %c0_i32_1 : i32, i32, i32
  }
  func.func @transform_8(%arg0: i32) -> (i32, i32) {
    %c0_i32 = arith.constant 0 : i32
    %c0_i32_0 = arith.constant 0 : i32
    %c0_i32_1 = arith.constant 0 : i32
    return %c0_i32, %c0_i32_0 : i32, i32
  }
  func.func @transform_9(%arg0: i32) -> (i32, i32) {
    %c0_i32 = arith.constant 0 : i32
    %c0_i32_0 = arith.constant 0 : i32
    %c0_i32_1 = arith.constant 0 : i32
    return %c0_i32, %c0_i32_0 : i32, i32
  }
  func.func @transform_10(%arg0: i32) -> (i32, i32) {
    %c0_i32 = arith.constant 0 : i32
    %c0_i32_0 = arith.constant 0 : i32
    %c0_i32_1 = arith.constant 0 : i32
    return %c0_i32, %c0_i32_0 : i32, i32
  }
  func.func @transform_11(%arg0: i32) -> (i32, i32) {
    %c0_i32 = arith.constant 0 : i32
    %c0_i32_0 = arith.constant 0 : i32
    %c0_i32_1 = arith.constant 0 : i32
    return %c0_i32, %c0_i32_0 : i32, i32
  }
  func.func @transform_12(%arg0: i32) -> (i32, i32) {
    %c0_i32 = arith.constant 0 : i32
    %c0_i32_0 = arith.constant 0 : i32
    %c0_i32_1 = arith.constant 0 : i32
    return %c0_i32, %c0_i32_0 : i32, i32
  }
  func.func @transform_13(%arg0: i32) -> (i32, i32, i32) {
    %c0_i32 = arith.constant 0 : i32
    %c0_i32_0 = arith.constant 0 : i32
    %c0_i32_1 = arith.constant 0 : i32
    return %arg0, %c0_i32, %c0_i32_0 : i32, i32, i32
  }
}

</mosaic_0001>

<llo_original>
// kernel: net_forward.1
$region0: #{net_forward.1}
  #allocation0 [shape = 'u32[]', space=smem, size = 0x4, offset = 0x4, fixed_abs, tag = 'smem constant byte address 0x4 - core index']
  #allocation1 [shape = 'u32[144,128]{1,0:T(1,128)}', space=vmem, size = 0x12000, scoped, tag = 'internal scratch']
  #allocation2 [shape = 'f32[225,128]{1,0:T(8,128)}', space=vmem, size = 0x1d000, scoped, tag = 'scratch operand']
  %s0 = inlined_call_operand.vmem [shape: bf16[2,9,225,32], index: 0, kind: input, shape index: {}]
  %s1 = inlined_call_operand.vmem [shape: bf16[32,128], index: 1, kind: input, shape index: {}]
  %s2 = inlined_call_operand.vmem [shape: f32[1,128], index: 2, kind: input, shape index: {}]
  %s3 = inlined_call_operand.vmem [shape: f32[1,128], index: 3, kind: input, shape index: {}]
  %s4 = inlined_call_operand.vmem [shape: bf16[9,128,128], index: 4, kind: input, shape index: {}]
  %s5 = inlined_call_operand.vmem [shape: f32[1,128], index: 5, kind: input, shape index: {}]
  %s6 = inlined_call_operand.vmem [shape: f32[1,128], index: 6, kind: input, shape index: {}]
  %s7 = inlined_call_operand.vmem [shape: bf16[16,128,128], index: 7, kind: input, shape index: {}]
  %s8 = inlined_call_operand.vmem [shape: f32[1,128], index: 8, kind: input, shape index: {}]
  %s9 = inlined_call_operand.vmem [shape: bf16[128,128], index: 9, kind: input, shape index: {}]
  %s10 = inlined_call_operand.vmem [shape: f32[1,128], index: 10, kind: input, shape index: {}]
  %s11 = inlined_call_operand.vmem [shape: bf16[128,128], index: 11, kind: input, shape index: {}]
  %s12 = inlined_call_operand.vmem [shape: f32[1,128], index: 12, kind: input, shape index: {}]
  %s13 = inlined_call_operand.hbm [shape: f32[2,1,128], index: 13, kind: output, shape index: {}]
  %s14 = sld [smem:[#allocation0]]
  $region85: #{net_forward.1} parent=0
    _
  %s16 = ssub.s32 1, %s14
  %s17 = scalar_select 0, %s16, %s14
  $region1: #{net_forward.1} parent=0
    #allocation3 [shape = 'u8[1024]{0}', space=vmem, size = 0x400, scoped, tag = 'output window, operand 0']
    #allocation4 [shape = 's32[2]{0}', space=sflag, size = 0x8, scoped, tag = 'scoped memory for net_forward.1']
    %18 = vsyncpa [#allocation4], 0
    %s19 = scalar_lea.sflag [#allocation4], 1
    %20 = vsyncpa %s19, 0
    loop: start=0, step=1, limit=4
    $region2: #{net_forward.1} parent=1 // loop_pre_header
      _
    $region3: #{net_forward.1} parent=1 // loop_header
      %s22 = sphi 0, %s26
      %p23 = scmp.ge.s32.totalorder %s22, 4
      %s32 = sphi 0, %s34
      %s35 = sphi 0, %s32
      %s36 = sphi 0, %s35
      %s52 = sphi 0, %s36
      %s56 = sphi 0, %s56
      %s58 = sphi 0, %s56
      %s59 = sphi 0, %s58
      %s73 = sphi 0, %s59
      %s77 = sphi 0, %s77
      %s79 = sphi 0, %s77
      %s80 = sphi 0, %s79
      %s94 = sphi 0, %s80
      %s98 = sphi 0, %s98
      %s100 = sphi 0, %s98
      %s101 = sphi 0, %s100
      %s115 = sphi 0, %s101
      %s119 = sphi 0, %s119
      %s121 = sphi 0, %s119
      %s122 = sphi 0, %s121
      %s136 = sphi 0, %s122
      %s140 = sphi 0, %s140
      %s142 = sphi 0, %s140
      %s143 = sphi 0, %s142
      %s157 = sphi 0, %s143
      %s161 = sphi 0, %s161
      %s163 = sphi 0, %s161
      %s164 = sphi 0, %s163
      %s178 = sphi 0, %s164
      %s182 = sphi 0, %s182
      %s184 = sphi 0, %s182
      %s185 = sphi 0, %s184
      %s199 = sphi 0, %s185
      %s203 = sphi 0, %s203
      %s205 = sphi 0, %s203
      %s206 = sphi 0, %s205
      %s220 = sphi 0, %s206
      %s224 = sphi 0, %s224
      %s226 = sphi 0, %s224
      %s227 = sphi 0, %s226
      %s241 = sphi 0, %s227
      %s245 = sphi 0, %s245
      %s247 = sphi 0, %s245
      %s248 = sphi 0, %s247
      %s262 = sphi 0, %s248
      %s266 = sphi 0, %s266
      %s268 = sphi 0, %s266
      %s269 = sphi 0, %s268
      %s283 = sphi 0, %s269
      %s287 = sphi 0, %s287
      %s289 = sphi 0, %s287
      %s290 = sphi 0, %s289
      %s304 = sphi 0, %s290
      %s310 = sphi 0, %s312
      %s313 = sphi 0, %s310
      %s314 = sphi 0, %s313
      %s330 = sphi 0, %s314
    $region4: #{net_forward.1} parent=1 // loop_header_branch
      %25 = sbr.rel (%p23) target = $region8
    $region5: #{net_forward.1} parent=1 // loop_body
      %s27 = ssub.s32 %s22, 1
      %s28 = ssub.s32 %s22, 2
      %s29 = sadd.s32 %s22, 1
      %s30 = ssub.s32 %s22, %s29
      %p31 = scmp.eq.s32.totalorder %s30, 0
      %s33 = sadd.s32 %s32, 1
      %s34 = scalar_select %p31, %s32, %s33
      %p37 = pneg %p31
      %p38 = scmp.eq.s32.totalorder %s22, 1
      %p39 = por %p37, %p38
      %p40 = scmp.ne.s32.totalorder %s32, %s35
      %p41 = scmp.eq.s32.totalorder %s22, 0
      %p42 = por %p40, %p41
      %p43 = scmp.ne.s32.totalorder %s32, %s35
      %p44 = scmp.eq.s32.totalorder %s27, 1
      %p45 = por %p43, %p44
      %p46 = scmp.ne.s32.totalorder %s35, %s36
      %p47 = scmp.eq.s32.totalorder %s27, 0
      %p48 = por %p46, %p47
      %p49 = scmp.ne.s32.totalorder %s35, %s36
      %p50 = scmp.eq.s32.totalorder %s28, 1
      %p51 = por %p49, %p50
      %p53 = scmp.ne.s32.totalorder %s36, %s52
      %p54 = scmp.eq.s32.totalorder %s28, 0
      %p55 = por %p53, %p54
      %s57 = sadd.s32 %s56, 1
      %p60 = scmp.eq.s32.totalorder %s22, 1
      %p61 = scmp.ne.s32.totalorder %s56, %s58
      %p62 = scmp.eq.s32.totalorder %s22, 0
      %p63 = por %p61, %p62
      %p64 = scmp.ne.s32.totalorder %s56, %s58
      %p65 = scmp.eq.s32.totalorder %s27, 1
      %p66 = por %p64, %p65
      %p67 = scmp.ne.s32.totalorder %s58, %s59
      %p68 = scmp.eq.s32.totalorder %s27, 0
      %p69 = por %p67, %p68
      %p70 = scmp.ne.s32.totalorder %s58, %s59
      %p71 = scmp.eq.s32.totalorder %s28, 1
      %p72 = por %p70, %p71
      %p74 = scmp.ne.s32.totalorder %s59, %s73
      %p75 = scmp.eq.s32.totalorder %s28, 0
      %p76 = por %p74, %p75
      %s78 = sadd.s32 %s77, 1
      %p81 = scmp.eq.s32.totalorder %s22, 1
      %p82 = scmp.ne.s32.totalorder %s77, %s79
      %p83 = scmp.eq.s32.totalorder %s22, 0
      %p84 = por %p82, %p83
      %p85 = scmp.ne.s32.totalorder %s77, %s79
      %p86 = scmp.eq.s32.totalorder %s27, 1
      %p87 = por %p85, %p86
      %p88 = scmp.ne.s32.totalorder %s79, %s80
      %p89 = scmp.eq.s32.totalorder %s27, 0
      %p90 = por %p88, %p89
      %p91 = scmp.ne.s32.totalorder %s79, %s80
      %p92 = scmp.eq.s32.totalorder %s28, 1
      %p93 = por %p91, %p92
      %p95 = scmp.ne.s32.totalorder %s80, %s94
      %p96 = scmp.eq.s32.totalorder %s28, 0
      %p97 = por %p95, %p96
      %s99 = sadd.s32 %s98, 1
      %p102 = scmp.eq.s32.totalorder %s22, 1
      %p103 = scmp.ne.s32.totalorder %s98, %s100
      %p104 = scmp.eq.s32.totalorder %s22, 0
      %p105 = por %p103, %p104
      %p106 = scmp.ne.s32.totalorder %s98, %s100
      %p107 = scmp.eq.s32.totalorder %s27, 1
      %p108 = por %p106, %p107
      %p109 = scmp.ne.s32.totalorder %s100, %s101
      %p110 = scmp.eq.s32.totalorder %s27, 0
      %p111 = por %p109, %p110
      %p112 = scmp.ne.s32.totalorder %s100, %s101
      %p113 = scmp.eq.s32.totalorder %s28, 1
      %p114 = por %p112, %p113
      %p116 = scmp.ne.s32.totalorder %s101, %s115
      %p117 = scmp.eq.s32.totalorder %s28, 0
      %p118 = por %p116, %p117
      %s120 = sadd.s32 %s119, 1
      %p123 = scmp.eq.s32.totalorder %s22, 1
      %p124 = scmp.ne.s32.totalorder %s119, %s121
      %p125 = scmp.eq.s32.totalorder %s22, 0
      %p126 = por %p124, %p125
      %p127 = scmp.ne.s32.totalorder %s119, %s121
      %p128 = scmp.eq.s32.totalorder %s27, 1
      %p129 = por %p127, %p128
      %p130 = scmp.ne.s32.totalorder %s121, %s122
      %p131 = scmp.eq.s32.totalorder %s27, 0
      %p132 = por %p130, %p131
      %p133 = scmp.ne.s32.totalorder %s121, %s122
      %p134 = scmp.eq.s32.totalorder %s28, 1
      %p135 = por %p133, %p134
      %p137 = scmp.ne.s32.totalorder %s122, %s136
      %p138 = scmp.eq.s32.totalorder %s28, 0
      %p139 = por %p137, %p138
      %s141 = sadd.s32 %s140, 1
      %p144 = scmp.eq.s32.totalorder %s22, 1
      %p145 = scmp.ne.s32.totalorder %s140, %s142
      %p146 = scmp.eq.s32.totalorder %s22, 0
      %p147 = por %p145, %p146
      %p148 = scmp.ne.s32.totalorder %s140, %s142
      %p149 = scmp.eq.s32.totalorder %s27, 1
      %p150 = por %p148, %p149
      %p151 = scmp.ne.s32.totalorder %s142, %s143
      %p152 = scmp.eq.s32.totalorder %s27, 0
      %p153 = por %p151, %p152
      %p154 = scmp.ne.s32.totalorder %s142, %s143
      %p155 = scmp.eq.s32.totalorder %s28, 1
      %p156 = por %p154, %p155
      %p158 = scmp.ne.s32.totalorder %s143, %s157
      %p159 = scmp.eq.s32.totalorder %s28, 0
      %p160 = por %p158, %p159
      %s162 = sadd.s32 %s161, 1
      %p165 = scmp.eq.s32.totalorder %s22, 1
      %p166 = scmp.ne.s32.totalorder %s161, %s163
      %p167 = scmp.eq.s32.totalorder %s22, 0
      %p168 = por %p166, %p167
      %p169 = scmp.ne.s32.totalorder %s161, %s163
      %p170 = scmp.eq.s32.totalorder %s27, 1
      %p171 = por %p169, %p170
      %p172 = scmp.ne.s32.totalorder %s163, %s164
      %p173 = scmp.eq.s32.totalorder %s27, 0
      %p174 = por %p172, %p173
      %p175 = scmp.ne.s32.totalorder %s163, %s164
      %p176 = scmp.eq.s32.totalorder %s28, 1
      %p177 = por %p175, %p176
      %p179 = scmp.ne.s32.totalorder %s164, %s178
      %p180 = scmp.eq.s32.totalorder %s28, 0
      %p181 = por %p179, %p180
      %s183 = sadd.s32 %s182, 1
      %p186 = scmp.eq.s32.totalorder %s22, 1
      %p187 = scmp.ne.s32.totalorder %s182, %s184
      %p188 = scmp.eq.s32.totalorder %s22, 0
      %p189 = por %p187, %p188
      %p190 = scmp.ne.s32.totalorder %s182, %s184
      %p191 = scmp.eq.s32.totalorder %s27, 1
      %p192 = por %p190, %p191
      %p193 = scmp.ne.s32.totalorder %s184, %s185
      %p194 = scmp.eq.s32.totalorder %s27, 0
      %p195 = por %p193, %p194
      %p196 = scmp.ne.s32.totalorder %s184, %s185
      %p197 = scmp.eq.s32.totalorder %s28, 1
      %p198 = por %p196, %p197
      %p200 = scmp.ne.s32.totalorder %s185, %s199
      %p201 = scmp.eq.s32.totalorder %s28, 0
      %p202 = por %p200, %p201
      %s204 = sadd.s32 %s203, 1
      %p207 = scmp.eq.s32.totalorder %s22, 1
      %p208 = scmp.ne.s32.totalorder %s203, %s205
      %p209 = scmp.eq.s32.totalorder %s22, 0
      %p210 = por %p208, %p209
      %p211 = scmp.ne.s32.totalorder %s203, %s205
      %p212 = scmp.eq.s32.totalorder %s27, 1
      %p213 = por %p211, %p212
      %p214 = scmp.ne.s32.totalorder %s205, %s206
      %p215 = scmp.eq.s32.totalorder %s27, 0
      %p216 = por %p214, %p215
      %p217 = scmp.ne.s32.totalorder %s205, %s206
      %p218 = scmp.eq.s32.totalorder %s28, 1
      %p219 = por %p217, %p218
      %p221 = scmp.ne.s32.totalorder %s206, %s220
      %p222 = scmp.eq.s32.totalorder %s28, 0
      %p223 = por %p221, %p222
      %s225 = sadd.s32 %s224, 1
      %p228 = scmp.eq.s32.totalorder %s22, 1
      %p229 = scmp.ne.s32.totalorder %s224, %s226
      %p230 = scmp.eq.s32.totalorder %s22, 0
      %p231 = por %p229, %p230
      %p232 = scmp.ne.s32.totalorder %s224, %s226
      %p233 = scmp.eq.s32.totalorder %s27, 1
      %p234 = por %p232, %p233
      %p235 = scmp.ne.s32.totalorder %s226, %s227
      %p236 = scmp.eq.s32.totalorder %s27, 0
      %p237 = por %p235, %p236
      %p238 = scmp.ne.s32.totalorder %s226, %s227
      %p239 = scmp.eq.s32.totalorder %s28, 1
      %p240 = por %p238, %p239
      %p242 = scmp.ne.s32.totalorder %s227, %s241
      %p243 = scmp.eq.s32.totalorder %s28, 0
      %p244 = por %p242, %p243
      %s246 = sadd.s32 %s245, 1
      %p249 = scmp.eq.s32.totalorder %s22, 1
      %p250 = scmp.ne.s32.totalorder %s245, %s247
      %p251 = scmp.eq.s32.totalorder %s22, 0
      %p252 = por %p250, %p251
      %p253 = scmp.ne.s32.totalorder %s245, %s247
      %p254 = scmp.eq.s32.totalorder %s27, 1
      %p255 = por %p253, %p254
      %p256 = scmp.ne.s32.totalorder %s247, %s248
      %p257 = scmp.eq.s32.totalorder %s27, 0
      %p258 = por %p256, %p257
      %p259 = scmp.ne.s32.totalorder %s247, %s248
      %p260 = scmp.eq.s32.totalorder %s28, 1
      %p261 = por %p259, %p260
      %p263 = scmp.ne.s32.totalorder %s248, %s262
      %p264 = scmp.eq.s32.totalorder %s28, 0
      %p265 = por %p263, %p264
      %s267 = sadd.s32 %s266, 1
      %p270 = scmp.eq.s32.totalorder %s22, 1
      %p271 = scmp.ne.s32.totalorder %s266, %s268
      %p272 = scmp.eq.s32.totalorder %s22, 0
      %p273 = por %p271, %p272
      %p274 = scmp.ne.s32.totalorder %s266, %s268
      %p275 = scmp.eq.s32.totalorder %s27, 1
      %p276 = por %p274, %p275
      %p277 = scmp.ne.s32.totalorder %s268, %s269
      %p278 = scmp.eq.s32.totalorder %s27, 0
      %p279 = por %p277, %p278
      %p280 = scmp.ne.s32.totalorder %s268, %s269
      %p281 = scmp.eq.s32.totalorder %s28, 1
      %p282 = por %p280, %p281
      %p284 = scmp.ne.s32.totalorder %s269, %s283
      %p285 = scmp.eq.s32.totalorder %s28, 0
      %p286 = por %p284, %p285
      %s288 = sadd.s32 %s287, 1
      %p291 = scmp.eq.s32.totalorder %s22, 1
      %p292 = scmp.ne.s32.totalorder %s287, %s289
      %p293 = scmp.eq.s32.totalorder %s22, 0
      %p294 = por %p292, %p293
      %p295 = scmp.ne.s32.totalorder %s287, %s289
      %p296 = scmp.eq.s32.totalorder %s27, 1
      %p297 = por %p295, %p296
      %p298 = scmp.ne.s32.totalorder %s289, %s290
      %p299 = scmp.eq.s32.totalorder %s27, 0
      %p300 = por %p298, %p299
      %p301 = scmp.ne.s32.totalorder %s289, %s290
      %p302 = scmp.eq.s32.totalorder %s28, 1
      %p303 = por %p301, %p302
      %p305 = scmp.ne.s32.totalorder %s290, %s304
      %p306 = scmp.eq.s32.totalorder %s28, 0
      %p307 = por %p305, %p306
      %s308 = ssub.s32 %s22, %s29
      %p309 = scmp.eq.s32.totalorder %s308, 0
      %s311 = sadd.s32 %s310, 1
      %s312 = scalar_select %p309, %s310, %s311
      %p315 = pneg %p309
      %p316 = scmp.eq.s32.totalorder %s22, 1
      %p317 = por %p315, %p316
      %p318 = scmp.ne.s32.totalorder %s310, %s313
      %p319 = scmp.eq.s32.totalorder %s22, 0
      %p320 = por %p318, %p319
      %p321 = scmp.ne.s32.totalorder %s310, %s313
      %p322 = scmp.eq.s32.totalorder %s27, 1
      %p323 = por %p321, %p322
      %p324 = scmp.ne.s32.totalorder %s313, %s314
      %p325 = scmp.eq.s32.totalorder %s27, 0
      %p326 = por %p324, %p325
      %p327 = scmp.ne.s32.totalorder %s313, %s314
      %p328 = scmp.eq.s32.totalorder %s28, 1
      %p329 = por %p327, %p328
      %p331 = scmp.ne.s32.totalorder %s314, %s330
      %p332 = scmp.eq.s32.totalorder %s28, 0
      %p333 = por %p331, %p332
      %p334 = scmp.le.s32.totalorder 1, %s22
      %p335 = scmp.lt.s32.totalorder %s22, 3
      %p336 = pnand %p334, %p335
      %p337 = pneg %p336
      // Predicated region
      $region9: #{net_forward.1} parent=5 // pred_check
        _
      $region10: #{net_forward.1} parent=5 // pred_check_branch
        %339 = sbr.rel (%p336) target = $region12
      $region11: #{net_forward.1} parent=5 // pred_region
        %s340 = ssub.s32 %s22, 1
        // Predicated region
        $region13: #{net_forward.1} parent=11 // pred_check
          %p341 = pneg %p69
        $region14: #{net_forward.1} parent=11 // pred_check_branch
          %343 = sbr.rel (%p341) target = $region16
        $region15: #{net_forward.1} parent=11 // pred_region
          _
        $region16: #{net_forward.1} parent=11 // pred_fallthru
          _
        // Predicated region
        $region17: #{net_forward.1} parent=11 // pred_check
          %p344 = pneg %p90
        $region18: #{net_forward.1} parent=11 // pred_check_branch
          %346 = sbr.rel (%p344) target = $region20
        $region19: #{net_forward.1} parent=11 // pred_region
          _
        $region20: #{net_forward.1} parent=11 // pred_fallthru
          _
        // Predicated region
        $region21: #{net_forward.1} parent=11 // pred_check
          %p347 = pneg %p111
        $region22: #{net_forward.1} parent=11 // pred_check_branch
          %349 = sbr.rel (%p347) target = $region24
        $region23: #{net_forward.1} parent=11 // pred_region
          _
        $region24: #{net_forward.1} parent=11 // pred_fallthru
          _
        // Predicated region
        $region25: #{net_forward.1} parent=11 // pred_check
          %p350 = pneg %p132
        $region26: #{net_forward.1} parent=11 // pred_check_branch
          %352 = sbr.rel (%p350) target = $region28
        $region27: #{net_forward.1} parent=11 // pred_region
          _
        $region28: #{net_forward.1} parent=11 // pred_fallthru
          _
        // Predicated region
        $region29: #{net_forward.1} parent=11 // pred_check
          %p353 = pneg %p153
        $region30: #{net_forward.1} parent=11 // pred_check_branch
          %355 = sbr.rel (%p353) target = $region32
        $region31: #{net_forward.1} parent=11 // pred_region
          _
        $region32: #{net_forward.1} parent=11 // pred_fallthru
          _
        // Predicated region
        $region33: #{net_forward.1} parent=11 // pred_check
          %p356 = pneg %p174
        $region34: #{net_forward.1} parent=11 // pred_check_branch
          %358 = sbr.rel (%p356) target = $region36
        $region35: #{net_forward.1} parent=11 // pred_region
          _
        $region36: #{net_forward.1} parent=11 // pred_fallthru
          _
        // Predicated region
        $region37: #{net_forward.1} parent=11 // pred_check
          %p359 = pneg %p195
        $region38: #{net_forward.1} parent=11 // pred_check_branch
          %361 = sbr.rel (%p359) target = $region40
        $region39: #{net_forward.1} parent=11 // pred_region
          _
        $region40: #{net_forward.1} parent=11 // pred_fallthru
          _
        // Predicated region
        $region41: #{net_forward.1} parent=11 // pred_check
          %p362 = pneg %p216
        $region42: #{net_forward.1} parent=11 // pred_check_branch
          %364 = sbr.rel (%p362) target = $region44
        $region43: #{net_forward.1} parent=11 // pred_region
          _
        $region44: #{net_forward.1} parent=11 // pred_fallthru
          _
        // Predicated region
        $region45: #{net_forward.1} parent=11 // pred_check
          %p365 = pneg %p237
        $region46: #{net_forward.1} parent=11 // pred_check_branch
          %367 = sbr.rel (%p365) target = $region48
        $region47: #{net_forward.1} parent=11 // pred_region
          _
        $region48: #{net_forward.1} parent=11 // pred_fallthru
          _
        // Predicated region
        $region49: #{net_forward.1} parent=11 // pred_check
          %p368 = pneg %p258
        $region50: #{net_forward.1} parent=11 // pred_check_branch
          %370 = sbr.rel (%p368) target = $region52
        $region51: #{net_forward.1} parent=11 // pred_region
          _
        $region52: #{net_forward.1} parent=11 // pred_fallthru
          _
        // Predicated region
        $region53: #{net_forward.1} parent=11 // pred_check
          %p371 = pneg %p279
        $region54: #{net_forward.1} parent=11 // pred_check_branch
          %373 = sbr.rel (%p371) target = $region56
        $region55: #{net_forward.1} parent=11 // pred_region
          _
        $region56: #{net_forward.1} parent=11 // pred_fallthru
          _
        // Predicated region
        $region57: #{net_forward.1} parent=11 // pred_check
          %p374 = pneg %p300
        $region58: #{net_forward.1} parent=11 // pred_check_branch
          %376 = sbr.rel (%p374) target = $region60
        $region59: #{net_forward.1} parent=11 // pred_region
          _
        $region60: #{net_forward.1} parent=11 // pred_fallthru
          _
      $region12: #{net_forward.1} parent=5 // pred_fallthru
        _
      %p377 = scmp.lt.s32.totalorder %s22, 2
      // Predicated region
      $region61: #{net_forward.1} parent=5 // pred_check
        %p378 = pneg %p377
      $region62: #{net_forward.1} parent=5 // pred_check_branch
        %380 = sbr.rel (%p378) target = $region64
      $region63: #{net_forward.1} parent=5 // pred_region
        // Predicated region
        $region65: #{net_forward.1} parent=63 // pred_check
          %p381 = pneg %p42
        $region66: #{net_forward.1} parent=63 // pred_check_branch
          %383 = sbr.rel (%p381) target = $region68
        $region67: #{net_forward.1} parent=63 // pred_region
          %p384 = scmp.lt.s32.totalorder %s22, 1
          %s385 = scalar_select %p384, %s22, 1
          %s386 = smul.addr %s385, 261
          %s387 = smul.addr %s386, 4
          %s388 = scalar_lea.vmem %s0, %s387
        $region68: #{net_forward.1} parent=63 // pred_fallthru
          _
      $region64: #{net_forward.1} parent=5 // pred_fallthru
        _
      %p389 = scmp.le.s32.totalorder 1, %s22
      %p390 = scmp.lt.s32.totalorder %s22, 3
      %p391 = pnand %p389, %p390
      %p392 = pneg %p391
      // Predicated region
      $region69: #{net_forward.1} parent=5 // pred_check
        _
      $region70: #{net_forward.1} parent=5 // pred_check_branch
        %394 = sbr.rel (%p391) target = $region72
      $region71: #{net_forward.1} parent=5 // pred_region
        %s395 = ssub.s32 %s22, 1
        %p396 = scmp.lt.s32.totalorder %s27, 1
        %s397 = scalar_select %p396, %s27, 1
        %s398 = smul.addr %s397, 261
        %s399 = smul.addr %s398, 4
        %s400 = scalar_lea.vmem %s0, %s399
        %p401 = pneg %p48
        %p402 = pneg %p45
        %p403 = pneg %p69
        %p404 = pneg %p66
        %p405 = pneg %p90
        %p406 = pneg %p87
        %p407 = pneg %p111
        %p408 = pneg %p108
        %p409 = pneg %p132
        %p410 = pneg %p129
        %p411 = pneg %p153
        %p412 = pneg %p150
        %p413 = pneg %p174
        %p414 = pneg %p171
        %p415 = pneg %p195
        %p416 = pneg %p192
        %p417 = pneg %p216
        %p418 = pneg %p213
        %p419 = pneg %p237
        %p420 = pneg %p234
        %p421 = pneg %p258
        %p422 = pneg %p255
        %p423 = pneg %p279
        %p424 = pneg %p276
        %p425 = pneg %p300
        %p426 = pneg %p297
        %p427 = pneg %p326
        %p428 = pneg %p323
        %s429 = sand.u32 %s313, 1
        %s430 = scalar_lea.sflag [#allocation4], %s429
        %s431 = sand.u32 %s313, 1
        %s432 = scalar_lea.vmem [#allocation3], %s431
        %p433 = scmp.lt.s32.totalorder %s27, 1
        %s434 = scalar_select %p433, %s27, 1
        %s435 = smul.addr %s434, 261
        %s436 = smul.addr %s435, 4
        %s437 = scalar_lea.vmem %s0, %s436
        %v439 = vld [vmem:[%s437] sm:$0xf]
        %v440 = vld [vmem:[%s437 + $0x4] sm:$0xf]
        %v441 = vld [vmem:[%s437 + $0x8] sm:$0xf]
        %v442 = vld [vmem:[%s437 + $0xc] sm:$0xf]
        %v443 = vld [vmem:[%s437 + $0x10] sm:$0xf]
        %v444 = vld [vmem:[%s437 + $0x14] sm:$0xf]
        %v445 = vld [vmem:[%s437 + $0x18] sm:$0xf]
        %v446 = vld [vmem:[%s437 + $0x1c] sm:$0xf]
        %v447 = vld [vmem:[%s437 + $0x20] sm:$0xf]
        %v448 = vld [vmem:[%s437 + $0x24] sm:$0xf]
        %v449 = vld [vmem:[%s437 + $0x28] sm:$0xf]
        %v450 = vld [vmem:[%s437 + $0x2c] sm:$0xf]
        %v451 = vld [vmem:[%s437 + $0x30] sm:$0xf]
        %v452 = vld [vmem:[%s437 + $0x34] sm:$0xf]
        %v453 = vld [vmem:[%s437 + $0x38] sm:$0xf]
        %v454 = vld [vmem:[%s437 + $0x3c] sm:$0xf]
        %v455 = vld [vmem:[%s437 + $0x40] sm:$0xf]
        %v456 = vld [vmem:[%s437 + $0x44] sm:$0xf]
        %v457 = vld [vmem:[%s437 + $0x48] sm:$0xf]
        %v458 = vld [vmem:[%s437 + $0x4c] sm:$0xf]
        %v459 = vld [vmem:[%s437 + $0x50] sm:$0xf]
        %v460 = vld [vmem:[%s437 + $0x54] sm:$0xf]
        %v461 = vld [vmem:[%s437 + $0x58] sm:$0xf]
        %v462 = vld [vmem:[%s437 + $0x5c] sm:$0xf]
        %v463 = vld [vmem:[%s437 + $0x60] sm:$0xf]
        %v464 = vld [vmem:[%s437 + $0x64] sm:$0xf]
        %v465 = vld [vmem:[%s437 + $0x68] sm:$0xf]
        %v466 = vld [vmem:[%s437 + $0x6c] sm:$0xf]
        %v467 = vld [vmem:[%s437 + $0x70] sm:$0x1]
        %v468 = vld [vmem:[%s1] sm:$0xf]
        %v469 = vld [vmem:[%s1 + $0x4] sm:$0xf]
        %v470 = vld [vmem:[%s1 + $0x8] sm:$0xf]
        %v471 = vld [vmem:[%s1 + $0xc] sm:$0xf]
        %v501 = vunpack.c.l.b16 %v439
        %v502 = vunpack.c.l.b16 %v440
        %v503 = vunpack.c.l.b16 %v441
        %v504 = vunpack.c.l.b16 %v442
        %v505 = vunpack.c.l.b16 %v443
        %v506 = vunpack.c.l.b16 %v444
        %v507 = vunpack.c.l.b16 %v445
        %v508 = vunpack.c.l.b16 %v446
        %v509 = vunpack.c.l.b16 %v447
        %v510 = vunpack.c.l.b16 %v448
        %v511 = vunpack.c.l.b16 %v449
        %v512 = vunpack.c.l.b16 %v450
        %v513 = vunpack.c.l.b16 %v451
        %v514 = vunpack.c.l.b16 %v452
        %v515 = vunpack.c.l.b16 %v453
        %v516 = vunpack.c.l.b16 %v454
        %v517 = vunpack.c.l.b16 %v455
        %v518 = vunpack.c.l.b16 %v456
        %v519 = vunpack.c.l.b16 %v457
        %v520 = vunpack.c.l.b16 %v458
        %v521 = vunpack.c.l.b16 %v459
        %v522 = vunpack.c.l.b16 %v460
        %v523 = vunpack.c.l.b16 %v461
        %v524 = vunpack.c.l.b16 %v462
        %v525 = vunpack.c.l.b16 %v463
        %v526 = vunpack.c.l.b16 %v464
        %v527 = vunpack.c.l.b16 %v465
        %v528 = vunpack.c.l.b16 %v466
        %v529 = vunpack.c.l.b16 %v467
        %v530 = vpack.c.b16 %v502, %v501
        %v531 = vpack.c.b16 %v504, %v503
        %v532 = vpack.c.b16 %v506, %v505
        %v533 = vpack.c.b16 %v508, %v507
        %v534 = vpack.c.b16 %v510, %v509
        %v535 = vpack.c.b16 %v512, %v511
        %v536 = vpack.c.b16 %v514, %v513
        %v537 = vpack.c.b16 %v516, %v515
        %v538 = vpack.c.b16 %v518, %v517
        %v539 = vpack.c.b16 %v520, %v519
        %v540 = vpack.c.b16 %v522, %v521
        %v541 = vpack.c.b16 %v524, %v523
        %v542 = vpack.c.b16 %v526, %v525
        %v543 = vpack.c.b16 %v528, %v527
        %v544 = vpack.c.b16 %v529, %v529
        %v549 = vunpack.c.l.b16 %v468
        %v550 = vunpack.c.l.b16 %v469
        %v551 = vunpack.c.l.b16 %v470
        %v552 = vunpack.c.l.b16 %v471
        %v553 = vpack.c.b16 %v550, %v549
        %v554 = vpack.c.b16 %v552, %v551
        %vm557 = vcmask 261120
        %v559 = vsel %vm557, %v530, 0
        %v562 = vsel %vm557, %v531, 0
        %v565 = vsel %vm557, %v532, 0
        %v568 = vsel %vm557, %v533, 0
        %v571 = vsel %vm557, %v534, 0
        %v574 = vsel %vm557, %v535, 0
        %v577 = vsel %vm557, %v536, 0
        %v580 = vsel %vm557, %v537, 0
        %v583 = vsel %vm557, %v538, 0
        %v586 = vsel %vm557, %v539, 0
        %v589 = vsel %vm557, %v540, 0
        %v592 = vsel %vm557, %v541, 0
        %v595 = vsel %vm557, %v542, 0
        %v598 = vsel %vm557, %v543, 0
        %v601 = vsel %vm557, %v544, 0
        %603 = vmatprep.subr.bf16.mxu0 0
        %604 = vmatpush1.bf16.msra.mxu0 %v553
        %605 = vmatprep.subr.bf16.mxu0 0
        %606 = vmatpush1.bf16.msra.mxu0 %v554
        %607 = vmatprep.subr.bf16.mxu0 0
        %608 = vmatpush1.bf16.msra.mxu0 0
        %609 = vmatprep.subr.bf16.mxu0 0
        %610 = vmatpush1.bf16.msra.mxu0 0
        %611 = vmatprep.subr.bf16.mxu0 0
        %612 = vmatpush1.bf16.msra.mxu0 0
        %613 = vmatprep.subr.bf16.mxu0 0
        %614 = vmatpush1.bf16.msra.mxu0 0
        %615 = vmatprep.subr.bf16.mxu0 0
        %616 = vmatpush1.bf16.msra.mxu0 0
        %617 = vmatprep.subr.bf16.mxu0 0
        %618 = vmatpush1.bf16.msra.mxu0 0
        %619 = vmatprep.subr.bf16.mxu0 0
        %620 = vmatpush1.bf16.msra.mxu0 0
        %621 = vmatprep.subr.bf16.mxu0 0
        %622 = vmatpush1.bf16.msra.mxu0 0
        %623 = vmatprep.subr.bf16.mxu0 0
        %624 = vmatpush1.bf16.msra.mxu0 0
        %625 = vmatprep.subr.bf16.mxu0 0
        %626 = vmatpush1.bf16.msra.mxu0 0
        %627 = vmatprep.subr.bf16.mxu0 0
        %628 = vmatpush1.bf16.msra.mxu0 0
        %629 = vmatprep.subr.bf16.mxu0 0
        %630 = vmatpush1.bf16.msra.mxu0 0
        %631 = vmatprep.subr.bf16.mxu0 0
        %632 = vmatpush1.bf16.msra.mxu0 0
        %633 = vmatprep.subr.bf16.mxu0 0
        %634 = vmatpush1.bf16.msra.mxu0 0
        %635 = vmatprep.mubr.bf16.mxu0 0
        %636 = vmatmul.mubr.bf16.gmra.mrb[0].mxu0 %v559
        %v637 = vpop.f32.mrb[0].mxu0
        %v638 = vadd.f32 0.0, %v637
        %v639 = vpop.f32.mrb[0].mxu0
        %v640 = vpop.f32.mrb[0].mxu0
        %v641 = vadd.f32 0.0, %v640
        %v642 = vpop.f32.mrb[0].mxu0
        %643 = vmatprep.mubr.bf16.mxu0 0
        %644 = vmatmul.mubr.bf16.gmra.mrb[0].mxu0 %v562
        %v645 = vpop.f32.mrb[0].mxu0
        %v646 = vadd.f32 0.0, %v645
        %v647 = vpop.f32.mrb[0].mxu0
        %v648 = vpop.f32.mrb[0].mxu0
        %v649 = vadd.f32 0.0, %v648
        %v650 = vpop.f32.mrb[0].mxu0
        %651 = vmatprep.mubr.bf16.mxu0 0
        %652 = vmatmul.mubr.bf16.gmra.mrb[0].mxu0 %v565
        %v653 = vpop.f32.mrb[0].mxu0
        %v654 = vadd.f32 0.0, %v653
        %v655 = vpop.f32.mrb[0].mxu0
        %v656 = vpop.f32.mrb[0].mxu0
        %v657 = vadd.f32 0.0, %v656
        %v658 = vpop.f32.mrb[0].mxu0
        %659 = vmatprep.mubr.bf16.mxu0 0
        %660 = vmatmul.mubr.bf16.gmra.mrb[0].mxu0 %v568
        %v661 = vpop.f32.mrb[0].mxu0
        %v662 = vadd.f32 0.0, %v661
        %v663 = vpop.f32.mrb[0].mxu0
        %v664 = vpop.f32.mrb[0].mxu0
        %v665 = vadd.f32 0.0, %v664
        %v666 = vpop.f32.mrb[0].mxu0
        %667 = vmatprep.mubr.bf16.mxu0 0
        %668 = vmatmul.mubr.bf16.gmra.mrb[0].mxu0 %v571
        %v669 = vpop.f32.mrb[0].mxu0
        %v670 = vadd.f32 0.0, %v669
        %v671 = vpop.f32.mrb[0].mxu0
        %v672 = vpop.f32.mrb[0].mxu0
        %v673 = vadd.f32 0.0, %v672
        %v674 = vpop.f32.mrb[0].mxu0
        %675 = vmatprep.mubr.bf16.mxu0 0
        %676 = vmatmul.mubr.bf16.gmra.mrb[0].mxu0 %v574
        %v677 = vpop.f32.mrb[0].mxu0
        %v678 = vadd.f32 0.0, %v677
        %v679 = vpop.f32.mrb[0].mxu0
        %v680 = vpop.f32.mrb[0].mxu0
        %v681 = vadd.f32 0.0, %v680
        %v682 = vpop.f32.mrb[0].mxu0
        %683 = vmatprep.mubr.bf16.mxu0 0
        %684 = vmatmul.mubr.bf16.gmra.mrb[0].mxu0 %v577
        %v685 = vpop.f32.mrb[0].mxu0
        %v686 = vadd.f32 0.0, %v685
        %v687 = vpop.f32.mrb[0].mxu0
        %v688 = vpop.f32.mrb[0].mxu0
        %v689 = vadd.f32 0.0, %v688
        %v690 = vpop.f32.mrb[0].mxu0
        %691 = vmatprep.mubr.bf16.mxu0 0
        %692 = vmatmul.mubr.bf16.gmra.mrb[0].mxu0 %v580
        %v693 = vpop.f32.mrb[0].mxu0
        %v694 = vadd.f32 0.0, %v693
        %v695 = vpop.f32.mrb[0].mxu0
        %v696 = vpop.f32.mrb[0].mxu0
        %v697 = vadd.f32 0.0, %v696
        %v698 = vpop.f32.mrb[0].mxu0
        %699 = vmatprep.mubr.bf16.mxu0 0
        %700 = vmatmul.mubr.bf16.gmra.mrb[0].mxu0 %v583
        %v701 = vpop.f32.mrb[0].mxu0
        %v702 = vadd.f32 0.0, %v701
        %v703 = vpop.f32.mrb[0].mxu0
        %v704 = vpop.f32.mrb[0].mxu0
        %v705 = vadd.f32 0.0, %v704
        %v706 = vpop.f32.mrb[0].mxu0
        %707 = vmatprep.mubr.bf16.mxu0 0
        %708 = vmatmul.mubr.bf16.gmra.mrb[0].mxu0 %v586
        %v709 = vpop.f32.mrb[0].mxu0
        %v710 = vadd.f32 0.0, %v709
        %v711 = vpop.f32.mrb[0].mxu0
        %v712 = vpop.f32.mrb[0].mxu0
        %v713 = vadd.f32 0.0, %v712
        %v714 = vpop.f32.mrb[0].mxu0
        %715 = vmatprep.mubr.bf16.mxu0 0
        %716 = vmatmul.mubr.bf16.gmra.mrb[0].mxu0 %v589
        %v717 = vpop.f32.mrb[0].mxu0
        %v718 = vadd.f32 0.0, %v717
        %v719 = vpop.f32.mrb[0].mxu0
        %v720 = vpop.f32.mrb[0].mxu0
        %v721 = vadd.f32 0.0, %v720
        %v722 = vpop.f32.mrb[0].mxu0
        %723 = vmatprep.mubr.bf16.mxu0 0
        %724 = vmatmul.mubr.bf16.gmra.mrb[0].mxu0 %v592
        %v725 = vpop.f32.mrb[0].mxu0
        %v726 = vadd.f32 0.0, %v725
        %v727 = vpop.f32.mrb[0].mxu0
        %v728 = vpop.f32.mrb[0].mxu0
        %v729 = vadd.f32 0.0, %v728
        %v730 = vpop.f32.mrb[0].mxu0
        %731 = vmatprep.mubr.bf16.mxu0 0
        %732 = vmatmul.mubr.bf16.gmra.mrb[0].mxu0 %v595
        %v733 = vpop.f32.mrb[0].mxu0
        %v734 = vadd.f32 0.0, %v733
        %v735 = vpop.f32.mrb[0].mxu0
        %v736 = vpop.f32.mrb[0].mxu0
        %v737 = vadd.f32 0.0, %v736
        %v738 = vpop.f32.mrb[0].mxu0
        %739 = vmatprep.mubr.bf16.mxu0 0
        %740 = vmatmul.mubr.bf16.gmra.mrb[0].mxu0 %v598
        %v741 = vpop.f32.mrb[0].mxu0
        %v742 = vadd.f32 0.0, %v741
        %v743 = vpop.f32.mrb[0].mxu0
        %v744 = vpop.f32.mrb[0].mxu0
        %v745 = vadd.f32 0.0, %v744
        %v746 = vpop.f32.mrb[0].mxu0
        %747 = vmatprep.mubr.bf16.mxu0 0
        %748 = vmatmul.mubr.bf16.gmra.mrb[0].mxu0 %v601
        %v749 = vpop.f32.mrb[0].mxu0
        %v750 = vadd.f32 0.0, %v749
        %v751 = vpop.f32.mrb[0].mxu0
        %v752 = vpop.f32.mrb[0].mxu0
        %v753 = vpop.f32.mrb[0].mxu0
        %754 = vdwg.mxu0
        %v755 = vld [vmem:[%s2] sm:$0x1]
        %v757 = vlaneseq
        %v758 = vshrl.u32 %v757, 7
        %v759 = vsub.s32 0, %v758
        %v760 = vrot.slane %v755, %v759
        %v762 = vmul.f32 %v638, %v760
        %v763 = vmul.f32 %v641, %v760
        %v764 = vmul.f32 %v646, %v760
        %v765 = vmul.f32 %v649, %v760
        %v766 = vmul.f32 %v654, %v760
        %v767 = vmul.f32 %v657, %v760
        %v768 = vmul.f32 %v662, %v760
        %v769 = vmul.f32 %v665, %v760
        %v770 = vmul.f32 %v670, %v760
        %v771 = vmul.f32 %v673, %v760
        %v772 = vmul.f32 %v678, %v760
        %v773 = vmul.f32 %v681, %v760
        %v774 = vmul.f32 %v686, %v760
        %v775 = vmul.f32 %v689, %v760
        %v776 = vmul.f32 %v694, %v760
        %v777 = vmul.f32 %v697, %v760
        %v778 = vmul.f32 %v702, %v760
        %v779 = vmul.f32 %v705, %v760
        %v780 = vmul.f32 %v710, %v760
        %v781 = vmul.f32 %v713, %v760
        %v782 = vmul.f32 %v718, %v760
        %v783 = vmul.f32 %v721, %v760
        %v784 = vmul.f32 %v726, %v760
        %v785 = vmul.f32 %v729, %v760
        %v786 = vmul.f32 %v734, %v760
        %v787 = vmul.f32 %v737, %v760
        %v788 = vmul.f32 %v742, %v760
        %v789 = vmul.f32 %v745, %v760
        %v790 = vmul.f32 %v750, %v760
        %v791 = vld [vmem:[%s3] sm:$0x1]
        %v793 = vlaneseq
        %v794 = vshrl.u32 %v793, 7
        %v795 = vsub.s32 0, %v794
        %v796 = vrot.slane %v791, %v795
        %v798 = vadd.f32 %v762, %v796
        %v799 = vadd.f32 %v763, %v796
        %v800 = vadd.f32 %v764, %v796
        %v801 = vadd.f32 %v765, %v796
        %v802 = vadd.f32 %v766, %v796
        %v803 = vadd.f32 %v767, %v796
        %v804 = vadd.f32 %v768, %v796
        %v805 = vadd.f32 %v769, %v796
        %v806 = vadd.f32 %v770, %v796
        %v807 = vadd.f32 %v771, %v796
        %v808 = vadd.f32 %v772, %v796
        %v809 = vadd.f32 %v773, %v796
        %v810 = vadd.f32 %v774, %v796
        %v811 = vadd.f32 %v775, %v796
        %v812 = vadd.f32 %v776, %v796
        %v813 = vadd.f32 %v777, %v796
        %v814 = vadd.f32 %v778, %v796
        %v815 = vadd.f32 %v779, %v796
        %v816 = vadd.f32 %v780, %v796
        %v817 = vadd.f32 %v781, %v796
        %v818 = vadd.f32 %v782, %v796
        %v819 = vadd.f32 %v783, %v796
        %v820 = vadd.f32 %v784, %v796
        %v821 = vadd.f32 %v785, %v796
        %v822 = vadd.f32 %v786, %v796
        %v823 = vadd.f32 %v787, %v796
        %v824 = vadd.f32 %v788, %v796
        %v825 = vadd.f32 %v789, %v796
        %v826 = vadd.f32 %v790, %v796
        %v827 = vmax.f32 %v798, 0.0
        %v828 = vmax.f32 %v799, 0.0
        %v829 = vmax.f32 %v800, 0.0
        %v830 = vmax.f32 %v801, 0.0
        %v831 = vmax.f32 %v802, 0.0
        %v832 = vmax.f32 %v803, 0.0
        %v833 = vmax.f32 %v804, 0.0
        %v834 = vmax.f32 %v805, 0.0
        %v835 = vmax.f32 %v806, 0.0
        %v836 = vmax.f32 %v807, 0.0
        %v837 = vmax.f32 %v808, 0.0
        %v838 = vmax.f32 %v809, 0.0
        %v839 = vmax.f32 %v810, 0.0
        %v840 = vmax.f32 %v811, 0.0
        %v841 = vmax.f32 %v812, 0.0
        %v842 = vmax.f32 %v813, 0.0
        %v843 = vmax.f32 %v814, 0.0
        %v844 = vmax.f32 %v815, 0.0
        %v845 = vmax.f32 %v816, 0.0
        %v846 = vmax.f32 %v817, 0.0
        %v847 = vmax.f32 %v818, 0.0
        %v848 = vmax.f32 %v819, 0.0
        %v849 = vmax.f32 %v820, 0.0
        %v850 = vmax.f32 %v821, 0.0
        %v851 = vmax.f32 %v822, 0.0
        %v852 = vmax.f32 %v823, 0.0
        %v853 = vmax.f32 %v824, 0.0
        %v854 = vmax.f32 %v825, 0.0
        %v855 = vmax.f32 %v826, 0.0
        %s856 = scalar_lea.vmem %s437, 116
        %v857 = vld [vmem:[%s856] sm:$0xf]
        %v858 = vld [vmem:[%s856 + $0x4] sm:$0xf]
        %v859 = vld [vmem:[%s856 + $0x8] sm:$0xf]
        %v860 = vld [vmem:[%s856 + $0xc] sm:$0xf]
        %v861 = vld [vmem:[%s856 + $0x10] sm:$0xf]
        %v862 = vld [vmem:[%s856 + $0x14] sm:$0xf]
        %v863 = vld [vmem:[%s856 + $0x18] sm:$0xf]
        %v864 = vld [vmem:[%s856 + $0x1c] sm:$0xf]
        %v865 = vld [vmem:[%s856 + $0x20] sm:$0xf]
        %v866 = vld [vmem:[%s856 + $0x24] sm:$0xf]
        %v867 = vld [vmem:[%s856 + $0x28] sm:$0xf]
        %v868 = vld [vmem:[%s856 + $0x2c] sm:$0xf]
        %v869 = vld [vmem:[%s856 + $0x30] sm:$0xf]
        %v870 = vld [vmem:[%s856 + $0x34] sm:$0xf]
        %v871 = vld [vmem:[%s856 + $0x38] sm:$0xf]
        %v872 = vld [vmem:[%s856 + $0x3c] sm:$0xf]
        %v873 = vld [vmem:[%s856 + $0x40] sm:$0xf]
        %v874 = vld [vmem:[%s856 + $0x44] sm:$0xf]
        %v875 = vld [vmem:[%s856 + $0x48] sm:$0xf]
        %v876 = vld [vmem:[%s856 + $0x4c] sm:$0xf]
        %v877 = vld [vmem:[%s856 + $0x50] sm:$0xf]
        %v878 = vld [vmem:[%s856 + $0x54] sm:$0xf]
        %v879 = vld [vmem:[%s856 + $0x58] sm:$0xf]
        %v880 = vld [vmem:[%s856 + $0x5c] sm:$0xf]
        %v881 = vld [vmem:[%s856 + $0x60] sm:$0xf]
        %v882 = vld [vmem:[%s856 + $0x64] sm:$0xf]
        %v883 = vld [vmem:[%s856 + $0x68] sm:$0xf]
        %v884 = vld [vmem:[%s856 + $0x6c] sm:$0xf]
        %v885 = vld [vmem:[%s856 + $0x70] sm:$0x1]
        %v915 = vunpack.c.l.b16 %v857
        %v916 = vunpack.c.l.b16 %v858
        %v917 = vunpack.c.l.b16 %v859
        %v918 = vunpack.c.l.b16 %v860
        %v919 = vunpack.c.l.b16 %v861
        %v920 = vunpack.c.l.b16 %v862
        %v921 = vunpack.c.l.b16 %v863
        %v922 = vunpack.c.l.b16 %v864
        %v923 = vunpack.c.l.b16 %v865
        %v924 = vunpack.c.l.b16 %v866
        %v925 = vunpack.c.l.b16 %v867
        %v926 = vunpack.c.l.b16 %v868
        %v927 = vunpack.c.l.b16 %v869
        %v928 = vunpack.c.l.b16 %v870
        %v929 = vunpack.c.l.b16 %v871
        %v930 = vunpack.c.l.b16 %v872
        %v931 = vunpack.c.l.b16 %v873
        %v932 = vunpack.c.l.b16 %v874
        %v933 = vunpack.c.l.b16 %v875
        %v934 = vunpack.c.l.b16 %v876
        %v935 = vunpack.c.l.b16 %v877
        %v936 = vunpack.c.l.b16 %v878
        %v937 = vunpack.c.l.b16 %v879
        %v938 = vunpack.c.l.b16 %v880
        %v939 = vunpack.c.l.b16 %v881
        %v940 = vunpack.c.l.b16 %v882
        %v941 = vunpack.c.l.b16 %v883
        %v942 = vunpack.c.l.b16 %v884
        %v943 = vunpack.c.l.b16 %v885
        %v944 = vpack.c.b16 %v916, %v915
        %v945 = vpack.c.b16 %v918, %v917
        %v946 = vpack.c.b16 %v920, %v919
        %v947 = vpack.c.b16 %v922, %v921
        %v948 = vpack.c.b16 %v924, %v923
        %v949 = vpack.c.b16 %v926, %v925
        %v950 = vpack.c.b16 %v928, %v927
        %v951 = vpack.c.b16 %v930, %v929
        %v952 = vpack.c.b16 %v932, %v931
        %v953 = vpack.c.b16 %v934, %v933
        %v954 = vpack.c.b16 %v936, %v935
        %v955 = vpack.c.b16 %v938, %v937
        %v956 = vpack.c.b16 %v940, %v939
        %v957 = vpack.c.b16 %v942, %v941
        %v958 = vpack.c.b16 %v943, %v943
        %v960 = vsel %vm557, %v944, 0
        %v963 = vsel %vm557, %v945, 0
        %v966 = vsel %vm557, %v946, 0
        %v969 = vsel %vm557, %v947, 0
        %v972 = vsel %vm557, %v948, 0
        %v975 = vsel %vm557, %v949, 0
        %v978 = vsel %vm557, %v950, 0
        %v981 = vsel %vm557, %v951, 0
        %v984 = vsel %vm557, %v952, 0
        %v987 = vsel %vm557, %v953, 0
        %v990 = vsel %vm557, %v954, 0
        %v993 = vsel %vm557, %v955, 0
        %v996 = vsel %vm557, %v956, 0
        %v999 = vsel %vm557, %v957, 0
        %v1002 = vsel %vm557, %v958, 0
        %1004 = vmatprep.subr.bf16.mxu0 0
        %1005 = vmatpush1.bf16.msra.mxu0 %v553
        %1006 = vmatprep.subr.bf16.mxu0 0
        %1007 = vmatpush1.bf16.msra.mxu0 %v554
        %1008 = vmatprep.subr.bf16.mxu0 0
        %1009 = vmatpush1.bf16.msra.mxu0 0
        %1010 = vmatprep.subr.bf16.mxu0 0
        %1011 = vmatpush1.bf16.msra.mxu0 0
        %1012 = vmatprep.subr.bf16.mxu0 0
        %1013 = vmatpush1.bf16.msra.mxu0 0
        %1014 = vmatprep.subr.bf16.mxu0 0
        %1015 = vmatpush1.bf16.msra.mxu0 0
        %1016 = vmatprep.subr.bf16.mxu0 0
        %1017 = vmatpush1.bf16.msra.mxu0 0
        %1018 = vmatprep.subr.bf16.mxu0 0
        %1019 = vmatpush1.bf16.msra.mxu0 0
        %1020 = vmatprep.subr.bf16.mxu0 0
        %1021 = vmatpush1.bf16.msra.mxu0 0
        %1022 = vmatprep.subr.bf16.mxu0 0
        %1023 = vmatpush1.bf16.msra.mxu0 0
        %1024 = vmatprep.subr.bf16.mxu0 0
        %1025 = vmatpush1.bf16.msra.mxu0 0
        %1026 = vmatprep.subr.bf16.mxu0 0
        %1027 = vmatpush1.bf16.msra.mxu0 0
        %1028 = vmatprep.subr.bf16.mxu0 0
        %1029 = vmatpush1.bf16.msra.mxu0 0
        %1030 = vmatprep.subr.bf16.mxu0 0
        %1031 = vmatpush1.bf16.msra.mxu0 0
        %1032 = vmatprep.subr.bf16.mxu0 0
        %1033 = vmatpush1.bf16.msra.mxu0 0
        %1034 = vmatprep.subr.bf16.mxu0 0
        %1035 = vmatpush1.bf16.msra.mxu0 0
        %1036 = vmatprep.mubr.bf16.mxu0 0
        %1037 = vmatmul.mubr.bf16.gmra.mrb[0].mxu0 %v960
        %v1038 = vpop.f32.mrb[0].mxu0
        %v1039 = vadd.f32 0.0, %v1038
        %v1040 = vpop.f32.mrb[0].mxu0
        %v1041 = vpop.f32.mrb[0].mxu0
        %v1042 = vadd.f32 0.0, %v1041
        %v1043 = vpop.f32.mrb[0].mxu0
        %1044 = vmatprep.mubr.bf16.mxu0 0
        %1045 = vmatmul.mubr.bf16.gmra.mrb[0].mxu0 %v963
        %v1046 = vpop.f32.mrb[0].mxu0
        %v1047 = vadd.f32 0.0, %v1046
        %v1048 = vpop.f32.mrb[0].mxu0
        %v1049 = vpop.f32.mrb[0].mxu0
        %v1050 = vadd.f32 0.0, %v1049
        %v1051 = vpop.f32.mrb[0].mxu0
        %1052 = vmatprep.mubr.bf16.mxu0 0
        %1053 = vmatmul.mubr.bf16.gmra.mrb[0].mxu0 %v966
        %v1054 = vpop.f32.mrb[0].mxu0
        %v1055 = vadd.f32 0.0, %v1054
        %v1056 = vpop.f32.mrb[0].mxu0
        %v1057 = vpop.f32.mrb[0].mxu0
        %v1058 = vadd.f32 0.0, %v1057
        %v1059 = vpop.f32.mrb[0].mxu0
        %1060 = vmatprep.mubr.bf16.mxu0 0
        %1061 = vmatmul.mubr.bf16.gmra.mrb[0].mxu0 %v969
        %v1062 = vpop.f32.mrb[0].mxu0
        %v1063 = vadd.f32 0.0, %v1062
        %v1064 = vpop.f32.mrb[0].mxu0
        %v1065 = vpop.f32.mrb[0].mxu0
        %v1066 = vadd.f32 0.0, %v1065
        %v1067 = vpop.f32.mrb[0].mxu0
        %1068 = vmatprep.mubr.bf16.mxu0 0
        %1069 = vmatmul.mubr.bf16.gmra.mrb[0].mxu0 %v972
        %v1070 = vpop.f32.mrb[0].mxu0
        %v1071 = vadd.f32 0.0, %v1070
        %v1072 = vpop.f32.mrb[0].mxu0
        %v1073 = vpop.f32.mrb[0].mxu0
        %v1074 = vadd.f32 0.0, %v1073
        %v1075 = vpop.f32.mrb[0].mxu0
        %1076 = vmatprep.mubr.bf16.mxu0 0
        %1077 = vmatmul.mubr.bf16.gmra.mrb[0].mxu0 %v975
        %v1078 = vpop.f32.mrb[0].mxu0
        %v1079 = vadd.f32 0.0, %v1078
        %v1080 = vpop.f32.mrb[0].mxu0
        %v1081 = vpop.f32.mrb[0].mxu0
        %v1082 = vadd.f32 0.0, %v1081
        %v1083 = vpop.f32.mrb[0].mxu0
        %1084 = vmatprep.mubr.bf16.mxu0 0
        %1085 = vmatmul.mubr.bf16.gmra.mrb[0].mxu0 %v978
        %v1086 = vpop.f32.mrb[0].mxu0
        %v1087 = vadd.f32 0.0, %v1086
        %v1088 = vpop.f32.mrb[0].mxu0
        %v1089 = vpop.f32.mrb[0].mxu0
        %v1090 = vadd.f32 0.0, %v1089
        %v1091 = vpop.f32.mrb[0].mxu0
        %1092 = vmatprep.mubr.bf16.mxu0 0
        %1093 = vmatmul.mubr.bf16.gmra.mrb[0].mxu0 %v981
        %v1094 = vpop.f32.mrb[0].mxu0
        %v1095 = vadd.f32 0.0, %v1094
        %v1096 = vpop.f32.mrb[0].mxu0
        %v1097 = vpop.f32.mrb[0].mxu0
        %v1098 = vadd.f32 0.0, %v1097
        %v1099 = vpop.f32.mrb[0].mxu0
        %1100 = vmatprep.mubr.bf16.mxu0 0
        %1101 = vmatmul.mubr.bf16.gmra.mrb[0].mxu0 %v984
        %v1102 = vpop.f32.mrb[0].mxu0
        %v1103 = vadd.f32 0.0, %v1102
        %v1104 = vpop.f32.mrb[0].mxu0
        %v1105 = vpop.f32.mrb[0].mxu0
        %v1106 = vadd.f32 0.0, %v1105
        %v1107 = vpop.f32.mrb[0].mxu0
        %1108 = vmatprep.mubr.bf16.mxu0 0
        %1109 = vmatmul.mubr.bf16.gmra.mrb[0].mxu0 %v987
        %v1110 = vpop.f32.mrb[0].mxu0
        %v1111 = vadd.f32 0.0, %v1110
        %v1112 = vpop.f32.mrb[0].mxu0
        %v1113 = vpop.f32.mrb[0].mxu0
        %v1114 = vadd.f32 0.0, %v1113
        %v1115 = vpop.f32.mrb[0].mxu0
        %1116 = vmatprep.mubr.bf16.mxu0 0
        %1117 = vmatmul.mubr.bf16.gmra.mrb[0].mxu0 %v990
        %v1118 = vpop.f32.mrb[0].mxu0
        %v1119 = vadd.f32 0.0, %v1118
        %v1120 = vpop.f32.mrb[0].mxu0
        %v1121 = vpop.f32.mrb[0].mxu0
        %v1122 = vadd.f32 0.0, %v1121
        %v1123 = vpop.f32.mrb[0].mxu0
        %1124 = vmatprep.mubr.bf16.mxu0 0
        %1125 = vmatmul.mubr.bf16.gmra.mrb[0].mxu0 %v993
        %v1126 = vpop.f32.mrb[0].mxu0
        %v1127 = vadd.f32 0.0, %v1126
        %v1128 = vpop.f32.mrb[0].mxu0
        %v1129 = vpop.f32.mrb[0].mxu0
        %v1130 = vadd.f32 0.0, %v1129
        %v1131 = vpop.f32.mrb[0].mxu0
        %1132 = vmatprep.mubr.bf16.mxu0 0
        %1133 = vmatmul.mubr.bf16.gmra.mrb[0].mxu0 %v996
        %v1134 = vpop.f32.mrb[0].mxu0
        %v1135 = vadd.f32 0.0, %v1134
        %v1136 = vpop.f32.mrb[0].mxu0
        %v1137 = vpop.f32.mrb[0].mxu0
        %v1138 = vadd.f32 0.0, %v1137
        %v1139 = vpop.f32.mrb[0].mxu0
        %1140 = vmatprep.mubr.bf16.mxu0 0
        %1141 = vmatmul.mubr.bf16.gmra.mrb[0].mxu0 %v999
        %v1142 = vpop.f32.mrb[0].mxu0
        %v1143 = vadd.f32 0.0, %v1142
        %v1144 = vpop.f32.mrb[0].mxu0
        %v1145 = vpop.f32.mrb[0].mxu0
        %v1146 = vadd.f32 0.0, %v1145
        %v1147 = vpop.f32.mrb[0].mxu0
        %1148 = vmatprep.mubr.bf16.mxu0 0
        %1149 = vmatmul.mubr.bf16.gmra.mrb[0].mxu0 %v1002
        %v1150 = vpop.f32.mrb[0].mxu0
        %v1151 = vadd.f32 0.0, %v1150
        %v1152 = vpop.f32.mrb[0].mxu0
        %v1153 = vpop.f32.mrb[0].mxu0
        %v1154 = vpop.f32.mrb[0].mxu0
        %1155 = vdwg.mxu0
        %v1156 = vmul.f32 %v1039, %v760
        %v1157 = vmul.f32 %v1042, %v760
        %v1158 = vmul.f32 %v1047, %v760
        %v1159 = vmul.f32 %v1050, %v760
        %v1160 = vmul.f32 %v1055, %v760
        %v1161 = vmul.f32 %v1058, %v760
        %v1162 = vmul.f32 %v1063, %v760
        %v1163 = vmul.f32 %v1066, %v760
        %v1164 = vmul.f32 %v1071, %v760
        %v1165 = vmul.f32 %v1074, %v760
        %v1166 = vmul.f32 %v1079, %v760
        %v1167 = vmul.f32 %v1082, %v760
        %v1168 = vmul.f32 %v1087, %v760
        %v1169 = vmul.f32 %v1090, %v760
        %v1170 = vmul.f32 %v1095, %v760
        %v1171 = vmul.f32 %v1098, %v760
        %v1172 = vmul.f32 %v1103, %v760
        %v1173 = vmul.f32 %v1106, %v760
        %v1174 = vmul.f32 %v1111, %v760
        %v1175 = vmul.f32 %v1114, %v760
        %v1176 = vmul.f32 %v1119, %v760
        %v1177 = vmul.f32 %v1122, %v760
        %v1178 = vmul.f32 %v1127, %v760
        %v1179 = vmul.f32 %v1130, %v760
        %v1180 = vmul.f32 %v1135, %v760
        %v1181 = vmul.f32 %v1138, %v760
        %v1182 = vmul.f32 %v1143, %v760
        %v1183 = vmul.f32 %v1146, %v760
        %v1184 = vmul.f32 %v1151, %v760
        %v1185 = vadd.f32 %v1156, %v796
        %v1186 = vadd.f32 %v1157, %v796
        %v1187 = vadd.f32 %v1158, %v796
        %v1188 = vadd.f32 %v1159, %v796
        %v1189 = vadd.f32 %v1160, %v796
        %v1190 = vadd.f32 %v1161, %v796
        %v1191 = vadd.f32 %v1162, %v796
        %v1192 = vadd.f32 %v1163, %v796
        %v1193 = vadd.f32 %v1164, %v796
        %v1194 = vadd.f32 %v1165, %v796
        %v1195 = vadd.f32 %v1166, %v796
        %v1196 = vadd.f32 %v1167, %v796
        %v1197 = vadd.f32 %v1168, %v796
        %v1198 = vadd.f32 %v1169, %v796
        %v1199 = vadd.f32 %v1170, %v796
        %v1200 = vadd.f32 %v1171, %v796
        %v1201 = vadd.f32 %v1172, %v796
        %v1202 = vadd.f32 %v1173, %v796
        %v1203 = vadd.f32 %v1174, %v796
        %v1204 = vadd.f32 %v1175, %v796
        %v1205 = vadd.f32 %v1176, %v796
        %v1206 = vadd.f32 %v1177, %v796
        %v1207 = vadd.f32 %v1178, %v796
        %v1208 = vadd.f32 %v1179, %v796
        %v1209 = vadd.f32 %v1180, %v796
        %v1210 = vadd.f32 %v1181, %v796
        %v1211 = vadd.f32 %v1182, %v796
        %v1212 = vadd.f32 %v1183, %v796
        %v1213 = vadd.f32 %v1184, %v796
        %v1214 = vmax.f32 %v1185, 0.0
        %v1215 = vmax.f32 %v1186, 0.0
        %v1216 = vmax.f32 %v1187, 0.0
        %v1217 = vmax.f32 %v1188, 0.0
        %v1218 = vmax.f32 %v1189, 0.0
        %v1219 = vmax.f32 %v1190, 0.0
        %v1220 = vmax.f32 %v1191, 0.0
        %v1221 = vmax.f32 %v1192, 0.0
        %v1222 = vmax.f32 %v1193, 0.0
        %v1223 = vmax.f32 %v1194, 0.0
        %v1224 = vmax.f32 %v1195, 0.0
        %v1225 = vmax.f32 %v1196, 0.0
        %v1226 = vmax.f32 %v1197, 0.0
        %v1227 = vmax.f32 %v1198, 0.0
        %v1228 = vmax.f32 %v1199, 0.0
        %v1229 = vmax.f32 %v1200, 0.0
        %v1230 = vmax.f32 %v1201, 0.0
        %v1231 = vmax.f32 %v1202, 0.0
        %v1232 = vmax.f32 %v1203, 0.0
        %v1233 = vmax.f32 %v1204, 0.0
        %v1234 = vmax.f32 %v1205, 0.0
        %v1235 = vmax.f32 %v1206, 0.0
        %v1236 = vmax.f32 %v1207, 0.0
        %v1237 = vmax.f32 %v1208, 0.0
        %v1238 = vmax.f32 %v1209, 0.0
        %v1239 = vmax.f32 %v1210, 0.0
        %v1240 = vmax.f32 %v1211, 0.0
        %v1241 = vmax.f32 %v1212, 0.0
        %v1242 = vmax.f32 %v1213, 0.0
        %v1243 = vmax.f32 %v827, %v1214
        %v1244 = vmax.f32 %v828, %v1215
        %v1245 = vmax.f32 %v829, %v1216
        %v1246 = vmax.f32 %v830, %v1217
        %v1247 = vmax.f32 %v831, %v1218
        %v1248 = vmax.f32 %v832, %v1219
        %v1249 = vmax.f32 %v833, %v1220
        %v1250 = vmax.f32 %v834, %v1221
        %v1251 = vmax.f32 %v835, %v1222
        %v1252 = vmax.f32 %v836, %v1223
        %v1253 = vmax.f32 %v837, %v1224
        %v1254 = vmax.f32 %v838, %v1225
        %v1255 = vmax.f32 %v839, %v1226
        %v1256 = vmax.f32 %v840, %v1227
        %v1257 = vmax.f32 %v841, %v1228
        %v1258 = vmax.f32 %v842, %v1229
        %v1259 = vmax.f32 %v843, %v1230
        %v1260 = vmax.f32 %v844, %v1231
        %v1261 = vmax.f32 %v845, %v1232
        %v1262 = vmax.f32 %v846, %v1233
        %v1263 = vmax.f32 %v847, %v1234
        %v1264 = vmax.f32 %v848, %v1235
        %v1265 = vmax.f32 %v849, %v1236
        %v1266 = vmax.f32 %v850, %v1237
        %v1267 = vmax.f32 %v851, %v1238
        %v1268 = vmax.f32 %v852, %v1239
        %v1269 = vmax.f32 %v853, %v1240
        %v1270 = vmax.f32 %v854, %v1241
        %v1271 = vmax.f32 %v855, %v1242
        %s1272 = scalar_lea.vmem %s437, 232
        %v1273 = vld [vmem:[%s1272] sm:$0xf]
        %v1274 = vld [vmem:[%s1272 + $0x4] sm:$0xf]
        %v1275 = vld [vmem:[%s1272 + $0x8] sm:$0xf]
        %v1276 = vld [vmem:[%s1272 + $0xc] sm:$0xf]
        %v1277 = vld [vmem:[%s1272 + $0x10] sm:$0xf]
        %v1278 = vld [vmem:[%s1272 + $0x14] sm:$0xf]
        %v1279 = vld [vmem:[%s1272 + $0x18] sm:$0xf]
        %v1280 = vld [vmem:[%s1272 + $0x1c] sm:$0xf]
        %v1281 = vld [vmem:[%s1272 + $0x20] sm:$0xf]
        %v1282 = vld [vmem:[%s1272 + $0x24] sm:$0xf]
        %v1283 = vld [vmem:[%s1272 + $0x28] sm:$0xf]
        %v1284 = vld [vmem:[%s1272 + $0x2c] sm:$0xf]
        %v1285 = vld [vmem:[%s1272 + $0x30] sm:$0xf]
        %v1286 = vld [vmem:[%s1272 + $0x34] sm:$0xf]
        %v1287 = vld [vmem:[%s1272 + $0x38] sm:$0xf]
        %v1288 = vld [vmem:[%s1272 + $0x3c] sm:$0xf]
        %v1289 = vld [vmem:[%s1272 + $0x40] sm:$0xf]
        %v1290 = vld [vmem:[%s1272 + $0x44] sm:$0xf]
        %v1291 = vld [vmem:[%s1272 + $0x48] sm:$0xf]
        %v1292 = vld [vmem:[%s1272 + $0x4c] sm:$0xf]
        %v1293 = vld [vmem:[%s1272 + $0x50] sm:$0xf]
        %v1294 = vld [vmem:[%s1272 + $0x54] sm:$0xf]
        %v1295 = vld [vmem:[%s1272 + $0x58] sm:$0xf]
        %v1296 = vld [vmem:[%s1272 + $0x5c] sm:$0xf]
        %v1297 = vld [vmem:[%s1272 + $0x60] sm:$0xf]
        %v1298 = vld [vmem:[%s1272 + $0x64] sm:$0xf]
        %v1299 = vld [vmem:[%s1272 + $0x68] sm:$0xf]
        %v1300 = vld [vmem:[%s1272 + $0x6c] sm:$0xf]
        %v1301 = vld [vmem:[%s1272 + $0x70] sm:$0x1]
        %v1331 = vunpack.c.l.b16 %v1273
        %v1332 = vunpack.c.l.b16 %v1274
        %v1333 = vunpack.c.l.b16 %v1275
        %v1334 = vunpack.c.l.b16 %v1276
        %v1335 = vunpack.c.l.b16 %v1277
        %v1336 = vunpack.c.l.b16 %v1278
        %v1337 = vunpack.c.l.b16 %v1279
        %v1338 = vunpack.c.l.b16 %v1280
        %v1339 = vunpack.c.l.b16 %v1281
        %v1340 = vunpack.c.l.b16 %v1282
        %v1341 = vunpack.c.l.b16 %v1283
        %v1342 = vunpack.c.l.b16 %v1284
        %v1343 = vunpack.c.l.b16 %v1285
        %v1344 = vunpack.c.l.b16 %v1286
        %v1345 = vunpack.c.l.b16 %v1287
        %v1346 = vunpack.c.l.b16 %v1288
        %v1347 = vunpack.c.l.b16 %v1289
        %v1348 = vunpack.c.l.b16 %v1290
        %v1349 = vunpack.c.l.b16 %v1291
        %v1350 = vunpack.c.l.b16 %v1292
        %v1351 = vunpack.c.l.b16 %v1293
        %v1352 = vunpack.c.l.b16 %v1294
        %v1353 = vunpack.c.l.b16 %v1295
        %v1354 = vunpack.c.l.b16 %v1296
        %v1355 = vunpack.c.l.b16 %v1297
        %v1356 = vunpack.c.l.b16 %v1298
        %v1357 = vunpack.c.l.b16 %v1299
        %v1358 = vunpack.c.l.b16 %v1300
        %v1359 = vunpack.c.l.b16 %v1301
        %v1360 = vpack.c.b16 %v1332, %v1331
        %v1361 = vpack.c.b16 %v1334, %v1333
        %v1362 = vpack.c.b16 %v1336, %v1335
        %v1363 = vpack.c.b16 %v1338, %v1337
        %v1364 = vpack.c.b16 %v1340, %v1339
        %v1365 = vpack.c.b16 %v1342, %v1341
        %v1366 = vpack.c.b16 %v1344, %v1343
        %v1367 = vpack.c.b16 %v1346, %v1345
        %v1368 = vpack.c.b16 %v1348, %v1347
        %v1369 = vpack.c.b16 %v1350, %v1349
        %v1370 = vpack.c.b16 %v1352, %v1351
        %v1371 = vpack.c.b16 %v1354, %v1353
        %v1372 = vpack.c.b16 %v1356, %v1355
        %v1373 = vpack.c.b16 %v1358, %v1357
        %v1374 = vpack.c.b16 %v1359, %v1359
        %v1376 = vsel %vm557, %v1360, 0
        %v1379 = vsel %vm557, %v1361, 0
        %v1382 = vsel %vm557, %v1362, 0
        %v1385 = vsel %vm557, %v1363, 0
        %v1388 = vsel %vm557, %v1364, 0
        %v1391 = vsel %vm557, %v1365, 0
        %v1394 = vsel %vm557, %v1366, 0
        %v1397 = vsel %vm557, %v1367, 0
        %v1400 = vsel %vm557, %v1368, 0
        %v1403 = vsel %vm557, %v1369, 0
        %v1406 = vsel %vm557, %v1370, 0
        %v1409 = vsel %vm557, %v1371, 0
        %v1412 = vsel %vm557, %v1372, 0
        %v1415 = vsel %vm557, %v1373, 0
        %v1418 = vsel %vm557, %v1374, 0
        %1420 = vmatprep.subr.bf16.mxu0 0
        %1421 = vmatpush1.bf16.msra.mxu0 %v553
        %1422 = vmatprep.subr.bf16.mxu0 0
        %1423 = vmatpush1.bf16.msra.mxu0 %v554
        %1424 = vmatprep.subr.bf16.mxu0 0
        %1425 = vmatpush1.bf16.msra.mxu0 0
        %1426 = vmatprep.subr.bf16.mxu0 0
        %1427 = vmatpush1.bf16.msra.mxu0 0
        %1428 = vmatprep.subr.bf16.mxu0 0
        %1429 = vmatpush1.bf16.msra.mxu0 0
        %1430 = vmatprep.subr.bf16.mxu0 0
        %1431 = vmatpush1.bf16.msra.mxu0 0
        %1432 = vmatprep.subr.bf16.mxu0 0
        %1433 = vmatpush1.bf16.msra.mxu0 0
        %1434 = vmatprep.subr.bf16.mxu0 0
        %1435 = vmatpush1.bf16.msra.mxu0 0
        %1436 = vmatprep.subr.bf16.mxu0 0
        %1437 = vmatpush1.bf16.msra.mxu0 0
        %1438 = vmatprep.subr.bf16.mxu0 0
        %1439 = vmatpush1.bf16.msra.mxu0 0
        %1440 = vmatprep.subr.bf16.mxu0 0
        %1441 = vmatpush1.bf16.msra.mxu0 0
        %1442 = vmatprep.subr.bf16.mxu0 0
        %1443 = vmatpush1.bf16.msra.mxu0 0
        %1444 = vmatprep.subr.bf16.mxu0 0
        %1445 = vmatpush1.bf16.msra.mxu0 0
        %1446 = vmatprep.subr.bf16.mxu0 0
        %1447 = vmatpush1.bf16.msra.mxu0 0
        %1448 = vmatprep.subr.bf16.mxu0 0
        %1449 = vmatpush1.bf16.msra.mxu0 0
        %1450 = vmatprep.subr.bf16.mxu0 0
        %1451 = vmatpush1.bf16.msra.mxu0 0
        %1452 = vmatprep.mubr.bf16.mxu0 0
        %1453 = vmatmul.mubr.bf16.gmra.mrb[0].mxu0 %v1376
        %v1454 = vpop.f32.mrb[0].mxu0
        %v1455 = vadd.f32 0.0, %v1454
        %v1456 = vpop.f32.mrb[0].mxu0
        %v1457 = vpop.f32.mrb[0].mxu0
        %v1458 = vadd.f32 0.0, %v1457
        %v1459 = vpop.f32.mrb[0].mxu0
        %1460 = vmatprep.mubr.bf16.mxu0 0
        %1461 = vmatmul.mubr.bf16.gmra.mrb[0].mxu0 %v1379
        %v1462 = vpop.f32.mrb[0].mxu0
        %v1463 = vadd.f32 0.0, %v1462
        %v1464 = vpop.f32.mrb[0].mxu0
        %v1465 = vpop.f32.mrb[0].mxu0
        %v1466 = vadd.f32 0.0, %v1465
        %v1467 = vpop.f32.mrb[0].mxu0
        %1468 = vmatprep.mubr.bf16.mxu0 0
        %1469 = vmatmul.mubr.bf16.gmra.mrb[0].mxu0 %v1382
        %v1470 = vpop.f32.mrb[0].mxu0
        %v1471 = vadd.f32 0.0, %v1470
        %v1472 = vpop.f32.mrb[0].mxu0
        %v1473 = vpop.f32.mrb[0].mxu0
        %v1474 = vadd.f32 0.0, %v1473
        %v1475 = vpop.f32.mrb[0].mxu0
        %1476 = vmatprep.mubr.bf16.mxu0 0
        %1477 = vmatmul.mubr.bf16.gmra.mrb[0].mxu0 %v1385
        %v1478 = vpop.f32.mrb[0].mxu0
        %v1479 = vadd.f32 0.0, %v1478
        %v1480 = vpop.f32.mrb[0].mxu0
        %v1481 = vpop.f32.mrb[0].mxu0
        %v1482 = vadd.f32 0.0, %v1481
        %v1483 = vpop.f32.mrb[0].mxu0
        %1484 = vmatprep.mubr.bf16.mxu0 0
        %1485 = vmatmul.mubr.bf16.gmra.mrb[0].mxu0 %v1388
        %v1486 = vpop.f32.mrb[0].mxu0
        %v1487 = vadd.f32 0.0, %v1486
        %v1488 = vpop.f32.mrb[0].mxu0
        %v1489 = vpop.f32.mrb[0].mxu0
        %v1490 = vadd.f32 0.0, %v1489
        %v1491 = vpop.f32.mrb[0].mxu0
        %1492 = vmatprep.mubr.bf16.mxu0 0
        %1493 = vmatmul.mubr.bf16.gmra.mrb[0].mxu0 %v1391
        %v1494 = vpop.f32.mrb[0].mxu0
        %v1495 = vadd.f32 0.0, %v1494
        %v1496 = vpop.f32.mrb[0].mxu0
        %v1497 = vpop.f32.mrb[0].mxu0
        %v1498 = vadd.f32 0.0, %v1497
        %v1499 = vpop.f32.mrb[0].mxu0
        %1500 = vmatprep.mubr.bf16.mxu0 0
        %1501 = vmatmul.mubr.bf16.gmra.mrb[0].mxu0 %v1394
        %v1502 = vpop.f32.mrb[0].mxu0
        %v1503 = vadd.f32 0.0, %v1502
        %v1504 = vpop.f32.mrb[0].mxu0
        %v1505 = vpop.f32.mrb[0].mxu0
        %v1506 = vadd.f32 0.0, %v1505
        %v1507 = vpop.f32.mrb[0].mxu0
        %1508 = vmatprep.mubr.bf16.mxu0 0
        %1509 = vmatmul.mubr.bf16.gmra.mrb[0].mxu0 %v1397
        %v1510 = vpop.f32.mrb[0].mxu0
        %v1511 = vadd.f32 0.0, %v1510
        %v1512 = vpop.f32.mrb[0].mxu0
        %v1513 = vpop.f32.mrb[0].mxu0
        %v1514 = vadd.f32 0.0, %v1513
        %v1515 = vpop.f32.mrb[0].mxu0
        %1516 = vmatprep.mubr.bf16.mxu0 0
        %1517 = vmatmul.mubr.bf16.gmra.mrb[0].mxu0 %v1400
        %v1518 = vpop.f32.mrb[0].mxu0
        %v1519 = vadd.f32 0.0, %v1518
        %v1520 = vpop.f32.mrb[0].mxu0
        %v1521 = vpop.f32.mrb[0].mxu0
        %v1522 = vadd.f32 0.0, %v1521
        %v1523 = vpop.f32.mrb[0].mxu0
        %1524 = vmatprep.mubr.bf16.mxu0 0
        %1525 = vmatmul.mubr.bf16.gmra.mrb[0].mxu0 %v1403
        %v1526 = vpop.f32.mrb[0].mxu0
        %v1527 = vadd.f32 0.0, %v1526
        %v1528 = vpop.f32.mrb[0].mxu0
        %v1529 = vpop.f32.mrb[0].mxu0
        %v1530 = vadd.f32 0.0, %v1529
        %v1531 = vpop.f32.mrb[0].mxu0
        %1532 = vmatprep.mubr.bf16.mxu0 0
        %1533 = vmatmul.mubr.bf16.gmra.mrb[0].mxu0 %v1406
        %v1534 = vpop.f32.mrb[0].mxu0
        %v1535 = vadd.f32 0.0, %v1534
        %v1536 = vpop.f32.mrb[0].mxu0
        %v1537 = vpop.f32.mrb[0].mxu0
        %v1538 = vadd.f32 0.0, %v1537
        %v1539 = vpop.f32.mrb[0].mxu0
        %1540 = vmatprep.mubr.bf16.mxu0 0
        %1541 = vmatmul.mubr.bf16.gmra.mrb[0].mxu0 %v1409
        %v1542 = vpop.f32.mrb[0].mxu0
        %v1543 = vadd.f32 0.0, %v1542
        %v1544 = vpop.f32.mrb[0].mxu0
        %v1545 = vpop.f32.mrb[0].mxu0
        %v1546 = vadd.f32 0.0, %v1545
        %v1547 = vpop.f32.mrb[0].mxu0
        %1548 = vmatprep.mubr.bf16.mxu0 0
        %1549 = vmatmul.mubr.bf16.gmra.mrb[0].mxu0 %v1412
        %v1550 = vpop.f32.mrb[0].mxu0
        %v1551 = vadd.f32 0.0, %v1550
        %v1552 = vpop.f32.mrb[0].mxu0
        %v1553 = vpop.f32.mrb[0].mxu0
        %v1554 = vadd.f32 0.0, %v1553
        %v1555 = vpop.f32.mrb[0].mxu0
        %1556 = vmatprep.mubr.bf16.mxu0 0
        %1557 = vmatmul.mubr.bf16.gmra.mrb[0].mxu0 %v1415
        %v1558 = vpop.f32.mrb[0].mxu0
        %v1559 = vadd.f32 0.0, %v1558
        %v1560 = vpop.f32.mrb[0].mxu0
        %v1561 = vpop.f32.mrb[0].mxu0
        %v1562 = vadd.f32 0.0, %v1561
        %v1563 = vpop.f32.mrb[0].mxu0
        %1564 = vmatprep.mubr.bf16.mxu0 0
        %1565 = vmatmul.mubr.bf16.gmra.mrb[0].mxu0 %v1418
        %v1566 = vpop.f32.mrb[0].mxu0
        %v1567 = vadd.f32 0.0, %v1566
        %v1568 = vpop.f32.mrb[0].mxu0
        %v1569 = vpop.f32.mrb[0].mxu0
        %v1570 = vpop.f32.mrb[0].mxu0
        %1571 = vdwg.mxu0
        %v1572 = vmul.f32 %v1455, %v760
        %v1573 = vmul.f32 %v1458, %v760
        %v1574 = vmul.f32 %v1463, %v760
        %v1575 = vmul.f32 %v1466, %v760
        %v1576 = vmul.f32 %v1471, %v760
        %v1577 = vmul.f32 %v1474, %v760
        %v1578 = vmul.f32 %v1479, %v760
        %v1579 = vmul.f32 %v1482, %v760
        %v1580 = vmul.f32 %v1487, %v760
        %v1581 = vmul.f32 %v1490, %v760
        %v1582 = vmul.f32 %v1495, %v760
        %v1583 = vmul.f32 %v1498, %v760
        %v1584 = vmul.f32 %v1503, %v760
        %v1585 = vmul.f32 %v1506, %v760
        %v1586 = vmul.f32 %v1511, %v760
        %v1587 = vmul.f32 %v1514, %v760
        %v1588 = vmul.f32 %v1519, %v760
        %v1589 = vmul.f32 %v1522, %v760
        %v1590 = vmul.f32 %v1527, %v760
        %v1591 = vmul.f32 %v1530, %v760
        %v1592 = vmul.f32 %v1535, %v760
        %v1593 = vmul.f32 %v1538, %v760
        %v1594 = vmul.f32 %v1543, %v760
        %v1595 = vmul.f32 %v1546, %v760
        %v1596 = vmul.f32 %v1551, %v760
        %v1597 = vmul.f32 %v1554, %v760
        %v1598 = vmul.f32 %v1559, %v760
        %v1599 = vmul.f32 %v1562, %v760
        %v1600 = vmul.f32 %v1567, %v760
        %v1601 = vadd.f32 %v1572, %v796
        %v1602 = vadd.f32 %v1573, %v796
        %v1603 = vadd.f32 %v1574, %v796
        %v1604 = vadd.f32 %v1575, %v796
        %v1605 = vadd.f32 %v1576, %v796
        %v1606 = vadd.f32 %v1577, %v796
        %v1607 = vadd.f32 %v1578, %v796
        %v1608 = vadd.f32 %v1579, %v796
        %v1609 = vadd.f32 %v1580, %v796
        %v1610 = vadd.f32 %v1581, %v796
        %v1611 = vadd.f32 %v1582, %v796
        %v1612 = vadd.f32 %v1583, %v796
        %v1613 = vadd.f32 %v1584, %v796
        %v1614 = vadd.f32 %v1585, %v796
        %v1615 = vadd.f32 %v1586, %v796
        %v1616 = vadd.f32 %v1587, %v796
        %v1617 = vadd.f32 %v1588, %v796
        %v1618 = vadd.f32 %v1589, %v796
        %v1619 = vadd.f32 %v1590, %v796
        %v1620 = vadd.f32 %v1591, %v796
        %v1621 = vadd.f32 %v1592, %v796
        %v1622 = vadd.f32 %v1593, %v796
        %v1623 = vadd.f32 %v1594, %v796
        %v1624 = vadd.f32 %v1595, %v796
        %v1625 = vadd.f32 %v1596, %v796
        %v1626 = vadd.f32 %v1597, %v796
        %v1627 = vadd.f32 %v1598, %v796
        %v1628 = vadd.f32 %v1599, %v796
        %v1629 = vadd.f32 %v1600, %v796
        %v1630 = vmax.f32 %v1601, 0.0
        %v1631 = vmax.f32 %v1602, 0.0
        %v1632 = vmax.f32 %v1603, 0.0
        %v1633 = vmax.f32 %v1604, 0.0
        %v1634 = vmax.f32 %v1605, 0.0
        %v1635 = vmax.f32 %v1606, 0.0
        %v1636 = vmax.f32 %v1607, 0.0
        %v1637 = vmax.f32 %v1608, 0.0
        %v1638 = vmax.f32 %v1609, 0.0
        %v1639 = vmax.f32 %v1610, 0.0
        %v1640 = vmax.f32 %v1611, 0.0
        %v1641 = vmax.f32 %v1612, 0.0
        %v1642 = vmax.f32 %v1613, 0.0
        %v1643 = vmax.f32 %v1614, 0.0
        %v1644 = vmax.f32 %v1615, 0.0
        %v1645 = vmax.f32 %v1616, 0.0
        %v1646 = vmax.f32 %v1617, 0.0
        %v1647 = vmax.f32 %v1618, 0.0
        %v1648 = vmax.f32 %v1619, 0.0
        %v1649 = vmax.f32 %v1620, 0.0
        %v1650 = vmax.f32 %v1621, 0.0
        %v1651 = vmax.f32 %v1622, 0.0
        %v1652 = vmax.f32 %v1623, 0.0
        %v1653 = vmax.f32 %v1624, 0.0
        %v1654 = vmax.f32 %v1625, 0.0
        %v1655 = vmax.f32 %v1626, 0.0
        %v1656 = vmax.f32 %v1627, 0.0
        %v1657 = vmax.f32 %v1628, 0.0
        %v1658 = vmax.f32 %v1629, 0.0
        %v1659 = vmax.f32 %v1243, %v1630
        %v1660 = vmax.f32 %v1244, %v1631
        %v1661 = vmax.f32 %v1245, %v1632
        %v1662 = vmax.f32 %v1246, %v1633
        %v1663 = vmax.f32 %v1247, %v1634
        %v1664 = vmax.f32 %v1248, %v1635
        %v1665 = vmax.f32 %v1249, %v1636
        %v1666 = vmax.f32 %v1250, %v1637
        %v1667 = vmax.f32 %v1251, %v1638
        %v1668 = vmax.f32 %v1252, %v1639
        %v1669 = vmax.f32 %v1253, %v1640
        %v1670 = vmax.f32 %v1254, %v1641
        %v1671 = vmax.f32 %v1255, %v1642
        %v1672 = vmax.f32 %v1256, %v1643
        %v1673 = vmax.f32 %v1257, %v1644
        %v1674 = vmax.f32 %v1258, %v1645
        %v1675 = vmax.f32 %v1259, %v1646
        %v1676 = vmax.f32 %v1260, %v1647
        %v1677 = vmax.f32 %v1261, %v1648
        %v1678 = vmax.f32 %v1262, %v1649
        %v1679 = vmax.f32 %v1263, %v1650
        %v1680 = vmax.f32 %v1264, %v1651
        %v1681 = vmax.f32 %v1265, %v1652
        %v1682 = vmax.f32 %v1266, %v1653
        %v1683 = vmax.f32 %v1267, %v1654
        %v1684 = vmax.f32 %v1268, %v1655
        %v1685 = vmax.f32 %v1269, %v1656
        %v1686 = vmax.f32 %v1270, %v1657
        %v1687 = vmax.f32 %v1271, %v1658
        %s1688 = scalar_lea.vmem %s437, 348
        %v1689 = vld [vmem:[%s1688] sm:$0xf]
        %v1690 = vld [vmem:[%s1688 + $0x4] sm:$0xf]
        %v1691 = vld [vmem:[%s1688 + $0x8] sm:$0xf]
        %v1692 = vld [vmem:[%s1688 + $0xc] sm:$0xf]
        %v1693 = vld [vmem:[%s1688 + $0x10] sm:$0xf]
        %v1694 = vld [vmem:[%s1688 + $0x14] sm:$0xf]
        %v1695 = vld [vmem:[%s1688 + $0x18] sm:$0xf]
        %v1696 = vld [vmem:[%s1688 + $0x1c] sm:$0xf]
        %v1697 = vld [vmem:[%s1688 + $0x20] sm:$0xf]
        %v1698 = vld [vmem:[%s1688 + $0x24] sm:$0xf]
        %v1699 = vld [vmem:[%s1688 + $0x28] sm:$0xf]
        %v1700 = vld [vmem:[%s1688 + $0x2c] sm:$0xf]
        %v1701 = vld [vmem:[%s1688 + $0x30] sm:$0xf]
        %v1702 = vld [vmem:[%s1688 + $0x34] sm:$0xf]
        %v1703 = vld [vmem:[%s1688 + $0x38] sm:$0xf]
        %v1704 = vld [vmem:[%s1688 + $0x3c] sm:$0xf]
        %v1705 = vld [vmem:[%s1688 + $0x40] sm:$0xf]
        %v1706 = vld [vmem:[%s1688 + $0x44] sm:$0xf]
        %v1707 = vld [vmem:[%s1688 + $0x48] sm:$0xf]
        %v1708 = vld [vmem:[%s1688 + $0x4c] sm:$0xf]
        %v1709 = vld [vmem:[%s1688 + $0x50] sm:$0xf]
        %v1710 = vld [vmem:[%s1688 + $0x54] sm:$0xf]
        %v1711 = vld [vmem:[%s1688 + $0x58] sm:$0xf]
        %v1712 = vld [vmem:[%s1688 + $0x5c] sm:$0xf]
        %v1713 = vld [vmem:[%s1688 + $0x60] sm:$0xf]
        %v1714 = vld [vmem:[%s1688 + $0x64] sm:$0xf]
        %v1715 = vld [vmem:[%s1688 + $0x68] sm:$0xf]
        %v1716 = vld [vmem:[%s1688 + $0x6c] sm:$0xf]
        %v1717 = vld [vmem:[%s1688 + $0x70] sm:$0x1]
        %v1747 = vunpack.c.l.b16 %v1689
        %v1748 = vunpack.c.l.b16 %v1690
        %v1749 = vunpack.c.l.b16 %v1691
        %v1750 = vunpack.c.l.b16 %v1692
        %v1751 = vunpack.c.l.b16 %v1693
        %v1752 = vunpack.c.l.b16 %v1694
        %v1753 = vunpack.c.l.b16 %v1695
        %v1754 = vunpack.c.l.b16 %v1696
        %v1755 = vunpack.c.l.b16 %v1697
        %v1756 = vunpack.c.l.b16 %v1698
        %v1757 = vunpack.c.l.b16 %v1699
        %v1758 = vunpack.c.l.b16 %v1700
        %v1759 = vunpack.c.l.b16 %v1701
        %v1760 = vunpack.c.l.b16 %v1702
        %v1761 = vunpack.c.l.b16 %v1703
        %v1762 = vunpack.c.l.b16 %v1704
        %v1763 = vunpack.c.l.b16 %v1705
        %v1764 = vunpack.c.l.b16 %v1706
        %v1765 = vunpack.c.l.b16 %v1707
        %v1766 = vunpack.c.l.b16 %v1708
        %v1767 = vunpack.c.l.b16 %v1709
        %v1768 = vunpack.c.l.b16 %v1710
        %v1769 = vunpack.c.l.b16 %v1711
        %v1770 = vunpack.c.l.b16 %v1712
        %v1771 = vunpack.c.l.b16 %v1713
        %v1772 = vunpack.c.l.b16 %v1714
        %v1773 = vunpack.c.l.b16 %v1715
        %v1774 = vunpack.c.l.b16 %v1716
        %v1775 = vunpack.c.l.b16 %v1717
        %v1776 = vpack.c.b16 %v1748, %v1747
        %v1777 = vpack.c.b16 %v1750, %v1749
        %v1778 = vpack.c.b16 %v1752, %v1751
        %v1779 = vpack.c.b16 %v1754, %v1753
        %v1780 = vpack.c.b16 %v1756, %v1755
        %v1781 = vpack.c.b16 %v1758, %v1757
        %v1782 = vpack.c.b16 %v1760, %v1759
        %v1783 = vpack.c.b16 %v1762, %v1761
        %v1784 = vpack.c.b16 %v1764, %v1763
        %v1785 = vpack.c.b16 %v1766, %v1765
        %v1786 = vpack.c.b16 %v1768, %v1767
        %v1787 = vpack.c.b16 %v1770, %v1769
        %v1788 = vpack.c.b16 %v1772, %v1771
        %v1789 = vpack.c.b16 %v1774, %v1773
        %v1790 = vpack.c.b16 %v1775, %v1775
        %v1792 = vsel %vm557, %v1776, 0
        %v1795 = vsel %vm557, %v1777, 0
        %v1798 = vsel %vm557, %v1778, 0
        %v1801 = vsel %vm557, %v1779, 0
        %v1804 = vsel %vm557, %v1780, 0
        %v1807 = vsel %vm557, %v1781, 0
        %v1810 = vsel %vm557, %v1782, 0
        %v1813 = vsel %vm557, %v1783, 0
        %v1816 = vsel %vm557, %v1784, 0
        %v1819 = vsel %vm557, %v1785, 0
        %v1822 = vsel %vm557, %v1786, 0
        %v1825 = vsel %vm557, %v1787, 0
        %v1828 = vsel %vm557, %v1788, 0
        %v1831 = vsel %vm557, %v1789, 0
        %v1834 = vsel %vm557, %v1790, 0
        %1836 = vmatprep.subr.bf16.mxu0 0
        %1837 = vmatpush1.bf16.msra.mxu0 %v553
        %1838 = vmatprep.subr.bf16.mxu0 0
        %1839 = vmatpush1.bf16.msra.mxu0 %v554
        %1840 = vmatprep.subr.bf16.mxu0 0
        %1841 = vmatpush1.bf16.msra.mxu0 0
        %1842 = vmatprep.subr.bf16.mxu0 0
        %1843 = vmatpush1.bf16.msra.mxu0 0
        %1844 = vmatprep.subr.bf16.mxu0 0
        %1845 = vmatpush1.bf16.msra.mxu0 0
        %1846 = vmatprep.subr.bf16.mxu0 0
        %1847 = vmatpush1.bf16.msra.mxu0 0
        %1848 = vmatprep.subr.bf16.mxu0 0
        %1849 = vmatpush1.bf16.msra.mxu0 0
        %1850 = vmatprep.subr.bf16.mxu0 0
        %1851 = vmatpush1.bf16.msra.mxu0 0
        %1852 = vmatprep.subr.bf16.mxu0 0
        %1853 = vmatpush1.bf16.msra.mxu0 0
        %1854 = vmatprep.subr.bf16.mxu0 0
        %1855 = vmatpush1.bf16.msra.mxu0 0
        %1856 = vmatprep.subr.bf16.mxu0 0
        %1857 = vmatpush1.bf16.msra.mxu0 0
        %1858 = vmatprep.subr.bf16.mxu0 0
        %1859 = vmatpush1.bf16.msra.mxu0 0
        %1860 = vmatprep.subr.bf16.mxu0 0
        %1861 = vmatpush1.bf16.msra.mxu0 0
        %1862 = vmatprep.subr.bf16.mxu0 0
        %1863 = vmatpush1.bf16.msra.mxu0 0
        %1864 = vmatprep.subr.bf16.mxu0 0
        %1865 = vmatpush1.bf16.msra.mxu0 0
        %1866 = vmatprep.subr.bf16.mxu0 0
        %1867 = vmatpush1.bf16.msra.mxu0 0
        %1868 = vmatprep.mubr.bf16.mxu0 0
        %1869 = vmatmul.mubr.bf16.gmra.mrb[0].mxu0 %v1792
        %v1870 = vpop.f32.mrb[0].mxu0
        %v1871 = vadd.f32 0.0, %v1870
        %v1872 = vpop.f32.mrb[0].mxu0
        %v1873 = vpop.f32.mrb[0].mxu0
        %v1874 = vadd.f32 0.0, %v1873
        %v1875 = vpop.f32.mrb[0].mxu0
        %1876 = vmatprep.mubr.bf16.mxu0 0
        %1877 = vmatmul.mubr.bf16.gmra.mrb[0].mxu0 %v1795
        %v1878 = vpop.f32.mrb[0].mxu0
        %v1879 = vadd.f32 0.0, %v1878
        %v1880 = vpop.f32.mrb[0].mxu0
        %v1881 = vpop.f32.mrb[0].mxu0
        %v1882 = vadd.f32 0.0, %v1881
        %v1883 = vpop.f32.mrb[0].mxu0
        %1884 = vmatprep.mubr.bf16.mxu0 0
        %1885 = vmatmul.mubr.bf16.gmra.mrb[0].mxu0 %v1798
        %v1886 = vpop.f32.mrb[0].mxu0
        %v1887 = vadd.f32 0.0, %v1886
        %v1888 = vpop.f32.mrb[0].mxu0
        %v1889 = vpop.f32.mrb[0].mxu0
        %v1890 = vadd.f32 0.0, %v1889
        %v1891 = vpop.f32.mrb[0].mxu0
        %1892 = vmatprep.mubr.bf16.mxu0 0
        %1893 = vmatmul.mubr.bf16.gmra.mrb[0].mxu0 %v1801
        %v1894 = vpop.f32.mrb[0].mxu0
        %v1895 = vadd.f32 0.0, %v1894
        %v1896 = vpop.f32.mrb[0].mxu0
        %v1897 = vpop.f32.mrb[0].mxu0
        %v1898 = vadd.f32 0.0, %v1897
        %v1899 = vpop.f32.mrb[0].mxu0
        %1900 = vmatprep.mubr.bf16.mxu0 0
        %1901 = vmatmul.mubr.bf16.gmra.mrb[0].mxu0 %v1804
        %v1902 = vpop.f32.mrb[0].mxu0
        %v1903 = vadd.f32 0.0, %v1902
        %v1904 = vpop.f32.mrb[0].mxu0
        %v1905 = vpop.f32.mrb[0].mxu0
        %v1906 = vadd.f32 0.0, %v1905
        %v1907 = vpop.f32.mrb[0].mxu0
        %1908 = vmatprep.mubr.bf16.mxu0 0
        %1909 = vmatmul.mubr.bf16.gmra.mrb[0].mxu0 %v1807
        %v1910 = vpop.f32.mrb[0].mxu0
        %v1911 = vadd.f32 0.0, %v1910
        %v1912 = vpop.f32.mrb[0].mxu0
        %v1913 = vpop.f32.mrb[0].mxu0
        %v1914 = vadd.f32 0.0, %v1913
        %v1915 = vpop.f32.mrb[0].mxu0
        %1916 = vmatprep.mubr.bf16.mxu0 0
        %1917 = vmatmul.mubr.bf16.gmra.mrb[0].mxu0 %v1810
        %v1918 = vpop.f32.mrb[0].mxu0
        %v1919 = vadd.f32 0.0, %v1918
        %v1920 = vpop.f32.mrb[0].mxu0
        %v1921 = vpop.f32.mrb[0].mxu0
        %v1922 = vadd.f32 0.0, %v1921
        %v1923 = vpop.f32.mrb[0].mxu0
        %1924 = vmatprep.mubr.bf16.mxu0 0
        %1925 = vmatmul.mubr.bf16.gmra.mrb[0].mxu0 %v1813
        %v1926 = vpop.f32.mrb[0].mxu0
        %v1927 = vadd.f32 0.0, %v1926
        %v1928 = vpop.f32.mrb[0].mxu0
        %v1929 = vpop.f32.mrb[0].mxu0
        %v1930 = vadd.f32 0.0, %v1929
        %v1931 = vpop.f32.mrb[0].mxu0
        %1932 = vmatprep.mubr.bf16.mxu0 0
        %1933 = vmatmul.mubr.bf16.gmra.mrb[0].mxu0 %v1816
        %v1934 = vpop.f32.mrb[0].mxu0
        %v1935 = vadd.f32 0.0, %v1934
        %v1936 = vpop.f32.mrb[0].mxu0
        %v1937 = vpop.f32.mrb[0].mxu0
        %v1938 = vadd.f32 0.0, %v1937
        %v1939 = vpop.f32.mrb[0].mxu0
        %1940 = vmatprep.mubr.bf16.mxu0 0
        %1941 = vmatmul.mubr.bf16.gmra.mrb[0].mxu0 %v1819
        %v1942 = vpop.f32.mrb[0].mxu0
        %v1943 = vadd.f32 0.0, %v1942
        %v1944 = vpop.f32.mrb[0].mxu0
        %v1945 = vpop.f32.mrb[0].mxu0
        %v1946 = vadd.f32 0.0, %v1945
        %v1947 = vpop.f32.mrb[0].mxu0
        %1948 = vmatprep.mubr.bf16.mxu0 0
        %1949 = vmatmul.mubr.bf16.gmra.mrb[0].mxu0 %v1822
        %v1950 = vpop.f32.mrb[0].mxu0
        %v1951 = vadd.f32 0.0, %v1950
        %v1952 = vpop.f32.mrb[0].mxu0
        %v1953 = vpop.f32.mrb[0].mxu0
        %v1954 = vadd.f32 0.0, %v1953
        %v1955 = vpop.f32.mrb[0].mxu0
        %1956 = vmatprep.mubr.bf16.mxu0 0
        %1957 = vmatmul.mubr.bf16.gmra.mrb[0].mxu0 %v1825
        %v1958 = vpop.f32.mrb[0].mxu0
        %v1959 = vadd.f32 0.0, %v1958
        %v1960 = vpop.f32.mrb[0].mxu0
        %v1961 = vpop.f32.mrb[0].mxu0
        %v1962 = vadd.f32 0.0, %v1961
        %v1963 = vpop.f32.mrb[0].mxu0
        %1964 = vmatprep.mubr.bf16.mxu0 0
        %1965 = vmatmul.mubr.bf16.gmra.mrb[0].mxu0 %v1828
        %v1966 = vpop.f32.mrb[0].mxu0
        %v1967 = vadd.f32 0.0, %v1966
        %v1968 = vpop.f32.mrb[0].mxu0
        %v1969 = vpop.f32.mrb[0].mxu0
        %v1970 = vadd.f32 0.0, %v1969
        %v1971 = vpop.f32.mrb[0].mxu0
        %1972 = vmatprep.mubr.bf16.mxu0 0
        %1973 = vmatmul.mubr.bf16.gmra.mrb[0].mxu0 %v1831
        %v1974 = vpop.f32.mrb[0].mxu0
        %v1975 = vadd.f32 0.0, %v1974
        %v1976 = vpop.f32.mrb[0].mxu0
        %v1977 = vpop.f32.mrb[0].mxu0
        %v1978 = vadd.f32 0.0, %v1977
        %v1979 = vpop.f32.mrb[0].mxu0
        %1980 = vmatprep.mubr.bf16.mxu0 0
        %1981 = vmatmul.mubr.bf16.gmra.mrb[0].mxu0 %v1834
        %v1982 = vpop.f32.mrb[0].mxu0
        %v1983 = vadd.f32 0.0, %v1982
        %v1984 = vpop.f32.mrb[0].mxu0
        %v1985 = vpop.f32.mrb[0].mxu0
        %v1986 = vpop.f32.mrb[0].mxu0
        %1987 = vdwg.mxu0
        %v1988 = vmul.f32 %v1871, %v760
        %v1989 = vmul.f32 %v1874, %v760
        %v1990 = vmul.f32 %v1879, %v760
        %v1991 = vmul.f32 %v1882, %v760
        %v1992 = vmul.f32 %v1887, %v760
        %v1993 = vmul.f32 %v1890, %v760
        %v1994 = vmul.f32 %v1895, %v760
        %v1995 = vmul.f32 %v1898, %v760
        %v1996 = vmul.f32 %v1903, %v760
        %v1997 = vmul.f32 %v1906, %v760
        %v1998 = vmul.f32 %v1911, %v760
        %v1999 = vmul.f32 %v1914, %v760
        %v2000 = vmul.f32 %v1919, %v760
        %v2001 = vmul.f32 %v1922, %v760
        %v2002 = vmul.f32 %v1927, %v760
        %v2003 = vmul.f32 %v1930, %v760
        %v2004 = vmul.f32 %v1935, %v760
        %v2005 = vmul.f32 %v1938, %v760
        %v2006 = vmul.f32 %v1943, %v760
        %v2007 = vmul.f32 %v1946, %v760
        %v2008 = vmul.f32 %v1951, %v760
        %v2009 = vmul.f32 %v1954, %v760
        %v2010 = vmul.f32 %v1959, %v760
        %v2011 = vmul.f32 %v1962, %v760
        %v2012 = vmul.f32 %v1967, %v760
        %v2013 = vmul.f32 %v1970, %v760
        %v2014 = vmul.f32 %v1975, %v760
        %v2015 = vmul.f32 %v1978, %v760
        %v2016 = vmul.f32 %v1983, %v760
        %v2017 = vadd.f32 %v1988, %v796
        %v2018 = vadd.f32 %v1989, %v796
        %v2019 = vadd.f32 %v1990, %v796
        %v2020 = vadd.f32 %v1991, %v796
        %v2021 = vadd.f32 %v1992, %v796
        %v2022 = vadd.f32 %v1993, %v796
        %v2023 = vadd.f32 %v1994, %v796
        %v2024 = vadd.f32 %v1995, %v796
        %v2025 = vadd.f32 %v1996, %v796
        %v2026 = vadd.f32 %v1997, %v796
        %v2027 = vadd.f32 %v1998, %v796
        %v2028 = vadd.f32 %v1999, %v796
        %v2029 = vadd.f32 %v2000, %v796
        %v2030 = vadd.f32 %v2001, %v796
        %v2031 = vadd.f32 %v2002, %v796
        %v2032 = vadd.f32 %v2003, %v796
        %v2033 = vadd.f32 %v2004, %v796
        %v2034 = vadd.f32 %v2005, %v796
        %v2035 = vadd.f32 %v2006, %v796
        %v2036 = vadd.f32 %v2007, %v796
        %v2037 = vadd.f32 %v2008, %v796
        %v2038 = vadd.f32 %v2009, %v796
        %v2039 = vadd.f32 %v2010, %v796
        %v2040 = vadd.f32 %v2011, %v796
        %v2041 = vadd.f32 %v2012, %v796
        %v2042 = vadd.f32 %v2013, %v796
        %v2043 = vadd.f32 %v2014, %v796
        %v2044 = vadd.f32 %v2015, %v796
        %v2045 = vadd.f32 %v2016, %v796
        %v2046 = vmax.f32 %v2017, 0.0
        %v2047 = vmax.f32 %v2018, 0.0
        %v2048 = vmax.f32 %v2019, 0.0
        %v2049 = vmax.f32 %v2020, 0.0
        %v2050 = vmax.f32 %v2021, 0.0
        %v2051 = vmax.f32 %v2022, 0.0
        %v2052 = vmax.f32 %v2023, 0.0
        %v2053 = vmax.f32 %v2024, 0.0
        %v2054 = vmax.f32 %v2025, 0.0
        %v2055 = vmax.f32 %v2026, 0.0
        %v2056 = vmax.f32 %v2027, 0.0
        %v2057 = vmax.f32 %v2028, 0.0
        %v2058 = vmax.f32 %v2029, 0.0
        %v2059 = vmax.f32 %v2030, 0.0
        %v2060 = vmax.f32 %v2031, 0.0
        %v2061 = vmax.f32 %v2032, 0.0
        %v2062 = vmax.f32 %v2033, 0.0
        %v2063 = vmax.f32 %v2034, 0.0
        %v2064 = vmax.f32 %v2035, 0.0
        %v2065 = vmax.f32 %v2036, 0.0
        %v2066 = vmax.f32 %v2037, 0.0
        %v2067 = vmax.f32 %v2038, 0.0
        %v2068 = vmax.f32 %v2039, 0.0
        %v2069 = vmax.f32 %v2040, 0.0
        %v2070 = vmax.f32 %v2041, 0.0
        %v2071 = vmax.f32 %v2042, 0.0
        %v2072 = vmax.f32 %v2043, 0.0
        %v2073 = vmax.f32 %v2044, 0.0
        %v2074 = vmax.f32 %v2045, 0.0
        %v2075 = vmax.f32 %v1659, %v2046
        %v2076 = vmax.f32 %v1660, %v2047
        %v2077 = vmax.f32 %v1661, %v2048
        %v2078 = vmax.f32 %v1662, %v2049
        %v2079 = vmax.f32 %v1663, %v2050
        %v2080 = vmax.f32 %v1664, %v2051
        %v2081 = vmax.f32 %v1665, %v2052
        %v2082 = vmax.f32 %v1666, %v2053
        %v2083 = vmax.f32 %v1667, %v2054
        %v2084 = vmax.f32 %v1668, %v2055
        %v2085 = vmax.f32 %v1669, %v2056
        %v2086 = vmax.f32 %v1670, %v2057
        %v2087 = vmax.f32 %v1671, %v2058
        %v2088 = vmax.f32 %v1672, %v2059
        %v2089 = vmax.f32 %v1673, %v2060
        %v2090 = vmax.f32 %v1674, %v2061
        %v2091 = vmax.f32 %v1675, %v2062
        %v2092 = vmax.f32 %v1676, %v2063
        %v2093 = vmax.f32 %v1677, %v2064
        %v2094 = vmax.f32 %v1678, %v2065
        %v2095 = vmax.f32 %v1679, %v2066
        %v2096 = vmax.f32 %v1680, %v2067
        %v2097 = vmax.f32 %v1681, %v2068
        %v2098 = vmax.f32 %v1682, %v2069
        %v2099 = vmax.f32 %v1683, %v2070
        %v2100 = vmax.f32 %v1684, %v2071
        %v2101 = vmax.f32 %v1685, %v2072
        %v2102 = vmax.f32 %v1686, %v2073
        %v2103 = vmax.f32 %v1687, %v2074
        %s2104 = scalar_lea.vmem %s437, 464
        %v2105 = vld [vmem:[%s2104] sm:$0xf]
        %v2106 = vld [vmem:[%s2104 + $0x4] sm:$0xf]
        %v2107 = vld [vmem:[%s2104 + $0x8] sm:$0xf]
        %v2108 = vld [vmem:[%s2104 + $0xc] sm:$0xf]
        %v2109 = vld [vmem:[%s2104 + $0x10] sm:$0xf]
        %v2110 = vld [vmem:[%s2104 + $0x14] sm:$0xf]
        %v2111 = vld [vmem:[%s2104 + $0x18] sm:$0xf]
        %v2112 = vld [vmem:[%s2104 + $0x1c] sm:$0xf]
        %v2113 = vld [vmem:[%s2104 + $0x20] sm:$0xf]
        %v2114 = vld [vmem:[%s2104 + $0x24] sm:$0xf]
        %v2115 = vld [vmem:[%s2104 + $0x28] sm:$0xf]
        %v2116 = vld [vmem:[%s2104 + $0x2c] sm:$0xf]
        %v2117 = vld [vmem:[%s2104 + $0x30] sm:$0xf]
        %v2118 = vld [vmem:[%s2104 + $0x34] sm:$0xf]
        %v2119 = vld [vmem:[%s2104 + $0x38] sm:$0xf]
        %v2120 = vld [vmem:[%s2104 + $0x3c] sm:$0xf]
        %v2121 = vld [vmem:[%s2104 + $0x40] sm:$0xf]
        %v2122 = vld [vmem:[%s2104 + $0x44] sm:$0xf]
        %v2123 = vld [vmem:[%s2104 + $0x48] sm:$0xf]
        %v2124 = vld [vmem:[%s2104 + $0x4c] sm:$0xf]
        %v2125 = vld [vmem:[%s2104 + $0x50] sm:$0xf]
        %v2126 = vld [vmem:[%s2104 + $0x54] sm:$0xf]
        %v2127 = vld [vmem:[%s2104 + $0x58] sm:$0xf]
        %v2128 = vld [vmem:[%s2104 + $0x5c] sm:$0xf]
        %v2129 = vld [vmem:[%s2104 + $0x60] sm:$0xf]
        %v2130 = vld [vmem:[%s2104 + $0x64] sm:$0xf]
        %v2131 = vld [vmem:[%s2104 + $0x68] sm:$0xf]
        %v2132 = vld [vmem:[%s2104 + $0x6c] sm:$0xf]
        %v2133 = vld [vmem:[%s2104 + $0x70] sm:$0x1]
        %v2163 = vunpack.c.l.b16 %v2105
        %v2164 = vunpack.c.l.b16 %v2106
        %v2165 = vunpack.c.l.b16 %v2107
        %v2166 = vunpack.c.l.b16 %v2108
        %v2167 = vunpack.c.l.b16 %v2109
        %v2168 = vunpack.c.l.b16 %v2110
        %v2169 = vunpack.c.l.b16 %v2111
        %v2170 = vunpack.c.l.b16 %v2112
        %v2171 = vunpack.c.l.b16 %v2113
        %v2172 = vunpack.c.l.b16 %v2114
        %v2173 = vunpack.c.l.b16 %v2115
        %v2174 = vunpack.c.l.b16 %v2116
        %v2175 = vunpack.c.l.b16 %v2117
        %v2176 = vunpack.c.l.b16 %v2118
        %v2177 = vunpack.c.l.b16 %v2119
        %v2178 = vunpack.c.l.b16 %v2120
        %v2179 = vunpack.c.l.b16 %v2121
        %v2180 = vunpack.c.l.b16 %v2122
        %v2181 = vunpack.c.l.b16 %v2123
        %v2182 = vunpack.c.l.b16 %v2124
        %v2183 = vunpack.c.l.b16 %v2125
        %v2184 = vunpack.c.l.b16 %v2126
        %v2185 = vunpack.c.l.b16 %v2127
        %v2186 = vunpack.c.l.b16 %v2128
        %v2187 = vunpack.c.l.b16 %v2129
        %v2188 = vunpack.c.l.b16 %v2130
        %v2189 = vunpack.c.l.b16 %v2131
        %v2190 = vunpack.c.l.b16 %v2132
        %v2191 = vunpack.c.l.b16 %v2133
        %v2192 = vpack.c.b16 %v2164, %v2163
        %v2193 = vpack.c.b16 %v2166, %v2165
        %v2194 = vpack.c.b16 %v2168, %v2167
        %v2195 = vpack.c.b16 %v2170, %v2169
        %v2196 = vpack.c.b16 %v2172, %v2171
        %v2197 = vpack.c.b16 %v2174, %v2173
        %v2198 = vpack.c.b16 %v2176, %v2175
        %v2199 = vpack.c.b16 %v2178, %v2177
        %v2200 = vpack.c.b16 %v2180, %v2179
        %v2201 = vpack.c.b16 %v2182, %v2181
        %v2202 = vpack.c.b16 %v2184, %v2183
        %v2203 = vpack.c.b16 %v2186, %v2185
        %v2204 = vpack.c.b16 %v2188, %v2187
        %v2205 = vpack.c.b16 %v2190, %v2189
        %v2206 = vpack.c.b16 %v2191, %v2191
        %v2208 = vsel %vm557, %v2192, 0
        %v2211 = vsel %vm557, %v2193, 0
        %v2214 = vsel %vm557, %v2194, 0
        %v2217 = vsel %vm557, %v2195, 0
        %v2220 = vsel %vm557, %v2196, 0
        %v2223 = vsel %vm557, %v2197, 0
        %v2226 = vsel %vm557, %v2198, 0
        %v2229 = vsel %vm557, %v2199, 0
        %v2232 = vsel %vm557, %v2200, 0
        %v2235 = vsel %vm557, %v2201, 0
        %v2238 = vsel %vm557, %v2202, 0
        %v2241 = vsel %vm557, %v2203, 0
        %v2244 = vsel %vm557, %v2204, 0
        %v2247 = vsel %vm557, %v2205, 0
        %v2250 = vsel %vm557, %v2206, 0
        %2252 = vmatprep.subr.bf16.mxu0 0
        %2253 = vmatpush1.bf16.msra.mxu0 %v553
        %2254 = vmatprep.subr.bf16.mxu0 0
        %2255 = vmatpush1.bf16.msra.mxu0 %v554
        %2256 = vmatprep.subr.bf16.mxu0 0
        %2257 = vmatpush1.bf16.msra.mxu0 0
        %2258 = vmatprep.subr.bf16.mxu0 0
        %2259 = vmatpush1.bf16.msra.mxu0 0
        %2260 = vmatprep.subr.bf16.mxu0 0
        %2261 = vmatpush1.bf16.msra.mxu0 0
        %2262 = vmatprep.subr.bf16.mxu0 0
        %2263 = vmatpush1.bf16.msra.mxu0 0
        %2264 = vmatprep.subr.bf16.mxu0 0
        %2265 = vmatpush1.bf16.msra.mxu0 0
        %2266 = vmatprep.subr.bf16.mxu0 0
        %2267 = vmatpush1.bf16.msra.mxu0 0
        %2268 = vmatprep.subr.bf16.mxu0 0
        %2269 = vmatpush1.bf16.msra.mxu0 0
        %2270 = vmatprep.subr.bf16.mxu0 0
        %2271 = vmatpush1.bf16.msra.mxu0 0
        %2272 = vmatprep.subr.bf16.mxu0 0
        %2273 = vmatpush1.bf16.msra.mxu0 0
        %2274 = vmatprep.subr.bf16.mxu0 0
        %2275 = vmatpush1.bf16.msra.mxu0 0
        %2276 = vmatprep.subr.bf16.mxu0 0
        %2277 = vmatpush1.bf16.msra.mxu0 0
        %2278 = vmatprep.subr.bf16.mxu0 0
        %2279 = vmatpush1.bf16.msra.mxu0 0
        %2280 = vmatprep.subr.bf16.mxu0 0
        %2281 = vmatpush1.bf16.msra.mxu0 0
        %2282 = vmatprep.subr.bf16.mxu0 0
        %2283 = vmatpush1.bf16.msra.mxu0 0
        %2284 = vmatprep.mubr.bf16.mxu0 0
        %2285 = vmatmul.mubr.bf16.gmra.mrb[0].mxu0 %v2208
        %v2286 = vpop.f32.mrb[0].mxu0
        %v2287 = vadd.f32 0.0, %v2286
        %v2288 = vpop.f32.mrb[0].mxu0
        %v2289 = vpop.f32.mrb[0].mxu0
        %v2290 = vadd.f32 0.0, %v2289
        %v2291 = vpop.f32.mrb[0].mxu0
        %2292 = vmatprep.mubr.bf16.mxu0 0
        %2293 = vmatmul.mubr.bf16.gmra.mrb[0].mxu0 %v2211
        %v2294 = vpop.f32.mrb[0].mxu0
        %v2295 = vadd.f32 0.0, %v2294
        %v2296 = vpop.f32.mrb[0].mxu0
        %v2297 = vpop.f32.mrb[0].mxu0
        %v2298 = vadd.f32 0.0, %v2297
        %v2299 = vpop.f32.mrb[0].mxu0
        %2300 = vmatprep.mubr.bf16.mxu0 0
        %2301 = vmatmul.mubr.bf16.gmra.mrb[0].mxu0 %v2214
        %v2302 = vpop.f32.mrb[0].mxu0
        %v2303 = vadd.f32 0.0, %v2302
        %v2304 = vpop.f32.mrb[0].mxu0
        %v2305 = vpop.f32.mrb[0].mxu0
        %v2306 = vadd.f32 0.0, %v2305
        %v2307 = vpop.f32.mrb[0].mxu0
        %2308 = vmatprep.mubr.bf16.mxu0 0
        %2309 = vmatmul.mubr.bf16.gmra.mrb[0].mxu0 %v2217
        %v2310 = vpop.f32.mrb[0].mxu0
        %v2311 = vadd.f32 0.0, %v2310
        %v2312 = vpop.f32.mrb[0].mxu0
        %v2313 = vpop.f32.mrb[0].mxu0
        %v2314 = vadd.f32 0.0, %v2313
        %v2315 = vpop.f32.mrb[0].mxu0
        %2316 = vmatprep.mubr.bf16.mxu0 0
        %2317 = vmatmul.mubr.bf16.gmra.mrb[0].mxu0 %v2220
        %v2318 = vpop.f32.mrb[0].mxu0
        %v2319 = vadd.f32 0.0, %v2318
        %v2320 = vpop.f32.mrb[0].mxu0
        %v2321 = vpop.f32.mrb[0].mxu0
        %v2322 = vadd.f32 0.0, %v2321
        %v2323 = vpop.f32.mrb[0].mxu0
        %2324 = vmatprep.mubr.bf16.mxu0 0
        %2325 = vmatmul.mubr.bf16.gmra.mrb[0].mxu0 %v2223
        %v2326 = vpop.f32.mrb[0].mxu0
        %v2327 = vadd.f32 0.0, %v2326
        %v2328 = vpop.f32.mrb[0].mxu0
        %v2329 = vpop.f32.mrb[0].mxu0
        %v2330 = vadd.f32 0.0, %v2329
        %v2331 = vpop.f32.mrb[0].mxu0
        %2332 = vmatprep.mubr.bf16.mxu0 0
        %2333 = vmatmul.mubr.bf16.gmra.mrb[0].mxu0 %v2226
        %v2334 = vpop.f32.mrb[0].mxu0
        %v2335 = vadd.f32 0.0, %v2334
        %v2336 = vpop.f32.mrb[0].mxu0
        %v2337 = vpop.f32.mrb[0].mxu0
        %v2338 = vadd.f32 0.0, %v2337
        %v2339 = vpop.f32.mrb[0].mxu0
        %2340 = vmatprep.mubr.bf16.mxu0 0
        %2341 = vmatmul.mubr.bf16.gmra.mrb[0].mxu0 %v2229
        %v2342 = vpop.f32.mrb[0].mxu0
        %v2343 = vadd.f32 0.0, %v2342
        %v2344 = vpop.f32.mrb[0].mxu0
        %v2345 = vpop.f32.mrb[0].mxu0
        %v2346 = vadd.f32 0.0, %v2345
        %v2347 = vpop.f32.mrb[0].mxu0
        %2348 = vmatprep.mubr.bf16.mxu0 0
        %2349 = vmatmul.mubr.bf16.gmra.mrb[0].mxu0 %v2232
        %v2350 = vpop.f32.mrb[0].mxu0
        %v2351 = vadd.f32 0.0, %v2350
        %v2352 = vpop.f32.mrb[0].mxu0
        %v2353 = vpop.f32.mrb[0].mxu0
        %v2354 = vadd.f32 0.0, %v2353
        %v2355 = vpop.f32.mrb[0].mxu0
        %2356 = vmatprep.mubr.bf16.mxu0 0
        %2357 = vmatmul.mubr.bf16.gmra.mrb[0].mxu0 %v2235
        %v2358 = vpop.f32.mrb[0].mxu0
        %v2359 = vadd.f32 0.0, %v2358
        %v2360 = vpop.f32.mrb[0].mxu0
        %v2361 = vpop.f32.mrb[0].mxu0
        %v2362 = vadd.f32 0.0, %v2361
        %v2363 = vpop.f32.mrb[0].mxu0
        %2364 = vmatprep.mubr.bf16.mxu0 0
        %2365 = vmatmul.mubr.bf16.gmra.mrb[0].mxu0 %v2238
        %v2366 = vpop.f32.mrb[0].mxu0
        %v2367 = vadd.f32 0.0, %v2366
        %v2368 = vpop.f32.mrb[0].mxu0
        %v2369 = vpop.f32.mrb[0].mxu0
        %v2370 = vadd.f32 0.0, %v2369
        %v2371 = vpop.f32.mrb[0].mxu0
        %2372 = vmatprep.mubr.bf16.mxu0 0
        %2373 = vmatmul.mubr.bf16.gmra.mrb[0].mxu0 %v2241
        %v2374 = vpop.f32.mrb[0].mxu0
        %v2375 = vadd.f32 0.0, %v2374
        %v2376 = vpop.f32.mrb[0].mxu0
        %v2377 = vpop.f32.mrb[0].mxu0
        %v2378 = vadd.f32 0.0, %v2377
        %v2379 = vpop.f32.mrb[0].mxu0
        %2380 = vmatprep.mubr.bf16.mxu0 0
        %2381 = vmatmul.mubr.bf16.gmra.mrb[0].mxu0 %v2244
        %v2382 = vpop.f32.mrb[0].mxu0
        %v2383 = vadd.f32 0.0, %v2382
        %v2384 = vpop.f32.mrb[0].mxu0
        %v2385 = vpop.f32.mrb[0].mxu0
        %v2386 = vadd.f32 0.0, %v2385
        %v2387 = vpop.f32.mrb[0].mxu0
        %2388 = vmatprep.mubr.bf16.mxu0 0
        %2389 = vmatmul.mubr.bf16.gmra.mrb[0].mxu0 %v2247
        %v2390 = vpop.f32.mrb[0].mxu0
        %v2391 = vadd.f32 0.0, %v2390
        %v2392 = vpop.f32.mrb[0].mxu0
        %v2393 = vpop.f32.mrb[0].mxu0
        %v2394 = vadd.f32 0.0, %v2393
        %v2395 = vpop.f32.mrb[0].mxu0
        %2396 = vmatprep.mubr.bf16.mxu0 0
        %2397 = vmatmul.mubr.bf16.gmra.mrb[0].mxu0 %v2250
        %v2398 = vpop.f32.mrb[0].mxu0
        %v2399 = vadd.f32 0.0, %v2398
        %v2400 = vpop.f32.mrb[0].mxu0
        %v2401 = vpop.f32.mrb[0].mxu0
        %v2402 = vpop.f32.mrb[0].mxu0
        %2403 = vdwg.mxu0
        %v2404 = vmul.f32 %v2287, %v760
        %v2405 = vmul.f32 %v2290, %v760
        %v2406 = vmul.f32 %v2295, %v760
        %v2407 = vmul.f32 %v2298, %v760
        %v2408 = vmul.f32 %v2303, %v760
        %v2409 = vmul.f32 %v2306, %v760
        %v2410 = vmul.f32 %v2311, %v760
        %v2411 = vmul.f32 %v2314, %v760
        %v2412 = vmul.f32 %v2319, %v760
        %v2413 = vmul.f32 %v2322, %v760
        %v2414 = vmul.f32 %v2327, %v760
        %v2415 = vmul.f32 %v2330, %v760
        %v2416 = vmul.f32 %v2335, %v760
        %v2417 = vmul.f32 %v2338, %v760
        %v2418 = vmul.f32 %v2343, %v760
        %v2419 = vmul.f32 %v2346, %v760
        %v2420 = vmul.f32 %v2351, %v760
        %v2421 = vmul.f32 %v2354, %v760
        %v2422 = vmul.f32 %v2359, %v760
        %v2423 = vmul.f32 %v2362, %v760
        %v2424 = vmul.f32 %v2367, %v760
        %v2425 = vmul.f32 %v2370, %v760
        %v2426 = vmul.f32 %v2375, %v760
        %v2427 = vmul.f32 %v2378, %v760
        %v2428 = vmul.f32 %v2383, %v760
        %v2429 = vmul.f32 %v2386, %v760
        %v2430 = vmul.f32 %v2391, %v760
        %v2431 = vmul.f32 %v2394, %v760
        %v2432 = vmul.f32 %v2399, %v760
        %v2433 = vadd.f32 %v2404, %v796
        %v2434 = vadd.f32 %v2405, %v796
        %v2435 = vadd.f32 %v2406, %v796
        %v2436 = vadd.f32 %v2407, %v796
        %v2437 = vadd.f32 %v2408, %v796
        %v2438 = vadd.f32 %v2409, %v796
        %v2439 = vadd.f32 %v2410, %v796
        %v2440 = vadd.f32 %v2411, %v796
        %v2441 = vadd.f32 %v2412, %v796
        %v2442 = vadd.f32 %v2413, %v796
        %v2443 = vadd.f32 %v2414, %v796
        %v2444 = vadd.f32 %v2415, %v796
        %v2445 = vadd.f32 %v2416, %v796
        %v2446 = vadd.f32 %v2417, %v796
        %v2447 = vadd.f32 %v2418, %v796
        %v2448 = vadd.f32 %v2419, %v796
        %v2449 = vadd.f32 %v2420, %v796
        %v2450 = vadd.f32 %v2421, %v796
        %v2451 = vadd.f32 %v2422, %v796
        %v2452 = vadd.f32 %v2423, %v796
        %v2453 = vadd.f32 %v2424, %v796
        %v2454 = vadd.f32 %v2425, %v796
        %v2455 = vadd.f32 %v2426, %v796
        %v2456 = vadd.f32 %v2427, %v796
        %v2457 = vadd.f32 %v2428, %v796
        %v2458 = vadd.f32 %v2429, %v796
        %v2459 = vadd.f32 %v2430, %v796
        %v2460 = vadd.f32 %v2431, %v796
        %v2461 = vadd.f32 %v2432, %v796
        %v2462 = vmax.f32 %v2433, 0.0
        %v2463 = vmax.f32 %v2434, 0.0
        %v2464 = vmax.f32 %v2435, 0.0
        %v2465 = vmax.f32 %v2436, 0.0
        %v2466 = vmax.f32 %v2437, 0.0
        %v2467 = vmax.f32 %v2438, 0.0
        %v2468 = vmax.f32 %v2439, 0.0
        %v2469 = vmax.f32 %v2440, 0.0
        %v2470 = vmax.f32 %v2441, 0.0
        %v2471 = vmax.f32 %v2442, 0.0
        %v2472 = vmax.f32 %v2443, 0.0
        %v2473 = vmax.f32 %v2444, 0.0
        %v2474 = vmax.f32 %v2445, 0.0
        %v2475 = vmax.f32 %v2446, 0.0
        %v2476 = vmax.f32 %v2447, 0.0
        %v2477 = vmax.f32 %v2448, 0.0
        %v2478 = vmax.f32 %v2449, 0.0
        %v2479 = vmax.f32 %v2450, 0.0
        %v2480 = vmax.f32 %v2451, 0.0
        %v2481 = vmax.f32 %v2452, 0.0
        %v2482 = vmax.f32 %v2453, 0.0
        %v2483 = vmax.f32 %v2454, 0.0
        %v2484 = vmax.f32 %v2455, 0.0
        %v2485 = vmax.f32 %v2456, 0.0
        %v2486 = vmax.f32 %v2457, 0.0
        %v2487 = vmax.f32 %v2458, 0.0
        %v2488 = vmax.f32 %v2459, 0.0
        %v2489 = vmax.f32 %v2460, 0.0
        %v2490 = vmax.f32 %v2461, 0.0
        %v2491 = vmax.f32 %v2075, %v2462
        %v2492 = vmax.f32 %v2076, %v2463
        %v2493 = vmax.f32 %v2077, %v2464
        %v2494 = vmax.f32 %v2078, %v2465
        %v2495 = vmax.f32 %v2079, %v2466
        %v2496 = vmax.f32 %v2080, %v2467
        %v2497 = vmax.f32 %v2081, %v2468
        %v2498 = vmax.f32 %v2082, %v2469
        %v2499 = vmax.f32 %v2083, %v2470
        %v2500 = vmax.f32 %v2084, %v2471
        %v2501 = vmax.f32 %v2085, %v2472
        %v2502 = vmax.f32 %v2086, %v2473
        %v2503 = vmax.f32 %v2087, %v2474
        %v2504 = vmax.f32 %v2088, %v2475
        %v2505 = vmax.f32 %v2089, %v2476
        %v2506 = vmax.f32 %v2090, %v2477
        %v2507 = vmax.f32 %v2091, %v2478
        %v2508 = vmax.f32 %v2092, %v2479
        %v2509 = vmax.f32 %v2093, %v2480
        %v2510 = vmax.f32 %v2094, %v2481
        %v2511 = vmax.f32 %v2095, %v2482
        %v2512 = vmax.f32 %v2096, %v2483
        %v2513 = vmax.f32 %v2097, %v2484
        %v2514 = vmax.f32 %v2098, %v2485
        %v2515 = vmax.f32 %v2099, %v2486
        %v2516 = vmax.f32 %v2100, %v2487
        %v2517 = vmax.f32 %v2101, %v2488
        %v2518 = vmax.f32 %v2102, %v2489
        %v2519 = vmax.f32 %v2103, %v2490
        %s2520 = scalar_lea.vmem %s437, 580
        %v2521 = vld [vmem:[%s2520] sm:$0xf]
        %v2522 = vld [vmem:[%s2520 + $0x4] sm:$0xf]
        %v2523 = vld [vmem:[%s2520 + $0x8] sm:$0xf]
        %v2524 = vld [vmem:[%s2520 + $0xc] sm:$0xf]
        %v2525 = vld [vmem:[%s2520 + $0x10] sm:$0xf]
        %v2526 = vld [vmem:[%s2520 + $0x14] sm:$0xf]
        %v2527 = vld [vmem:[%s2520 + $0x18] sm:$0xf]
        %v2528 = vld [vmem:[%s2520 + $0x1c] sm:$0xf]
        %v2529 = vld [vmem:[%s2520 + $0x20] sm:$0xf]
        %v2530 = vld [vmem:[%s2520 + $0x24] sm:$0xf]
        %v2531 = vld [vmem:[%s2520 + $0x28] sm:$0xf]
        %v2532 = vld [vmem:[%s2520 + $0x2c] sm:$0xf]
        %v2533 = vld [vmem:[%s2520 + $0x30] sm:$0xf]
        %v2534 = vld [vmem:[%s2520 + $0x34] sm:$0xf]
        %v2535 = vld [vmem:[%s2520 + $0x38] sm:$0xf]
        %v2536 = vld [vmem:[%s2520 + $0x3c] sm:$0xf]
        %v2537 = vld [vmem:[%s2520 + $0x40] sm:$0xf]
        %v2538 = vld [vmem:[%s2520 + $0x44] sm:$0xf]
        %v2539 = vld [vmem:[%s2520 + $0x48] sm:$0xf]
        %v2540 = vld [vmem:[%s2520 + $0x4c] sm:$0xf]
        %v2541 = vld [vmem:[%s2520 + $0x50] sm:$0xf]
        %v2542 = vld [vmem:[%s2520 + $0x54] sm:$0xf]
        %v2543 = vld [vmem:[%s2520 + $0x58] sm:$0xf]
        %v2544 = vld [vmem:[%s2520 + $0x5c] sm:$0xf]
        %v2545 = vld [vmem:[%s2520 + $0x60] sm:$0xf]
        %v2546 = vld [vmem:[%s2520 + $0x64] sm:$0xf]
        %v2547 = vld [vmem:[%s2520 + $0x68] sm:$0xf]
        %v2548 = vld [vmem:[%s2520 + $0x6c] sm:$0xf]
        %v2549 = vld [vmem:[%s2520 + $0x70] sm:$0x1]
        %v2579 = vunpack.c.l.b16 %v2521
        %v2580 = vunpack.c.l.b16 %v2522
        %v2581 = vunpack.c.l.b16 %v2523
        %v2582 = vunpack.c.l.b16 %v2524
        %v2583 = vunpack.c.l.b16 %v2525
        %v2584 = vunpack.c.l.b16 %v2526
        %v2585 = vunpack.c.l.b16 %v2527
        %v2586 = vunpack.c.l.b16 %v2528
        %v2587 = vunpack.c.l.b16 %v2529
        %v2588 = vunpack.c.l.b16 %v2530
        %v2589 = vunpack.c.l.b16 %v2531
        %v2590 = vunpack.c.l.b16 %v2532
        %v2591 = vunpack.c.l.b16 %v2533
        %v2592 = vunpack.c.l.b16 %v2534
        %v2593 = vunpack.c.l.b16 %v2535
        %v2594 = vunpack.c.l.b16 %v2536
        %v2595 = vunpack.c.l.b16 %v2537
        %v2596 = vunpack.c.l.b16 %v2538
        %v2597 = vunpack.c.l.b16 %v2539
        %v2598 = vunpack.c.l.b16 %v2540
        %v2599 = vunpack.c.l.b16 %v2541
        %v2600 = vunpack.c.l.b16 %v2542
        %v2601 = vunpack.c.l.b16 %v2543
        %v2602 = vunpack.c.l.b16 %v2544
        %v2603 = vunpack.c.l.b16 %v2545
        %v2604 = vunpack.c.l.b16 %v2546
        %v2605 = vunpack.c.l.b16 %v2547
        %v2606 = vunpack.c.l.b16 %v2548
        %v2607 = vunpack.c.l.b16 %v2549
        %v2608 = vpack.c.b16 %v2580, %v2579
        %v2609 = vpack.c.b16 %v2582, %v2581
        %v2610 = vpack.c.b16 %v2584, %v2583
        %v2611 = vpack.c.b16 %v2586, %v2585
        %v2612 = vpack.c.b16 %v2588, %v2587
        %v2613 = vpack.c.b16 %v2590, %v2589
        %v2614 = vpack.c.b16 %v2592, %v2591
        %v2615 = vpack.c.b16 %v2594, %v2593
        %v2616 = vpack.c.b16 %v2596, %v2595
        %v2617 = vpack.c.b16 %v2598, %v2597
        %v2618 = vpack.c.b16 %v2600, %v2599
        %v2619 = vpack.c.b16 %v2602, %v2601
        %v2620 = vpack.c.b16 %v2604, %v2603
        %v2621 = vpack.c.b16 %v2606, %v2605
        %v2622 = vpack.c.b16 %v2607, %v2607
        %v2624 = vsel %vm557, %v2608, 0
        %v2627 = vsel %vm557, %v2609, 0
        %v2630 = vsel %vm557, %v2610, 0
        %v2633 = vsel %vm557, %v2611, 0
        %v2636 = vsel %vm557, %v2612, 0
        %v2639 = vsel %vm557, %v2613, 0
        %v2642 = vsel %vm557, %v2614, 0
        %v2645 = vsel %vm557, %v2615, 0
        %v2648 = vsel %vm557, %v2616, 0
        %v2651 = vsel %vm557, %v2617, 0
        %v2654 = vsel %vm557, %v2618, 0
        %v2657 = vsel %vm557, %v2619, 0
        %v2660 = vsel %vm557, %v2620, 0
        %v2663 = vsel %vm557, %v2621, 0
        %v2666 = vsel %vm557, %v2622, 0
        %2668 = vmatprep.subr.bf16.mxu0 0
        %2669 = vmatpush1.bf16.msra.mxu0 %v553
        %2670 = vmatprep.subr.bf16.mxu0 0
        %2671 = vmatpush1.bf16.msra.mxu0 %v554
        %2672 = vmatprep.subr.bf16.mxu0 0
        %2673 = vmatpush1.bf16.msra.mxu0 0
        %2674 = vmatprep.subr.bf16.mxu0 0
        %2675 = vmatpush1.bf16.msra.mxu0 0
        %2676 = vmatprep.subr.bf16.mxu0 0
        %2677 = vmatpush1.bf16.msra.mxu0 0
        %2678 = vmatprep.subr.bf16.mxu0 0
        %2679 = vmatpush1.bf16.msra.mxu0 0
        %2680 = vmatprep.subr.bf16.mxu0 0
        %2681 = vmatpush1.bf16.msra.mxu0 0
        %2682 = vmatprep.subr.bf16.mxu0 0
        %2683 = vmatpush1.bf16.msra.mxu0 0
        %2684 = vmatprep.subr.bf16.mxu0 0
        %2685 = vmatpush1.bf16.msra.mxu0 0
        %2686 = vmatprep.subr.bf16.mxu0 0
        %2687 = vmatpush1.bf16.msra.mxu0 0
        %2688 = vmatprep.subr.bf16.mxu0 0
        %2689 = vmatpush1.bf16.msra.mxu0 0
        %2690 = vmatprep.subr.bf16.mxu0 0
        %2691 = vmatpush1.bf16.msra.mxu0 0
        %2692 = vmatprep.subr.bf16.mxu0 0
        %2693 = vmatpush1.bf16.msra.mxu0 0
        %2694 = vmatprep.subr.bf16.mxu0 0
        %2695 = vmatpush1.bf16.msra.mxu0 0
        %2696 = vmatprep.subr.bf16.mxu0 0
        %2697 = vmatpush1.bf16.msra.mxu0 0
        %2698 = vmatprep.subr.bf16.mxu0 0
        %2699 = vmatpush1.bf16.msra.mxu0 0
        %2700 = vmatprep.mubr.bf16.mxu0 0
        %2701 = vmatmul.mubr.bf16.gmra.mrb[0].mxu0 %v2624
        %v2702 = vpop.f32.mrb[0].mxu0
        %v2703 = vadd.f32 0.0, %v2702
        %v2704 = vpop.f32.mrb[0].mxu0
        %v2705 = vpop.f32.mrb[0].mxu0
        %v2706 = vadd.f32 0.0, %v2705
        %v2707 = vpop.f32.mrb[0].mxu0
        %2708 = vmatprep.mubr.bf16.mxu0 0
        %2709 = vmatmul.mubr.bf16.gmra.mrb[0].mxu0 %v2627
        %v2710 = vpop.f32.mrb[0].mxu0
        %v2711 = vadd.f32 0.0, %v2710
        %v2712 = vpop.f32.mrb[0].mxu0
        %v2713 = vpop.f32.mrb[0].mxu0
        %v2714 = vadd.f32 0.0, %v2713
        %v2715 = vpop.f32.mrb[0].mxu0
        %2716 = vmatprep.mubr.bf16.mxu0 0
        %2717 = vmatmul.mubr.bf16.gmra.mrb[0].mxu0 %v2630
        %v2718 = vpop.f32.mrb[0].mxu0
        %v2719 = vadd.f32 0.0, %v2718
        %v2720 = vpop.f32.mrb[0].mxu0
        %v2721 = vpop.f32.mrb[0].mxu0
        %v2722 = vadd.f32 0.0, %v2721
        %v2723 = vpop.f32.mrb[0].mxu0
        %2724 = vmatprep.mubr.bf16.mxu0 0
        %2725 = vmatmul.mubr.bf16.gmra.mrb[0].mxu0 %v2633
        %v2726 = vpop.f32.mrb[0].mxu0
        %v2727 = vadd.f32 0.0, %v2726
        %v2728 = vpop.f32.mrb[0].mxu0
        %v2729 = vpop.f32.mrb[0].mxu0
        %v2730 = vadd.f32 0.0, %v2729
        %v2731 = vpop.f32.mrb[0].mxu0
        %2732 = vmatprep.mubr.bf16.mxu0 0
        %2733 = vmatmul.mubr.bf16.gmra.mrb[0].mxu0 %v2636
        %v2734 = vpop.f32.mrb[0].mxu0
        %v2735 = vadd.f32 0.0, %v2734
        %v2736 = vpop.f32.mrb[0].mxu0
        %v2737 = vpop.f32.mrb[0].mxu0
        %v2738 = vadd.f32 0.0, %v2737
        %v2739 = vpop.f32.mrb[0].mxu0
        %2740 = vmatprep.mubr.bf16.mxu0 0
        %2741 = vmatmul.mubr.bf16.gmra.mrb[0].mxu0 %v2639
        %v2742 = vpop.f32.mrb[0].mxu0
        %v2743 = vadd.f32 0.0, %v2742
        %v2744 = vpop.f32.mrb[0].mxu0
        %v2745 = vpop.f32.mrb[0].mxu0
        %v2746 = vadd.f32 0.0, %v2745
        %v2747 = vpop.f32.mrb[0].mxu0
        %2748 = vmatprep.mubr.bf16.mxu0 0
        %2749 = vmatmul.mubr.bf16.gmra.mrb[0].mxu0 %v2642
        %v2750 = vpop.f32.mrb[0].mxu0
        %v2751 = vadd.f32 0.0, %v2750
        %v2752 = vpop.f32.mrb[0].mxu0
        %v2753 = vpop.f32.mrb[0].mxu0
        %v2754 = vadd.f32 0.0, %v2753
        %v2755 = vpop.f32.mrb[0].mxu0
        %2756 = vmatprep.mubr.bf16.mxu0 0
        %2757 = vmatmul.mubr.bf16.gmra.mrb[0].mxu0 %v2645
        %v2758 = vpop.f32.mrb[0].mxu0
        %v2759 = vadd.f32 0.0, %v2758
        %v2760 = vpop.f32.mrb[0].mxu0
        %v2761 = vpop.f32.mrb[0].mxu0
        %v2762 = vadd.f32 0.0, %v2761
        %v2763 = vpop.f32.mrb[0].mxu0
        %2764 = vmatprep.mubr.bf16.mxu0 0
        %2765 = vmatmul.mubr.bf16.gmra.mrb[0].mxu0 %v2648
        %v2766 = vpop.f32.mrb[0].mxu0
        %v2767 = vadd.f32 0.0, %v2766
        %v2768 = vpop.f32.mrb[0].mxu0
        %v2769 = vpop.f32.mrb[0].mxu0
        %v2770 = vadd.f32 0.0, %v2769
        %v2771 = vpop.f32.mrb[0].mxu0
        %2772 = vmatprep.mubr.bf16.mxu0 0
        %2773 = vmatmul.mubr.bf16.gmra.mrb[0].mxu0 %v2651
        %v2774 = vpop.f32.mrb[0].mxu0
        %v2775 = vadd.f32 0.0, %v2774
        %v2776 = vpop.f32.mrb[0].mxu0
        %v2777 = vpop.f32.mrb[0].mxu0
        %v2778 = vadd.f32 0.0, %v2777
        %v2779 = vpop.f32.mrb[0].mxu0
        %2780 = vmatprep.mubr.bf16.mxu0 0
        %2781 = vmatmul.mubr.bf16.gmra.mrb[0].mxu0 %v2654
        %v2782 = vpop.f32.mrb[0].mxu0
        %v2783 = vadd.f32 0.0, %v2782
        %v2784 = vpop.f32.mrb[0].mxu0
        %v2785 = vpop.f32.mrb[0].mxu0
        %v2786 = vadd.f32 0.0, %v2785
        %v2787 = vpop.f32.mrb[0].mxu0
        %2788 = vmatprep.mubr.bf16.mxu0 0
        %2789 = vmatmul.mubr.bf16.gmra.mrb[0].mxu0 %v2657
        %v2790 = vpop.f32.mrb[0].mxu0
        %v2791 = vadd.f32 0.0, %v2790
        %v2792 = vpop.f32.mrb[0].mxu0
        %v2793 = vpop.f32.mrb[0].mxu0
        %v2794 = vadd.f32 0.0, %v2793
        %v2795 = vpop.f32.mrb[0].mxu0
        %2796 = vmatprep.mubr.bf16.mxu0 0
        %2797 = vmatmul.mubr.bf16.gmra.mrb[0].mxu0 %v2660
        %v2798 = vpop.f32.mrb[0].mxu0
        %v2799 = vadd.f32 0.0, %v2798
        %v2800 = vpop.f32.mrb[0].mxu0
        %v2801 = vpop.f32.mrb[0].mxu0
        %v2802 = vadd.f32 0.0, %v2801
        %v2803 = vpop.f32.mrb[0].mxu0
        %2804 = vmatprep.mubr.bf16.mxu0 0
        %2805 = vmatmul.mubr.bf16.gmra.mrb[0].mxu0 %v2663
        %v2806 = vpop.f32.mrb[0].mxu0
        %v2807 = vadd.f32 0.0, %v2806
        %v2808 = vpop.f32.mrb[0].mxu0
        %v2809 = vpop.f32.mrb[0].mxu0
        %v2810 = vadd.f32 0.0, %v2809
        %v2811 = vpop.f32.mrb[0].mxu0
        %2812 = vmatprep.mubr.bf16.mxu0 0
        %2813 = vmatmul.mubr.bf16.gmra.mrb[0].mxu0 %v2666
        %v2814 = vpop.f32.mrb[0].mxu0
        %v2815 = vadd.f32 0.0, %v2814
        %v2816 = vpop.f32.mrb[0].mxu0
        %v2817 = vpop.f32.mrb[0].mxu0
        %v2818 = vpop.f32.mrb[0].mxu0
        %2819 = vdwg.mxu0
        %v2820 = vmul.f32 %v2703, %v760
        %v2821 = vmul.f32 %v2706, %v760
        %v2822 = vmul.f32 %v2711, %v760
        %v2823 = vmul.f32 %v2714, %v760
        %v2824 = vmul.f32 %v2719, %v760
        %v2825 = vmul.f32 %v2722, %v760
        %v2826 = vmul.f32 %v2727, %v760
        %v2827 = vmul.f32 %v2730, %v760
        %v2828 = vmul.f32 %v2735, %v760
        %v2829 = vmul.f32 %v2738, %v760
        %v2830 = vmul.f32 %v2743, %v760
        %v2831 = vmul.f32 %v2746, %v760
        %v2832 = vmul.f32 %v2751, %v760
        %v2833 = vmul.f32 %v2754, %v760
        %v2834 = vmul.f32 %v2759, %v760
        %v2835 = vmul.f32 %v2762, %v760
        %v2836 = vmul.f32 %v2767, %v760
        %v2837 = vmul.f32 %v2770, %v760
        %v2838 = vmul.f32 %v2775, %v760
        %v2839 = vmul.f32 %v2778, %v760
        %v2840 = vmul.f32 %v2783, %v760
        %v2841 = vmul.f32 %v2786, %v760
        %v2842 = vmul.f32 %v2791, %v760
        %v2843 = vmul.f32 %v2794, %v760
        %v2844 = vmul.f32 %v2799, %v760
        %v2845 = vmul.f32 %v2802, %v760
        %v2846 = vmul.f32 %v2807, %v760
        %v2847 = vmul.f32 %v2810, %v760
        %v2848 = vmul.f32 %v2815, %v760
        %v2849 = vadd.f32 %v2820, %v796
        %v2850 = vadd.f32 %v2821, %v796
        %v2851 = vadd.f32 %v2822, %v796
        %v2852 = vadd.f32 %v2823, %v796
        %v2853 = vadd.f32 %v2824, %v796
        %v2854 = vadd.f32 %v2825, %v796
        %v2855 = vadd.f32 %v2826, %v796
        %v2856 = vadd.f32 %v2827, %v796
        %v2857 = vadd.f32 %v2828, %v796
        %v2858 = vadd.f32 %v2829, %v796
        %v2859 = vadd.f32 %v2830, %v796
        %v2860 = vadd.f32 %v2831, %v796
        %v2861 = vadd.f32 %v2832, %v796
        %v2862 = vadd.f32 %v2833, %v796
        %v2863 = vadd.f32 %v2834, %v796
        %v2864 = vadd.f32 %v2835, %v796
        %v2865 = vadd.f32 %v2836, %v796
        %v2866 = vadd.f32 %v2837, %v796
        %v2867 = vadd.f32 %v2838, %v796
        %v2868 = vadd.f32 %v2839, %v796
        %v2869 = vadd.f32 %v2840, %v796
        %v2870 = vadd.f32 %v2841, %v796
        %v2871 = vadd.f32 %v2842, %v796
        %v2872 = vadd.f32 %v2843, %v796
        %v2873 = vadd.f32 %v2844, %v796
        %v2874 = vadd.f32 %v2845, %v796
        %v2875 = vadd.f32 %v2846, %v796
        %v2876 = vadd.f32 %v2847, %v796
        %v2877 = vadd.f32 %v2848, %v796
        %v2878 = vmax.f32 %v2849, 0.0
        %v2879 = vmax.f32 %v2850, 0.0
        %v2880 = vmax.f32 %v2851, 0.0
        %v2881 = vmax.f32 %v2852, 0.0
        %v2882 = vmax.f32 %v2853, 0.0
        %v2883 = vmax.f32 %v2854, 0.0
        %v2884 = vmax.f32 %v2855, 0.0
        %v2885 = vmax.f32 %v2856, 0.0
        %v2886 = vmax.f32 %v2857, 0.0
        %v2887 = vmax.f32 %v2858, 0.0
        %v2888 = vmax.f32 %v2859, 0.0
        %v2889 = vmax.f32 %v2860, 0.0
        %v2890 = vmax.f32 %v2861, 0.0
        %v2891 = vmax.f32 %v2862, 0.0
        %v2892 = vmax.f32 %v2863, 0.0
        %v2893 = vmax.f32 %v2864, 0.0
        %v2894 = vmax.f32 %v2865, 0.0
        %v2895 = vmax.f32 %v2866, 0.0
        %v2896 = vmax.f32 %v2867, 0.0
        %v2897 = vmax.f32 %v2868, 0.0
        %v2898 = vmax.f32 %v2869, 0.0
        %v2899 = vmax.f32 %v2870, 0.0
        %v2900 = vmax.f32 %v2871, 0.0
        %v2901 = vmax.f32 %v2872, 0.0
        %v2902 = vmax.f32 %v2873, 0.0
        %v2903 = vmax.f32 %v2874, 0.0
        %v2904 = vmax.f32 %v2875, 0.0
        %v2905 = vmax.f32 %v2876, 0.0
        %v2906 = vmax.f32 %v2877, 0.0
        %v2907 = vmax.f32 %v2491, %v2878
        %v2908 = vmax.f32 %v2492, %v2879
        %v2909 = vmax.f32 %v2493, %v2880
        %v2910 = vmax.f32 %v2494, %v2881
        %v2911 = vmax.f32 %v2495, %v2882
        %v2912 = vmax.f32 %v2496, %v2883
        %v2913 = vmax.f32 %v2497, %v2884
        %v2914 = vmax.f32 %v2498, %v2885
        %v2915 = vmax.f32 %v2499, %v2886
        %v2916 = vmax.f32 %v2500, %v2887
        %v2917 = vmax.f32 %v2501, %v2888
        %v2918 = vmax.f32 %v2502, %v2889
        %v2919 = vmax.f32 %v2503, %v2890
        %v2920 = vmax.f32 %v2504, %v2891
        %v2921 = vmax.f32 %v2505, %v2892
        %v2922 = vmax.f32 %v2506, %v2893
        %v2923 = vmax.f32 %v2507, %v2894
        %v2924 = vmax.f32 %v2508, %v2895
        %v2925 = vmax.f32 %v2509, %v2896
        %v2926 = vmax.f32 %v2510, %v2897
        %v2927 = vmax.f32 %v2511, %v2898
        %v2928 = vmax.f32 %v2512, %v2899
        %v2929 = vmax.f32 %v2513, %v2900
        %v2930 = vmax.f32 %v2514, %v2901
        %v2931 = vmax.f32 %v2515, %v2902
        %v2932 = vmax.f32 %v2516, %v2903
        %v2933 = vmax.f32 %v2517, %v2904
        %v2934 = vmax.f32 %v2518, %v2905
        %v2935 = vmax.f32 %v2519, %v2906
        %s2936 = scalar_lea.vmem %s437, 696
        %v2937 = vld [vmem:[%s2936] sm:$0xf]
        %v2938 = vld [vmem:[%s2936 + $0x4] sm:$0xf]
        %v2939 = vld [vmem:[%s2936 + $0x8] sm:$0xf]
        %v2940 = vld [vmem:[%s2936 + $0xc] sm:$0xf]
        %v2941 = vld [vmem:[%s2936 + $0x10] sm:$0xf]
        %v2942 = vld [vmem:[%s2936 + $0x14] sm:$0xf]
        %v2943 = vld [vmem:[%s2936 + $0x18] sm:$0xf]
        %v2944 = vld [vmem:[%s2936 + $0x1c] sm:$0xf]
        %v2945 = vld [vmem:[%s2936 + $0x20] sm:$0xf]
        %v2946 = vld [vmem:[%s2936 + $0x24] sm:$0xf]
        %v2947 = vld [vmem:[%s2936 + $0x28] sm:$0xf]
        %v2948 = vld [vmem:[%s2936 + $0x2c] sm:$0xf]
        %v2949 = vld [vmem:[%s2936 + $0x30] sm:$0xf]
        %v2950 = vld [vmem:[%s2936 + $0x34] sm:$0xf]
        %v2951 = vld [vmem:[%s2936 + $0x38] sm:$0xf]
        %v2952 = vld [vmem:[%s2936 + $0x3c] sm:$0xf]
        %v2953 = vld [vmem:[%s2936 + $0x40] sm:$0xf]
        %v2954 = vld [vmem:[%s2936 + $0x44] sm:$0xf]
        %v2955 = vld [vmem:[%s2936 + $0x48] sm:$0xf]
        %v2956 = vld [vmem:[%s2936 + $0x4c] sm:$0xf]
        %v2957 = vld [vmem:[%s2936 + $0x50] sm:$0xf]
        %v2958 = vld [vmem:[%s2936 + $0x54] sm:$0xf]
        %v2959 = vld [vmem:[%s2936 + $0x58] sm:$0xf]
        %v2960 = vld [vmem:[%s2936 + $0x5c] sm:$0xf]
        %v2961 = vld [vmem:[%s2936 + $0x60] sm:$0xf]
        %v2962 = vld [vmem:[%s2936 + $0x64] sm:$0xf]
        %v2963 = vld [vmem:[%s2936 + $0x68] sm:$0xf]
        %v2964 = vld [vmem:[%s2936 + $0x6c] sm:$0xf]
        %v2965 = vld [vmem:[%s2936 + $0x70] sm:$0x1]
        %v2995 = vunpack.c.l.b16 %v2937
        %v2996 = vunpack.c.l.b16 %v2938
        %v2997 = vunpack.c.l.b16 %v2939
        %v2998 = vunpack.c.l.b16 %v2940
        %v2999 = vunpack.c.l.b16 %v2941
        %v3000 = vunpack.c.l.b16 %v2942
        %v3001 = vunpack.c.l.b16 %v2943
        %v3002 = vunpack.c.l.b16 %v2944
        %v3003 = vunpack.c.l.b16 %v2945
        %v3004 = vunpack.c.l.b16 %v2946
        %v3005 = vunpack.c.l.b16 %v2947
        %v3006 = vunpack.c.l.b16 %v2948
        %v3007 = vunpack.c.l.b16 %v2949
        %v3008 = vunpack.c.l.b16 %v2950
        %v3009 = vunpack.c.l.b16 %v2951
        %v3010 = vunpack.c.l.b16 %v2952
        %v3011 = vunpack.c.l.b16 %v2953
        %v3012 = vunpack.c.l.b16 %v2954
        %v3013 = vunpack.c.l.b16 %v2955
        %v3014 = vunpack.c.l.b16 %v2956
        %v3015 = vunpack.c.l.b16 %v2957
        %v3016 = vunpack.c.l.b16 %v2958
        %v3017 = vunpack.c.l.b16 %v2959
        %v3018 = vunpack.c.l.b16 %v2960
        %v3019 = vunpack.c.l.b16 %v2961
        %v3020 = vunpack.c.l.b16 %v2962
        %v3021 = vunpack.c.l.b16 %v2963
        %v3022 = vunpack.c.l.b16 %v2964
        %v3023 = vunpack.c.l.b16 %v2965
        %v3024 = vpack.c.b16 %v2996, %v2995
        %v3025 = vpack.c.b16 %v2998, %v2997
        %v3026 = vpack.c.b16 %v3000, %v2999
        %v3027 = vpack.c.b16 %v3002, %v3001
        %v3028 = vpack.c.b16 %v3004, %v3003
        %v3029 = vpack.c.b16 %v3006, %v3005
        %v3030 = vpack.c.b16 %v3008, %v3007
        %v3031 = vpack.c.b16 %v3010, %v3009
        %v3032 = vpack.c.b16 %v3012, %v3011
        %v3033 = vpack.c.b16 %v3014, %v3013
        %v3034 = vpack.c.b16 %v3016, %v3015
        %v3035 = vpack.c.b16 %v3018, %v3017
        %v3036 = vpack.c.b16 %v3020, %v3019
        %v3037 = vpack.c.b16 %v3022, %v3021
        %v3038 = vpack.c.b16 %v3023, %v3023
        %v3040 = vsel %vm557, %v3024, 0
        %v3043 = vsel %vm557, %v3025, 0
        %v3046 = vsel %vm557, %v3026, 0
        %v3049 = vsel %vm557, %v3027, 0
        %v3052 = vsel %vm557, %v3028, 0
        %v3055 = vsel %vm557, %v3029, 0
        %v3058 = vsel %vm557, %v3030, 0
        %v3061 = vsel %vm557, %v3031, 0
        %v3064 = vsel %vm557, %v3032, 0
        %v3067 = vsel %vm557, %v3033, 0
        %v3070 = vsel %vm557, %v3034, 0
        %v3073 = vsel %vm557, %v3035, 0
        %v3076 = vsel %vm557, %v3036, 0
        %v3079 = vsel %vm557, %v3037, 0
        %v3082 = vsel %vm557, %v3038, 0
        %3084 = vmatprep.subr.bf16.mxu0 0
        %3085 = vmatpush1.bf16.msra.mxu0 %v553
        %3086 = vmatprep.subr.bf16.mxu0 0
        %3087 = vmatpush1.bf16.msra.mxu0 %v554
        %3088 = vmatprep.subr.bf16.mxu0 0
        %3089 = vmatpush1.bf16.msra.mxu0 0
        %3090 = vmatprep.subr.bf16.mxu0 0
        %3091 = vmatpush1.bf16.msra.mxu0 0
        %3092 = vmatprep.subr.bf16.mxu0 0
        %3093 = vmatpush1.bf16.msra.mxu0 0
        %3094 = vmatprep.subr.bf16.mxu0 0
        %3095 = vmatpush1.bf16.msra.mxu0 0
        %3096 = vmatprep.subr.bf16.mxu0 0
        %3097 = vmatpush1.bf16.msra.mxu0 0
        %3098 = vmatprep.subr.bf16.mxu0 0
        %3099 = vmatpush1.bf16.msra.mxu0 0
        %3100 = vmatprep.subr.bf16.mxu0 0
        %3101 = vmatpush1.bf16.msra.mxu0 0
        %3102 = vmatprep.subr.bf16.mxu0 0
        %3103 = vmatpush1.bf16.msra.mxu0 0
        %3104 = vmatprep.subr.bf16.mxu0 0
        %3105 = vmatpush1.bf16.msra.mxu0 0
        %3106 = vmatprep.subr.bf16.mxu0 0
        %3107 = vmatpush1.bf16.msra.mxu0 0
        %3108 = vmatprep.subr.bf16.mxu0 0
        %3109 = vmatpush1.bf16.msra.mxu0 0
        %3110 = vmatprep.subr.bf16.mxu0 0
        %3111 = vmatpush1.bf16.msra.mxu0 0
        %3112 = vmatprep.subr.bf16.mxu0 0
        %3113 = vmatpush1.bf16.msra.mxu0 0
        %3114 = vmatprep.subr.bf16.mxu0 0
        %3115 = vmatpush1.bf16.msra.mxu0 0
        %3116 = vmatprep.mubr.bf16.mxu0 0
        %3117 = vmatmul.mubr.bf16.gmra.mrb[0].mxu0 %v3040
        %v3118 = vpop.f32.mrb[0].mxu0
        %v3119 = vadd.f32 0.0, %v3118
        %v3120 = vpop.f32.mrb[0].mxu0
        %v3121 = vpop.f32.mrb[0].mxu0
        %v3122 = vadd.f32 0.0, %v3121
        %v3123 = vpop.f32.mrb[0].mxu0
        %3124 = vmatprep.mubr.bf16.mxu0 0
        %3125 = vmatmul.mubr.bf16.gmra.mrb[0].mxu0 %v3043
        %v3126 = vpop.f32.mrb[0].mxu0
        %v3127 = vadd.f32 0.0, %v3126
        %v3128 = vpop.f32.mrb[0].mxu0
        %v3129 = vpop.f32.mrb[0].mxu0
        %v3130 = vadd.f32 0.0, %v3129
        %v3131 = vpop.f32.mrb[0].mxu0
        %3132 = vmatprep.mubr.bf16.mxu0 0
        %3133 = vmatmul.mubr.bf16.gmra.mrb[0].mxu0 %v3046
        %v3134 = vpop.f32.mrb[0].mxu0
        %v3135 = vadd.f32 0.0, %v3134
        %v3136 = vpop.f32.mrb[0].mxu0
        %v3137 = vpop.f32.mrb[0].mxu0
        %v3138 = vadd.f32 0.0, %v3137
        %v3139 = vpop.f32.mrb[0].mxu0
        %3140 = vmatprep.mubr.bf16.mxu0 0
        %3141 = vmatmul.mubr.bf16.gmra.mrb[0].mxu0 %v3049
        %v3142 = vpop.f32.mrb[0].mxu0
        %v3143 = vadd.f32 0.0, %v3142
        %v3144 = vpop.f32.mrb[0].mxu0
        %v3145 = vpop.f32.mrb[0].mxu0
        %v3146 = vadd.f32 0.0, %v3145
        %v3147 = vpop.f32.mrb[0].mxu0
        %3148 = vmatprep.mubr.bf16.mxu0 0
        %3149 = vmatmul.mubr.bf16.gmra.mrb[0].mxu0 %v3052
        %v3150 = vpop.f32.mrb[0].mxu0
        %v3151 = vadd.f32 0.0, %v3150
        %v3152 = vpop.f32.mrb[0].mxu0
        %v3153 = vpop.f32.mrb[0].mxu0
        %v3154 = vadd.f32 0.0, %v3153
        %v3155 = vpop.f32.mrb[0].mxu0
        %3156 = vmatprep.mubr.bf16.mxu0 0
        %3157 = vmatmul.mubr.bf16.gmra.mrb[0].mxu0 %v3055
        %v3158 = vpop.f32.mrb[0].mxu0
        %v3159 = vadd.f32 0.0, %v3158
        %v3160 = vpop.f32.mrb[0].mxu0
        %v3161 = vpop.f32.mrb[0].mxu0
        %v3162 = vadd.f32 0.0, %v3161
        %v3163 = vpop.f32.mrb[0].mxu0
        %3164 = vmatprep.mubr.bf16.mxu0 0
        %3165 = vmatmul.mubr.bf16.gmra.mrb[0].mxu0 %v3058
        %v3166 = vpop.f32.mrb[0].mxu0
        %v3167 = vadd.f32 0.0, %v3166
        %v3168 = vpop.f32.mrb[0].mxu0
        %v3169 = vpop.f32.mrb[0].mxu0
        %v3170 = vadd.f32 0.0, %v3169
        %v3171 = vpop.f32.mrb[0].mxu0
        %3172 = vmatprep.mubr.bf16.mxu0 0
        %3173 = vmatmul.mubr.bf16.gmra.mrb[0].mxu0 %v3061
        %v3174 = vpop.f32.mrb[0].mxu0
        %v3175 = vadd.f32 0.0, %v3174
        %v3176 = vpop.f32.mrb[0].mxu0
        %v3177 = vpop.f32.mrb[0].mxu0
        %v3178 = vadd.f32 0.0, %v3177
        %v3179 = vpop.f32.mrb[0].mxu0
        %3180 = vmatprep.mubr.bf16.mxu0 0
        %3181 = vmatmul.mubr.bf16.gmra.mrb[0].mxu0 %v3064
        %v3182 = vpop.f32.mrb[0].mxu0
        %v3183 = vadd.f32 0.0, %v3182
        %v3184 = vpop.f32.mrb[0].mxu0
        %v3185 = vpop.f32.mrb[0].mxu0
        %v3186 = vadd.f32 0.0, %v3185
        %v3187 = vpop.f32.mrb[0].mxu0
        %3188 = vmatprep.mubr.bf16.mxu0 0
        %3189 = vmatmul.mubr.bf16.gmra.mrb[0].mxu0 %v3067
        %v3190 = vpop.f32.mrb[0].mxu0
        %v3191 = vadd.f32 0.0, %v3190
        %v3192 = vpop.f32.mrb[0].mxu0
        %v3193 = vpop.f32.mrb[0].mxu0
        %v3194 = vadd.f32 0.0, %v3193
        %v3195 = vpop.f32.mrb[0].mxu0
        %3196 = vmatprep.mubr.bf16.mxu0 0
        %3197 = vmatmul.mubr.bf16.gmra.mrb[0].mxu0 %v3070
        %v3198 = vpop.f32.mrb[0].mxu0
        %v3199 = vadd.f32 0.0, %v3198
        %v3200 = vpop.f32.mrb[0].mxu0
        %v3201 = vpop.f32.mrb[0].mxu0
        %v3202 = vadd.f32 0.0, %v3201
        %v3203 = vpop.f32.mrb[0].mxu0
        %3204 = vmatprep.mubr.bf16.mxu0 0
        %3205 = vmatmul.mubr.bf16.gmra.mrb[0].mxu0 %v3073
        %v3206 = vpop.f32.mrb[0].mxu0
        %v3207 = vadd.f32 0.0, %v3206
        %v3208 = vpop.f32.mrb[0].mxu0
        %v3209 = vpop.f32.mrb[0].mxu0
        %v3210 = vadd.f32 0.0, %v3209
        %v3211 = vpop.f32.mrb[0].mxu0
        %3212 = vmatprep.mubr.bf16.mxu0 0
        %3213 = vmatmul.mubr.bf16.gmra.mrb[0].mxu0 %v3076
        %v3214 = vpop.f32.mrb[0].mxu0
        %v3215 = vadd.f32 0.0, %v3214
        %v3216 = vpop.f32.mrb[0].mxu0
        %v3217 = vpop.f32.mrb[0].mxu0
        %v3218 = vadd.f32 0.0, %v3217
        %v3219 = vpop.f32.mrb[0].mxu0
        %3220 = vmatprep.mubr.bf16.mxu0 0
        %3221 = vmatmul.mubr.bf16.gmra.mrb[0].mxu0 %v3079
        %v3222 = vpop.f32.mrb[0].mxu0
        %v3223 = vadd.f32 0.0, %v3222
        %v3224 = vpop.f32.mrb[0].mxu0
        %v3225 = vpop.f32.mrb[0].mxu0
        %v3226 = vadd.f32 0.0, %v3225
        %v3227 = vpop.f32.mrb[0].mxu0
        %3228 = vmatprep.mubr.bf16.mxu0 0
        %3229 = vmatmul.mubr.bf16.gmra.mrb[0].mxu0 %v3082
        %v3230 = vpop.f32.mrb[0].mxu0
        %v3231 = vadd.f32 0.0, %v3230
        %v3232 = vpop.f32.mrb[0].mxu0
        %v3233 = vpop.f32.mrb[0].mxu0
        %v3234 = vpop.f32.mrb[0].mxu0
        %3235 = vdwg.mxu0
        %v3236 = vmul.f32 %v3119, %v760
        %v3237 = vmul.f32 %v3122, %v760
        %v3238 = vmul.f32 %v3127, %v760
        %v3239 = vmul.f32 %v3130, %v760
        %v3240 = vmul.f32 %v3135, %v760
        %v3241 = vmul.f32 %v3138, %v760
        %v3242 = vmul.f32 %v3143, %v760
        %v3243 = vmul.f32 %v3146, %v760
        %v3244 = vmul.f32 %v3151, %v760
        %v3245 = vmul.f32 %v3154, %v760
        %v3246 = vmul.f32 %v3159, %v760
        %v3247 = vmul.f32 %v3162, %v760
        %v3248 = vmul.f32 %v3167, %v760
        %v3249 = vmul.f32 %v3170, %v760
        %v3250 = vmul.f32 %v3175, %v760
        %v3251 = vmul.f32 %v3178, %v760
        %v3252 = vmul.f32 %v3183, %v760
        %v3253 = vmul.f32 %v3186, %v760
        %v3254 = vmul.f32 %v3191, %v760
        %v3255 = vmul.f32 %v3194, %v760
        %v3256 = vmul.f32 %v3199, %v760
        %v3257 = vmul.f32 %v3202, %v760
        %v3258 = vmul.f32 %v3207, %v760
        %v3259 = vmul.f32 %v3210, %v760
        %v3260 = vmul.f32 %v3215, %v760
        %v3261 = vmul.f32 %v3218, %v760
        %v3262 = vmul.f32 %v3223, %v760
        %v3263 = vmul.f32 %v3226, %v760
        %v3264 = vmul.f32 %v3231, %v760
        %v3265 = vadd.f32 %v3236, %v796
        %v3266 = vadd.f32 %v3237, %v796
        %v3267 = vadd.f32 %v3238, %v796
        %v3268 = vadd.f32 %v3239, %v796
        %v3269 = vadd.f32 %v3240, %v796
        %v3270 = vadd.f32 %v3241, %v796
        %v3271 = vadd.f32 %v3242, %v796
        %v3272 = vadd.f32 %v3243, %v796
        %v3273 = vadd.f32 %v3244, %v796
        %v3274 = vadd.f32 %v3245, %v796
        %v3275 = vadd.f32 %v3246, %v796
        %v3276 = vadd.f32 %v3247, %v796
        %v3277 = vadd.f32 %v3248, %v796
        %v3278 = vadd.f32 %v3249, %v796
        %v3279 = vadd.f32 %v3250, %v796
        %v3280 = vadd.f32 %v3251, %v796
        %v3281 = vadd.f32 %v3252, %v796
        %v3282 = vadd.f32 %v3253, %v796
        %v3283 = vadd.f32 %v3254, %v796
        %v3284 = vadd.f32 %v3255, %v796
        %v3285 = vadd.f32 %v3256, %v796
        %v3286 = vadd.f32 %v3257, %v796
        %v3287 = vadd.f32 %v3258, %v796
        %v3288 = vadd.f32 %v3259, %v796
        %v3289 = vadd.f32 %v3260, %v796
        %v3290 = vadd.f32 %v3261, %v796
        %v3291 = vadd.f32 %v3262, %v796
        %v3292 = vadd.f32 %v3263, %v796
        %v3293 = vadd.f32 %v3264, %v796
        %v3294 = vmax.f32 %v3265, 0.0
        %v3295 = vmax.f32 %v3266, 0.0
        %v3296 = vmax.f32 %v3267, 0.0
        %v3297 = vmax.f32 %v3268, 0.0
        %v3298 = vmax.f32 %v3269, 0.0
        %v3299 = vmax.f32 %v3270, 0.0
        %v3300 = vmax.f32 %v3271, 0.0
        %v3301 = vmax.f32 %v3272, 0.0
        %v3302 = vmax.f32 %v3273, 0.0
        %v3303 = vmax.f32 %v3274, 0.0
        %v3304 = vmax.f32 %v3275, 0.0
        %v3305 = vmax.f32 %v3276, 0.0
        %v3306 = vmax.f32 %v3277, 0.0
        %v3307 = vmax.f32 %v3278, 0.0
        %v3308 = vmax.f32 %v3279, 0.0
        %v3309 = vmax.f32 %v3280, 0.0
        %v3310 = vmax.f32 %v3281, 0.0
        %v3311 = vmax.f32 %v3282, 0.0
        %v3312 = vmax.f32 %v3283, 0.0
        %v3313 = vmax.f32 %v3284, 0.0
        %v3314 = vmax.f32 %v3285, 0.0
        %v3315 = vmax.f32 %v3286, 0.0
        %v3316 = vmax.f32 %v3287, 0.0
        %v3317 = vmax.f32 %v3288, 0.0
        %v3318 = vmax.f32 %v3289, 0.0
        %v3319 = vmax.f32 %v3290, 0.0
        %v3320 = vmax.f32 %v3291, 0.0
        %v3321 = vmax.f32 %v3292, 0.0
        %v3322 = vmax.f32 %v3293, 0.0
        %v3323 = vmax.f32 %v2907, %v3294
        %v3324 = vmax.f32 %v2908, %v3295
        %v3325 = vmax.f32 %v2909, %v3296
        %v3326 = vmax.f32 %v2910, %v3297
        %v3327 = vmax.f32 %v2911, %v3298
        %v3328 = vmax.f32 %v2912, %v3299
        %v3329 = vmax.f32 %v2913, %v3300
        %v3330 = vmax.f32 %v2914, %v3301
        %v3331 = vmax.f32 %v2915, %v3302
        %v3332 = vmax.f32 %v2916, %v3303
        %v3333 = vmax.f32 %v2917, %v3304
        %v3334 = vmax.f32 %v2918, %v3305
        %v3335 = vmax.f32 %v2919, %v3306
        %v3336 = vmax.f32 %v2920, %v3307
        %v3337 = vmax.f32 %v2921, %v3308
        %v3338 = vmax.f32 %v2922, %v3309
        %v3339 = vmax.f32 %v2923, %v3310
        %v3340 = vmax.f32 %v2924, %v3311
        %v3341 = vmax.f32 %v2925, %v3312
        %v3342 = vmax.f32 %v2926, %v3313
        %v3343 = vmax.f32 %v2927, %v3314
        %v3344 = vmax.f32 %v2928, %v3315
        %v3345 = vmax.f32 %v2929, %v3316
        %v3346 = vmax.f32 %v2930, %v3317
        %v3347 = vmax.f32 %v2931, %v3318
        %v3348 = vmax.f32 %v2932, %v3319
        %v3349 = vmax.f32 %v2933, %v3320
        %v3350 = vmax.f32 %v2934, %v3321
        %v3351 = vmax.f32 %v2935, %v3322
        %s3352 = scalar_lea.vmem %s437, 812
        %v3353 = vld [vmem:[%s3352] sm:$0xf]
        %v3354 = vld [vmem:[%s3352 + $0x4] sm:$0xf]
        %v3355 = vld [vmem:[%s3352 + $0x8] sm:$0xf]
        %v3356 = vld [vmem:[%s3352 + $0xc] sm:$0xf]
        %v3357 = vld [vmem:[%s3352 + $0x10] sm:$0xf]
        %v3358 = vld [vmem:[%s3352 + $0x14] sm:$0xf]
        %v3359 = vld [vmem:[%s3352 + $0x18] sm:$0xf]
        %v3360 = vld [vmem:[%s3352 + $0x1c] sm:$0xf]
        %v3361 = vld [vmem:[%s3352 + $0x20] sm:$0xf]
        %v3362 = vld [vmem:[%s3352 + $0x24] sm:$0xf]
        %v3363 = vld [vmem:[%s3352 + $0x28] sm:$0xf]
        %v3364 = vld [vmem:[%s3352 + $0x2c] sm:$0xf]
        %v3365 = vld [vmem:[%s3352 + $0x30] sm:$0xf]
        %v3366 = vld [vmem:[%s3352 + $0x34] sm:$0xf]
        %v3367 = vld [vmem:[%s3352 + $0x38] sm:$0xf]
        %v3368 = vld [vmem:[%s3352 + $0x3c] sm:$0xf]
        %v3369 = vld [vmem:[%s3352 + $0x40] sm:$0xf]
        %v3370 = vld [vmem:[%s3352 + $0x44] sm:$0xf]
        %v3371 = vld [vmem:[%s3352 + $0x48] sm:$0xf]
        %v3372 = vld [vmem:[%s3352 + $0x4c] sm:$0xf]
        %v3373 = vld [vmem:[%s3352 + $0x50] sm:$0xf]
        %v3374 = vld [vmem:[%s3352 + $0x54] sm:$0xf]
        %v3375 = vld [vmem:[%s3352 + $0x58] sm:$0xf]
        %v3376 = vld [vmem:[%s3352 + $0x5c] sm:$0xf]
        %v3377 = vld [vmem:[%s3352 + $0x60] sm:$0xf]
        %v3378 = vld [vmem:[%s3352 + $0x64] sm:$0xf]
        %v3379 = vld [vmem:[%s3352 + $0x68] sm:$0xf]
        %v3380 = vld [vmem:[%s3352 + $0x6c] sm:$0xf]
        %v3381 = vld [vmem:[%s3352 + $0x70] sm:$0x1]
        %v3411 = vunpack.c.l.b16 %v3353
        %v3412 = vunpack.c.l.b16 %v3354
        %v3413 = vunpack.c.l.b16 %v3355
        %v3414 = vunpack.c.l.b16 %v3356
        %v3415 = vunpack.c.l.b16 %v3357
        %v3416 = vunpack.c.l.b16 %v3358
        %v3417 = vunpack.c.l.b16 %v3359
        %v3418 = vunpack.c.l.b16 %v3360
        %v3419 = vunpack.c.l.b16 %v3361
        %v3420 = vunpack.c.l.b16 %v3362
        %v3421 = vunpack.c.l.b16 %v3363
        %v3422 = vunpack.c.l.b16 %v3364
        %v3423 = vunpack.c.l.b16 %v3365
        %v3424 = vunpack.c.l.b16 %v3366
        %v3425 = vunpack.c.l.b16 %v3367
        %v3426 = vunpack.c.l.b16 %v3368
        %v3427 = vunpack.c.l.b16 %v3369
        %v3428 = vunpack.c.l.b16 %v3370
        %v3429 = vunpack.c.l.b16 %v3371
        %v3430 = vunpack.c.l.b16 %v3372
        %v3431 = vunpack.c.l.b16 %v3373
        %v3432 = vunpack.c.l.b16 %v3374
        %v3433 = vunpack.c.l.b16 %v3375
        %v3434 = vunpack.c.l.b16 %v3376
        %v3435 = vunpack.c.l.b16 %v3377
        %v3436 = vunpack.c.l.b16 %v3378
        %v3437 = vunpack.c.l.b16 %v3379
        %v3438 = vunpack.c.l.b16 %v3380
        %v3439 = vunpack.c.l.b16 %v3381
        %v3440 = vpack.c.b16 %v3412, %v3411
        %v3441 = vpack.c.b16 %v3414, %v3413
        %v3442 = vpack.c.b16 %v3416, %v3415
        %v3443 = vpack.c.b16 %v3418, %v3417
        %v3444 = vpack.c.b16 %v3420, %v3419
        %v3445 = vpack.c.b16 %v3422, %v3421
        %v3446 = vpack.c.b16 %v3424, %v3423
        %v3447 = vpack.c.b16 %v3426, %v3425
        %v3448 = vpack.c.b16 %v3428, %v3427
        %v3449 = vpack.c.b16 %v3430, %v3429
        %v3450 = vpack.c.b16 %v3432, %v3431
        %v3451 = vpack.c.b16 %v3434, %v3433
        %v3452 = vpack.c.b16 %v3436, %v3435
        %v3453 = vpack.c.b16 %v3438, %v3437
        %v3454 = vpack.c.b16 %v3439, %v3439
        %v3456 = vsel %vm557, %v3440, 0
        %v3459 = vsel %vm557, %v3441, 0
        %v3462 = vsel %vm557, %v3442, 0
        %v3465 = vsel %vm557, %v3443, 0
        %v3468 = vsel %vm557, %v3444, 0
        %v3471 = vsel %vm557, %v3445, 0
        %v3474 = vsel %vm557, %v3446, 0
        %v3477 = vsel %vm557, %v3447, 0
        %v3480 = vsel %vm557, %v3448, 0
        %v3483 = vsel %vm557, %v3449, 0
        %v3486 = vsel %vm557, %v3450, 0
        %v3489 = vsel %vm557, %v3451, 0
        %v3492 = vsel %vm557, %v3452, 0
        %v3495 = vsel %vm557, %v3453, 0
        %v3498 = vsel %vm557, %v3454, 0
        %3500 = vmatprep.subr.bf16.mxu0 0
        %3501 = vmatpush1.bf16.msra.mxu0 %v553
        %3502 = vmatprep.subr.bf16.mxu0 0
        %3503 = vmatpush1.bf16.msra.mxu0 %v554
        %3504 = vmatprep.subr.bf16.mxu0 0
        %3505 = vmatpush1.bf16.msra.mxu0 0
        %3506 = vmatprep.subr.bf16.mxu0 0
        %3507 = vmatpush1.bf16.msra.mxu0 0
        %3508 = vmatprep.subr.bf16.mxu0 0
        %3509 = vmatpush1.bf16.msra.mxu0 0
        %3510 = vmatprep.subr.bf16.mxu0 0
        %3511 = vmatpush1.bf16.msra.mxu0 0
        %3512 = vmatprep.subr.bf16.mxu0 0
        %3513 = vmatpush1.bf16.msra.mxu0 0
        %3514 = vmatprep.subr.bf16.mxu0 0
        %3515 = vmatpush1.bf16.msra.mxu0 0
        %3516 = vmatprep.subr.bf16.mxu0 0
        %3517 = vmatpush1.bf16.msra.mxu0 0
        %3518 = vmatprep.subr.bf16.mxu0 0
        %3519 = vmatpush1.bf16.msra.mxu0 0
        %3520 = vmatprep.subr.bf16.mxu0 0
        %3521 = vmatpush1.bf16.msra.mxu0 0
        %3522 = vmatprep.subr.bf16.mxu0 0
        %3523 = vmatpush1.bf16.msra.mxu0 0
        %3524 = vmatprep.subr.bf16.mxu0 0
        %3525 = vmatpush1.bf16.msra.mxu0 0
        %3526 = vmatprep.subr.bf16.mxu0 0
        %3527 = vmatpush1.bf16.msra.mxu0 0
        %3528 = vmatprep.subr.bf16.mxu0 0
        %3529 = vmatpush1.bf16.msra.mxu0 0
        %3530 = vmatprep.subr.bf16.mxu0 0
        %3531 = vmatpush1.bf16.msra.mxu0 0
        %3532 = vmatprep.mubr.bf16.mxu0 0
        %3533 = vmatmul.mubr.bf16.gmra.mrb[0].mxu0 %v3456
        %v3534 = vpop.f32.mrb[0].mxu0
        %v3535 = vadd.f32 0.0, %v3534
        %v3536 = vpop.f32.mrb[0].mxu0
        %v3537 = vpop.f32.mrb[0].mxu0
        %v3538 = vadd.f32 0.0, %v3537
        %v3539 = vpop.f32.mrb[0].mxu0
        %3540 = vmatprep.mubr.bf16.mxu0 0
        %3541 = vmatmul.mubr.bf16.gmra.mrb[0].mxu0 %v3459
        %v3542 = vpop.f32.mrb[0].mxu0
        %v3543 = vadd.f32 0.0, %v3542
        %v3544 = vpop.f32.mrb[0].mxu0
        %v3545 = vpop.f32.mrb[0].mxu0
        %v3546 = vadd.f32 0.0, %v3545
        %v3547 = vpop.f32.mrb[0].mxu0
        %3548 = vmatprep.mubr.bf16.mxu0 0
        %3549 = vmatmul.mubr.bf16.gmra.mrb[0].mxu0 %v3462
        %v3550 = vpop.f32.mrb[0].mxu0
        %v3551 = vadd.f32 0.0, %v3550
        %v3552 = vpop.f32.mrb[0].mxu0
        %v3553 = vpop.f32.mrb[0].mxu0
        %v3554 = vadd.f32 0.0, %v3553
        %v3555 = vpop.f32.mrb[0].mxu0
        %3556 = vmatprep.mubr.bf16.mxu0 0
        %3557 = vmatmul.mubr.bf16.gmra.mrb[0].mxu0 %v3465
        %v3558 = vpop.f32.mrb[0].mxu0
        %v3559 = vadd.f32 0.0, %v3558
        %v3560 = vpop.f32.mrb[0].mxu0
        %v3561 = vpop.f32.mrb[0].mxu0
        %v3562 = vadd.f32 0.0, %v3561
        %v3563 = vpop.f32.mrb[0].mxu0
        %3564 = vmatprep.mubr.bf16.mxu0 0
        %3565 = vmatmul.mubr.bf16.gmra.mrb[0].mxu0 %v3468
        %v3566 = vpop.f32.mrb[0].mxu0
        %v3567 = vadd.f32 0.0, %v3566
        %v3568 = vpop.f32.mrb[0].mxu0
        %v3569 = vpop.f32.mrb[0].mxu0
        %v3570 = vadd.f32 0.0, %v3569
        %v3571 = vpop.f32.mrb[0].mxu0
        %3572 = vmatprep.mubr.bf16.mxu0 0
        %3573 = vmatmul.mubr.bf16.gmra.mrb[0].mxu0 %v3471
        %v3574 = vpop.f32.mrb[0].mxu0
        %v3575 = vadd.f32 0.0, %v3574
        %v3576 = vpop.f32.mrb[0].mxu0
        %v3577 = vpop.f32.mrb[0].mxu0
        %v3578 = vadd.f32 0.0, %v3577
        %v3579 = vpop.f32.mrb[0].mxu0
        %3580 = vmatprep.mubr.bf16.mxu0 0
        %3581 = vmatmul.mubr.bf16.gmra.mrb[0].mxu0 %v3474
        %v3582 = vpop.f32.mrb[0].mxu0
        %v3583 = vadd.f32 0.0, %v3582
        %v3584 = vpop.f32.mrb[0].mxu0
        %v3585 = vpop.f32.mrb[0].mxu0
        %v3586 = vadd.f32 0.0, %v3585
        %v3587 = vpop.f32.mrb[0].mxu0
        %3588 = vmatprep.mubr.bf16.mxu0 0
        %3589 = vmatmul.mubr.bf16.gmra.mrb[0].mxu0 %v3477
        %v3590 = vpop.f32.mrb[0].mxu0
        %v3591 = vadd.f32 0.0, %v3590
        %v3592 = vpop.f32.mrb[0].mxu0
        %v3593 = vpop.f32.mrb[0].mxu0
        %v3594 = vadd.f32 0.0, %v3593
        %v3595 = vpop.f32.mrb[0].mxu0
        %3596 = vmatprep.mubr.bf16.mxu0 0
        %3597 = vmatmul.mubr.bf16.gmra.mrb[0].mxu0 %v3480
        %v3598 = vpop.f32.mrb[0].mxu0
        %v3599 = vadd.f32 0.0, %v3598
        %v3600 = vpop.f32.mrb[0].mxu0
        %v3601 = vpop.f32.mrb[0].mxu0
        %v3602 = vadd.f32 0.0, %v3601
        %v3603 = vpop.f32.mrb[0].mxu0
        %3604 = vmatprep.mubr.bf16.mxu0 0
        %3605 = vmatmul.mubr.bf16.gmra.mrb[0].mxu0 %v3483
        %v3606 = vpop.f32.mrb[0].mxu0
        %v3607 = vadd.f32 0.0, %v3606
        %v3608 = vpop.f32.mrb[0].mxu0
        %v3609 = vpop.f32.mrb[0].mxu0
        %v3610 = vadd.f32 0.0, %v3609
        %v3611 = vpop.f32.mrb[0].mxu0
        %3612 = vmatprep.mubr.bf16.mxu0 0
        %3613 = vmatmul.mubr.bf16.gmra.mrb[0].mxu0 %v3486
        %v3614 = vpop.f32.mrb[0].mxu0
        %v3615 = vadd.f32 0.0, %v3614
        %v3616 = vpop.f32.mrb[0].mxu0
        %v3617 = vpop.f32.mrb[0].mxu0
        %v3618 = vadd.f32 0.0, %v3617
        %v3619 = vpop.f32.mrb[0].mxu0
        %3620 = vmatprep.mubr.bf16.mxu0 0
        %3621 = vmatmul.mubr.bf16.gmra.mrb[0].mxu0 %v3489
        %v3622 = vpop.f32.mrb[0].mxu0
        %v3623 = vadd.f32 0.0, %v3622
        %v3624 = vpop.f32.mrb[0].mxu0
        %v3625 = vpop.f32.mrb[0].mxu0
        %v3626 = vadd.f32 0.0, %v3625
        %v3627 = vpop.f32.mrb[0].mxu0
        %3628 = vmatprep.mubr.bf16.mxu0 0
        %3629 = vmatmul.mubr.bf16.gmra.mrb[0].mxu0 %v3492
        %v3630 = vpop.f32.mrb[0].mxu0
        %v3631 = vadd.f32 0.0, %v3630
        %v3632 = vpop.f32.mrb[0].mxu0
        %v3633 = vpop.f32.mrb[0].mxu0
        %v3634 = vadd.f32 0.0, %v3633
        %v3635 = vpop.f32.mrb[0].mxu0
        %3636 = vmatprep.mubr.bf16.mxu0 0
        %3637 = vmatmul.mubr.bf16.gmra.mrb[0].mxu0 %v3495
        %v3638 = vpop.f32.mrb[0].mxu0
        %v3639 = vadd.f32 0.0, %v3638
        %v3640 = vpop.f32.mrb[0].mxu0
        %v3641 = vpop.f32.mrb[0].mxu0
        %v3642 = vadd.f32 0.0, %v3641
        %v3643 = vpop.f32.mrb[0].mxu0
        %3644 = vmatprep.mubr.bf16.mxu0 0
        %3645 = vmatmul.mubr.bf16.gmra.mrb[0].mxu0 %v3498
        %v3646 = vpop.f32.mrb[0].mxu0
        %v3647 = vadd.f32 0.0, %v3646
        %v3648 = vpop.f32.mrb[0].mxu0
        %v3649 = vpop.f32.mrb[0].mxu0
        %v3650 = vpop.f32.mrb[0].mxu0
        %3651 = vdwg.mxu0
        %v3652 = vmul.f32 %v3535, %v760
        %v3653 = vmul.f32 %v3538, %v760
        %v3654 = vmul.f32 %v3543, %v760
        %v3655 = vmul.f32 %v3546, %v760
        %v3656 = vmul.f32 %v3551, %v760
        %v3657 = vmul.f32 %v3554, %v760
        %v3658 = vmul.f32 %v3559, %v760
        %v3659 = vmul.f32 %v3562, %v760
        %v3660 = vmul.f32 %v3567, %v760
        %v3661 = vmul.f32 %v3570, %v760
        %v3662 = vmul.f32 %v3575, %v760
        %v3663 = vmul.f32 %v3578, %v760
        %v3664 = vmul.f32 %v3583, %v760
        %v3665 = vmul.f32 %v3586, %v760
        %v3666 = vmul.f32 %v3591, %v760
        %v3667 = vmul.f32 %v3594, %v760
        %v3668 = vmul.f32 %v3599, %v760
        %v3669 = vmul.f32 %v3602, %v760
        %v3670 = vmul.f32 %v3607, %v760
        %v3671 = vmul.f32 %v3610, %v760
        %v3672 = vmul.f32 %v3615, %v760
        %v3673 = vmul.f32 %v3618, %v760
        %v3674 = vmul.f32 %v3623, %v760
        %v3675 = vmul.f32 %v3626, %v760
        %v3676 = vmul.f32 %v3631, %v760
        %v3677 = vmul.f32 %v3634, %v760
        %v3678 = vmul.f32 %v3639, %v760
        %v3679 = vmul.f32 %v3642, %v760
        %v3680 = vmul.f32 %v3647, %v760
        %v3681 = vadd.f32 %v3652, %v796
        %v3682 = vadd.f32 %v3653, %v796
        %v3683 = vadd.f32 %v3654, %v796
        %v3684 = vadd.f32 %v3655, %v796
        %v3685 = vadd.f32 %v3656, %v796
        %v3686 = vadd.f32 %v3657, %v796
        %v3687 = vadd.f32 %v3658, %v796
        %v3688 = vadd.f32 %v3659, %v796
        %v3689 = vadd.f32 %v3660, %v796
        %v3690 = vadd.f32 %v3661, %v796
        %v3691 = vadd.f32 %v3662, %v796
        %v3692 = vadd.f32 %v3663, %v796
        %v3693 = vadd.f32 %v3664, %v796
        %v3694 = vadd.f32 %v3665, %v796
        %v3695 = vadd.f32 %v3666, %v796
        %v3696 = vadd.f32 %v3667, %v796
        %v3697 = vadd.f32 %v3668, %v796
        %v3698 = vadd.f32 %v3669, %v796
        %v3699 = vadd.f32 %v3670, %v796
        %v3700 = vadd.f32 %v3671, %v796
        %v3701 = vadd.f32 %v3672, %v796
        %v3702 = vadd.f32 %v3673, %v796
        %v3703 = vadd.f32 %v3674, %v796
        %v3704 = vadd.f32 %v3675, %v796
        %v3705 = vadd.f32 %v3676, %v796
        %v3706 = vadd.f32 %v3677, %v796
        %v3707 = vadd.f32 %v3678, %v796
        %v3708 = vadd.f32 %v3679, %v796
        %v3709 = vadd.f32 %v3680, %v796
        %v3710 = vmax.f32 %v3681, 0.0
        %v3711 = vmax.f32 %v3682, 0.0
        %v3712 = vmax.f32 %v3683, 0.0
        %v3713 = vmax.f32 %v3684, 0.0
        %v3714 = vmax.f32 %v3685, 0.0
        %v3715 = vmax.f32 %v3686, 0.0
        %v3716 = vmax.f32 %v3687, 0.0
        %v3717 = vmax.f32 %v3688, 0.0
        %v3718 = vmax.f32 %v3689, 0.0
        %v3719 = vmax.f32 %v3690, 0.0
        %v3720 = vmax.f32 %v3691, 0.0
        %v3721 = vmax.f32 %v3692, 0.0
        %v3722 = vmax.f32 %v3693, 0.0
        %v3723 = vmax.f32 %v3694, 0.0
        %v3724 = vmax.f32 %v3695, 0.0
        %v3725 = vmax.f32 %v3696, 0.0
        %v3726 = vmax.f32 %v3697, 0.0
        %v3727 = vmax.f32 %v3698, 0.0
        %v3728 = vmax.f32 %v3699, 0.0
        %v3729 = vmax.f32 %v3700, 0.0
        %v3730 = vmax.f32 %v3701, 0.0
        %v3731 = vmax.f32 %v3702, 0.0
        %v3732 = vmax.f32 %v3703, 0.0
        %v3733 = vmax.f32 %v3704, 0.0
        %v3734 = vmax.f32 %v3705, 0.0
        %v3735 = vmax.f32 %v3706, 0.0
        %v3736 = vmax.f32 %v3707, 0.0
        %v3737 = vmax.f32 %v3708, 0.0
        %v3738 = vmax.f32 %v3709, 0.0
        %v3739 = vmax.f32 %v3323, %v3710
        %v3740 = vmax.f32 %v3324, %v3711
        %v3741 = vmax.f32 %v3325, %v3712
        %v3742 = vmax.f32 %v3326, %v3713
        %v3743 = vmax.f32 %v3327, %v3714
        %v3744 = vmax.f32 %v3328, %v3715
        %v3745 = vmax.f32 %v3329, %v3716
        %v3746 = vmax.f32 %v3330, %v3717
        %v3747 = vmax.f32 %v3331, %v3718
        %v3748 = vmax.f32 %v3332, %v3719
        %v3749 = vmax.f32 %v3333, %v3720
        %v3750 = vmax.f32 %v3334, %v3721
        %v3751 = vmax.f32 %v3335, %v3722
        %v3752 = vmax.f32 %v3336, %v3723
        %v3753 = vmax.f32 %v3337, %v3724
        %v3754 = vmax.f32 %v3338, %v3725
        %v3755 = vmax.f32 %v3339, %v3726
        %v3756 = vmax.f32 %v3340, %v3727
        %v3757 = vmax.f32 %v3341, %v3728
        %v3758 = vmax.f32 %v3342, %v3729
        %v3759 = vmax.f32 %v3343, %v3730
        %v3760 = vmax.f32 %v3344, %v3731
        %v3761 = vmax.f32 %v3345, %v3732
        %v3762 = vmax.f32 %v3346, %v3733
        %v3763 = vmax.f32 %v3347, %v3734
        %v3764 = vmax.f32 %v3348, %v3735
        %v3765 = vmax.f32 %v3349, %v3736
        %v3766 = vmax.f32 %v3350, %v3737
        %v3767 = vmax.f32 %v3351, %v3738
        %s3768 = scalar_lea.vmem %s437, 928
        %v3769 = vld [vmem:[%s3768] sm:$0xf]
        %v3770 = vld [vmem:[%s3768 + $0x4] sm:$0xf]
        %v3771 = vld [vmem:[%s3768 + $0x8] sm:$0xf]
        %v3772 = vld [vmem:[%s3768 + $0xc] sm:$0xf]
        %v3773 = vld [vmem:[%s3768 + $0x10] sm:$0xf]
        %v3774 = vld [vmem:[%s3768 + $0x14] sm:$0xf]
        %v3775 = vld [vmem:[%s3768 + $0x18] sm:$0xf]
        %v3776 = vld [vmem:[%s3768 + $0x1c] sm:$0xf]
        %v3777 = vld [vmem:[%s3768 + $0x20] sm:$0xf]
        %v3778 = vld [vmem:[%s3768 + $0x24] sm:$0xf]
        %v3779 = vld [vmem:[%s3768 + $0x28] sm:$0xf]
        %v3780 = vld [vmem:[%s3768 + $0x2c] sm:$0xf]
        %v3781 = vld [vmem:[%s3768 + $0x30] sm:$0xf]
        %v3782 = vld [vmem:[%s3768 + $0x34] sm:$0xf]
        %v3783 = vld [vmem:[%s3768 + $0x38] sm:$0xf]
        %v3784 = vld [vmem:[%s3768 + $0x3c] sm:$0xf]
        %v3785 = vld [vmem:[%s3768 + $0x40] sm:$0xf]
        %v3786 = vld [vmem:[%s3768 + $0x44] sm:$0xf]
        %v3787 = vld [vmem:[%s3768 + $0x48] sm:$0xf]
        %v3788 = vld [vmem:[%s3768 + $0x4c] sm:$0xf]
        %v3789 = vld [vmem:[%s3768 + $0x50] sm:$0xf]
        %v3790 = vld [vmem:[%s3768 + $0x54] sm:$0xf]
        %v3791 = vld [vmem:[%s3768 + $0x58] sm:$0xf]
        %v3792 = vld [vmem:[%s3768 + $0x5c] sm:$0xf]
        %v3793 = vld [vmem:[%s3768 + $0x60] sm:$0xf]
        %v3794 = vld [vmem:[%s3768 + $0x64] sm:$0xf]
        %v3795 = vld [vmem:[%s3768 + $0x68] sm:$0xf]
        %v3796 = vld [vmem:[%s3768 + $0x6c] sm:$0xf]
        %v3797 = vld [vmem:[%s3768 + $0x70] sm:$0x1]
        %v3827 = vunpack.c.l.b16 %v3769
        %v3828 = vunpack.c.l.b16 %v3770
        %v3829 = vunpack.c.l.b16 %v3771
        %v3830 = vunpack.c.l.b16 %v3772
        %v3831 = vunpack.c.l.b16 %v3773
        %v3832 = vunpack.c.l.b16 %v3774
        %v3833 = vunpack.c.l.b16 %v3775
        %v3834 = vunpack.c.l.b16 %v3776
        %v3835 = vunpack.c.l.b16 %v3777
        %v3836 = vunpack.c.l.b16 %v3778
        %v3837 = vunpack.c.l.b16 %v3779
        %v3838 = vunpack.c.l.b16 %v3780
        %v3839 = vunpack.c.l.b16 %v3781
        %v3840 = vunpack.c.l.b16 %v3782
        %v3841 = vunpack.c.l.b16 %v3783
        %v3842 = vunpack.c.l.b16 %v3784
        %v3843 = vunpack.c.l.b16 %v3785
        %v3844 = vunpack.c.l.b16 %v3786
        %v3845 = vunpack.c.l.b16 %v3787
        %v3846 = vunpack.c.l.b16 %v3788
        %v3847 = vunpack.c.l.b16 %v3789
        %v3848 = vunpack.c.l.b16 %v3790
        %v3849 = vunpack.c.l.b16 %v3791
        %v3850 = vunpack.c.l.b16 %v3792
        %v3851 = vunpack.c.l.b16 %v3793
        %v3852 = vunpack.c.l.b16 %v3794
        %v3853 = vunpack.c.l.b16 %v3795
        %v3854 = vunpack.c.l.b16 %v3796
        %v3855 = vunpack.c.l.b16 %v3797
        %v3856 = vpack.c.b16 %v3828, %v3827
        %v3857 = vpack.c.b16 %v3830, %v3829
        %v3858 = vpack.c.b16 %v3832, %v3831
        %v3859 = vpack.c.b16 %v3834, %v3833
        %v3860 = vpack.c.b16 %v3836, %v3835
        %v3861 = vpack.c.b16 %v3838, %v3837
        %v3862 = vpack.c.b16 %v3840, %v3839
        %v3863 = vpack.c.b16 %v3842, %v3841
        %v3864 = vpack.c.b16 %v3844, %v3843
        %v3865 = vpack.c.b16 %v3846, %v3845
        %v3866 = vpack.c.b16 %v3848, %v3847
        %v3867 = vpack.c.b16 %v3850, %v3849
        %v3868 = vpack.c.b16 %v3852, %v3851
        %v3869 = vpack.c.b16 %v3854, %v3853
        %v3870 = vpack.c.b16 %v3855, %v3855
        %v3872 = vsel %vm557, %v3856, 0
        %v3875 = vsel %vm557, %v3857, 0
        %v3878 = vsel %vm557, %v3858, 0
        %v3881 = vsel %vm557, %v3859, 0
        %v3884 = vsel %vm557, %v3860, 0
        %v3887 = vsel %vm557, %v3861, 0
        %v3890 = vsel %vm557, %v3862, 0
        %v3893 = vsel %vm557, %v3863, 0
        %v3896 = vsel %vm557, %v3864, 0
        %v3899 = vsel %vm557, %v3865, 0
        %v3902 = vsel %vm557, %v3866, 0
        %v3905 = vsel %vm557, %v3867, 0
        %v3908 = vsel %vm557, %v3868, 0
        %v3911 = vsel %vm557, %v3869, 0
        %v3914 = vsel %vm557, %v3870, 0
        %3916 = vmatprep.subr.bf16.mxu0 0
        %3917 = vmatpush1.bf16.msra.mxu0 %v553
        %3918 = vmatprep.subr.bf16.mxu0 0
        %3919 = vmatpush1.bf16.msra.mxu0 %v554
        %3920 = vmatprep.subr.bf16.mxu0 0
        %3921 = vmatpush1.bf16.msra.mxu0 0
        %3922 = vmatprep.subr.bf16.mxu0 0
        %3923 = vmatpush1.bf16.msra.mxu0 0
        %3924 = vmatprep.subr.bf16.mxu0 0
        %3925 = vmatpush1.bf16.msra.mxu0 0
        %3926 = vmatprep.subr.bf16.mxu0 0
        %3927 = vmatpush1.bf16.msra.mxu0 0
        %3928 = vmatprep.subr.bf16.mxu0 0
        %3929 = vmatpush1.bf16.msra.mxu0 0
        %3930 = vmatprep.subr.bf16.mxu0 0
        %3931 = vmatpush1.bf16.msra.mxu0 0
        %3932 = vmatprep.subr.bf16.mxu0 0
        %3933 = vmatpush1.bf16.msra.mxu0 0
        %3934 = vmatprep.subr.bf16.mxu0 0
        %3935 = vmatpush1.bf16.msra.mxu0 0
        %3936 = vmatprep.subr.bf16.mxu0 0
        %3937 = vmatpush1.bf16.msra.mxu0 0
        %3938 = vmatprep.subr.bf16.mxu0 0
        %3939 = vmatpush1.bf16.msra.mxu0 0
        %3940 = vmatprep.subr.bf16.mxu0 0
        %3941 = vmatpush1.bf16.msra.mxu0 0
        %3942 = vmatprep.subr.bf16.mxu0 0
        %3943 = vmatpush1.bf16.msra.mxu0 0
        %3944 = vmatprep.subr.bf16.mxu0 0
        %3945 = vmatpush1.bf16.msra.mxu0 0
        %3946 = vmatprep.subr.bf16.mxu0 0
        %3947 = vmatpush1.bf16.msra.mxu0 0
        %3948 = vmatprep.mubr.bf16.mxu0 0
        %3949 = vmatmul.mubr.bf16.gmra.mrb[0].mxu0 %v3872
        %v3950 = vpop.f32.mrb[0].mxu0
        %v3951 = vadd.f32 0.0, %v3950
        %v3952 = vpop.f32.mrb[0].mxu0
        %v3953 = vpop.f32.mrb[0].mxu0
        %v3954 = vadd.f32 0.0, %v3953
        %v3955 = vpop.f32.mrb[0].mxu0
        %3956 = vmatprep.mubr.bf16.mxu0 0
        %3957 = vmatmul.mubr.bf16.gmra.mrb[0].mxu0 %v3875
        %v3958 = vpop.f32.mrb[0].mxu0
        %v3959 = vadd.f32 0.0, %v3958
        %v3960 = vpop.f32.mrb[0].mxu0
        %v3961 = vpop.f32.mrb[0].mxu0
        %v3962 = vadd.f32 0.0, %v3961
        %v3963 = vpop.f32.mrb[0].mxu0
        %3964 = vmatprep.mubr.bf16.mxu0 0
        %3965 = vmatmul.mubr.bf16.gmra.mrb[0].mxu0 %v3878
        %v3966 = vpop.f32.mrb[0].mxu0
        %v3967 = vadd.f32 0.0, %v3966
        %v3968 = vpop.f32.mrb[0].mxu0
        %v3969 = vpop.f32.mrb[0].mxu0
        %v3970 = vadd.f32 0.0, %v3969
        %v3971 = vpop.f32.mrb[0].mxu0
        %3972 = vmatprep.mubr.bf16.mxu0 0
        %3973 = vmatmul.mubr.bf16.gmra.mrb[0].mxu0 %v3881
        %v3974 = vpop.f32.mrb[0].mxu0
        %v3975 = vadd.f32 0.0, %v3974
        %v3976 = vpop.f32.mrb[0].mxu0
        %v3977 = vpop.f32.mrb[0].mxu0
        %v3978 = vadd.f32 0.0, %v3977
        %v3979 = vpop.f32.mrb[0].mxu0
        %3980 = vmatprep.mubr.bf16.mxu0 0
        %3981 = vmatmul.mubr.bf16.gmra.mrb[0].mxu0 %v3884
        %v3982 = vpop.f32.mrb[0].mxu0
        %v3983 = vadd.f32 0.0, %v3982
        %v3984 = vpop.f32.mrb[0].mxu0
        %v3985 = vpop.f32.mrb[0].mxu0
        %v3986 = vadd.f32 0.0, %v3985
        %v3987 = vpop.f32.mrb[0].mxu0
        %3988 = vmatprep.mubr.bf16.mxu0 0
        %3989 = vmatmul.mubr.bf16.gmra.mrb[0].mxu0 %v3887
        %v3990 = vpop.f32.mrb[0].mxu0
        %v3991 = vadd.f32 0.0, %v3990
        %v3992 = vpop.f32.mrb[0].mxu0
        %v3993 = vpop.f32.mrb[0].mxu0
        %v3994 = vadd.f32 0.0, %v3993
        %v3995 = vpop.f32.mrb[0].mxu0
        %3996 = vmatprep.mubr.bf16.mxu0 0
        %3997 = vmatmul.mubr.bf16.gmra.mrb[0].mxu0 %v3890
        %v3998 = vpop.f32.mrb[0].mxu0
        %v3999 = vadd.f32 0.0, %v3998
        %v4000 = vpop.f32.mrb[0].mxu0
        %v4001 = vpop.f32.mrb[0].mxu0
        %v4002 = vadd.f32 0.0, %v4001
        %v4003 = vpop.f32.mrb[0].mxu0
        %4004 = vmatprep.mubr.bf16.mxu0 0
        %4005 = vmatmul.mubr.bf16.gmra.mrb[0].mxu0 %v3893
        %v4006 = vpop.f32.mrb[0].mxu0
        %v4007 = vadd.f32 0.0, %v4006
        %v4008 = vpop.f32.mrb[0].mxu0
        %v4009 = vpop.f32.mrb[0].mxu0
        %v4010 = vadd.f32 0.0, %v4009
        %v4011 = vpop.f32.mrb[0].mxu0
        %4012 = vmatprep.mubr.bf16.mxu0 0
        %4013 = vmatmul.mubr.bf16.gmra.mrb[0].mxu0 %v3896
        %v4014 = vpop.f32.mrb[0].mxu0
        %v4015 = vadd.f32 0.0, %v4014
        %v4016 = vpop.f32.mrb[0].mxu0
        %v4017 = vpop.f32.mrb[0].mxu0
        %v4018 = vadd.f32 0.0, %v4017
        %v4019 = vpop.f32.mrb[0].mxu0
        %4020 = vmatprep.mubr.bf16.mxu0 0
        %4021 = vmatmul.mubr.bf16.gmra.mrb[0].mxu0 %v3899
        %v4022 = vpop.f32.mrb[0].mxu0
        %v4023 = vadd.f32 0.0, %v4022
        %v4024 = vpop.f32.mrb[0].mxu0
        %v4025 = vpop.f32.mrb[0].mxu0
        %v4026 = vadd.f32 0.0, %v4025
        %v4027 = vpop.f32.mrb[0].mxu0
        %4028 = vmatprep.mubr.bf16.mxu0 0
        %4029 = vmatmul.mubr.bf16.gmra.mrb[0].mxu0 %v3902
        %v4030 = vpop.f32.mrb[0].mxu0
        %v4031 = vadd.f32 0.0, %v4030
        %v4032 = vpop.f32.mrb[0].mxu0
        %v4033 = vpop.f32.mrb[0].mxu0
        %v4034 = vadd.f32 0.0, %v4033
        %v4035 = vpop.f32.mrb[0].mxu0
        %4036 = vmatprep.mubr.bf16.mxu0 0
        %4037 = vmatmul.mubr.bf16.gmra.mrb[0].mxu0 %v3905
        %v4038 = vpop.f32.mrb[0].mxu0
        %v4039 = vadd.f32 0.0, %v4038
        %v4040 = vpop.f32.mrb[0].mxu0
        %v4041 = vpop.f32.mrb[0].mxu0
        %v4042 = vadd.f32 0.0, %v4041
        %v4043 = vpop.f32.mrb[0].mxu0
        %4044 = vmatprep.mubr.bf16.mxu0 0
        %4045 = vmatmul.mubr.bf16.gmra.mrb[0].mxu0 %v3908
        %v4046 = vpop.f32.mrb[0].mxu0
        %v4047 = vadd.f32 0.0, %v4046
        %v4048 = vpop.f32.mrb[0].mxu0
        %v4049 = vpop.f32.mrb[0].mxu0
        %v4050 = vadd.f32 0.0, %v4049
        %v4051 = vpop.f32.mrb[0].mxu0
        %4052 = vmatprep.mubr.bf16.mxu0 0
        %4053 = vmatmul.mubr.bf16.gmra.mrb[0].mxu0 %v3911
        %v4054 = vpop.f32.mrb[0].mxu0
        %v4055 = vadd.f32 0.0, %v4054
        %v4056 = vpop.f32.mrb[0].mxu0
        %v4057 = vpop.f32.mrb[0].mxu0
        %v4058 = vadd.f32 0.0, %v4057
        %v4059 = vpop.f32.mrb[0].mxu0
        %4060 = vmatprep.mubr.bf16.mxu0 0
        %4061 = vmatmul.mubr.bf16.gmra.mrb[0].mxu0 %v3914
        %v4062 = vpop.f32.mrb[0].mxu0
        %v4063 = vadd.f32 0.0, %v4062
        %v4064 = vpop.f32.mrb[0].mxu0
        %v4065 = vpop.f32.mrb[0].mxu0
        %v4066 = vpop.f32.mrb[0].mxu0
        %4067 = vdwg.mxu0
        %v4068 = vmul.f32 %v3951, %v760
        %v4069 = vmul.f32 %v3954, %v760
        %v4070 = vmul.f32 %v3959, %v760
        %v4071 = vmul.f32 %v3962, %v760
        %v4072 = vmul.f32 %v3967, %v760
        %v4073 = vmul.f32 %v3970, %v760
        %v4074 = vmul.f32 %v3975, %v760
        %v4075 = vmul.f32 %v3978, %v760
        %v4076 = vmul.f32 %v3983, %v760
        %v4077 = vmul.f32 %v3986, %v760
        %v4078 = vmul.f32 %v3991, %v760
        %v4079 = vmul.f32 %v3994, %v760
        %v4080 = vmul.f32 %v3999, %v760
        %v4081 = vmul.f32 %v4002, %v760
        %v4082 = vmul.f32 %v4007, %v760
        %v4083 = vmul.f32 %v4010, %v760
        %v4084 = vmul.f32 %v4015, %v760
        %v4085 = vmul.f32 %v4018, %v760
        %v4086 = vmul.f32 %v4023, %v760
        %v4087 = vmul.f32 %v4026, %v760
        %v4088 = vmul.f32 %v4031, %v760
        %v4089 = vmul.f32 %v4034, %v760
        %v4090 = vmul.f32 %v4039, %v760
        %v4091 = vmul.f32 %v4042, %v760
        %v4092 = vmul.f32 %v4047, %v760
        %v4093 = vmul.f32 %v4050, %v760
        %v4094 = vmul.f32 %v4055, %v760
        %v4095 = vmul.f32 %v4058, %v760
        %v4096 = vmul.f32 %v4063, %v760
        %v4097 = vadd.f32 %v4068, %v796
        %v4098 = vadd.f32 %v4069, %v796
        %v4099 = vadd.f32 %v4070, %v796
        %v4100 = vadd.f32 %v4071, %v796
        %v4101 = vadd.f32 %v4072, %v796
        %v4102 = vadd.f32 %v4073, %v796
        %v4103 = vadd.f32 %v4074, %v796
        %v4104 = vadd.f32 %v4075, %v796
        %v4105 = vadd.f32 %v4076, %v796
        %v4106 = vadd.f32 %v4077, %v796
        %v4107 = vadd.f32 %v4078, %v796
        %v4108 = vadd.f32 %v4079, %v796
        %v4109 = vadd.f32 %v4080, %v796
        %v4110 = vadd.f32 %v4081, %v796
        %v4111 = vadd.f32 %v4082, %v796
        %v4112 = vadd.f32 %v4083, %v796
        %v4113 = vadd.f32 %v4084, %v796
        %v4114 = vadd.f32 %v4085, %v796
        %v4115 = vadd.f32 %v4086, %v796
        %v4116 = vadd.f32 %v4087, %v796
        %v4117 = vadd.f32 %v4088, %v796
        %v4118 = vadd.f32 %v4089, %v796
        %v4119 = vadd.f32 %v4090, %v796
        %v4120 = vadd.f32 %v4091, %v796
        %v4121 = vadd.f32 %v4092, %v796
        %v4122 = vadd.f32 %v4093, %v796
        %v4123 = vadd.f32 %v4094, %v796
        %v4124 = vadd.f32 %v4095, %v796
        %v4125 = vadd.f32 %v4096, %v796
        %v4126 = vmax.f32 %v4097, 0.0
        %v4127 = vmax.f32 %v4098, 0.0
        %v4128 = vmax.f32 %v4099, 0.0
        %v4129 = vmax.f32 %v4100, 0.0
        %v4130 = vmax.f32 %v4101, 0.0
        %v4131 = vmax.f32 %v4102, 0.0
        %v4132 = vmax.f32 %v4103, 0.0
        %v4133 = vmax.f32 %v4104, 0.0
        %v4134 = vmax.f32 %v4105, 0.0
        %v4135 = vmax.f32 %v4106, 0.0
        %v4136 = vmax.f32 %v4107, 0.0
        %v4137 = vmax.f32 %v4108, 0.0
        %v4138 = vmax.f32 %v4109, 0.0
        %v4139 = vmax.f32 %v4110, 0.0
        %v4140 = vmax.f32 %v4111, 0.0
        %v4141 = vmax.f32 %v4112, 0.0
        %v4142 = vmax.f32 %v4113, 0.0
        %v4143 = vmax.f32 %v4114, 0.0
        %v4144 = vmax.f32 %v4115, 0.0
        %v4145 = vmax.f32 %v4116, 0.0
        %v4146 = vmax.f32 %v4117, 0.0
        %v4147 = vmax.f32 %v4118, 0.0
        %v4148 = vmax.f32 %v4119, 0.0
        %v4149 = vmax.f32 %v4120, 0.0
        %v4150 = vmax.f32 %v4121, 0.0
        %v4151 = vmax.f32 %v4122, 0.0
        %v4152 = vmax.f32 %v4123, 0.0
        %v4153 = vmax.f32 %v4124, 0.0
        %v4154 = vmax.f32 %v4125, 0.0
        %v4155 = vmax.f32 %v3739, %v4126
        %v4156 = vmax.f32 %v3740, %v4127
        %v4157 = vmax.f32 %v3741, %v4128
        %v4158 = vmax.f32 %v3742, %v4129
        %v4159 = vmax.f32 %v3743, %v4130
        %v4160 = vmax.f32 %v3744, %v4131
        %v4161 = vmax.f32 %v3745, %v4132
        %v4162 = vmax.f32 %v3746, %v4133
        %v4163 = vmax.f32 %v3747, %v4134
        %v4164 = vmax.f32 %v3748, %v4135
        %v4165 = vmax.f32 %v3749, %v4136
        %v4166 = vmax.f32 %v3750, %v4137
        %v4167 = vmax.f32 %v3751, %v4138
        %v4168 = vmax.f32 %v3752, %v4139
        %v4169 = vmax.f32 %v3753, %v4140
        %v4170 = vmax.f32 %v3754, %v4141
        %v4171 = vmax.f32 %v3755, %v4142
        %v4172 = vmax.f32 %v3756, %v4143
        %v4173 = vmax.f32 %v3757, %v4144
        %v4174 = vmax.f32 %v3758, %v4145
        %v4175 = vmax.f32 %v3759, %v4146
        %v4176 = vmax.f32 %v3760, %v4147
        %v4177 = vmax.f32 %v3761, %v4148
        %v4178 = vmax.f32 %v3762, %v4149
        %v4179 = vmax.f32 %v3763, %v4150
        %v4180 = vmax.f32 %v3764, %v4151
        %v4181 = vmax.f32 %v3765, %v4152
        %v4182 = vmax.f32 %v3766, %v4153
        %v4183 = vmax.f32 %v3767, %v4154
        %4184 = vst [vmem:[#allocation2] sm:$0xff] %v4155
        %4185 = vst [vmem:[#allocation2 + $0x8] sm:$0xff] %v4156
        %4186 = vst [vmem:[#allocation2 + $0x10] sm:$0xff] %v4157
        %4187 = vst [vmem:[#allocation2 + $0x18] sm:$0xff] %v4158
        %4188 = vst [vmem:[#allocation2 + $0x20] sm:$0xff] %v4159
        %4189 = vst [vmem:[#allocation2 + $0x28] sm:$0xff] %v4160
        %4190 = vst [vmem:[#allocation2 + $0x30] sm:$0xff] %v4161
        %4191 = vst [vmem:[#allocation2 + $0x38] sm:$0xff] %v4162
        %4192 = vst [vmem:[#allocation2 + $0x40] sm:$0xff] %v4163
        %4193 = vst [vmem:[#allocation2 + $0x48] sm:$0xff] %v4164
        %4194 = vst [vmem:[#allocation2 + $0x50] sm:$0xff] %v4165
        %4195 = vst [vmem:[#allocation2 + $0x58] sm:$0xff] %v4166
        %4196 = vst [vmem:[#allocation2 + $0x60] sm:$0xff] %v4167
        %4197 = vst [vmem:[#allocation2 + $0x68] sm:$0xff] %v4168
        %4198 = vst [vmem:[#allocation2 + $0x70] sm:$0xff] %v4169
        %4199 = vst [vmem:[#allocation2 + $0x78] sm:$0xff] %v4170
        %4200 = vst [vmem:[#allocation2 + $0x80] sm:$0xff] %v4171
        %4201 = vst [vmem:[#allocation2 + $0x88] sm:$0xff] %v4172
        %4202 = vst [vmem:[#allocation2 + $0x90] sm:$0xff] %v4173
        %4203 = vst [vmem:[#allocation2 + $0x98] sm:$0xff] %v4174
        %4204 = vst [vmem:[#allocation2 + $0xa0] sm:$0xff] %v4175
        %4205 = vst [vmem:[#allocation2 + $0xa8] sm:$0xff] %v4176
        %4206 = vst [vmem:[#allocation2 + $0xb0] sm:$0xff] %v4177
        %4207 = vst [vmem:[#allocation2 + $0xb8] sm:$0xff] %v4178
        %4208 = vst [vmem:[#allocation2 + $0xc0] sm:$0xff] %v4179
        %4209 = vst [vmem:[#allocation2 + $0xc8] sm:$0xff] %v4180
        %4210 = vst [vmem:[#allocation2 + $0xd0] sm:$0xff] %v4181
        %4211 = vst [vmem:[#allocation2 + $0xd8] sm:$0xff] %v4182
        %4212 = vst [vmem:[#allocation2 + $0xe0] sm:$0x1] %v4183
        %v4213 = vld [vmem:[#allocation2] sm:$0xff]
        %v4214 = vld [vmem:[#allocation2 + $0x8] sm:$0xff]
        %v4215 = vld [vmem:[#allocation2 + $0x10] sm:$0xff]
        %v4216 = vld [vmem:[#allocation2 + $0x18] sm:$0xff]
        %v4217 = vld [vmem:[#allocation2 + $0x20] sm:$0xff]
        %v4218 = vld [vmem:[#allocation2 + $0x28] sm:$0xff]
        %v4219 = vld [vmem:[#allocation2 + $0x30] sm:$0xff]
        %v4220 = vld [vmem:[#allocation2 + $0x38] sm:$0xff]
        %v4221 = vld [vmem:[#allocation2 + $0x40] sm:$0xff]
        %v4222 = vld [vmem:[#allocation2 + $0x48] sm:$0xff]
        %v4223 = vld [vmem:[#allocation2 + $0x50] sm:$0xff]
        %v4224 = vld [vmem:[#allocation2 + $0x58] sm:$0xff]
        %v4225 = vld [vmem:[#allocation2 + $0x60] sm:$0xff]
        %v4226 = vld [vmem:[#allocation2 + $0x68] sm:$0xff]
        %v4227 = vld [vmem:[#allocation2 + $0x70] sm:$0xff]
        %v4228 = vld [vmem:[#allocation2 + $0x78] sm:$0xff]
        %v4229 = vld [vmem:[#allocation2 + $0x80] sm:$0xff]
        %v4230 = vld [vmem:[#allocation2 + $0x88] sm:$0xff]
        %v4231 = vld [vmem:[#allocation2 + $0x90] sm:$0xff]
        %v4232 = vld [vmem:[#allocation2 + $0x98] sm:$0xff]
        %v4233 = vld [vmem:[#allocation2 + $0xa0] sm:$0xff]
        %v4234 = vld [vmem:[#allocation2 + $0xa8] sm:$0xff]
        %v4235 = vld [vmem:[#allocation2 + $0xb0] sm:$0x3]
        %v4236 = vpack.c.bf16 %v4214, %v4213
        %v4237 = vpack.c.bf16 %v4216, %v4215
        %v4238 = vpack.c.bf16 %v4218, %v4217
        %v4239 = vpack.c.bf16 %v4220, %v4219
        %v4240 = vpack.c.bf16 %v4222, %v4221
        %v4241 = vpack.c.bf16 %v4224, %v4223
        %v4242 = vpack.c.bf16 %v4226, %v4225
        %v4243 = vpack.c.bf16 %v4228, %v4227
        %v4244 = vpack.c.bf16 %v4230, %v4229
        %v4245 = vpack.c.bf16 %v4232, %v4231
        %v4246 = vpack.c.bf16 %v4234, %v4233
        %v4247 = vpack.c.bf16 %v4235, %v4235
        %v4248 = vld [vmem:[%s4] sm:$0xf]
        %v4249 = vld [vmem:[%s4 + $0x4] sm:$0xf]
        %v4250 = vld [vmem:[%s4 + $0x8] sm:$0xf]
        %v4251 = vld [vmem:[%s4 + $0xc] sm:$0xf]
        %v4252 = vld [vmem:[%s4 + $0x10] sm:$0xf]
        %v4253 = vld [vmem:[%s4 + $0x14] sm:$0xf]
        %v4254 = vld [vmem:[%s4 + $0x18] sm:$0xf]
        %v4255 = vld [vmem:[%s4 + $0x1c] sm:$0xf]
        %v4256 = vld [vmem:[%s4 + $0x20] sm:$0xf]
        %v4257 = vld [vmem:[%s4 + $0x24] sm:$0xf]
        %v4258 = vld [vmem:[%s4 + $0x28] sm:$0xf]
        %v4259 = vld [vmem:[%s4 + $0x2c] sm:$0xf]
        %v4260 = vld [vmem:[%s4 + $0x30] sm:$0xf]
        %v4261 = vld [vmem:[%s4 + $0x34] sm:$0xf]
        %v4262 = vld [vmem:[%s4 + $0x38] sm:$0xf]
        %v4263 = vld [vmem:[%s4 + $0x3c] sm:$0xf]
        %v4264 = vld [vmem:[#allocation2 + $0x1] sm:$0xff]
        %v4265 = vld [vmem:[#allocation2 + $0x9] sm:$0xff]
        %v4266 = vld [vmem:[#allocation2 + $0x11] sm:$0xff]
        %v4267 = vld [vmem:[#allocation2 + $0x19] sm:$0xff]
        %v4268 = vld [vmem:[#allocation2 + $0x21] sm:$0xff]
        %v4269 = vld [vmem:[#allocation2 + $0x29] sm:$0xff]
        %v4270 = vld [vmem:[#allocation2 + $0x31] sm:$0xff]
        %v4271 = vld [vmem:[#allocation2 + $0x39] sm:$0xff]
        %v4272 = vld [vmem:[#allocation2 + $0x41] sm:$0xff]
        %v4273 = vld [vmem:[#allocation2 + $0x49] sm:$0xff]
        %v4274 = vld [vmem:[#allocation2 + $0x51] sm:$0xff]
        %v4275 = vld [vmem:[#allocation2 + $0x59] sm:$0xff]
        %v4276 = vld [vmem:[#allocation2 + $0x61] sm:$0xff]
        %v4277 = vld [vmem:[#allocation2 + $0x69] sm:$0xff]
        %v4278 = vld [vmem:[#allocation2 + $0x71] sm:$0xff]
        %v4279 = vld [vmem:[#allocation2 + $0x79] sm:$0xff]
        %v4280 = vld [vmem:[#allocation2 + $0x81] sm:$0xff]
        %v4281 = vld [vmem:[#allocation2 + $0x89] sm:$0xff]
        %v4282 = vld [vmem:[#allocation2 + $0x91] sm:$0xff]
        %v4283 = vld [vmem:[#allocation2 + $0x99] sm:$0xff]
        %v4284 = vld [vmem:[#allocation2 + $0xa1] sm:$0xff]
        %v4285 = vld [vmem:[#allocation2 + $0xa9] sm:$0xff]
        %v4286 = vld [vmem:[#allocation2 + $0xb1] sm:$0x3]
        %v4287 = vpack.c.bf16 %v4265, %v4264
        %v4288 = vpack.c.bf16 %v4267, %v4266
        %v4289 = vpack.c.bf16 %v4269, %v4268
        %v4290 = vpack.c.bf16 %v4271, %v4270
        %v4291 = vpack.c.bf16 %v4273, %v4272
        %v4292 = vpack.c.bf16 %v4275, %v4274
        %v4293 = vpack.c.bf16 %v4277, %v4276
        %v4294 = vpack.c.bf16 %v4279, %v4278
        %v4295 = vpack.c.bf16 %v4281, %v4280
        %v4296 = vpack.c.bf16 %v4283, %v4282
        %v4297 = vpack.c.bf16 %v4285, %v4284
        %v4298 = vpack.c.bf16 %v4286, %v4286
        %s4299 = scalar_lea.vmem %s4, 64
        %v4300 = vld [vmem:[%s4299] sm:$0xf]
        %v4301 = vld [vmem:[%s4299 + $0x4] sm:$0xf]
        %v4302 = vld [vmem:[%s4299 + $0x8] sm:$0xf]
        %v4303 = vld [vmem:[%s4299 + $0xc] sm:$0xf]
        %v4304 = vld [vmem:[%s4299 + $0x10] sm:$0xf]
        %v4305 = vld [vmem:[%s4299 + $0x14] sm:$0xf]
        %v4306 = vld [vmem:[%s4299 + $0x18] sm:$0xf]
        %v4307 = vld [vmem:[%s4299 + $0x1c] sm:$0xf]
        %v4308 = vld [vmem:[%s4299 + $0x20] sm:$0xf]
        %v4309 = vld [vmem:[%s4299 + $0x24] sm:$0xf]
        %v4310 = vld [vmem:[%s4299 + $0x28] sm:$0xf]
        %v4311 = vld [vmem:[%s4299 + $0x2c] sm:$0xf]
        %v4312 = vld [vmem:[%s4299 + $0x30] sm:$0xf]
        %v4313 = vld [vmem:[%s4299 + $0x34] sm:$0xf]
        %v4314 = vld [vmem:[%s4299 + $0x38] sm:$0xf]
        %v4315 = vld [vmem:[%s4299 + $0x3c] sm:$0xf]
        %v4332 = vunpack.c.l.b16 %v4300
        %v4333 = vunpack.c.l.b16 %v4301
        %v4334 = vunpack.c.l.b16 %v4302
        %v4335 = vunpack.c.l.b16 %v4303
        %v4336 = vunpack.c.l.b16 %v4304
        %v4337 = vunpack.c.l.b16 %v4305
        %v4338 = vunpack.c.l.b16 %v4306
        %v4339 = vunpack.c.l.b16 %v4307
        %v4340 = vunpack.c.l.b16 %v4308
        %v4341 = vunpack.c.l.b16 %v4309
        %v4342 = vunpack.c.l.b16 %v4310
        %v4343 = vunpack.c.l.b16 %v4311
        %v4344 = vunpack.c.l.b16 %v4312
        %v4345 = vunpack.c.l.b16 %v4313
        %v4346 = vunpack.c.l.b16 %v4314
        %v4347 = vunpack.c.l.b16 %v4315
        %v4348 = vpack.c.b16 %v4333, %v4332
        %v4349 = vpack.c.b16 %v4335, %v4334
        %v4350 = vpack.c.b16 %v4337, %v4336
        %v4351 = vpack.c.b16 %v4339, %v4338
        %v4352 = vpack.c.b16 %v4341, %v4340
        %v4353 = vpack.c.b16 %v4343, %v4342
        %v4354 = vpack.c.b16 %v4345, %v4344
        %v4355 = vpack.c.b16 %v4347, %v4346
        %4364 = vmatprep.subr.bf16.mxu0 0
        %4365 = vmatpush1.bf16.msra.mxu0 %v4348
        %4366 = vmatprep.subr.bf16.mxu0 0
        %4367 = vmatpush1.bf16.msra.mxu0 %v4349
        %4368 = vmatprep.subr.bf16.mxu0 0
        %4369 = vmatpush1.bf16.msra.mxu0 %v4350
        %4370 = vmatprep.subr.bf16.mxu0 0
        %4371 = vmatpush1.bf16.msra.mxu0 %v4351
        %4372 = vmatprep.subr.bf16.mxu0 0
        %4373 = vmatpush1.bf16.msra.mxu0 %v4352
        %4374 = vmatprep.subr.bf16.mxu0 0
        %4375 = vmatpush1.bf16.msra.mxu0 %v4353
        %4376 = vmatprep.subr.bf16.mxu0 0
        %4377 = vmatpush1.bf16.msra.mxu0 %v4354
        %4378 = vmatprep.subr.bf16.mxu0 0
        %4379 = vmatpush1.bf16.msra.mxu0 %v4355
        %4380 = vmatprep.subr.bf16.mxu0 0
        %4381 = vmatpush1.bf16.msra.mxu0 0
        %4382 = vmatprep.subr.bf16.mxu0 0
        %4383 = vmatpush1.bf16.msra.mxu0 0
        %4384 = vmatprep.subr.bf16.mxu0 0
        %4385 = vmatpush1.bf16.msra.mxu0 0
        %4386 = vmatprep.subr.bf16.mxu0 0
        %4387 = vmatpush1.bf16.msra.mxu0 0
        %4388 = vmatprep.subr.bf16.mxu0 0
        %4389 = vmatpush1.bf16.msra.mxu0 0
        %4390 = vmatprep.subr.bf16.mxu0 0
        %4391 = vmatpush1.bf16.msra.mxu0 0
        %4392 = vmatprep.subr.bf16.mxu0 0
        %4393 = vmatpush1.bf16.msra.mxu0 0
        %4394 = vmatprep.subr.bf16.mxu0 0
        %4395 = vmatpush1.bf16.msra.mxu0 0
        %4396 = vmatprep.mubr.bf16.mxu0 0
        %4397 = vmatmul.mubr.bf16.gmra.mrb[0].mxu0 %v4287
        %v4398 = vpop.f32.mrb[0].mxu0
        %v4399 = vadd.f32 0.0, %v4398
        %v4400 = vpop.f32.mrb[0].mxu0
        %v4401 = vpop.f32.mrb[0].mxu0
        %v4402 = vadd.f32 0.0, %v4401
        %v4403 = vpop.f32.mrb[0].mxu0
        %4404 = vmatprep.mubr.bf16.mxu0 0
        %4405 = vmatmul.mubr.bf16.gmra.mrb[0].mxu0 %v4288
        %v4406 = vpop.f32.mrb[0].mxu0
        %v4407 = vadd.f32 0.0, %v4406
        %v4408 = vpop.f32.mrb[0].mxu0
        %v4409 = vpop.f32.mrb[0].mxu0
        %v4410 = vadd.f32 0.0, %v4409
        %v4411 = vpop.f32.mrb[0].mxu0
        %4412 = vmatprep.mubr.bf16.mxu0 0
        %4413 = vmatmul.mubr.bf16.gmra.mrb[0].mxu0 %v4289
        %v4414 = vpop.f32.mrb[0].mxu0
        %v4415 = vadd.f32 0.0, %v4414
        %v4416 = vpop.f32.mrb[0].mxu0
        %v4417 = vpop.f32.mrb[0].mxu0
        %v4418 = vadd.f32 0.0, %v4417
        %v4419 = vpop.f32.mrb[0].mxu0
        %4420 = vmatprep.mubr.bf16.mxu0 0
        %4421 = vmatmul.mubr.bf16.gmra.mrb[0].mxu0 %v4290
        %v4422 = vpop.f32.mrb[0].mxu0
        %v4423 = vadd.f32 0.0, %v4422
        %v4424 = vpop.f32.mrb[0].mxu0
        %v4425 = vpop.f32.mrb[0].mxu0
        %v4426 = vadd.f32 0.0, %v4425
        %v4427 = vpop.f32.mrb[0].mxu0
        %4428 = vmatprep.mubr.bf16.mxu0 0
        %4429 = vmatmul.mubr.bf16.gmra.mrb[0].mxu0 %v4291
        %v4430 = vpop.f32.mrb[0].mxu0
        %v4431 = vadd.f32 0.0, %v4430
        %v4432 = vpop.f32.mrb[0].mxu0
        %v4433 = vpop.f32.mrb[0].mxu0
        %v4434 = vadd.f32 0.0, %v4433
        %v4435 = vpop.f32.mrb[0].mxu0
        %4436 = vmatprep.mubr.bf16.mxu0 0
        %4437 = vmatmul.mubr.bf16.gmra.mrb[0].mxu0 %v4292
        %v4438 = vpop.f32.mrb[0].mxu0
        %v4439 = vadd.f32 0.0, %v4438
        %v4440 = vpop.f32.mrb[0].mxu0
        %v4441 = vpop.f32.mrb[0].mxu0
        %v4442 = vadd.f32 0.0, %v4441
        %v4443 = vpop.f32.mrb[0].mxu0
        %4444 = vmatprep.mubr.bf16.mxu0 0
        %4445 = vmatmul.mubr.bf16.gmra.mrb[0].mxu0 %v4293
        %v4446 = vpop.f32.mrb[0].mxu0
        %v4447 = vadd.f32 0.0, %v4446
        %v4448 = vpop.f32.mrb[0].mxu0
        %v4449 = vpop.f32.mrb[0].mxu0
        %v4450 = vadd.f32 0.0, %v4449
        %v4451 = vpop.f32.mrb[0].mxu0
        %4452 = vmatprep.mubr.bf16.mxu0 0
        %4453 = vmatmul.mubr.bf16.gmra.mrb[0].mxu0 %v4294
        %v4454 = vpop.f32.mrb[0].mxu0
        %v4455 = vadd.f32 0.0, %v4454
        %v4456 = vpop.f32.mrb[0].mxu0
        %v4457 = vpop.f32.mrb[0].mxu0
        %v4458 = vadd.f32 0.0, %v4457
        %v4459 = vpop.f32.mrb[0].mxu0
        %4460 = vmatprep.mubr.bf16.mxu0 0
        %4461 = vmatmul.mubr.bf16.gmra.mrb[0].mxu0 %v4295
        %v4462 = vpop.f32.mrb[0].mxu0
        %v4463 = vadd.f32 0.0, %v4462
        %v4464 = vpop.f32.mrb[0].mxu0
        %v4465 = vpop.f32.mrb[0].mxu0
        %v4466 = vadd.f32 0.0, %v4465
        %v4467 = vpop.f32.mrb[0].mxu0
        %4468 = vmatprep.mubr.bf16.mxu0 0
        %4469 = vmatmul.mubr.bf16.gmra.mrb[0].mxu0 %v4296
        %v4470 = vpop.f32.mrb[0].mxu0
        %v4471 = vadd.f32 0.0, %v4470
        %v4472 = vpop.f32.mrb[0].mxu0
        %v4473 = vpop.f32.mrb[0].mxu0
        %v4474 = vadd.f32 0.0, %v4473
        %v4475 = vpop.f32.mrb[0].mxu0
        %4476 = vmatprep.mubr.bf16.mxu0 0
        %4477 = vmatmul.mubr.bf16.gmra.mrb[0].mxu0 %v4297
        %v4478 = vpop.f32.mrb[0].mxu0
        %v4479 = vadd.f32 0.0, %v4478
        %v4480 = vpop.f32.mrb[0].mxu0
        %v4481 = vpop.f32.mrb[0].mxu0
        %v4482 = vadd.f32 0.0, %v4481
        %v4483 = vpop.f32.mrb[0].mxu0
        %4484 = vmatprep.mubr.bf16.mxu0 0
        %4485 = vmatmul.mubr.bf16.gmra.mrb[0].mxu0 %v4298
        %v4486 = vpop.f32.mrb[0].mxu0
        %v4487 = vadd.f32 0.0, %v4486
        %v4488 = vpop.f32.mrb[0].mxu0
        %v4489 = vpop.f32.mrb[0].mxu0
        %v4490 = vpop.f32.mrb[0].mxu0
        %4491 = vdwg.mxu0
        %v4508 = vunpack.c.l.b16 %v4248
        %v4509 = vunpack.c.l.b16 %v4249
        %v4510 = vunpack.c.l.b16 %v4250
        %v4511 = vunpack.c.l.b16 %v4251
        %v4512 = vunpack.c.l.b16 %v4252
        %v4513 = vunpack.c.l.b16 %v4253
        %v4514 = vunpack.c.l.b16 %v4254
        %v4515 = vunpack.c.l.b16 %v4255
        %v4516 = vunpack.c.l.b16 %v4256
        %v4517 = vunpack.c.l.b16 %v4257
        %v4518 = vunpack.c.l.b16 %v4258
        %v4519 = vunpack.c.l.b16 %v4259
        %v4520 = vunpack.c.l.b16 %v4260
        %v4521 = vunpack.c.l.b16 %v4261
        %v4522 = vunpack.c.l.b16 %v4262
        %v4523 = vunpack.c.l.b16 %v4263
        %v4524 = vpack.c.b16 %v4509, %v4508
        %v4525 = vpack.c.b16 %v4511, %v4510
        %v4526 = vpack.c.b16 %v4513, %v4512
        %v4527 = vpack.c.b16 %v4515, %v4514
        %v4528 = vpack.c.b16 %v4517, %v4516
        %v4529 = vpack.c.b16 %v4519, %v4518
        %v4530 = vpack.c.b16 %v4521, %v4520
        %v4531 = vpack.c.b16 %v4523, %v4522
        %4540 = vmatprep.subr.bf16.mxu0 0
        %4541 = vmatpush1.bf16.msra.mxu0 %v4524
        %4542 = vmatprep.subr.bf16.mxu0 0
        %4543 = vmatpush1.bf16.msra.mxu0 %v4525
        %4544 = vmatprep.subr.bf16.mxu0 0
        %4545 = vmatpush1.bf16.msra.mxu0 %v4526
        %4546 = vmatprep.subr.bf16.mxu0 0
        %4547 = vmatpush1.bf16.msra.mxu0 %v4527
        %4548 = vmatprep.subr.bf16.mxu0 0
        %4549 = vmatpush1.bf16.msra.mxu0 %v4528
        %4550 = vmatprep.subr.bf16.mxu0 0
        %4551 = vmatpush1.bf16.msra.mxu0 %v4529
        %4552 = vmatprep.subr.bf16.mxu0 0
        %4553 = vmatpush1.bf16.msra.mxu0 %v4530
        %4554 = vmatprep.subr.bf16.mxu0 0
        %4555 = vmatpush1.bf16.msra.mxu0 %v4531
        %4556 = vmatprep.subr.bf16.mxu0 0
        %4557 = vmatpush1.bf16.msra.mxu0 0
        %4558 = vmatprep.subr.bf16.mxu0 0
        %4559 = vmatpush1.bf16.msra.mxu0 0
        %4560 = vmatprep.subr.bf16.mxu0 0
        %4561 = vmatpush1.bf16.msra.mxu0 0
        %4562 = vmatprep.subr.bf16.mxu0 0
        %4563 = vmatpush1.bf16.msra.mxu0 0
        %4564 = vmatprep.subr.bf16.mxu0 0
        %4565 = vmatpush1.bf16.msra.mxu0 0
        %4566 = vmatprep.subr.bf16.mxu0 0
        %4567 = vmatpush1.bf16.msra.mxu0 0
        %4568 = vmatprep.subr.bf16.mxu0 0
        %4569 = vmatpush1.bf16.msra.mxu0 0
        %4570 = vmatprep.subr.bf16.mxu0 0
        %4571 = vmatpush1.bf16.msra.mxu0 0
        %4572 = vmatprep.mubr.bf16.mxu0 0
        %4573 = vmatmul.mubr.bf16.gmra.mrb[0].mxu0 %v4236
        %v4574 = vpop.f32.mrb[0].mxu0
        %v4575 = vadd.f32 %v4399, %v4574
        %v4576 = vpop.f32.mrb[0].mxu0
        %v4577 = vpop.f32.mrb[0].mxu0
        %v4578 = vadd.f32 %v4402, %v4577
        %v4579 = vpop.f32.mrb[0].mxu0
        %4580 = vmatprep.mubr.bf16.mxu0 0
        %4581 = vmatmul.mubr.bf16.gmra.mrb[0].mxu0 %v4237
        %v4582 = vpop.f32.mrb[0].mxu0
        %v4583 = vadd.f32 %v4407, %v4582
        %v4584 = vpop.f32.mrb[0].mxu0
        %v4585 = vpop.f32.mrb[0].mxu0
        %v4586 = vadd.f32 %v4410, %v4585
        %v4587 = vpop.f32.mrb[0].mxu0
        %4588 = vmatprep.mubr.bf16.mxu0 0
        %4589 = vmatmul.mubr.bf16.gmra.mrb[0].mxu0 %v4238
        %v4590 = vpop.f32.mrb[0].mxu0
        %v4591 = vadd.f32 %v4415, %v4590
        %v4592 = vpop.f32.mrb[0].mxu0
        %v4593 = vpop.f32.mrb[0].mxu0
        %v4594 = vadd.f32 %v4418, %v4593
        %v4595 = vpop.f32.mrb[0].mxu0
        %4596 = vmatprep.mubr.bf16.mxu0 0
        %4597 = vmatmul.mubr.bf16.gmra.mrb[0].mxu0 %v4239
        %v4598 = vpop.f32.mrb[0].mxu0
        %v4599 = vadd.f32 %v4423, %v4598
        %v4600 = vpop.f32.mrb[0].mxu0
        %v4601 = vpop.f32.mrb[0].mxu0
        %v4602 = vadd.f32 %v4426, %v4601
        %v4603 = vpop.f32.mrb[0].mxu0
        %4604 = vmatprep.mubr.bf16.mxu0 0
        %4605 = vmatmul.mubr.bf16.gmra.mrb[0].mxu0 %v4240
        %v4606 = vpop.f32.mrb[0].mxu0
        %v4607 = vadd.f32 %v4431, %v4606
        %v4608 = vpop.f32.mrb[0].mxu0
        %v4609 = vpop.f32.mrb[0].mxu0
        %v4610 = vadd.f32 %v4434, %v4609
        %v4611 = vpop.f32.mrb[0].mxu0
        %4612 = vmatprep.mubr.bf16.mxu0 0
        %4613 = vmatmul.mubr.bf16.gmra.mrb[0].mxu0 %v4241
        %v4614 = vpop.f32.mrb[0].mxu0
        %v4615 = vadd.f32 %v4439, %v4614
        %v4616 = vpop.f32.mrb[0].mxu0
        %v4617 = vpop.f32.mrb[0].mxu0
        %v4618 = vadd.f32 %v4442, %v4617
        %v4619 = vpop.f32.mrb[0].mxu0
        %4620 = vmatprep.mubr.bf16.mxu0 0
        %4621 = vmatmul.mubr.bf16.gmra.mrb[0].mxu0 %v4242
        %v4622 = vpop.f32.mrb[0].mxu0
        %v4623 = vadd.f32 %v4447, %v4622
        %v4624 = vpop.f32.mrb[0].mxu0
        %v4625 = vpop.f32.mrb[0].mxu0
        %v4626 = vadd.f32 %v4450, %v4625
        %v4627 = vpop.f32.mrb[0].mxu0
        %4628 = vmatprep.mubr.bf16.mxu0 0
        %4629 = vmatmul.mubr.bf16.gmra.mrb[0].mxu0 %v4243
        %v4630 = vpop.f32.mrb[0].mxu0
        %v4631 = vadd.f32 %v4455, %v4630
        %v4632 = vpop.f32.mrb[0].mxu0
        %v4633 = vpop.f32.mrb[0].mxu0
        %v4634 = vadd.f32 %v4458, %v4633
        %v4635 = vpop.f32.mrb[0].mxu0
        %4636 = vmatprep.mubr.bf16.mxu0 0
        %4637 = vmatmul.mubr.bf16.gmra.mrb[0].mxu0 %v4244
        %v4638 = vpop.f32.mrb[0].mxu0
        %v4639 = vadd.f32 %v4463, %v4638
        %v4640 = vpop.f32.mrb[0].mxu0
        %v4641 = vpop.f32.mrb[0].mxu0
        %v4642 = vadd.f32 %v4466, %v4641
        %v4643 = vpop.f32.mrb[0].mxu0
        %4644 = vmatprep.mubr.bf16.mxu0 0
        %4645 = vmatmul.mubr.bf16.gmra.mrb[0].mxu0 %v4245
        %v4646 = vpop.f32.mrb[0].mxu0
        %v4647 = vadd.f32 %v4471, %v4646
        %v4648 = vpop.f32.mrb[0].mxu0
        %v4649 = vpop.f32.mrb[0].mxu0
        %v4650 = vadd.f32 %v4474, %v4649
        %v4651 = vpop.f32.mrb[0].mxu0
        %4652 = vmatprep.mubr.bf16.mxu0 0
        %4653 = vmatmul.mubr.bf16.gmra.mrb[0].mxu0 %v4246
        %v4654 = vpop.f32.mrb[0].mxu0
        %v4655 = vadd.f32 %v4479, %v4654
        %v4656 = vpop.f32.mrb[0].mxu0
        %v4657 = vpop.f32.mrb[0].mxu0
        %v4658 = vadd.f32 %v4482, %v4657
        %v4659 = vpop.f32.mrb[0].mxu0
        %4660 = vmatprep.mubr.bf16.mxu0 0
        %4661 = vmatmul.mubr.bf16.gmra.mrb[0].mxu0 %v4247
        %v4662 = vpop.f32.mrb[0].mxu0
        %v4663 = vadd.f32 %v4487, %v4662
        %v4664 = vpop.f32.mrb[0].mxu0
        %v4665 = vpop.f32.mrb[0].mxu0
        %v4666 = vpop.f32.mrb[0].mxu0
        %4667 = vdwg.mxu0
        %v4668 = vld [vmem:[#allocation2 + $0x2] sm:$0xff]
        %v4669 = vld [vmem:[#allocation2 + $0xa] sm:$0xff]
        %v4670 = vld [vmem:[#allocation2 + $0x12] sm:$0xff]
        %v4671 = vld [vmem:[#allocation2 + $0x1a] sm:$0xff]
        %v4672 = vld [vmem:[#allocation2 + $0x22] sm:$0xff]
        %v4673 = vld [vmem:[#allocation2 + $0x2a] sm:$0xff]
        %v4674 = vld [vmem:[#allocation2 + $0x32] sm:$0xff]
        %v4675 = vld [vmem:[#allocation2 + $0x3a] sm:$0xff]
        %v4676 = vld [vmem:[#allocation2 + $0x42] sm:$0xff]
        %v4677 = vld [vmem:[#allocation2 + $0x4a] sm:$0xff]
        %v4678 = vld [vmem:[#allocation2 + $0x52] sm:$0xff]
        %v4679 = vld [vmem:[#allocation2 + $0x5a] sm:$0xff]
        %v4680 = vld [vmem:[#allocation2 + $0x62] sm:$0xff]
        %v4681 = vld [vmem:[#allocation2 + $0x6a] sm:$0xff]
        %v4682 = vld [vmem:[#allocation2 + $0x72] sm:$0xff]
        %v4683 = vld [vmem:[#allocation2 + $0x7a] sm:$0xff]
        %v4684 = vld [vmem:[#allocation2 + $0x82] sm:$0xff]
        %v4685 = vld [vmem:[#allocation2 + $0x8a] sm:$0xff]
        %v4686 = vld [vmem:[#allocation2 + $0x92] sm:$0xff]
        %v4687 = vld [vmem:[#allocation2 + $0x9a] sm:$0xff]
        %v4688 = vld [vmem:[#allocation2 + $0xa2] sm:$0xff]
        %v4689 = vld [vmem:[#allocation2 + $0xaa] sm:$0xff]
        %v4690 = vld [vmem:[#allocation2 + $0xb2] sm:$0x3]
        %v4691 = vpack.c.bf16 %v4669, %v4668
        %v4692 = vpack.c.bf16 %v4671, %v4670
        %v4693 = vpack.c.bf16 %v4673, %v4672
        %v4694 = vpack.c.bf16 %v4675, %v4674
        %v4695 = vpack.c.bf16 %v4677, %v4676
        %v4696 = vpack.c.bf16 %v4679, %v4678
        %v4697 = vpack.c.bf16 %v4681, %v4680
        %v4698 = vpack.c.bf16 %v4683, %v4682
        %v4699 = vpack.c.bf16 %v4685, %v4684
        %v4700 = vpack.c.bf16 %v4687, %v4686
        %v4701 = vpack.c.bf16 %v4689, %v4688
        %v4702 = vpack.c.bf16 %v4690, %v4690
        %s4703 = scalar_lea.vmem %s4, 128
        %v4704 = vld [vmem:[%s4703] sm:$0xf]
        %v4705 = vld [vmem:[%s4703 + $0x4] sm:$0xf]
        %v4706 = vld [vmem:[%s4703 + $0x8] sm:$0xf]
        %v4707 = vld [vmem:[%s4703 + $0xc] sm:$0xf]
        %v4708 = vld [vmem:[%s4703 + $0x10] sm:$0xf]
        %v4709 = vld [vmem:[%s4703 + $0x14] sm:$0xf]
        %v4710 = vld [vmem:[%s4703 + $0x18] sm:$0xf]
        %v4711 = vld [vmem:[%s4703 + $0x1c] sm:$0xf]
        %v4712 = vld [vmem:[%s4703 + $0x20] sm:$0xf]
        %v4713 = vld [vmem:[%s4703 + $0x24] sm:$0xf]
        %v4714 = vld [vmem:[%s4703 + $0x28] sm:$0xf]
        %v4715 = vld [vmem:[%s4703 + $0x2c] sm:$0xf]
        %v4716 = vld [vmem:[%s4703 + $0x30] sm:$0xf]
        %v4717 = vld [vmem:[%s4703 + $0x34] sm:$0xf]
        %v4718 = vld [vmem:[%s4703 + $0x38] sm:$0xf]
        %v4719 = vld [vmem:[%s4703 + $0x3c] sm:$0xf]
        %v4736 = vunpack.c.l.b16 %v4704
        %v4737 = vunpack.c.l.b16 %v4705
        %v4738 = vunpack.c.l.b16 %v4706
        %v4739 = vunpack.c.l.b16 %v4707
        %v4740 = vunpack.c.l.b16 %v4708
        %v4741 = vunpack.c.l.b16 %v4709
        %v4742 = vunpack.c.l.b16 %v4710
        %v4743 = vunpack.c.l.b16 %v4711
        %v4744 = vunpack.c.l.b16 %v4712
        %v4745 = vunpack.c.l.b16 %v4713
        %v4746 = vunpack.c.l.b16 %v4714
        %v4747 = vunpack.c.l.b16 %v4715
        %v4748 = vunpack.c.l.b16 %v4716
        %v4749 = vunpack.c.l.b16 %v4717
        %v4750 = vunpack.c.l.b16 %v4718
        %v4751 = vunpack.c.l.b16 %v4719
        %v4752 = vpack.c.b16 %v4737, %v4736
        %v4753 = vpack.c.b16 %v4739, %v4738
        %v4754 = vpack.c.b16 %v4741, %v4740
        %v4755 = vpack.c.b16 %v4743, %v4742
        %v4756 = vpack.c.b16 %v4745, %v4744
        %v4757 = vpack.c.b16 %v4747, %v4746
        %v4758 = vpack.c.b16 %v4749, %v4748
        %v4759 = vpack.c.b16 %v4751, %v4750
        %4768 = vmatprep.subr.bf16.mxu0 0
        %4769 = vmatpush1.bf16.msra.mxu0 %v4752
        %4770 = vmatprep.subr.bf16.mxu0 0
        %4771 = vmatpush1.bf16.msra.mxu0 %v4753
        %4772 = vmatprep.subr.bf16.mxu0 0
        %4773 = vmatpush1.bf16.msra.mxu0 %v4754
        %4774 = vmatprep.subr.bf16.mxu0 0
        %4775 = vmatpush1.bf16.msra.mxu0 %v4755
        %4776 = vmatprep.subr.bf16.mxu0 0
        %4777 = vmatpush1.bf16.msra.mxu0 %v4756
        %4778 = vmatprep.subr.bf16.mxu0 0
        %4779 = vmatpush1.bf16.msra.mxu0 %v4757
        %4780 = vmatprep.subr.bf16.mxu0 0
        %4781 = vmatpush1.bf16.msra.mxu0 %v4758
        %4782 = vmatprep.subr.bf16.mxu0 0
        %4783 = vmatpush1.bf16.msra.mxu0 %v4759
        %4784 = vmatprep.subr.bf16.mxu0 0
        %4785 = vmatpush1.bf16.msra.mxu0 0
        %4786 = vmatprep.subr.bf16.mxu0 0
        %4787 = vmatpush1.bf16.msra.mxu0 0
        %4788 = vmatprep.subr.bf16.mxu0 0
        %4789 = vmatpush1.bf16.msra.mxu0 0
        %4790 = vmatprep.subr.bf16.mxu0 0
        %4791 = vmatpush1.bf16.msra.mxu0 0
        %4792 = vmatprep.subr.bf16.mxu0 0
        %4793 = vmatpush1.bf16.msra.mxu0 0
        %4794 = vmatprep.subr.bf16.mxu0 0
        %4795 = vmatpush1.bf16.msra.mxu0 0
        %4796 = vmatprep.subr.bf16.mxu0 0
        %4797 = vmatpush1.bf16.msra.mxu0 0
        %4798 = vmatprep.subr.bf16.mxu0 0
        %4799 = vmatpush1.bf16.msra.mxu0 0
        %4800 = vmatprep.mubr.bf16.mxu0 0
        %4801 = vmatmul.mubr.bf16.gmra.mrb[0].mxu0 %v4691
        %v4802 = vpop.f32.mrb[0].mxu0
        %v4803 = vadd.f32 0.0, %v4802
        %v4804 = vpop.f32.mrb[0].mxu0
        %v4805 = vpop.f32.mrb[0].mxu0
        %v4806 = vadd.f32 0.0, %v4805
        %v4807 = vpop.f32.mrb[0].mxu0
        %4808 = vmatprep.mubr.bf16.mxu0 0
        %4809 = vmatmul.mubr.bf16.gmra.mrb[0].mxu0 %v4692
        %v4810 = vpop.f32.mrb[0].mxu0
        %v4811 = vadd.f32 0.0, %v4810
        %v4812 = vpop.f32.mrb[0].mxu0
        %v4813 = vpop.f32.mrb[0].mxu0
        %v4814 = vadd.f32 0.0, %v4813
        %v4815 = vpop.f32.mrb[0].mxu0
        %4816 = vmatprep.mubr.bf16.mxu0 0
        %4817 = vmatmul.mubr.bf16.gmra.mrb[0].mxu0 %v4693
        %v4818 = vpop.f32.mrb[0].mxu0
        %v4819 = vadd.f32 0.0, %v4818
        %v4820 = vpop.f32.mrb[0].mxu0
        %v4821 = vpop.f32.mrb[0].mxu0
        %v4822 = vadd.f32 0.0, %v4821
        %v4823 = vpop.f32.mrb[0].mxu0
        %4824 = vmatprep.mubr.bf16.mxu0 0
        %4825 = vmatmul.mubr.bf16.gmra.mrb[0].mxu0 %v4694
        %v4826 = vpop.f32.mrb[0].mxu0
        %v4827 = vadd.f32 0.0, %v4826
        %v4828 = vpop.f32.mrb[0].mxu0
        %v4829 = vpop.f32.mrb[0].mxu0
        %v4830 = vadd.f32 0.0, %v4829
        %v4831 = vpop.f32.mrb[0].mxu0
        %4832 = vmatprep.mubr.bf16.mxu0 0
        %4833 = vmatmul.mubr.bf16.gmra.mrb[0].mxu0 %v4695
        %v4834 = vpop.f32.mrb[0].mxu0
        %v4835 = vadd.f32 0.0, %v4834
        %v4836 = vpop.f32.mrb[0].mxu0
        %v4837 = vpop.f32.mrb[0].mxu0
        %v4838 = vadd.f32 0.0, %v4837
        %v4839 = vpop.f32.mrb[0].mxu0
        %4840 = vmatprep.mubr.bf16.mxu0 0
        %4841 = vmatmul.mubr.bf16.gmra.mrb[0].mxu0 %v4696
        %v4842 = vpop.f32.mrb[0].mxu0
        %v4843 = vadd.f32 0.0, %v4842
        %v4844 = vpop.f32.mrb[0].mxu0
        %v4845 = vpop.f32.mrb[0].mxu0
        %v4846 = vadd.f32 0.0, %v4845
        %v4847 = vpop.f32.mrb[0].mxu0
        %4848 = vmatprep.mubr.bf16.mxu0 0
        %4849 = vmatmul.mubr.bf16.gmra.mrb[0].mxu0 %v4697
        %v4850 = vpop.f32.mrb[0].mxu0
        %v4851 = vadd.f32 0.0, %v4850
        %v4852 = vpop.f32.mrb[0].mxu0
        %v4853 = vpop.f32.mrb[0].mxu0
        %v4854 = vadd.f32 0.0, %v4853
        %v4855 = vpop.f32.mrb[0].mxu0
        %4856 = vmatprep.mubr.bf16.mxu0 0
        %4857 = vmatmul.mubr.bf16.gmra.mrb[0].mxu0 %v4698
        %v4858 = vpop.f32.mrb[0].mxu0
        %v4859 = vadd.f32 0.0, %v4858
        %v4860 = vpop.f32.mrb[0].mxu0
        %v4861 = vpop.f32.mrb[0].mxu0
        %v4862 = vadd.f32 0.0, %v4861
        %v4863 = vpop.f32.mrb[0].mxu0
        %4864 = vmatprep.mubr.bf16.mxu0 0
        %4865 = vmatmul.mubr.bf16.gmra.mrb[0].mxu0 %v4699
        %v4866 = vpop.f32.mrb[0].mxu0
        %v4867 = vadd.f32 0.0, %v4866
        %v4868 = vpop.f32.mrb[0].mxu0
        %v4869 = vpop.f32.mrb[0].mxu0
        %v4870 = vadd.f32 0.0, %v4869
        %v4871 = vpop.f32.mrb[0].mxu0
        %4872 = vmatprep.mubr.bf16.mxu0 0
        %4873 = vmatmul.mubr.bf16.gmra.mrb[0].mxu0 %v4700
        %v4874 = vpop.f32.mrb[0].mxu0
        %v4875 = vadd.f32 0.0, %v4874
        %v4876 = vpop.f32.mrb[0].mxu0
        %v4877 = vpop.f32.mrb[0].mxu0
        %v4878 = vadd.f32 0.0, %v4877
        %v4879 = vpop.f32.mrb[0].mxu0
        %4880 = vmatprep.mubr.bf16.mxu0 0
        %4881 = vmatmul.mubr.bf16.gmra.mrb[0].mxu0 %v4701
        %v4882 = vpop.f32.mrb[0].mxu0
        %v4883 = vadd.f32 0.0, %v4882
        %v4884 = vpop.f32.mrb[0].mxu0
        %v4885 = vpop.f32.mrb[0].mxu0
        %v4886 = vadd.f32 0.0, %v4885
        %v4887 = vpop.f32.mrb[0].mxu0
        %4888 = vmatprep.mubr.bf16.mxu0 0
        %4889 = vmatmul.mubr.bf16.gmra.mrb[0].mxu0 %v4702
        %v4890 = vpop.f32.mrb[0].mxu0
        %v4891 = vadd.f32 0.0, %v4890
        %v4892 = vpop.f32.mrb[0].mxu0
        %v4893 = vpop.f32.mrb[0].mxu0
        %v4894 = vpop.f32.mrb[0].mxu0
        %4895 = vdwg.mxu0
        %v4896 = vadd.f32 %v4575, %v4803
        %v4897 = vadd.f32 %v4578, %v4806
        %v4898 = vadd.f32 %v4583, %v4811
        %v4899 = vadd.f32 %v4586, %v4814
        %v4900 = vadd.f32 %v4591, %v4819
        %v4901 = vadd.f32 %v4594, %v4822
        %v4902 = vadd.f32 %v4599, %v4827
        %v4903 = vadd.f32 %v4602, %v4830
        %v4904 = vadd.f32 %v4607, %v4835
        %v4905 = vadd.f32 %v4610, %v4838
        %v4906 = vadd.f32 %v4615, %v4843
        %v4907 = vadd.f32 %v4618, %v4846
        %v4908 = vadd.f32 %v4623, %v4851
        %v4909 = vadd.f32 %v4626, %v4854
        %v4910 = vadd.f32 %v4631, %v4859
        %v4911 = vadd.f32 %v4634, %v4862
        %v4912 = vadd.f32 %v4639, %v4867
        %v4913 = vadd.f32 %v4642, %v4870
        %v4914 = vadd.f32 %v4647, %v4875
        %v4915 = vadd.f32 %v4650, %v4878
        %v4916 = vadd.f32 %v4655, %v4883
        %v4917 = vadd.f32 %v4658, %v4886
        %v4918 = vadd.f32 %v4663, %v4891
        %v4919 = vld [vmem:[#allocation2 + $0xf] sm:$0xff]
        %v4920 = vld [vmem:[#allocation2 + $0x17] sm:$0xff]
        %v4921 = vld [vmem:[#allocation2 + $0x1f] sm:$0xff]
        %v4922 = vld [vmem:[#allocation2 + $0x27] sm:$0xff]
        %v4923 = vld [vmem:[#allocation2 + $0x2f] sm:$0xff]
        %v4924 = vld [vmem:[#allocation2 + $0x37] sm:$0xff]
        %v4925 = vld [vmem:[#allocation2 + $0x3f] sm:$0xff]
        %v4926 = vld [vmem:[#allocation2 + $0x47] sm:$0xff]
        %v4927 = vld [vmem:[#allocation2 + $0x4f] sm:$0xff]
        %v4928 = vld [vmem:[#allocation2 + $0x57] sm:$0xff]
        %v4929 = vld [vmem:[#allocation2 + $0x5f] sm:$0xff]
        %v4930 = vld [vmem:[#allocation2 + $0x67] sm:$0xff]
        %v4931 = vld [vmem:[#allocation2 + $0x6f] sm:$0xff]
        %v4932 = vld [vmem:[#allocation2 + $0x77] sm:$0xff]
        %v4933 = vld [vmem:[#allocation2 + $0x7f] sm:$0xff]
        %v4934 = vld [vmem:[#allocation2 + $0x87] sm:$0xff]
        %v4935 = vld [vmem:[#allocation2 + $0x8f] sm:$0xff]
        %v4936 = vld [vmem:[#allocation2 + $0x97] sm:$0xff]
        %v4937 = vld [vmem:[#allocation2 + $0x9f] sm:$0xff]
        %v4938 = vld [vmem:[#allocation2 + $0xa7] sm:$0xff]
        %v4939 = vld [vmem:[#allocation2 + $0xaf] sm:$0xff]
        %v4940 = vld [vmem:[#allocation2 + $0xb7] sm:$0xff]
        %v4941 = vld [vmem:[#allocation2 + $0xbf] sm:$0x3]
        %v4942 = vpack.c.bf16 %v4920, %v4919
        %v4943 = vpack.c.bf16 %v4922, %v4921
        %v4944 = vpack.c.bf16 %v4924, %v4923
        %v4945 = vpack.c.bf16 %v4926, %v4925
        %v4946 = vpack.c.bf16 %v4928, %v4927
        %v4947 = vpack.c.bf16 %v4930, %v4929
        %v4948 = vpack.c.bf16 %v4932, %v4931
        %v4949 = vpack.c.bf16 %v4934, %v4933
        %v4950 = vpack.c.bf16 %v4936, %v4935
        %v4951 = vpack.c.bf16 %v4938, %v4937
        %v4952 = vpack.c.bf16 %v4940, %v4939
        %v4953 = vpack.c.bf16 %v4941, %v4941
        %s4954 = scalar_lea.vmem %s4, 192
        %v4955 = vld [vmem:[%s4954] sm:$0xf]
        %v4956 = vld [vmem:[%s4954 + $0x4] sm:$0xf]
        %v4957 = vld [vmem:[%s4954 + $0x8] sm:$0xf]
        %v4958 = vld [vmem:[%s4954 + $0xc] sm:$0xf]
        %v4959 = vld [vmem:[%s4954 + $0x10] sm:$0xf]
        %v4960 = vld [vmem:[%s4954 + $0x14] sm:$0xf]
        %v4961 = vld [vmem:[%s4954 + $0x18] sm:$0xf]
        %v4962 = vld [vmem:[%s4954 + $0x1c] sm:$0xf]
        %v4963 = vld [vmem:[%s4954 + $0x20] sm:$0xf]
        %v4964 = vld [vmem:[%s4954 + $0x24] sm:$0xf]
        %v4965 = vld [vmem:[%s4954 + $0x28] sm:$0xf]
        %v4966 = vld [vmem:[%s4954 + $0x2c] sm:$0xf]
        %v4967 = vld [vmem:[%s4954 + $0x30] sm:$0xf]
        %v4968 = vld [vmem:[%s4954 + $0x34] sm:$0xf]
        %v4969 = vld [vmem:[%s4954 + $0x38] sm:$0xf]
        %v4970 = vld [vmem:[%s4954 + $0x3c] sm:$0xf]
        %v4987 = vunpack.c.l.b16 %v4955
        %v4988 = vunpack.c.l.b16 %v4956
        %v4989 = vunpack.c.l.b16 %v4957
        %v4990 = vunpack.c.l.b16 %v4958
        %v4991 = vunpack.c.l.b16 %v4959
        %v4992 = vunpack.c.l.b16 %v4960
        %v4993 = vunpack.c.l.b16 %v4961
        %v4994 = vunpack.c.l.b16 %v4962
        %v4995 = vunpack.c.l.b16 %v4963
        %v4996 = vunpack.c.l.b16 %v4964
        %v4997 = vunpack.c.l.b16 %v4965
        %v4998 = vunpack.c.l.b16 %v4966
        %v4999 = vunpack.c.l.b16 %v4967
        %v5000 = vunpack.c.l.b16 %v4968
        %v5001 = vunpack.c.l.b16 %v4969
        %v5002 = vunpack.c.l.b16 %v4970
        %v5003 = vpack.c.b16 %v4988, %v4987
        %v5004 = vpack.c.b16 %v4990, %v4989
        %v5005 = vpack.c.b16 %v4992, %v4991
        %v5006 = vpack.c.b16 %v4994, %v4993
        %v5007 = vpack.c.b16 %v4996, %v4995
        %v5008 = vpack.c.b16 %v4998, %v4997
        %v5009 = vpack.c.b16 %v5000, %v4999
        %v5010 = vpack.c.b16 %v5002, %v5001
        %5019 = vmatprep.subr.bf16.mxu0 0
        %5020 = vmatpush1.bf16.msra.mxu0 %v5003
        %5021 = vmatprep.subr.bf16.mxu0 0
        %5022 = vmatpush1.bf16.msra.mxu0 %v5004
        %5023 = vmatprep.subr.bf16.mxu0 0
        %5024 = vmatpush1.bf16.msra.mxu0 %v5005
        %5025 = vmatprep.subr.bf16.mxu0 0
        %5026 = vmatpush1.bf16.msra.mxu0 %v5006
        %5027 = vmatprep.subr.bf16.mxu0 0
        %5028 = vmatpush1.bf16.msra.mxu0 %v5007
        %5029 = vmatprep.subr.bf16.mxu0 0
        %5030 = vmatpush1.bf16.msra.mxu0 %v5008
        %5031 = vmatprep.subr.bf16.mxu0 0
        %5032 = vmatpush1.bf16.msra.mxu0 %v5009
        %5033 = vmatprep.subr.bf16.mxu0 0
        %5034 = vmatpush1.bf16.msra.mxu0 %v5010
        %5035 = vmatprep.subr.bf16.mxu0 0
        %5036 = vmatpush1.bf16.msra.mxu0 0
        %5037 = vmatprep.subr.bf16.mxu0 0
        %5038 = vmatpush1.bf16.msra.mxu0 0
        %5039 = vmatprep.subr.bf16.mxu0 0
        %5040 = vmatpush1.bf16.msra.mxu0 0
        %5041 = vmatprep.subr.bf16.mxu0 0
        %5042 = vmatpush1.bf16.msra.mxu0 0
        %5043 = vmatprep.subr.bf16.mxu0 0
        %5044 = vmatpush1.bf16.msra.mxu0 0
        %5045 = vmatprep.subr.bf16.mxu0 0
        %5046 = vmatpush1.bf16.msra.mxu0 0
        %5047 = vmatprep.subr.bf16.mxu0 0
        %5048 = vmatpush1.bf16.msra.mxu0 0
        %5049 = vmatprep.subr.bf16.mxu0 0
        %5050 = vmatpush1.bf16.msra.mxu0 0
        %5051 = vmatprep.mubr.bf16.mxu0 0
        %5052 = vmatmul.mubr.bf16.gmra.mrb[0].mxu0 %v4942
        %v5053 = vpop.f32.mrb[0].mxu0
        %v5054 = vadd.f32 0.0, %v5053
        %v5055 = vpop.f32.mrb[0].mxu0
        %v5056 = vpop.f32.mrb[0].mxu0
        %v5057 = vadd.f32 0.0, %v5056
        %v5058 = vpop.f32.mrb[0].mxu0
        %5059 = vmatprep.mubr.bf16.mxu0 0
        %5060 = vmatmul.mubr.bf16.gmra.mrb[0].mxu0 %v4943
        %v5061 = vpop.f32.mrb[0].mxu0
        %v5062 = vadd.f32 0.0, %v5061
        %v5063 = vpop.f32.mrb[0].mxu0
        %v5064 = vpop.f32.mrb[0].mxu0
        %v5065 = vadd.f32 0.0, %v5064
        %v5066 = vpop.f32.mrb[0].mxu0
        %5067 = vmatprep.mubr.bf16.mxu0 0
        %5068 = vmatmul.mubr.bf16.gmra.mrb[0].mxu0 %v4944
        %v5069 = vpop.f32.mrb[0].mxu0
        %v5070 = vadd.f32 0.0, %v5069
        %v5071 = vpop.f32.mrb[0].mxu0
        %v5072 = vpop.f32.mrb[0].mxu0
        %v5073 = vadd.f32 0.0, %v5072
        %v5074 = vpop.f32.mrb[0].mxu0
        %5075 = vmatprep.mubr.bf16.mxu0 0
        %5076 = vmatmul.mubr.bf16.gmra.mrb[0].mxu0 %v4945
        %v5077 = vpop.f32.mrb[0].mxu0
        %v5078 = vadd.f32 0.0, %v5077
        %v5079 = vpop.f32.mrb[0].mxu0
        %v5080 = vpop.f32.mrb[0].mxu0
        %v5081 = vadd.f32 0.0, %v5080
        %v5082 = vpop.f32.mrb[0].mxu0
        %5083 = vmatprep.mubr.bf16.mxu0 0
        %5084 = vmatmul.mubr.bf16.gmra.mrb[0].mxu0 %v4946
        %v5085 = vpop.f32.mrb[0].mxu0
        %v5086 = vadd.f32 0.0, %v5085
        %v5087 = vpop.f32.mrb[0].mxu0
        %v5088 = vpop.f32.mrb[0].mxu0
        %v5089 = vadd.f32 0.0, %v5088
        %v5090 = vpop.f32.mrb[0].mxu0
        %5091 = vmatprep.mubr.bf16.mxu0 0
        %5092 = vmatmul.mubr.bf16.gmra.mrb[0].mxu0 %v4947
        %v5093 = vpop.f32.mrb[0].mxu0
        %v5094 = vadd.f32 0.0, %v5093
        %v5095 = vpop.f32.mrb[0].mxu0
        %v5096 = vpop.f32.mrb[0].mxu0
        %v5097 = vadd.f32 0.0, %v5096
        %v5098 = vpop.f32.mrb[0].mxu0
        %5099 = vmatprep.mubr.bf16.mxu0 0
        %5100 = vmatmul.mubr.bf16.gmra.mrb[0].mxu0 %v4948
        %v5101 = vpop.f32.mrb[0].mxu0
        %v5102 = vadd.f32 0.0, %v5101
        %v5103 = vpop.f32.mrb[0].mxu0
        %v5104 = vpop.f32.mrb[0].mxu0
        %v5105 = vadd.f32 0.0, %v5104
        %v5106 = vpop.f32.mrb[0].mxu0
        %5107 = vmatprep.mubr.bf16.mxu0 0
        %5108 = vmatmul.mubr.bf16.gmra.mrb[0].mxu0 %v4949
        %v5109 = vpop.f32.mrb[0].mxu0
        %v5110 = vadd.f32 0.0, %v5109
        %v5111 = vpop.f32.mrb[0].mxu0
        %v5112 = vpop.f32.mrb[0].mxu0
        %v5113 = vadd.f32 0.0, %v5112
        %v5114 = vpop.f32.mrb[0].mxu0
        %5115 = vmatprep.mubr.bf16.mxu0 0
        %5116 = vmatmul.mubr.bf16.gmra.mrb[0].mxu0 %v4950
        %v5117 = vpop.f32.mrb[0].mxu0
        %v5118 = vadd.f32 0.0, %v5117
        %v5119 = vpop.f32.mrb[0].mxu0
        %v5120 = vpop.f32.mrb[0].mxu0
        %v5121 = vadd.f32 0.0, %v5120
        %v5122 = vpop.f32.mrb[0].mxu0
        %5123 = vmatprep.mubr.bf16.mxu0 0
        %5124 = vmatmul.mubr.bf16.gmra.mrb[0].mxu0 %v4951
        %v5125 = vpop.f32.mrb[0].mxu0
        %v5126 = vadd.f32 0.0, %v5125
        %v5127 = vpop.f32.mrb[0].mxu0
        %v5128 = vpop.f32.mrb[0].mxu0
        %v5129 = vadd.f32 0.0, %v5128
        %v5130 = vpop.f32.mrb[0].mxu0
        %5131 = vmatprep.mubr.bf16.mxu0 0
        %5132 = vmatmul.mubr.bf16.gmra.mrb[0].mxu0 %v4952
        %v5133 = vpop.f32.mrb[0].mxu0
        %v5134 = vadd.f32 0.0, %v5133
        %v5135 = vpop.f32.mrb[0].mxu0
        %v5136 = vpop.f32.mrb[0].mxu0
        %v5137 = vadd.f32 0.0, %v5136
        %v5138 = vpop.f32.mrb[0].mxu0
        %5139 = vmatprep.mubr.bf16.mxu0 0
        %5140 = vmatmul.mubr.bf16.gmra.mrb[0].mxu0 %v4953
        %v5141 = vpop.f32.mrb[0].mxu0
        %v5142 = vadd.f32 0.0, %v5141
        %v5143 = vpop.f32.mrb[0].mxu0
        %v5144 = vpop.f32.mrb[0].mxu0
        %v5145 = vpop.f32.mrb[0].mxu0
        %5146 = vdwg.mxu0
        %v5147 = vadd.f32 %v4896, %v5054
        %v5148 = vadd.f32 %v4897, %v5057
        %v5149 = vadd.f32 %v4898, %v5062
        %v5150 = vadd.f32 %v4899, %v5065
        %v5151 = vadd.f32 %v4900, %v5070
        %v5152 = vadd.f32 %v4901, %v5073
        %v5153 = vadd.f32 %v4902, %v5078
        %v5154 = vadd.f32 %v4903, %v5081
        %v5155 = vadd.f32 %v4904, %v5086
        %v5156 = vadd.f32 %v4905, %v5089
        %v5157 = vadd.f32 %v4906, %v5094
        %v5158 = vadd.f32 %v4907, %v5097
        %v5159 = vadd.f32 %v4908, %v5102
        %v5160 = vadd.f32 %v4909, %v5105
        %v5161 = vadd.f32 %v4910, %v5110
        %v5162 = vadd.f32 %v4911, %v5113
        %v5163 = vadd.f32 %v4912, %v5118
        %v5164 = vadd.f32 %v4913, %v5121
        %v5165 = vadd.f32 %v4914, %v5126
        %v5166 = vadd.f32 %v4915, %v5129
        %v5167 = vadd.f32 %v4916, %v5134
        %v5168 = vadd.f32 %v4917, %v5137
        %v5169 = vadd.f32 %v4918, %v5142
        %v5170 = vld [vmem:[#allocation2 + $0x10] sm:$0xff]
        %v5171 = vld [vmem:[#allocation2 + $0x18] sm:$0xff]
        %v5172 = vld [vmem:[#allocation2 + $0x20] sm:$0xff]
        %v5173 = vld [vmem:[#allocation2 + $0x28] sm:$0xff]
        %v5174 = vld [vmem:[#allocation2 + $0x30] sm:$0xff]
        %v5175 = vld [vmem:[#allocation2 + $0x38] sm:$0xff]
        %v5176 = vld [vmem:[#allocation2 + $0x40] sm:$0xff]
        %v5177 = vld [vmem:[#allocation2 + $0x48] sm:$0xff]
        %v5178 = vld [vmem:[#allocation2 + $0x50] sm:$0xff]
        %v5179 = vld [vmem:[#allocation2 + $0x58] sm:$0xff]
        %v5180 = vld [vmem:[#allocation2 + $0x60] sm:$0xff]
        %v5181 = vld [vmem:[#allocation2 + $0x68] sm:$0xff]
        %v5182 = vld [vmem:[#allocation2 + $0x70] sm:$0xff]
        %v5183 = vld [vmem:[#allocation2 + $0x78] sm:$0xff]
        %v5184 = vld [vmem:[#allocation2 + $0x80] sm:$0xff]
        %v5185 = vld [vmem:[#allocation2 + $0x88] sm:$0xff]
        %v5186 = vld [vmem:[#allocation2 + $0x90] sm:$0xff]
        %v5187 = vld [vmem:[#allocation2 + $0x98] sm:$0xff]
        %v5188 = vld [vmem:[#allocation2 + $0xa0] sm:$0xff]
        %v5189 = vld [vmem:[#allocation2 + $0xa8] sm:$0xff]
        %v5190 = vld [vmem:[#allocation2 + $0xb0] sm:$0xff]
        %v5191 = vld [vmem:[#allocation2 + $0xb8] sm:$0xff]
        %v5192 = vld [vmem:[#allocation2 + $0xc0] sm:$0x3]
        %v5193 = vpack.c.bf16 %v5171, %v5170
        %v5194 = vpack.c.bf16 %v5173, %v5172
        %v5195 = vpack.c.bf16 %v5175, %v5174
        %v5196 = vpack.c.bf16 %v5177, %v5176
        %v5197 = vpack.c.bf16 %v5179, %v5178
        %v5198 = vpack.c.bf16 %v5181, %v5180
        %v5199 = vpack.c.bf16 %v5183, %v5182
        %v5200 = vpack.c.bf16 %v5185, %v5184
        %v5201 = vpack.c.bf16 %v5187, %v5186
        %v5202 = vpack.c.bf16 %v5189, %v5188
        %v5203 = vpack.c.bf16 %v5191, %v5190
        %v5204 = vpack.c.bf16 %v5192, %v5192
        %s5205 = scalar_lea.vmem %s4, 256
        %v5206 = vld [vmem:[%s5205] sm:$0xf]
        %v5207 = vld [vmem:[%s5205 + $0x4] sm:$0xf]
        %v5208 = vld [vmem:[%s5205 + $0x8] sm:$0xf]
        %v5209 = vld [vmem:[%s5205 + $0xc] sm:$0xf]
        %v5210 = vld [vmem:[%s5205 + $0x10] sm:$0xf]
        %v5211 = vld [vmem:[%s5205 + $0x14] sm:$0xf]
        %v5212 = vld [vmem:[%s5205 + $0x18] sm:$0xf]
        %v5213 = vld [vmem:[%s5205 + $0x1c] sm:$0xf]
        %v5214 = vld [vmem:[%s5205 + $0x20] sm:$0xf]
        %v5215 = vld [vmem:[%s5205 + $0x24] sm:$0xf]
        %v5216 = vld [vmem:[%s5205 + $0x28] sm:$0xf]
        %v5217 = vld [vmem:[%s5205 + $0x2c] sm:$0xf]
        %v5218 = vld [vmem:[%s5205 + $0x30] sm:$0xf]
        %v5219 = vld [vmem:[%s5205 + $0x34] sm:$0xf]
        %v5220 = vld [vmem:[%s5205 + $0x38] sm:$0xf]
        %v5221 = vld [vmem:[%s5205 + $0x3c] sm:$0xf]
        %v5238 = vunpack.c.l.b16 %v5206
        %v5239 = vunpack.c.l.b16 %v5207
        %v5240 = vunpack.c.l.b16 %v5208
        %v5241 = vunpack.c.l.b16 %v5209
        %v5242 = vunpack.c.l.b16 %v5210
        %v5243 = vunpack.c.l.b16 %v5211
        %v5244 = vunpack.c.l.b16 %v5212
        %v5245 = vunpack.c.l.b16 %v5213
        %v5246 = vunpack.c.l.b16 %v5214
        %v5247 = vunpack.c.l.b16 %v5215
        %v5248 = vunpack.c.l.b16 %v5216
        %v5249 = vunpack.c.l.b16 %v5217
        %v5250 = vunpack.c.l.b16 %v5218
        %v5251 = vunpack.c.l.b16 %v5219
        %v5252 = vunpack.c.l.b16 %v5220
        %v5253 = vunpack.c.l.b16 %v5221
        %v5254 = vpack.c.b16 %v5239, %v5238
        %v5255 = vpack.c.b16 %v5241, %v5240
        %v5256 = vpack.c.b16 %v5243, %v5242
        %v5257 = vpack.c.b16 %v5245, %v5244
        %v5258 = vpack.c.b16 %v5247, %v5246
        %v5259 = vpack.c.b16 %v5249, %v5248
        %v5260 = vpack.c.b16 %v5251, %v5250
        %v5261 = vpack.c.b16 %v5253, %v5252
        %5270 = vmatprep.subr.bf16.mxu0 0
        %5271 = vmatpush1.bf16.msra.mxu0 %v5254
        %5272 = vmatprep.subr.bf16.mxu0 0
        %5273 = vmatpush1.bf16.msra.mxu0 %v5255
        %5274 = vmatprep.subr.bf16.mxu0 0
        %5275 = vmatpush1.bf16.msra.mxu0 %v5256
        %5276 = vmatprep.subr.bf16.mxu0 0
        %5277 = vmatpush1.bf16.msra.mxu0 %v5257
        %5278 = vmatprep.subr.bf16.mxu0 0
        %5279 = vmatpush1.bf16.msra.mxu0 %v5258
        %5280 = vmatprep.subr.bf16.mxu0 0
        %5281 = vmatpush1.bf16.msra.mxu0 %v5259
        %5282 = vmatprep.subr.bf16.mxu0 0
        %5283 = vmatpush1.bf16.msra.mxu0 %v5260
        %5284 = vmatprep.subr.bf16.mxu0 0
        %5285 = vmatpush1.bf16.msra.mxu0 %v5261
        %5286 = vmatprep.subr.bf16.mxu0 0
        %5287 = vmatpush1.bf16.msra.mxu0 0
        %5288 = vmatprep.subr.bf16.mxu0 0
        %5289 = vmatpush1.bf16.msra.mxu0 0
        %5290 = vmatprep.subr.bf16.mxu0 0
        %5291 = vmatpush1.bf16.msra.mxu0 0
        %5292 = vmatprep.subr.bf16.mxu0 0
        %5293 = vmatpush1.bf16.msra.mxu0 0
        %5294 = vmatprep.subr.bf16.mxu0 0
        %5295 = vmatpush1.bf16.msra.mxu0 0
        %5296 = vmatprep.subr.bf16.mxu0 0
        %5297 = vmatpush1.bf16.msra.mxu0 0
        %5298 = vmatprep.subr.bf16.mxu0 0
        %5299 = vmatpush1.bf16.msra.mxu0 0
        %5300 = vmatprep.subr.bf16.mxu0 0
        %5301 = vmatpush1.bf16.msra.mxu0 0
        %5302 = vmatprep.mubr.bf16.mxu0 0
        %5303 = vmatmul.mubr.bf16.gmra.mrb[0].mxu0 %v5193
        %v5304 = vpop.f32.mrb[0].mxu0
        %v5305 = vadd.f32 0.0, %v5304
        %v5306 = vpop.f32.mrb[0].mxu0
        %v5307 = vpop.f32.mrb[0].mxu0
        %v5308 = vadd.f32 0.0, %v5307
        %v5309 = vpop.f32.mrb[0].mxu0
        %5310 = vmatprep.mubr.bf16.mxu0 0
        %5311 = vmatmul.mubr.bf16.gmra.mrb[0].mxu0 %v5194
        %v5312 = vpop.f32.mrb[0].mxu0
        %v5313 = vadd.f32 0.0, %v5312
        %v5314 = vpop.f32.mrb[0].mxu0
        %v5315 = vpop.f32.mrb[0].mxu0
        %v5316 = vadd.f32 0.0, %v5315
        %v5317 = vpop.f32.mrb[0].mxu0
        %5318 = vmatprep.mubr.bf16.mxu0 0
        %5319 = vmatmul.mubr.bf16.gmra.mrb[0].mxu0 %v5195
        %v5320 = vpop.f32.mrb[0].mxu0
        %v5321 = vadd.f32 0.0, %v5320
        %v5322 = vpop.f32.mrb[0].mxu0
        %v5323 = vpop.f32.mrb[0].mxu0
        %v5324 = vadd.f32 0.0, %v5323
        %v5325 = vpop.f32.mrb[0].mxu0
        %5326 = vmatprep.mubr.bf16.mxu0 0
        %5327 = vmatmul.mubr.bf16.gmra.mrb[0].mxu0 %v5196
        %v5328 = vpop.f32.mrb[0].mxu0
        %v5329 = vadd.f32 0.0, %v5328
        %v5330 = vpop.f32.mrb[0].mxu0
        %v5331 = vpop.f32.mrb[0].mxu0
        %v5332 = vadd.f32 0.0, %v5331
        %v5333 = vpop.f32.mrb[0].mxu0
        %5334 = vmatprep.mubr.bf16.mxu0 0
        %5335 = vmatmul.mubr.bf16.gmra.mrb[0].mxu0 %v5197
        %v5336 = vpop.f32.mrb[0].mxu0
        %v5337 = vadd.f32 0.0, %v5336
        %v5338 = vpop.f32.mrb[0].mxu0
        %v5339 = vpop.f32.mrb[0].mxu0
        %v5340 = vadd.f32 0.0, %v5339
        %v5341 = vpop.f32.mrb[0].mxu0
        %5342 = vmatprep.mubr.bf16.mxu0 0
        %5343 = vmatmul.mubr.bf16.gmra.mrb[0].mxu0 %v5198
        %v5344 = vpop.f32.mrb[0].mxu0
        %v5345 = vadd.f32 0.0, %v5344
        %v5346 = vpop.f32.mrb[0].mxu0
        %v5347 = vpop.f32.mrb[0].mxu0
        %v5348 = vadd.f32 0.0, %v5347
        %v5349 = vpop.f32.mrb[0].mxu0
        %5350 = vmatprep.mubr.bf16.mxu0 0
        %5351 = vmatmul.mubr.bf16.gmra.mrb[0].mxu0 %v5199
        %v5352 = vpop.f32.mrb[0].mxu0
        %v5353 = vadd.f32 0.0, %v5352
        %v5354 = vpop.f32.mrb[0].mxu0
        %v5355 = vpop.f32.mrb[0].mxu0
        %v5356 = vadd.f32 0.0, %v5355
        %v5357 = vpop.f32.mrb[0].mxu0
        %5358 = vmatprep.mubr.bf16.mxu0 0
        %5359 = vmatmul.mubr.bf16.gmra.mrb[0].mxu0 %v5200
        %v5360 = vpop.f32.mrb[0].mxu0
        %v5361 = vadd.f32 0.0, %v5360
        %v5362 = vpop.f32.mrb[0].mxu0
        %v5363 = vpop.f32.mrb[0].mxu0
        %v5364 = vadd.f32 0.0, %v5363
        %v5365 = vpop.f32.mrb[0].mxu0
        %5366 = vmatprep.mubr.bf16.mxu0 0
        %5367 = vmatmul.mubr.bf16.gmra.mrb[0].mxu0 %v5201
        %v5368 = vpop.f32.mrb[0].mxu0
        %v5369 = vadd.f32 0.0, %v5368
        %v5370 = vpop.f32.mrb[0].mxu0
        %v5371 = vpop.f32.mrb[0].mxu0
        %v5372 = vadd.f32 0.0, %v5371
        %v5373 = vpop.f32.mrb[0].mxu0
        %5374 = vmatprep.mubr.bf16.mxu0 0
        %5375 = vmatmul.mubr.bf16.gmra.mrb[0].mxu0 %v5202
        %v5376 = vpop.f32.mrb[0].mxu0
        %v5377 = vadd.f32 0.0, %v5376
        %v5378 = vpop.f32.mrb[0].mxu0
        %v5379 = vpop.f32.mrb[0].mxu0
        %v5380 = vadd.f32 0.0, %v5379
        %v5381 = vpop.f32.mrb[0].mxu0
        %5382 = vmatprep.mubr.bf16.mxu0 0
        %5383 = vmatmul.mubr.bf16.gmra.mrb[0].mxu0 %v5203
        %v5384 = vpop.f32.mrb[0].mxu0
        %v5385 = vadd.f32 0.0, %v5384
        %v5386 = vpop.f32.mrb[0].mxu0
        %v5387 = vpop.f32.mrb[0].mxu0
        %v5388 = vadd.f32 0.0, %v5387
        %v5389 = vpop.f32.mrb[0].mxu0
        %5390 = vmatprep.mubr.bf16.mxu0 0
        %5391 = vmatmul.mubr.bf16.gmra.mrb[0].mxu0 %v5204
        %v5392 = vpop.f32.mrb[0].mxu0
        %v5393 = vadd.f32 0.0, %v5392
        %v5394 = vpop.f32.mrb[0].mxu0
        %v5395 = vpop.f32.mrb[0].mxu0
        %v5396 = vpop.f32.mrb[0].mxu0
        %5397 = vdwg.mxu0
        %v5398 = vadd.f32 %v5147, %v5305
        %v5399 = vadd.f32 %v5148, %v5308
        %v5400 = vadd.f32 %v5149, %v5313
        %v5401 = vadd.f32 %v5150, %v5316
        %v5402 = vadd.f32 %v5151, %v5321
        %v5403 = vadd.f32 %v5152, %v5324
        %v5404 = vadd.f32 %v5153, %v5329
        %v5405 = vadd.f32 %v5154, %v5332
        %v5406 = vadd.f32 %v5155, %v5337
        %v5407 = vadd.f32 %v5156, %v5340
        %v5408 = vadd.f32 %v5157, %v5345
        %v5409 = vadd.f32 %v5158, %v5348
        %v5410 = vadd.f32 %v5159, %v5353
        %v5411 = vadd.f32 %v5160, %v5356
        %v5412 = vadd.f32 %v5161, %v5361
        %v5413 = vadd.f32 %v5162, %v5364
        %v5414 = vadd.f32 %v5163, %v5369
        %v5415 = vadd.f32 %v5164, %v5372
        %v5416 = vadd.f32 %v5165, %v5377
        %v5417 = vadd.f32 %v5166, %v5380
        %v5418 = vadd.f32 %v5167, %v5385
        %v5419 = vadd.f32 %v5168, %v5388
        %v5420 = vadd.f32 %v5169, %v5393
        %v5421 = vld [vmem:[#allocation2 + $0x11] sm:$0xff]
        %v5422 = vld [vmem:[#allocation2 + $0x19] sm:$0xff]
        %v5423 = vld [vmem:[#allocation2 + $0x21] sm:$0xff]
        %v5424 = vld [vmem:[#allocation2 + $0x29] sm:$0xff]
        %v5425 = vld [vmem:[#allocation2 + $0x31] sm:$0xff]
        %v5426 = vld [vmem:[#allocation2 + $0x39] sm:$0xff]
        %v5427 = vld [vmem:[#allocation2 + $0x41] sm:$0xff]
        %v5428 = vld [vmem:[#allocation2 + $0x49] sm:$0xff]
        %v5429 = vld [vmem:[#allocation2 + $0x51] sm:$0xff]
        %v5430 = vld [vmem:[#allocation2 + $0x59] sm:$0xff]
        %v5431 = vld [vmem:[#allocation2 + $0x61] sm:$0xff]
        %v5432 = vld [vmem:[#allocation2 + $0x69] sm:$0xff]
        %v5433 = vld [vmem:[#allocation2 + $0x71] sm:$0xff]
        %v5434 = vld [vmem:[#allocation2 + $0x79] sm:$0xff]
        %v5435 = vld [vmem:[#allocation2 + $0x81] sm:$0xff]
        %v5436 = vld [vmem:[#allocation2 + $0x89] sm:$0xff]
        %v5437 = vld [vmem:[#allocation2 + $0x91] sm:$0xff]
        %v5438 = vld [vmem:[#allocation2 + $0x99] sm:$0xff]
        %v5439 = vld [vmem:[#allocation2 + $0xa1] sm:$0xff]
        %v5440 = vld [vmem:[#allocation2 + $0xa9] sm:$0xff]
        %v5441 = vld [vmem:[#allocation2 + $0xb1] sm:$0xff]
        %v5442 = vld [vmem:[#allocation2 + $0xb9] sm:$0xff]
        %v5443 = vld [vmem:[#allocation2 + $0xc1] sm:$0x3]
        %v5444 = vpack.c.bf16 %v5422, %v5421
        %v5445 = vpack.c.bf16 %v5424, %v5423
        %v5446 = vpack.c.bf16 %v5426, %v5425
        %v5447 = vpack.c.bf16 %v5428, %v5427
        %v5448 = vpack.c.bf16 %v5430, %v5429
        %v5449 = vpack.c.bf16 %v5432, %v5431
        %v5450 = vpack.c.bf16 %v5434, %v5433
        %v5451 = vpack.c.bf16 %v5436, %v5435
        %v5452 = vpack.c.bf16 %v5438, %v5437
        %v5453 = vpack.c.bf16 %v5440, %v5439
        %v5454 = vpack.c.bf16 %v5442, %v5441
        %v5455 = vpack.c.bf16 %v5443, %v5443
        %s5456 = scalar_lea.vmem %s4, 320
        %v5457 = vld [vmem:[%s5456] sm:$0xf]
        %v5458 = vld [vmem:[%s5456 + $0x4] sm:$0xf]
        %v5459 = vld [vmem:[%s5456 + $0x8] sm:$0xf]
        %v5460 = vld [vmem:[%s5456 + $0xc] sm:$0xf]
        %v5461 = vld [vmem:[%s5456 + $0x10] sm:$0xf]
        %v5462 = vld [vmem:[%s5456 + $0x14] sm:$0xf]
        %v5463 = vld [vmem:[%s5456 + $0x18] sm:$0xf]
        %v5464 = vld [vmem:[%s5456 + $0x1c] sm:$0xf]
        %v5465 = vld [vmem:[%s5456 + $0x20] sm:$0xf]
        %v5466 = vld [vmem:[%s5456 + $0x24] sm:$0xf]
        %v5467 = vld [vmem:[%s5456 + $0x28] sm:$0xf]
        %v5468 = vld [vmem:[%s5456 + $0x2c] sm:$0xf]
        %v5469 = vld [vmem:[%s5456 + $0x30] sm:$0xf]
        %v5470 = vld [vmem:[%s5456 + $0x34] sm:$0xf]
        %v5471 = vld [vmem:[%s5456 + $0x38] sm:$0xf]
        %v5472 = vld [vmem:[%s5456 + $0x3c] sm:$0xf]
        %v5489 = vunpack.c.l.b16 %v5457
        %v5490 = vunpack.c.l.b16 %v5458
        %v5491 = vunpack.c.l.b16 %v5459
        %v5492 = vunpack.c.l.b16 %v5460
        %v5493 = vunpack.c.l.b16 %v5461
        %v5494 = vunpack.c.l.b16 %v5462
        %v5495 = vunpack.c.l.b16 %v5463
        %v5496 = vunpack.c.l.b16 %v5464
        %v5497 = vunpack.c.l.b16 %v5465
        %v5498 = vunpack.c.l.b16 %v5466
        %v5499 = vunpack.c.l.b16 %v5467
        %v5500 = vunpack.c.l.b16 %v5468
        %v5501 = vunpack.c.l.b16 %v5469
        %v5502 = vunpack.c.l.b16 %v5470
        %v5503 = vunpack.c.l.b16 %v5471
        %v5504 = vunpack.c.l.b16 %v5472
        %v5505 = vpack.c.b16 %v5490, %v5489
        %v5506 = vpack.c.b16 %v5492, %v5491
        %v5507 = vpack.c.b16 %v5494, %v5493
        %v5508 = vpack.c.b16 %v5496, %v5495
        %v5509 = vpack.c.b16 %v5498, %v5497
        %v5510 = vpack.c.b16 %v5500, %v5499
        %v5511 = vpack.c.b16 %v5502, %v5501
        %v5512 = vpack.c.b16 %v5504, %v5503
        %5521 = vmatprep.subr.bf16.mxu0 0
        %5522 = vmatpush1.bf16.msra.mxu0 %v5505
        %5523 = vmatprep.subr.bf16.mxu0 0
        %5524 = vmatpush1.bf16.msra.mxu0 %v5506
        %5525 = vmatprep.subr.bf16.mxu0 0
        %5526 = vmatpush1.bf16.msra.mxu0 %v5507
        %5527 = vmatprep.subr.bf16.mxu0 0
        %5528 = vmatpush1.bf16.msra.mxu0 %v5508
        %5529 = vmatprep.subr.bf16.mxu0 0
        %5530 = vmatpush1.bf16.msra.mxu0 %v5509
        %5531 = vmatprep.subr.bf16.mxu0 0
        %5532 = vmatpush1.bf16.msra.mxu0 %v5510
        %5533 = vmatprep.subr.bf16.mxu0 0
        %5534 = vmatpush1.bf16.msra.mxu0 %v5511
        %5535 = vmatprep.subr.bf16.mxu0 0
        %5536 = vmatpush1.bf16.msra.mxu0 %v5512
        %5537 = vmatprep.subr.bf16.mxu0 0
        %5538 = vmatpush1.bf16.msra.mxu0 0
        %5539 = vmatprep.subr.bf16.mxu0 0
        %5540 = vmatpush1.bf16.msra.mxu0 0
        %5541 = vmatprep.subr.bf16.mxu0 0
        %5542 = vmatpush1.bf16.msra.mxu0 0
        %5543 = vmatprep.subr.bf16.mxu0 0
        %5544 = vmatpush1.bf16.msra.mxu0 0
        %5545 = vmatprep.subr.bf16.mxu0 0
        %5546 = vmatpush1.bf16.msra.mxu0 0
        %5547 = vmatprep.subr.bf16.mxu0 0
        %5548 = vmatpush1.bf16.msra.mxu0 0
        %5549 = vmatprep.subr.bf16.mxu0 0
        %5550 = vmatpush1.bf16.msra.mxu0 0
        %5551 = vmatprep.subr.bf16.mxu0 0
        %5552 = vmatpush1.bf16.msra.mxu0 0
        %5553 = vmatprep.mubr.bf16.mxu0 0
        %5554 = vmatmul.mubr.bf16.gmra.mrb[0].mxu0 %v5444
        %v5555 = vpop.f32.mrb[0].mxu0
        %v5556 = vadd.f32 0.0, %v5555
        %v5557 = vpop.f32.mrb[0].mxu0
        %v5558 = vpop.f32.mrb[0].mxu0
        %v5559 = vadd.f32 0.0, %v5558
        %v5560 = vpop.f32.mrb[0].mxu0
        %5561 = vmatprep.mubr.bf16.mxu0 0
        %5562 = vmatmul.mubr.bf16.gmra.mrb[0].mxu0 %v5445
        %v5563 = vpop.f32.mrb[0].mxu0
        %v5564 = vadd.f32 0.0, %v5563
        %v5565 = vpop.f32.mrb[0].mxu0
        %v5566 = vpop.f32.mrb[0].mxu0
        %v5567 = vadd.f32 0.0, %v5566
        %v5568 = vpop.f32.mrb[0].mxu0
        %5569 = vmatprep.mubr.bf16.mxu0 0
        %5570 = vmatmul.mubr.bf16.gmra.mrb[0].mxu0 %v5446
        %v5571 = vpop.f32.mrb[0].mxu0
        %v5572 = vadd.f32 0.0, %v5571
        %v5573 = vpop.f32.mrb[0].mxu0
        %v5574 = vpop.f32.mrb[0].mxu0
        %v5575 = vadd.f32 0.0, %v5574
        %v5576 = vpop.f32.mrb[0].mxu0
        %5577 = vmatprep.mubr.bf16.mxu0 0
        %5578 = vmatmul.mubr.bf16.gmra.mrb[0].mxu0 %v5447
        %v5579 = vpop.f32.mrb[0].mxu0
        %v5580 = vadd.f32 0.0, %v5579
        %v5581 = vpop.f32.mrb[0].mxu0
        %v5582 = vpop.f32.mrb[0].mxu0
        %v5583 = vadd.f32 0.0, %v5582
        %v5584 = vpop.f32.mrb[0].mxu0
        %5585 = vmatprep.mubr.bf16.mxu0 0
        %5586 = vmatmul.mubr.bf16.gmra.mrb[0].mxu0 %v5448
        %v5587 = vpop.f32.mrb[0].mxu0
        %v5588 = vadd.f32 0.0, %v5587
        %v5589 = vpop.f32.mrb[0].mxu0
        %v5590 = vpop.f32.mrb[0].mxu0
        %v5591 = vadd.f32 0.0, %v5590
        %v5592 = vpop.f32.mrb[0].mxu0
        %5593 = vmatprep.mubr.bf16.mxu0 0
        %5594 = vmatmul.mubr.bf16.gmra.mrb[0].mxu0 %v5449
        %v5595 = vpop.f32.mrb[0].mxu0
        %v5596 = vadd.f32 0.0, %v5595
        %v5597 = vpop.f32.mrb[0].mxu0
        %v5598 = vpop.f32.mrb[0].mxu0
        %v5599 = vadd.f32 0.0, %v5598
        %v5600 = vpop.f32.mrb[0].mxu0
        %5601 = vmatprep.mubr.bf16.mxu0 0
        %5602 = vmatmul.mubr.bf16.gmra.mrb[0].mxu0 %v5450
        %v5603 = vpop.f32.mrb[0].mxu0
        %v5604 = vadd.f32 0.0, %v5603
        %v5605 = vpop.f32.mrb[0].mxu0
        %v5606 = vpop.f32.mrb[0].mxu0
        %v5607 = vadd.f32 0.0, %v5606
        %v5608 = vpop.f32.mrb[0].mxu0
        %5609 = vmatprep.mubr.bf16.mxu0 0
        %5610 = vmatmul.mubr.bf16.gmra.mrb[0].mxu0 %v5451
        %v5611 = vpop.f32.mrb[0].mxu0
        %v5612 = vadd.f32 0.0, %v5611
        %v5613 = vpop.f32.mrb[0].mxu0
        %v5614 = vpop.f32.mrb[0].mxu0
        %v5615 = vadd.f32 0.0, %v5614
        %v5616 = vpop.f32.mrb[0].mxu0
        %5617 = vmatprep.mubr.bf16.mxu0 0
        %5618 = vmatmul.mubr.bf16.gmra.mrb[0].mxu0 %v5452
        %v5619 = vpop.f32.mrb[0].mxu0
        %v5620 = vadd.f32 0.0, %v5619
        %v5621 = vpop.f32.mrb[0].mxu0
        %v5622 = vpop.f32.mrb[0].mxu0
        %v5623 = vadd.f32 0.0, %v5622
        %v5624 = vpop.f32.mrb[0].mxu0
        %5625 = vmatprep.mubr.bf16.mxu0 0
        %5626 = vmatmul.mubr.bf16.gmra.mrb[0].mxu0 %v5453
        %v5627 = vpop.f32.mrb[0].mxu0
        %v5628 = vadd.f32 0.0, %v5627
        %v5629 = vpop.f32.mrb[0].mxu0
        %v5630 = vpop.f32.mrb[0].mxu0
        %v5631 = vadd.f32 0.0, %v5630
        %v5632 = vpop.f32.mrb[0].mxu0
        %5633 = vmatprep.mubr.bf16.mxu0 0
        %5634 = vmatmul.mubr.bf16.gmra.mrb[0].mxu0 %v5454
        %v5635 = vpop.f32.mrb[0].mxu0
        %v5636 = vadd.f32 0.0, %v5635
        %v5637 = vpop.f32.mrb[0].mxu0
        %v5638 = vpop.f32.mrb[0].mxu0
        %v5639 = vadd.f32 0.0, %v5638
        %v5640 = vpop.f32.mrb[0].mxu0
        %5641 = vmatprep.mubr.bf16.mxu0 0
        %5642 = vmatmul.mubr.bf16.gmra.mrb[0].mxu0 %v5455
        %v5643 = vpop.f32.mrb[0].mxu0
        %v5644 = vadd.f32 0.0, %v5643
        %v5645 = vpop.f32.mrb[0].mxu0
        %v5646 = vpop.f32.mrb[0].mxu0
        %v5647 = vpop.f32.mrb[0].mxu0
        %5648 = vdwg.mxu0
        %v5649 = vadd.f32 %v5398, %v5556
        %v5650 = vadd.f32 %v5399, %v5559
        %v5651 = vadd.f32 %v5400, %v5564
        %v5652 = vadd.f32 %v5401, %v5567
        %v5653 = vadd.f32 %v5402, %v5572
        %v5654 = vadd.f32 %v5403, %v5575
        %v5655 = vadd.f32 %v5404, %v5580
        %v5656 = vadd.f32 %v5405, %v5583
        %v5657 = vadd.f32 %v5406, %v5588
        %v5658 = vadd.f32 %v5407, %v5591
        %v5659 = vadd.f32 %v5408, %v5596
        %v5660 = vadd.f32 %v5409, %v5599
        %v5661 = vadd.f32 %v5410, %v5604
        %v5662 = vadd.f32 %v5411, %v5607
        %v5663 = vadd.f32 %v5412, %v5612
        %v5664 = vadd.f32 %v5413, %v5615
        %v5665 = vadd.f32 %v5414, %v5620
        %v5666 = vadd.f32 %v5415, %v5623
        %v5667 = vadd.f32 %v5416, %v5628
        %v5668 = vadd.f32 %v5417, %v5631
        %v5669 = vadd.f32 %v5418, %v5636
        %v5670 = vadd.f32 %v5419, %v5639
        %v5671 = vadd.f32 %v5420, %v5644
        %v5672 = vld [vmem:[#allocation2 + $0x1e] sm:$0xff]
        %v5673 = vld [vmem:[#allocation2 + $0x26] sm:$0xff]
        %v5674 = vld [vmem:[#allocation2 + $0x2e] sm:$0xff]
        %v5675 = vld [vmem:[#allocation2 + $0x36] sm:$0xff]
        %v5676 = vld [vmem:[#allocation2 + $0x3e] sm:$0xff]
        %v5677 = vld [vmem:[#allocation2 + $0x46] sm:$0xff]
        %v5678 = vld [vmem:[#allocation2 + $0x4e] sm:$0xff]
        %v5679 = vld [vmem:[#allocation2 + $0x56] sm:$0xff]
        %v5680 = vld [vmem:[#allocation2 + $0x5e] sm:$0xff]
        %v5681 = vld [vmem:[#allocation2 + $0x66] sm:$0xff]
        %v5682 = vld [vmem:[#allocation2 + $0x6e] sm:$0xff]
        %v5683 = vld [vmem:[#allocation2 + $0x76] sm:$0xff]
        %v5684 = vld [vmem:[#allocation2 + $0x7e] sm:$0xff]
        %v5685 = vld [vmem:[#allocation2 + $0x86] sm:$0xff]
        %v5686 = vld [vmem:[#allocation2 + $0x8e] sm:$0xff]
        %v5687 = vld [vmem:[#allocation2 + $0x96] sm:$0xff]
        %v5688 = vld [vmem:[#allocation2 + $0x9e] sm:$0xff]
        %v5689 = vld [vmem:[#allocation2 + $0xa6] sm:$0xff]
        %v5690 = vld [vmem:[#allocation2 + $0xae] sm:$0xff]
        %v5691 = vld [vmem:[#allocation2 + $0xb6] sm:$0xff]
        %v5692 = vld [vmem:[#allocation2 + $0xbe] sm:$0xff]
        %v5693 = vld [vmem:[#allocation2 + $0xc6] sm:$0xff]
        %v5694 = vld [vmem:[#allocation2 + $0xce] sm:$0x3]
        %v5695 = vpack.c.bf16 %v5673, %v5672
        %v5696 = vpack.c.bf16 %v5675, %v5674
        %v5697 = vpack.c.bf16 %v5677, %v5676
        %v5698 = vpack.c.bf16 %v5679, %v5678
        %v5699 = vpack.c.bf16 %v5681, %v5680
        %v5700 = vpack.c.bf16 %v5683, %v5682
        %v5701 = vpack.c.bf16 %v5685, %v5684
        %v5702 = vpack.c.bf16 %v5687, %v5686
        %v5703 = vpack.c.bf16 %v5689, %v5688
        %v5704 = vpack.c.bf16 %v5691, %v5690
        %v5705 = vpack.c.bf16 %v5693, %v5692
        %v5706 = vpack.c.bf16 %v5694, %v5694
        %s5707 = scalar_lea.vmem %s4, 384
        %v5708 = vld [vmem:[%s5707] sm:$0xf]
        %v5709 = vld [vmem:[%s5707 + $0x4] sm:$0xf]
        %v5710 = vld [vmem:[%s5707 + $0x8] sm:$0xf]
        %v5711 = vld [vmem:[%s5707 + $0xc] sm:$0xf]
        %v5712 = vld [vmem:[%s5707 + $0x10] sm:$0xf]
        %v5713 = vld [vmem:[%s5707 + $0x14] sm:$0xf]
        %v5714 = vld [vmem:[%s5707 + $0x18] sm:$0xf]
        %v5715 = vld [vmem:[%s5707 + $0x1c] sm:$0xf]
        %v5716 = vld [vmem:[%s5707 + $0x20] sm:$0xf]
        %v5717 = vld [vmem:[%s5707 + $0x24] sm:$0xf]
        %v5718 = vld [vmem:[%s5707 + $0x28] sm:$0xf]
        %v5719 = vld [vmem:[%s5707 + $0x2c] sm:$0xf]
        %v5720 = vld [vmem:[%s5707 + $0x30] sm:$0xf]
        %v5721 = vld [vmem:[%s5707 + $0x34] sm:$0xf]
        %v5722 = vld [vmem:[%s5707 + $0x38] sm:$0xf]
        %v5723 = vld [vmem:[%s5707 + $0x3c] sm:$0xf]
        %v5740 = vunpack.c.l.b16 %v5708
        %v5741 = vunpack.c.l.b16 %v5709
        %v5742 = vunpack.c.l.b16 %v5710
        %v5743 = vunpack.c.l.b16 %v5711
        %v5744 = vunpack.c.l.b16 %v5712
        %v5745 = vunpack.c.l.b16 %v5713
        %v5746 = vunpack.c.l.b16 %v5714
        %v5747 = vunpack.c.l.b16 %v5715
        %v5748 = vunpack.c.l.b16 %v5716
        %v5749 = vunpack.c.l.b16 %v5717
        %v5750 = vunpack.c.l.b16 %v5718
        %v5751 = vunpack.c.l.b16 %v5719
        %v5752 = vunpack.c.l.b16 %v5720
        %v5753 = vunpack.c.l.b16 %v5721
        %v5754 = vunpack.c.l.b16 %v5722
        %v5755 = vunpack.c.l.b16 %v5723
        %v5756 = vpack.c.b16 %v5741, %v5740
        %v5757 = vpack.c.b16 %v5743, %v5742
        %v5758 = vpack.c.b16 %v5745, %v5744
        %v5759 = vpack.c.b16 %v5747, %v5746
        %v5760 = vpack.c.b16 %v5749, %v5748
        %v5761 = vpack.c.b16 %v5751, %v5750
        %v5762 = vpack.c.b16 %v5753, %v5752
        %v5763 = vpack.c.b16 %v5755, %v5754
        %5772 = vmatprep.subr.bf16.mxu0 0
        %5773 = vmatpush1.bf16.msra.mxu0 %v5756
        %5774 = vmatprep.subr.bf16.mxu0 0
        %5775 = vmatpush1.bf16.msra.mxu0 %v5757
        %5776 = vmatprep.subr.bf16.mxu0 0
        %5777 = vmatpush1.bf16.msra.mxu0 %v5758
        %5778 = vmatprep.subr.bf16.mxu0 0
        %5779 = vmatpush1.bf16.msra.mxu0 %v5759
        %5780 = vmatprep.subr.bf16.mxu0 0
        %5781 = vmatpush1.bf16.msra.mxu0 %v5760
        %5782 = vmatprep.subr.bf16.mxu0 0
        %5783 = vmatpush1.bf16.msra.mxu0 %v5761
        %5784 = vmatprep.subr.bf16.mxu0 0
        %5785 = vmatpush1.bf16.msra.mxu0 %v5762
        %5786 = vmatprep.subr.bf16.mxu0 0
        %5787 = vmatpush1.bf16.msra.mxu0 %v5763
        %5788 = vmatprep.subr.bf16.mxu0 0
        %5789 = vmatpush1.bf16.msra.mxu0 0
        %5790 = vmatprep.subr.bf16.mxu0 0
        %5791 = vmatpush1.bf16.msra.mxu0 0
        %5792 = vmatprep.subr.bf16.mxu0 0
        %5793 = vmatpush1.bf16.msra.mxu0 0
        %5794 = vmatprep.subr.bf16.mxu0 0
        %5795 = vmatpush1.bf16.msra.mxu0 0
        %5796 = vmatprep.subr.bf16.mxu0 0
        %5797 = vmatpush1.bf16.msra.mxu0 0
        %5798 = vmatprep.subr.bf16.mxu0 0
        %5799 = vmatpush1.bf16.msra.mxu0 0
        %5800 = vmatprep.subr.bf16.mxu0 0
        %5801 = vmatpush1.bf16.msra.mxu0 0
        %5802 = vmatprep.subr.bf16.mxu0 0
        %5803 = vmatpush1.bf16.msra.mxu0 0
        %5804 = vmatprep.mubr.bf16.mxu0 0
        %5805 = vmatmul.mubr.bf16.gmra.mrb[0].mxu0 %v5695
        %v5806 = vpop.f32.mrb[0].mxu0
        %v5807 = vadd.f32 0.0, %v5806
        %v5808 = vpop.f32.mrb[0].mxu0
        %v5809 = vpop.f32.mrb[0].mxu0
        %v5810 = vadd.f32 0.0, %v5809
        %v5811 = vpop.f32.mrb[0].mxu0
        %5812 = vmatprep.mubr.bf16.mxu0 0
        %5813 = vmatmul.mubr.bf16.gmra.mrb[0].mxu0 %v5696
        %v5814 = vpop.f32.mrb[0].mxu0
        %v5815 = vadd.f32 0.0, %v5814
        %v5816 = vpop.f32.mrb[0].mxu0
        %v5817 = vpop.f32.mrb[0].mxu0
        %v5818 = vadd.f32 0.0, %v5817
        %v5819 = vpop.f32.mrb[0].mxu0
        %5820 = vmatprep.mubr.bf16.mxu0 0
        %5821 = vmatmul.mubr.bf16.gmra.mrb[0].mxu0 %v5697
        %v5822 = vpop.f32.mrb[0].mxu0
        %v5823 = vadd.f32 0.0, %v5822
        %v5824 = vpop.f32.mrb[0].mxu0
        %v5825 = vpop.f32.mrb[0].mxu0
        %v5826 = vadd.f32 0.0, %v5825
        %v5827 = vpop.f32.mrb[0].mxu0
        %5828 = vmatprep.mubr.bf16.mxu0 0
        %5829 = vmatmul.mubr.bf16.gmra.mrb[0].mxu0 %v5698
        %v5830 = vpop.f32.mrb[0].mxu0
        %v5831 = vadd.f32 0.0, %v5830
        %v5832 = vpop.f32.mrb[0].mxu0
        %v5833 = vpop.f32.mrb[0].mxu0
        %v5834 = vadd.f32 0.0, %v5833
        %v5835 = vpop.f32.mrb[0].mxu0
        %5836 = vmatprep.mubr.bf16.mxu0 0
        %5837 = vmatmul.mubr.bf16.gmra.mrb[0].mxu0 %v5699
        %v5838 = vpop.f32.mrb[0].mxu0
        %v5839 = vadd.f32 0.0, %v5838
        %v5840 = vpop.f32.mrb[0].mxu0
        %v5841 = vpop.f32.mrb[0].mxu0
        %v5842 = vadd.f32 0.0, %v5841
        %v5843 = vpop.f32.mrb[0].mxu0
        %5844 = vmatprep.mubr.bf16.mxu0 0
        %5845 = vmatmul.mubr.bf16.gmra.mrb[0].mxu0 %v5700
        %v5846 = vpop.f32.mrb[0].mxu0
        %v5847 = vadd.f32 0.0, %v5846
        %v5848 = vpop.f32.mrb[0].mxu0
        %v5849 = vpop.f32.mrb[0].mxu0
        %v5850 = vadd.f32 0.0, %v5849
        %v5851 = vpop.f32.mrb[0].mxu0
        %5852 = vmatprep.mubr.bf16.mxu0 0
        %5853 = vmatmul.mubr.bf16.gmra.mrb[0].mxu0 %v5701
        %v5854 = vpop.f32.mrb[0].mxu0
        %v5855 = vadd.f32 0.0, %v5854
        %v5856 = vpop.f32.mrb[0].mxu0
        %v5857 = vpop.f32.mrb[0].mxu0
        %v5858 = vadd.f32 0.0, %v5857
        %v5859 = vpop.f32.mrb[0].mxu0
        %5860 = vmatprep.mubr.bf16.mxu0 0
        %5861 = vmatmul.mubr.bf16.gmra.mrb[0].mxu0 %v5702
        %v5862 = vpop.f32.mrb[0].mxu0
        %v5863 = vadd.f32 0.0, %v5862
        %v5864 = vpop.f32.mrb[0].mxu0
        %v5865 = vpop.f32.mrb[0].mxu0
        %v5866 = vadd.f32 0.0, %v5865
        %v5867 = vpop.f32.mrb[0].mxu0
        %5868 = vmatprep.mubr.bf16.mxu0 0
        %5869 = vmatmul.mubr.bf16.gmra.mrb[0].mxu0 %v5703
        %v5870 = vpop.f32.mrb[0].mxu0
        %v5871 = vadd.f32 0.0, %v5870
        %v5872 = vpop.f32.mrb[0].mxu0
        %v5873 = vpop.f32.mrb[0].mxu0
        %v5874 = vadd.f32 0.0, %v5873
        %v5875 = vpop.f32.mrb[0].mxu0
        %5876 = vmatprep.mubr.bf16.mxu0 0
        %5877 = vmatmul.mubr.bf16.gmra.mrb[0].mxu0 %v5704
        %v5878 = vpop.f32.mrb[0].mxu0
        %v5879 = vadd.f32 0.0, %v5878
        %v5880 = vpop.f32.mrb[0].mxu0
        %v5881 = vpop.f32.mrb[0].mxu0
        %v5882 = vadd.f32 0.0, %v5881
        %v5883 = vpop.f32.mrb[0].mxu0
        %5884 = vmatprep.mubr.bf16.mxu0 0
        %5885 = vmatmul.mubr.bf16.gmra.mrb[0].mxu0 %v5705
        %v5886 = vpop.f32.mrb[0].mxu0
        %v5887 = vadd.f32 0.0, %v5886
        %v5888 = vpop.f32.mrb[0].mxu0
        %v5889 = vpop.f32.mrb[0].mxu0
        %v5890 = vadd.f32 0.0, %v5889
        %v5891 = vpop.f32.mrb[0].mxu0
        %5892 = vmatprep.mubr.bf16.mxu0 0
        %5893 = vmatmul.mubr.bf16.gmra.mrb[0].mxu0 %v5706
        %v5894 = vpop.f32.mrb[0].mxu0
        %v5895 = vadd.f32 0.0, %v5894
        %v5896 = vpop.f32.mrb[0].mxu0
        %v5897 = vpop.f32.mrb[0].mxu0
        %v5898 = vpop.f32.mrb[0].mxu0
        %5899 = vdwg.mxu0
        %v5900 = vadd.f32 %v5649, %v5807
        %v5901 = vadd.f32 %v5650, %v5810
        %v5902 = vadd.f32 %v5651, %v5815
        %v5903 = vadd.f32 %v5652, %v5818
        %v5904 = vadd.f32 %v5653, %v5823
        %v5905 = vadd.f32 %v5654, %v5826
        %v5906 = vadd.f32 %v5655, %v5831
        %v5907 = vadd.f32 %v5656, %v5834
        %v5908 = vadd.f32 %v5657, %v5839
        %v5909 = vadd.f32 %v5658, %v5842
        %v5910 = vadd.f32 %v5659, %v5847
        %v5911 = vadd.f32 %v5660, %v5850
        %v5912 = vadd.f32 %v5661, %v5855
        %v5913 = vadd.f32 %v5662, %v5858
        %v5914 = vadd.f32 %v5663, %v5863
        %v5915 = vadd.f32 %v5664, %v5866
        %v5916 = vadd.f32 %v5665, %v5871
        %v5917 = vadd.f32 %v5666, %v5874
        %v5918 = vadd.f32 %v5667, %v5879
        %v5919 = vadd.f32 %v5668, %v5882
        %v5920 = vadd.f32 %v5669, %v5887
        %v5921 = vadd.f32 %v5670, %v5890
        %v5922 = vadd.f32 %v5671, %v5895
        %v5923 = vld [vmem:[#allocation2 + $0x1f] sm:$0xff]
        %v5924 = vld [vmem:[#allocation2 + $0x27] sm:$0xff]
        %v5925 = vld [vmem:[#allocation2 + $0x2f] sm:$0xff]
        %v5926 = vld [vmem:[#allocation2 + $0x37] sm:$0xff]
        %v5927 = vld [vmem:[#allocation2 + $0x3f] sm:$0xff]
        %v5928 = vld [vmem:[#allocation2 + $0x47] sm:$0xff]
        %v5929 = vld [vmem:[#allocation2 + $0x4f] sm:$0xff]
        %v5930 = vld [vmem:[#allocation2 + $0x57] sm:$0xff]
        %v5931 = vld [vmem:[#allocation2 + $0x5f] sm:$0xff]
        %v5932 = vld [vmem:[#allocation2 + $0x67] sm:$0xff]
        %v5933 = vld [vmem:[#allocation2 + $0x6f] sm:$0xff]
        %v5934 = vld [vmem:[#allocation2 + $0x77] sm:$0xff]
        %v5935 = vld [vmem:[#allocation2 + $0x7f] sm:$0xff]
        %v5936 = vld [vmem:[#allocation2 + $0x87] sm:$0xff]
        %v5937 = vld [vmem:[#allocation2 + $0x8f] sm:$0xff]
        %v5938 = vld [vmem:[#allocation2 + $0x97] sm:$0xff]
        %v5939 = vld [vmem:[#allocation2 + $0x9f] sm:$0xff]
        %v5940 = vld [vmem:[#allocation2 + $0xa7] sm:$0xff]
        %v5941 = vld [vmem:[#allocation2 + $0xaf] sm:$0xff]
        %v5942 = vld [vmem:[#allocation2 + $0xb7] sm:$0xff]
        %v5943 = vld [vmem:[#allocation2 + $0xbf] sm:$0xff]
        %v5944 = vld [vmem:[#allocation2 + $0xc7] sm:$0xff]
        %v5945 = vld [vmem:[#allocation2 + $0xcf] sm:$0x3]
        %v5946 = vpack.c.bf16 %v5924, %v5923
        %v5947 = vpack.c.bf16 %v5926, %v5925
        %v5948 = vpack.c.bf16 %v5928, %v5927
        %v5949 = vpack.c.bf16 %v5930, %v5929
        %v5950 = vpack.c.bf16 %v5932, %v5931
        %v5951 = vpack.c.bf16 %v5934, %v5933
        %v5952 = vpack.c.bf16 %v5936, %v5935
        %v5953 = vpack.c.bf16 %v5938, %v5937
        %v5954 = vpack.c.bf16 %v5940, %v5939
        %v5955 = vpack.c.bf16 %v5942, %v5941
        %v5956 = vpack.c.bf16 %v5944, %v5943
        %v5957 = vpack.c.bf16 %v5945, %v5945
        %s5958 = scalar_lea.vmem %s4, 448
        %v5959 = vld [vmem:[%s5958] sm:$0xf]
        %v5960 = vld [vmem:[%s5958 + $0x4] sm:$0xf]
        %v5961 = vld [vmem:[%s5958 + $0x8] sm:$0xf]
        %v5962 = vld [vmem:[%s5958 + $0xc] sm:$0xf]
        %v5963 = vld [vmem:[%s5958 + $0x10] sm:$0xf]
        %v5964 = vld [vmem:[%s5958 + $0x14] sm:$0xf]
        %v5965 = vld [vmem:[%s5958 + $0x18] sm:$0xf]
        %v5966 = vld [vmem:[%s5958 + $0x1c] sm:$0xf]
        %v5967 = vld [vmem:[%s5958 + $0x20] sm:$0xf]
        %v5968 = vld [vmem:[%s5958 + $0x24] sm:$0xf]
        %v5969 = vld [vmem:[%s5958 + $0x28] sm:$0xf]
        %v5970 = vld [vmem:[%s5958 + $0x2c] sm:$0xf]
        %v5971 = vld [vmem:[%s5958 + $0x30] sm:$0xf]
        %v5972 = vld [vmem:[%s5958 + $0x34] sm:$0xf]
        %v5973 = vld [vmem:[%s5958 + $0x38] sm:$0xf]
        %v5974 = vld [vmem:[%s5958 + $0x3c] sm:$0xf]
        %v5991 = vunpack.c.l.b16 %v5959
        %v5992 = vunpack.c.l.b16 %v5960
        %v5993 = vunpack.c.l.b16 %v5961
        %v5994 = vunpack.c.l.b16 %v5962
        %v5995 = vunpack.c.l.b16 %v5963
        %v5996 = vunpack.c.l.b16 %v5964
        %v5997 = vunpack.c.l.b16 %v5965
        %v5998 = vunpack.c.l.b16 %v5966
        %v5999 = vunpack.c.l.b16 %v5967
        %v6000 = vunpack.c.l.b16 %v5968
        %v6001 = vunpack.c.l.b16 %v5969
        %v6002 = vunpack.c.l.b16 %v5970
        %v6003 = vunpack.c.l.b16 %v5971
        %v6004 = vunpack.c.l.b16 %v5972
        %v6005 = vunpack.c.l.b16 %v5973
        %v6006 = vunpack.c.l.b16 %v5974
        %v6007 = vpack.c.b16 %v5992, %v5991
        %v6008 = vpack.c.b16 %v5994, %v5993
        %v6009 = vpack.c.b16 %v5996, %v5995
        %v6010 = vpack.c.b16 %v5998, %v5997
        %v6011 = vpack.c.b16 %v6000, %v5999
        %v6012 = vpack.c.b16 %v6002, %v6001
        %v6013 = vpack.c.b16 %v6004, %v6003
        %v6014 = vpack.c.b16 %v6006, %v6005
        %6023 = vmatprep.subr.bf16.mxu0 0
        %6024 = vmatpush1.bf16.msra.mxu0 %v6007
        %6025 = vmatprep.subr.bf16.mxu0 0
        %6026 = vmatpush1.bf16.msra.mxu0 %v6008
        %6027 = vmatprep.subr.bf16.mxu0 0
        %6028 = vmatpush1.bf16.msra.mxu0 %v6009
        %6029 = vmatprep.subr.bf16.mxu0 0
        %6030 = vmatpush1.bf16.msra.mxu0 %v6010
        %6031 = vmatprep.subr.bf16.mxu0 0
        %6032 = vmatpush1.bf16.msra.mxu0 %v6011
        %6033 = vmatprep.subr.bf16.mxu0 0
        %6034 = vmatpush1.bf16.msra.mxu0 %v6012
        %6035 = vmatprep.subr.bf16.mxu0 0
        %6036 = vmatpush1.bf16.msra.mxu0 %v6013
        %6037 = vmatprep.subr.bf16.mxu0 0
        %6038 = vmatpush1.bf16.msra.mxu0 %v6014
        %6039 = vmatprep.subr.bf16.mxu0 0
        %6040 = vmatpush1.bf16.msra.mxu0 0
        %6041 = vmatprep.subr.bf16.mxu0 0
        %6042 = vmatpush1.bf16.msra.mxu0 0
        %6043 = vmatprep.subr.bf16.mxu0 0
        %6044 = vmatpush1.bf16.msra.mxu0 0
        %6045 = vmatprep.subr.bf16.mxu0 0
        %6046 = vmatpush1.bf16.msra.mxu0 0
        %6047 = vmatprep.subr.bf16.mxu0 0
        %6048 = vmatpush1.bf16.msra.mxu0 0
        %6049 = vmatprep.subr.bf16.mxu0 0
        %6050 = vmatpush1.bf16.msra.mxu0 0
        %6051 = vmatprep.subr.bf16.mxu0 0
        %6052 = vmatpush1.bf16.msra.mxu0 0
        %6053 = vmatprep.subr.bf16.mxu0 0
        %6054 = vmatpush1.bf16.msra.mxu0 0
        %6055 = vmatprep.mubr.bf16.mxu0 0
        %6056 = vmatmul.mubr.bf16.gmra.mrb[0].mxu0 %v5946
        %v6057 = vpop.f32.mrb[0].mxu0
        %v6058 = vadd.f32 0.0, %v6057
        %v6059 = vpop.f32.mrb[0].mxu0
        %v6060 = vpop.f32.mrb[0].mxu0
        %v6061 = vadd.f32 0.0, %v6060
        %v6062 = vpop.f32.mrb[0].mxu0
        %6063 = vmatprep.mubr.bf16.mxu0 0
        %6064 = vmatmul.mubr.bf16.gmra.mrb[0].mxu0 %v5947
        %v6065 = vpop.f32.mrb[0].mxu0
        %v6066 = vadd.f32 0.0, %v6065
        %v6067 = vpop.f32.mrb[0].mxu0
        %v6068 = vpop.f32.mrb[0].mxu0
        %v6069 = vadd.f32 0.0, %v6068
        %v6070 = vpop.f32.mrb[0].mxu0
        %6071 = vmatprep.mubr.bf16.mxu0 0
        %6072 = vmatmul.mubr.bf16.gmra.mrb[0].mxu0 %v5948
        %v6073 = vpop.f32.mrb[0].mxu0
        %v6074 = vadd.f32 0.0, %v6073
        %v6075 = vpop.f32.mrb[0].mxu0
        %v6076 = vpop.f32.mrb[0].mxu0
        %v6077 = vadd.f32 0.0, %v6076
        %v6078 = vpop.f32.mrb[0].mxu0
        %6079 = vmatprep.mubr.bf16.mxu0 0
        %6080 = vmatmul.mubr.bf16.gmra.mrb[0].mxu0 %v5949
        %v6081 = vpop.f32.mrb[0].mxu0
        %v6082 = vadd.f32 0.0, %v6081
        %v6083 = vpop.f32.mrb[0].mxu0
        %v6084 = vpop.f32.mrb[0].mxu0
        %v6085 = vadd.f32 0.0, %v6084
        %v6086 = vpop.f32.mrb[0].mxu0
        %6087 = vmatprep.mubr.bf16.mxu0 0
        %6088 = vmatmul.mubr.bf16.gmra.mrb[0].mxu0 %v5950
        %v6089 = vpop.f32.mrb[0].mxu0
        %v6090 = vadd.f32 0.0, %v6089
        %v6091 = vpop.f32.mrb[0].mxu0
        %v6092 = vpop.f32.mrb[0].mxu0
        %v6093 = vadd.f32 0.0, %v6092
        %v6094 = vpop.f32.mrb[0].mxu0
        %6095 = vmatprep.mubr.bf16.mxu0 0
        %6096 = vmatmul.mubr.bf16.gmra.mrb[0].mxu0 %v5951
        %v6097 = vpop.f32.mrb[0].mxu0
        %v6098 = vadd.f32 0.0, %v6097
        %v6099 = vpop.f32.mrb[0].mxu0
        %v6100 = vpop.f32.mrb[0].mxu0
        %v6101 = vadd.f32 0.0, %v6100
        %v6102 = vpop.f32.mrb[0].mxu0
        %6103 = vmatprep.mubr.bf16.mxu0 0
        %6104 = vmatmul.mubr.bf16.gmra.mrb[0].mxu0 %v5952
        %v6105 = vpop.f32.mrb[0].mxu0
        %v6106 = vadd.f32 0.0, %v6105
        %v6107 = vpop.f32.mrb[0].mxu0
        %v6108 = vpop.f32.mrb[0].mxu0
        %v6109 = vadd.f32 0.0, %v6108
        %v6110 = vpop.f32.mrb[0].mxu0
        %6111 = vmatprep.mubr.bf16.mxu0 0
        %6112 = vmatmul.mubr.bf16.gmra.mrb[0].mxu0 %v5953
        %v6113 = vpop.f32.mrb[0].mxu0
        %v6114 = vadd.f32 0.0, %v6113
        %v6115 = vpop.f32.mrb[0].mxu0
        %v6116 = vpop.f32.mrb[0].mxu0
        %v6117 = vadd.f32 0.0, %v6116
        %v6118 = vpop.f32.mrb[0].mxu0
        %6119 = vmatprep.mubr.bf16.mxu0 0
        %6120 = vmatmul.mubr.bf16.gmra.mrb[0].mxu0 %v5954
        %v6121 = vpop.f32.mrb[0].mxu0
        %v6122 = vadd.f32 0.0, %v6121
        %v6123 = vpop.f32.mrb[0].mxu0
        %v6124 = vpop.f32.mrb[0].mxu0
        %v6125 = vadd.f32 0.0, %v6124
        %v6126 = vpop.f32.mrb[0].mxu0
        %6127 = vmatprep.mubr.bf16.mxu0 0
        %6128 = vmatmul.mubr.bf16.gmra.mrb[0].mxu0 %v5955
        %v6129 = vpop.f32.mrb[0].mxu0
        %v6130 = vadd.f32 0.0, %v6129
        %v6131 = vpop.f32.mrb[0].mxu0
        %v6132 = vpop.f32.mrb[0].mxu0
        %v6133 = vadd.f32 0.0, %v6132
        %v6134 = vpop.f32.mrb[0].mxu0
        %6135 = vmatprep.mubr.bf16.mxu0 0
        %6136 = vmatmul.mubr.bf16.gmra.mrb[0].mxu0 %v5956
        %v6137 = vpop.f32.mrb[0].mxu0
        %v6138 = vadd.f32 0.0, %v6137
        %v6139 = vpop.f32.mrb[0].mxu0
        %v6140 = vpop.f32.mrb[0].mxu0
        %v6141 = vadd.f32 0.0, %v6140
        %v6142 = vpop.f32.mrb[0].mxu0
        %6143 = vmatprep.mubr.bf16.mxu0 0
        %6144 = vmatmul.mubr.bf16.gmra.mrb[0].mxu0 %v5957
        %v6145 = vpop.f32.mrb[0].mxu0
        %v6146 = vadd.f32 0.0, %v6145
        %v6147 = vpop.f32.mrb[0].mxu0
        %v6148 = vpop.f32.mrb[0].mxu0
        %v6149 = vpop.f32.mrb[0].mxu0
        %6150 = vdwg.mxu0
        %v6151 = vadd.f32 %v5900, %v6058
        %v6152 = vadd.f32 %v5901, %v6061
        %v6153 = vadd.f32 %v5902, %v6066
        %v6154 = vadd.f32 %v5903, %v6069
        %v6155 = vadd.f32 %v5904, %v6074
        %v6156 = vadd.f32 %v5905, %v6077
        %v6157 = vadd.f32 %v5906, %v6082
        %v6158 = vadd.f32 %v5907, %v6085
        %v6159 = vadd.f32 %v5908, %v6090
        %v6160 = vadd.f32 %v5909, %v6093
        %v6161 = vadd.f32 %v5910, %v6098
        %v6162 = vadd.f32 %v5911, %v6101
        %v6163 = vadd.f32 %v5912, %v6106
        %v6164 = vadd.f32 %v5913, %v6109
        %v6165 = vadd.f32 %v5914, %v6114
        %v6166 = vadd.f32 %v5915, %v6117
        %v6167 = vadd.f32 %v5916, %v6122
        %v6168 = vadd.f32 %v5917, %v6125
        %v6169 = vadd.f32 %v5918, %v6130
        %v6170 = vadd.f32 %v5919, %v6133
        %v6171 = vadd.f32 %v5920, %v6138
        %v6172 = vadd.f32 %v5921, %v6141
        %v6173 = vadd.f32 %v5922, %v6146
        %v6174 = vld [vmem:[#allocation2 + $0x20] sm:$0xff]
        %v6175 = vld [vmem:[#allocation2 + $0x28] sm:$0xff]
        %v6176 = vld [vmem:[#allocation2 + $0x30] sm:$0xff]
        %v6177 = vld [vmem:[#allocation2 + $0x38] sm:$0xff]
        %v6178 = vld [vmem:[#allocation2 + $0x40] sm:$0xff]
        %v6179 = vld [vmem:[#allocation2 + $0x48] sm:$0xff]
        %v6180 = vld [vmem:[#allocation2 + $0x50] sm:$0xff]
        %v6181 = vld [vmem:[#allocation2 + $0x58] sm:$0xff]
        %v6182 = vld [vmem:[#allocation2 + $0x60] sm:$0xff]
        %v6183 = vld [vmem:[#allocation2 + $0x68] sm:$0xff]
        %v6184 = vld [vmem:[#allocation2 + $0x70] sm:$0xff]
        %v6185 = vld [vmem:[#allocation2 + $0x78] sm:$0xff]
        %v6186 = vld [vmem:[#allocation2 + $0x80] sm:$0xff]
        %v6187 = vld [vmem:[#allocation2 + $0x88] sm:$0xff]
        %v6188 = vld [vmem:[#allocation2 + $0x90] sm:$0xff]
        %v6189 = vld [vmem:[#allocation2 + $0x98] sm:$0xff]
        %v6190 = vld [vmem:[#allocation2 + $0xa0] sm:$0xff]
        %v6191 = vld [vmem:[#allocation2 + $0xa8] sm:$0xff]
        %v6192 = vld [vmem:[#allocation2 + $0xb0] sm:$0xff]
        %v6193 = vld [vmem:[#allocation2 + $0xb8] sm:$0xff]
        %v6194 = vld [vmem:[#allocation2 + $0xc0] sm:$0xff]
        %v6195 = vld [vmem:[#allocation2 + $0xc8] sm:$0xff]
        %v6196 = vld [vmem:[#allocation2 + $0xd0] sm:$0x3]
        %v6197 = vpack.c.bf16 %v6175, %v6174
        %v6198 = vpack.c.bf16 %v6177, %v6176
        %v6199 = vpack.c.bf16 %v6179, %v6178
        %v6200 = vpack.c.bf16 %v6181, %v6180
        %v6201 = vpack.c.bf16 %v6183, %v6182
        %v6202 = vpack.c.bf16 %v6185, %v6184
        %v6203 = vpack.c.bf16 %v6187, %v6186
        %v6204 = vpack.c.bf16 %v6189, %v6188
        %v6205 = vpack.c.bf16 %v6191, %v6190
        %v6206 = vpack.c.bf16 %v6193, %v6192
        %v6207 = vpack.c.bf16 %v6195, %v6194
        %v6208 = vpack.c.bf16 %v6196, %v6196
        %s6209 = scalar_lea.vmem %s4, 512
        %v6210 = vld [vmem:[%s6209] sm:$0xf]
        %v6211 = vld [vmem:[%s6209 + $0x4] sm:$0xf]
        %v6212 = vld [vmem:[%s6209 + $0x8] sm:$0xf]
        %v6213 = vld [vmem:[%s6209 + $0xc] sm:$0xf]
        %v6214 = vld [vmem:[%s6209 + $0x10] sm:$0xf]
        %v6215 = vld [vmem:[%s6209 + $0x14] sm:$0xf]
        %v6216 = vld [vmem:[%s6209 + $0x18] sm:$0xf]
        %v6217 = vld [vmem:[%s6209 + $0x1c] sm:$0xf]
        %v6218 = vld [vmem:[%s6209 + $0x20] sm:$0xf]
        %v6219 = vld [vmem:[%s6209 + $0x24] sm:$0xf]
        %v6220 = vld [vmem:[%s6209 + $0x28] sm:$0xf]
        %v6221 = vld [vmem:[%s6209 + $0x2c] sm:$0xf]
        %v6222 = vld [vmem:[%s6209 + $0x30] sm:$0xf]
        %v6223 = vld [vmem:[%s6209 + $0x34] sm:$0xf]
        %v6224 = vld [vmem:[%s6209 + $0x38] sm:$0xf]
        %v6225 = vld [vmem:[%s6209 + $0x3c] sm:$0xf]
        %v6242 = vunpack.c.l.b16 %v6210
        %v6243 = vunpack.c.l.b16 %v6211
        %v6244 = vunpack.c.l.b16 %v6212
        %v6245 = vunpack.c.l.b16 %v6213
        %v6246 = vunpack.c.l.b16 %v6214
        %v6247 = vunpack.c.l.b16 %v6215
        %v6248 = vunpack.c.l.b16 %v6216
        %v6249 = vunpack.c.l.b16 %v6217
        %v6250 = vunpack.c.l.b16 %v6218
        %v6251 = vunpack.c.l.b16 %v6219
        %v6252 = vunpack.c.l.b16 %v6220
        %v6253 = vunpack.c.l.b16 %v6221
        %v6254 = vunpack.c.l.b16 %v6222
        %v6255 = vunpack.c.l.b16 %v6223
        %v6256 = vunpack.c.l.b16 %v6224
        %v6257 = vunpack.c.l.b16 %v6225
        %v6258 = vpack.c.b16 %v6243, %v6242
        %v6259 = vpack.c.b16 %v6245, %v6244
        %v6260 = vpack.c.b16 %v6247, %v6246
        %v6261 = vpack.c.b16 %v6249, %v6248
        %v6262 = vpack.c.b16 %v6251, %v6250
        %v6263 = vpack.c.b16 %v6253, %v6252
        %v6264 = vpack.c.b16 %v6255, %v6254
        %v6265 = vpack.c.b16 %v6257, %v6256
        %6274 = vmatprep.subr.bf16.mxu0 0
        %6275 = vmatpush1.bf16.msra.mxu0 %v6258
        %6276 = vmatprep.subr.bf16.mxu0 0
        %6277 = vmatpush1.bf16.msra.mxu0 %v6259
        %6278 = vmatprep.subr.bf16.mxu0 0
        %6279 = vmatpush1.bf16.msra.mxu0 %v6260
        %6280 = vmatprep.subr.bf16.mxu0 0
        %6281 = vmatpush1.bf16.msra.mxu0 %v6261
        %6282 = vmatprep.subr.bf16.mxu0 0
        %6283 = vmatpush1.bf16.msra.mxu0 %v6262
        %6284 = vmatprep.subr.bf16.mxu0 0
        %6285 = vmatpush1.bf16.msra.mxu0 %v6263
        %6286 = vmatprep.subr.bf16.mxu0 0
        %6287 = vmatpush1.bf16.msra.mxu0 %v6264
        %6288 = vmatprep.subr.bf16.mxu0 0
        %6289 = vmatpush1.bf16.msra.mxu0 %v6265
        %6290 = vmatprep.subr.bf16.mxu0 0
        %6291 = vmatpush1.bf16.msra.mxu0 0
        %6292 = vmatprep.subr.bf16.mxu0 0
        %6293 = vmatpush1.bf16.msra.mxu0 0
        %6294 = vmatprep.subr.bf16.mxu0 0
        %6295 = vmatpush1.bf16.msra.mxu0 0
        %6296 = vmatprep.subr.bf16.mxu0 0
        %6297 = vmatpush1.bf16.msra.mxu0 0
        %6298 = vmatprep.subr.bf16.mxu0 0
        %6299 = vmatpush1.bf16.msra.mxu0 0
        %6300 = vmatprep.subr.bf16.mxu0 0
        %6301 = vmatpush1.bf16.msra.mxu0 0
        %6302 = vmatprep.subr.bf16.mxu0 0
        %6303 = vmatpush1.bf16.msra.mxu0 0
        %6304 = vmatprep.subr.bf16.mxu0 0
        %6305 = vmatpush1.bf16.msra.mxu0 0
        %6306 = vmatprep.mubr.bf16.mxu0 0
        %6307 = vmatmul.mubr.bf16.gmra.mrb[0].mxu0 %v6197
        %v6308 = vpop.f32.mrb[0].mxu0
        %v6309 = vadd.f32 0.0, %v6308
        %v6310 = vpop.f32.mrb[0].mxu0
        %v6311 = vpop.f32.mrb[0].mxu0
        %v6312 = vadd.f32 0.0, %v6311
        %v6313 = vpop.f32.mrb[0].mxu0
        %6314 = vmatprep.mubr.bf16.mxu0 0
        %6315 = vmatmul.mubr.bf16.gmra.mrb[0].mxu0 %v6198
        %v6316 = vpop.f32.mrb[0].mxu0
        %v6317 = vadd.f32 0.0, %v6316
        %v6318 = vpop.f32.mrb[0].mxu0
        %v6319 = vpop.f32.mrb[0].mxu0
        %v6320 = vadd.f32 0.0, %v6319
        %v6321 = vpop.f32.mrb[0].mxu0
        %6322 = vmatprep.mubr.bf16.mxu0 0
        %6323 = vmatmul.mubr.bf16.gmra.mrb[0].mxu0 %v6199
        %v6324 = vpop.f32.mrb[0].mxu0
        %v6325 = vadd.f32 0.0, %v6324
        %v6326 = vpop.f32.mrb[0].mxu0
        %v6327 = vpop.f32.mrb[0].mxu0
        %v6328 = vadd.f32 0.0, %v6327
        %v6329 = vpop.f32.mrb[0].mxu0
        %6330 = vmatprep.mubr.bf16.mxu0 0
        %6331 = vmatmul.mubr.bf16.gmra.mrb[0].mxu0 %v6200
        %v6332 = vpop.f32.mrb[0].mxu0
        %v6333 = vadd.f32 0.0, %v6332
        %v6334 = vpop.f32.mrb[0].mxu0
        %v6335 = vpop.f32.mrb[0].mxu0
        %v6336 = vadd.f32 0.0, %v6335
        %v6337 = vpop.f32.mrb[0].mxu0
        %6338 = vmatprep.mubr.bf16.mxu0 0
        %6339 = vmatmul.mubr.bf16.gmra.mrb[0].mxu0 %v6201
        %v6340 = vpop.f32.mrb[0].mxu0
        %v6341 = vadd.f32 0.0, %v6340
        %v6342 = vpop.f32.mrb[0].mxu0
        %v6343 = vpop.f32.mrb[0].mxu0
        %v6344 = vadd.f32 0.0, %v6343
        %v6345 = vpop.f32.mrb[0].mxu0
        %6346 = vmatprep.mubr.bf16.mxu0 0
        %6347 = vmatmul.mubr.bf16.gmra.mrb[0].mxu0 %v6202
        %v6348 = vpop.f32.mrb[0].mxu0
        %v6349 = vadd.f32 0.0, %v6348
        %v6350 = vpop.f32.mrb[0].mxu0
        %v6351 = vpop.f32.mrb[0].mxu0
        %v6352 = vadd.f32 0.0, %v6351
        %v6353 = vpop.f32.mrb[0].mxu0
        %6354 = vmatprep.mubr.bf16.mxu0 0
        %6355 = vmatmul.mubr.bf16.gmra.mrb[0].mxu0 %v6203
        %v6356 = vpop.f32.mrb[0].mxu0
        %v6357 = vadd.f32 0.0, %v6356
        %v6358 = vpop.f32.mrb[0].mxu0
        %v6359 = vpop.f32.mrb[0].mxu0
        %v6360 = vadd.f32 0.0, %v6359
        %v6361 = vpop.f32.mrb[0].mxu0
        %6362 = vmatprep.mubr.bf16.mxu0 0
        %6363 = vmatmul.mubr.bf16.gmra.mrb[0].mxu0 %v6204
        %v6364 = vpop.f32.mrb[0].mxu0
        %v6365 = vadd.f32 0.0, %v6364
        %v6366 = vpop.f32.mrb[0].mxu0
        %v6367 = vpop.f32.mrb[0].mxu0
        %v6368 = vadd.f32 0.0, %v6367
        %v6369 = vpop.f32.mrb[0].mxu0
        %6370 = vmatprep.mubr.bf16.mxu0 0
        %6371 = vmatmul.mubr.bf16.gmra.mrb[0].mxu0 %v6205
        %v6372 = vpop.f32.mrb[0].mxu0
        %v6373 = vadd.f32 0.0, %v6372
        %v6374 = vpop.f32.mrb[0].mxu0
        %v6375 = vpop.f32.mrb[0].mxu0
        %v6376 = vadd.f32 0.0, %v6375
        %v6377 = vpop.f32.mrb[0].mxu0
        %6378 = vmatprep.mubr.bf16.mxu0 0
        %6379 = vmatmul.mubr.bf16.gmra.mrb[0].mxu0 %v6206
        %v6380 = vpop.f32.mrb[0].mxu0
        %v6381 = vadd.f32 0.0, %v6380
        %v6382 = vpop.f32.mrb[0].mxu0
        %v6383 = vpop.f32.mrb[0].mxu0
        %v6384 = vadd.f32 0.0, %v6383
        %v6385 = vpop.f32.mrb[0].mxu0
        %6386 = vmatprep.mubr.bf16.mxu0 0
        %6387 = vmatmul.mubr.bf16.gmra.mrb[0].mxu0 %v6207
        %v6388 = vpop.f32.mrb[0].mxu0
        %v6389 = vadd.f32 0.0, %v6388
        %v6390 = vpop.f32.mrb[0].mxu0
        %v6391 = vpop.f32.mrb[0].mxu0
        %v6392 = vadd.f32 0.0, %v6391
        %v6393 = vpop.f32.mrb[0].mxu0
        %6394 = vmatprep.mubr.bf16.mxu0 0
        %6395 = vmatmul.mubr.bf16.gmra.mrb[0].mxu0 %v6208
        %v6396 = vpop.f32.mrb[0].mxu0
        %v6397 = vadd.f32 0.0, %v6396
        %v6398 = vpop.f32.mrb[0].mxu0
        %v6399 = vpop.f32.mrb[0].mxu0
        %v6400 = vpop.f32.mrb[0].mxu0
        %6401 = vdwg.mxu0
        %v6402 = vadd.f32 %v6151, %v6309
        %v6403 = vadd.f32 %v6152, %v6312
        %v6404 = vadd.f32 %v6153, %v6317
        %v6405 = vadd.f32 %v6154, %v6320
        %v6406 = vadd.f32 %v6155, %v6325
        %v6407 = vadd.f32 %v6156, %v6328
        %v6408 = vadd.f32 %v6157, %v6333
        %v6409 = vadd.f32 %v6158, %v6336
        %v6410 = vadd.f32 %v6159, %v6341
        %v6411 = vadd.f32 %v6160, %v6344
        %v6412 = vadd.f32 %v6161, %v6349
        %v6413 = vadd.f32 %v6162, %v6352
        %v6414 = vadd.f32 %v6163, %v6357
        %v6415 = vadd.f32 %v6164, %v6360
        %v6416 = vadd.f32 %v6165, %v6365
        %v6417 = vadd.f32 %v6166, %v6368
        %v6418 = vadd.f32 %v6167, %v6373
        %v6419 = vadd.f32 %v6168, %v6376
        %v6420 = vadd.f32 %v6169, %v6381
        %v6421 = vadd.f32 %v6170, %v6384
        %v6422 = vadd.f32 %v6171, %v6389
        %v6423 = vadd.f32 %v6172, %v6392
        %v6424 = vadd.f32 %v6173, %v6397
        %v6425 = vld [vmem:[%s5] sm:$0x1]
        %v6427 = vlaneseq
        %v6428 = vshrl.u32 %v6427, 7
        %v6429 = vsub.s32 0, %v6428
        %v6430 = vrot.slane %v6425, %v6429
        %v6432 = vmul.f32 %v6402, %v6430
        %v6433 = vmul.f32 %v6403, %v6430
        %v6434 = vmul.f32 %v6404, %v6430
        %v6435 = vmul.f32 %v6405, %v6430
        %v6436 = vmul.f32 %v6406, %v6430
        %v6437 = vmul.f32 %v6407, %v6430
        %v6438 = vmul.f32 %v6408, %v6430
        %v6439 = vmul.f32 %v6409, %v6430
        %v6440 = vmul.f32 %v6410, %v6430
        %v6441 = vmul.f32 %v6411, %v6430
        %v6442 = vmul.f32 %v6412, %v6430
        %v6443 = vmul.f32 %v6413, %v6430
        %v6444 = vmul.f32 %v6414, %v6430
        %v6445 = vmul.f32 %v6415, %v6430
        %v6446 = vmul.f32 %v6416, %v6430
        %v6447 = vmul.f32 %v6417, %v6430
        %v6448 = vmul.f32 %v6418, %v6430
        %v6449 = vmul.f32 %v6419, %v6430
        %v6450 = vmul.f32 %v6420, %v6430
        %v6451 = vmul.f32 %v6421, %v6430
        %v6452 = vmul.f32 %v6422, %v6430
        %v6453 = vmul.f32 %v6423, %v6430
        %v6454 = vmul.f32 %v6424, %v6430
        %v6455 = vld [vmem:[%s6] sm:$0x1]
        %v6457 = vlaneseq
        %v6458 = vshrl.u32 %v6457, 7
        %v6459 = vsub.s32 0, %v6458
        %v6460 = vrot.slane %v6455, %v6459
        %v6462 = vadd.f32 %v6432, %v6460
        %v6463 = vadd.f32 %v6433, %v6460
        %v6464 = vadd.f32 %v6434, %v6460
        %v6465 = vadd.f32 %v6435, %v6460
        %v6466 = vadd.f32 %v6436, %v6460
        %v6467 = vadd.f32 %v6437, %v6460
        %v6468 = vadd.f32 %v6438, %v6460
        %v6469 = vadd.f32 %v6439, %v6460
        %v6470 = vadd.f32 %v6440, %v6460
        %v6471 = vadd.f32 %v6441, %v6460
        %v6472 = vadd.f32 %v6442, %v6460
        %v6473 = vadd.f32 %v6443, %v6460
        %v6474 = vadd.f32 %v6444, %v6460
        %v6475 = vadd.f32 %v6445, %v6460
        %v6476 = vadd.f32 %v6446, %v6460
        %v6477 = vadd.f32 %v6447, %v6460
        %v6478 = vadd.f32 %v6448, %v6460
        %v6479 = vadd.f32 %v6449, %v6460
        %v6480 = vadd.f32 %v6450, %v6460
        %v6481 = vadd.f32 %v6451, %v6460
        %v6482 = vadd.f32 %v6452, %v6460
        %v6483 = vadd.f32 %v6453, %v6460
        %v6484 = vadd.f32 %v6454, %v6460
        %v6485 = vmax.f32 %v6462, 0.0
        %v6486 = vmax.f32 %v6463, 0.0
        %v6487 = vmax.f32 %v6464, 0.0
        %v6488 = vmax.f32 %v6465, 0.0
        %v6489 = vmax.f32 %v6466, 0.0
        %v6490 = vmax.f32 %v6467, 0.0
        %v6491 = vmax.f32 %v6468, 0.0
        %v6492 = vmax.f32 %v6469, 0.0
        %v6493 = vmax.f32 %v6470, 0.0
        %v6494 = vmax.f32 %v6471, 0.0
        %v6495 = vmax.f32 %v6472, 0.0
        %v6496 = vmax.f32 %v6473, 0.0
        %v6497 = vmax.f32 %v6474, 0.0
        %v6498 = vmax.f32 %v6475, 0.0
        %v6499 = vmax.f32 %v6476, 0.0
        %v6500 = vmax.f32 %v6477, 0.0
        %v6501 = vmax.f32 %v6478, 0.0
        %v6502 = vmax.f32 %v6479, 0.0
        %v6503 = vmax.f32 %v6480, 0.0
        %v6504 = vmax.f32 %v6481, 0.0
        %v6505 = vmax.f32 %v6482, 0.0
        %v6506 = vmax.f32 %v6483, 0.0
        %v6507 = vmax.f32 %v6484, 0.0
        %v6508 = vld [vmem:[%s8] sm:$0x1]
        %vm6512 = vcmask 1040384
        %v6513 = vrot.slane %v6486, 7
        %v6514 = vrot.slane %v6487, 7
        %v6515 = vsel %vm6512, %v6513, %v6514
        %v6516 = vrot.slane %v6488, 7
        %v6517 = vsel %vm6512, %v6514, %v6516
        %v6520 = vmax.f32 %v6485, %v6515
        %v6521 = vmax.f32 %v6486, %v6517
        %vm6524 = vcmask 1041408
        %v6525 = vrot.slane %v6488, 6
        %v6526 = vrot.slane %v6489, 6
        %v6527 = vsel %vm6524, %v6525, %v6526
        %v6528 = vrot.slane %v6490, 6
        %v6529 = vsel %vm6524, %v6526, %v6528
        %v6532 = vmax.f32 %v6520, %v6527
        %v6533 = vmax.f32 %v6521, %v6529
        %v6535 = vrot.slane %v6532, 1
        %v6537 = vmax.f32 %v6532, %v6535
        %v6538 = vrot.slane %v6532, 2
        %v6540 = vmax.f32 %v6537, %v6538
        %v6541 = vpack.c.bf16 %v6540, %v6540
        %v6542 = vld [vmem:[%s7] sm:$0xf]
        %v6543 = vld [vmem:[%s7 + $0x4] sm:$0xf]
        %v6544 = vld [vmem:[%s7 + $0x8] sm:$0xf]
        %v6545 = vld [vmem:[%s7 + $0xc] sm:$0xf]
        %v6546 = vld [vmem:[%s7 + $0x10] sm:$0xf]
        %v6547 = vld [vmem:[%s7 + $0x14] sm:$0xf]
        %v6548 = vld [vmem:[%s7 + $0x18] sm:$0xf]
        %v6549 = vld [vmem:[%s7 + $0x1c] sm:$0xf]
        %v6550 = vld [vmem:[%s7 + $0x20] sm:$0xf]
        %v6551 = vld [vmem:[%s7 + $0x24] sm:$0xf]
        %v6552 = vld [vmem:[%s7 + $0x28] sm:$0xf]
        %v6553 = vld [vmem:[%s7 + $0x2c] sm:$0xf]
        %v6554 = vld [vmem:[%s7 + $0x30] sm:$0xf]
        %v6555 = vld [vmem:[%s7 + $0x34] sm:$0xf]
        %v6556 = vld [vmem:[%s7 + $0x38] sm:$0xf]
        %v6557 = vld [vmem:[%s7 + $0x3c] sm:$0xf]
        %v6574 = vunpack.c.l.b16 %v6542
        %v6575 = vunpack.c.l.b16 %v6543
        %v6576 = vunpack.c.l.b16 %v6544
        %v6577 = vunpack.c.l.b16 %v6545
        %v6578 = vunpack.c.l.b16 %v6546
        %v6579 = vunpack.c.l.b16 %v6547
        %v6580 = vunpack.c.l.b16 %v6548
        %v6581 = vunpack.c.l.b16 %v6549
        %v6582 = vunpack.c.l.b16 %v6550
        %v6583 = vunpack.c.l.b16 %v6551
        %v6584 = vunpack.c.l.b16 %v6552
        %v6585 = vunpack.c.l.b16 %v6553
        %v6586 = vunpack.c.l.b16 %v6554
        %v6587 = vunpack.c.l.b16 %v6555
        %v6588 = vunpack.c.l.b16 %v6556
        %v6589 = vunpack.c.l.b16 %v6557
        %v6590 = vpack.c.b16 %v6575, %v6574
        %v6591 = vpack.c.b16 %v6577, %v6576
        %v6592 = vpack.c.b16 %v6579, %v6578
        %v6593 = vpack.c.b16 %v6581, %v6580
        %v6594 = vpack.c.b16 %v6583, %v6582
        %v6595 = vpack.c.b16 %v6585, %v6584
        %v6596 = vpack.c.b16 %v6587, %v6586
        %v6597 = vpack.c.b16 %v6589, %v6588
        %6606 = vmatprep.subr.bf16.mxu0 0
        %6607 = vmatpush1.bf16.msra.mxu0 %v6590
        %6608 = vmatprep.subr.bf16.mxu0 0
        %6609 = vmatpush1.bf16.msra.mxu0 %v6591
        %6610 = vmatprep.subr.bf16.mxu0 0
        %6611 = vmatpush1.bf16.msra.mxu0 %v6592
        %6612 = vmatprep.subr.bf16.mxu0 0
        %6613 = vmatpush1.bf16.msra.mxu0 %v6593
        %6614 = vmatprep.subr.bf16.mxu0 0
        %6615 = vmatpush1.bf16.msra.mxu0 %v6594
        %6616 = vmatprep.subr.bf16.mxu0 0
        %6617 = vmatpush1.bf16.msra.mxu0 %v6595
        %6618 = vmatprep.subr.bf16.mxu0 0
        %6619 = vmatpush1.bf16.msra.mxu0 %v6596
        %6620 = vmatprep.subr.bf16.mxu0 0
        %6621 = vmatpush1.bf16.msra.mxu0 %v6597
        %6622 = vmatprep.subr.bf16.mxu0 0
        %6623 = vmatpush1.bf16.msra.mxu0 0
        %6624 = vmatprep.subr.bf16.mxu0 0
        %6625 = vmatpush1.bf16.msra.mxu0 0
        %6626 = vmatprep.subr.bf16.mxu0 0
        %6627 = vmatpush1.bf16.msra.mxu0 0
        %6628 = vmatprep.subr.bf16.mxu0 0
        %6629 = vmatpush1.bf16.msra.mxu0 0
        %6630 = vmatprep.subr.bf16.mxu0 0
        %6631 = vmatpush1.bf16.msra.mxu0 0
        %6632 = vmatprep.subr.bf16.mxu0 0
        %6633 = vmatpush1.bf16.msra.mxu0 0
        %6634 = vmatprep.subr.bf16.mxu0 0
        %6635 = vmatpush1.bf16.msra.mxu0 0
        %6636 = vmatprep.subr.bf16.mxu0 0
        %6637 = vmatpush1.bf16.msra.mxu0 0
        %6638 = vmatprep.mubr.bf16.mxu0 0
        %6639 = vmatmul.mubr.bf16.gmra.mrb[0].mxu0 %v6541
        %v6640 = vpop.f32.mrb[0].mxu0
        %v6641 = vadd.f32 0.0, %v6640
        %v6642 = vpop.f32.mrb[0].mxu0
        %v6643 = vpop.f32.mrb[0].mxu0
        %v6644 = vpop.f32.mrb[0].mxu0
        %6645 = vdwg.mxu0
        %v6646 = vadd.f32 %v6508, %v6641
        %s6647 = scalar_lea.vmem %s7, 64
        %v6648 = vld [vmem:[%s6647] sm:$0xf]
        %v6649 = vld [vmem:[%s6647 + $0x4] sm:$0xf]
        %v6650 = vld [vmem:[%s6647 + $0x8] sm:$0xf]
        %v6651 = vld [vmem:[%s6647 + $0xc] sm:$0xf]
        %v6652 = vld [vmem:[%s6647 + $0x10] sm:$0xf]
        %v6653 = vld [vmem:[%s6647 + $0x14] sm:$0xf]
        %v6654 = vld [vmem:[%s6647 + $0x18] sm:$0xf]
        %v6655 = vld [vmem:[%s6647 + $0x1c] sm:$0xf]
        %v6656 = vld [vmem:[%s6647 + $0x20] sm:$0xf]
        %v6657 = vld [vmem:[%s6647 + $0x24] sm:$0xf]
        %v6658 = vld [vmem:[%s6647 + $0x28] sm:$0xf]
        %v6659 = vld [vmem:[%s6647 + $0x2c] sm:$0xf]
        %v6660 = vld [vmem:[%s6647 + $0x30] sm:$0xf]
        %v6661 = vld [vmem:[%s6647 + $0x34] sm:$0xf]
        %v6662 = vld [vmem:[%s6647 + $0x38] sm:$0xf]
        %v6663 = vld [vmem:[%s6647 + $0x3c] sm:$0xf]
        %v6665 = vshrl.u32 %v6541, 16
        %v6667 = vrot.slane %v6665, 1
        %v6685 = vunpack.c.l.b16 %v6648
        %v6686 = vunpack.c.l.b16 %v6649
        %v6687 = vunpack.c.l.b16 %v6650
        %v6688 = vunpack.c.l.b16 %v6651
        %v6689 = vunpack.c.l.b16 %v6652
        %v6690 = vunpack.c.l.b16 %v6653
        %v6691 = vunpack.c.l.b16 %v6654
        %v6692 = vunpack.c.l.b16 %v6655
        %v6693 = vunpack.c.l.b16 %v6656
        %v6694 = vunpack.c.l.b16 %v6657
        %v6695 = vunpack.c.l.b16 %v6658
        %v6696 = vunpack.c.l.b16 %v6659
        %v6697 = vunpack.c.l.b16 %v6660
        %v6698 = vunpack.c.l.b16 %v6661
        %v6699 = vunpack.c.l.b16 %v6662
        %v6700 = vunpack.c.l.b16 %v6663
        %v6701 = vpack.c.b16 %v6686, %v6685
        %v6702 = vpack.c.b16 %v6688, %v6687
        %v6703 = vpack.c.b16 %v6690, %v6689
        %v6704 = vpack.c.b16 %v6692, %v6691
        %v6705 = vpack.c.b16 %v6694, %v6693
        %v6706 = vpack.c.b16 %v6696, %v6695
        %v6707 = vpack.c.b16 %v6698, %v6697
        %v6708 = vpack.c.b16 %v6700, %v6699
        %6717 = vmatprep.subr.bf16.mxu0 0
        %6718 = vmatpush1.bf16.msra.mxu0 %v6701
        %6719 = vmatprep.subr.bf16.mxu0 0
        %6720 = vmatpush1.bf16.msra.mxu0 %v6702
        %6721 = vmatprep.subr.bf16.mxu0 0
        %6722 = vmatpush1.bf16.msra.mxu0 %v6703
        %6723 = vmatprep.subr.bf16.mxu0 0
        %6724 = vmatpush1.bf16.msra.mxu0 %v6704
        %6725 = vmatprep.subr.bf16.mxu0 0
        %6726 = vmatpush1.bf16.msra.mxu0 %v6705
        %6727 = vmatprep.subr.bf16.mxu0 0
        %6728 = vmatpush1.bf16.msra.mxu0 %v6706
        %6729 = vmatprep.subr.bf16.mxu0 0
        %6730 = vmatpush1.bf16.msra.mxu0 %v6707
        %6731 = vmatprep.subr.bf16.mxu0 0
        %6732 = vmatpush1.bf16.msra.mxu0 %v6708
        %6733 = vmatprep.subr.bf16.mxu0 0
        %6734 = vmatpush1.bf16.msra.mxu0 0
        %6735 = vmatprep.subr.bf16.mxu0 0
        %6736 = vmatpush1.bf16.msra.mxu0 0
        %6737 = vmatprep.subr.bf16.mxu0 0
        %6738 = vmatpush1.bf16.msra.mxu0 0
        %6739 = vmatprep.subr.bf16.mxu0 0
        %6740 = vmatpush1.bf16.msra.mxu0 0
        %6741 = vmatprep.subr.bf16.mxu0 0
        %6742 = vmatpush1.bf16.msra.mxu0 0
        %6743 = vmatprep.subr.bf16.mxu0 0
        %6744 = vmatpush1.bf16.msra.mxu0 0
        %6745 = vmatprep.subr.bf16.mxu0 0
        %6746 = vmatpush1.bf16.msra.mxu0 0
        %6747 = vmatprep.subr.bf16.mxu0 0
        %6748 = vmatpush1.bf16.msra.mxu0 0
        %6749 = vmatprep.mubr.bf16.mxu0 0
        %6750 = vmatmul.mubr.bf16.gmra.mrb[0].mxu0 %v6667
        %v6751 = vpop.f32.mrb[0].mxu0
        %v6752 = vadd.f32 0.0, %v6751
        %v6753 = vpop.f32.mrb[0].mxu0
        %v6754 = vpop.f32.mrb[0].mxu0
        %v6755 = vpop.f32.mrb[0].mxu0
        %6756 = vdwg.mxu0
        %v6757 = vadd.f32 %v6646, %v6752
        %v6759 = vrot.slane %v6533, 2
        %v6761 = vmax.f32 %v6537, %v6759
        %v6762 = vpack.c.bf16 %v6761, %v6761
        %s6763 = scalar_lea.vmem %s7, 128
        %v6764 = vld [vmem:[%s6763] sm:$0xf]
        %v6765 = vld [vmem:[%s6763 + $0x4] sm:$0xf]
        %v6766 = vld [vmem:[%s6763 + $0x8] sm:$0xf]
        %v6767 = vld [vmem:[%s6763 + $0xc] sm:$0xf]
        %v6768 = vld [vmem:[%s6763 + $0x10] sm:$0xf]
        %v6769 = vld [vmem:[%s6763 + $0x14] sm:$0xf]
        %v6770 = vld [vmem:[%s6763 + $0x18] sm:$0xf]
        %v6771 = vld [vmem:[%s6763 + $0x1c] sm:$0xf]
        %v6772 = vld [vmem:[%s6763 + $0x20] sm:$0xf]
        %v6773 = vld [vmem:[%s6763 + $0x24] sm:$0xf]
        %v6774 = vld [vmem:[%s6763 + $0x28] sm:$0xf]
        %v6775 = vld [vmem:[%s6763 + $0x2c] sm:$0xf]
        %v6776 = vld [vmem:[%s6763 + $0x30] sm:$0xf]
        %v6777 = vld [vmem:[%s6763 + $0x34] sm:$0xf]
        %v6778 = vld [vmem:[%s6763 + $0x38] sm:$0xf]
        %v6779 = vld [vmem:[%s6763 + $0x3c] sm:$0xf]
        %v6781 = vrot.slane %v6762, 3
        %v6799 = vunpack.c.l.b16 %v6764
        %v6800 = vunpack.c.l.b16 %v6765
        %v6801 = vunpack.c.l.b16 %v6766
        %v6802 = vunpack.c.l.b16 %v6767
        %v6803 = vunpack.c.l.b16 %v6768
        %v6804 = vunpack.c.l.b16 %v6769
        %v6805 = vunpack.c.l.b16 %v6770
        %v6806 = vunpack.c.l.b16 %v6771
        %v6807 = vunpack.c.l.b16 %v6772
        %v6808 = vunpack.c.l.b16 %v6773
        %v6809 = vunpack.c.l.b16 %v6774
        %v6810 = vunpack.c.l.b16 %v6775
        %v6811 = vunpack.c.l.b16 %v6776
        %v6812 = vunpack.c.l.b16 %v6777
        %v6813 = vunpack.c.l.b16 %v6778
        %v6814 = vunpack.c.l.b16 %v6779
        %v6815 = vpack.c.b16 %v6800, %v6799
        %v6816 = vpack.c.b16 %v6802, %v6801
        %v6817 = vpack.c.b16 %v6804, %v6803
        %v6818 = vpack.c.b16 %v6806, %v6805
        %v6819 = vpack.c.b16 %v6808, %v6807
        %v6820 = vpack.c.b16 %v6810, %v6809
        %v6821 = vpack.c.b16 %v6812, %v6811
        %v6822 = vpack.c.b16 %v6814, %v6813
        %6831 = vmatprep.subr.bf16.mxu0 0
        %6832 = vmatpush1.bf16.msra.mxu0 %v6815
        %6833 = vmatprep.subr.bf16.mxu0 0
        %6834 = vmatpush1.bf16.msra.mxu0 %v6816
        %6835 = vmatprep.subr.bf16.mxu0 0
        %6836 = vmatpush1.bf16.msra.mxu0 %v6817
        %6837 = vmatprep.subr.bf16.mxu0 0
        %6838 = vmatpush1.bf16.msra.mxu0 %v6818
        %6839 = vmatprep.subr.bf16.mxu0 0
        %6840 = vmatpush1.bf16.msra.mxu0 %v6819
        %6841 = vmatprep.subr.bf16.mxu0 0
        %6842 = vmatpush1.bf16.msra.mxu0 %v6820
        %6843 = vmatprep.subr.bf16.mxu0 0
        %6844 = vmatpush1.bf16.msra.mxu0 %v6821
        %6845 = vmatprep.subr.bf16.mxu0 0
        %6846 = vmatpush1.bf16.msra.mxu0 %v6822
        %6847 = vmatprep.subr.bf16.mxu0 0
        %6848 = vmatpush1.bf16.msra.mxu0 0
        %6849 = vmatprep.subr.bf16.mxu0 0
        %6850 = vmatpush1.bf16.msra.mxu0 0
        %6851 = vmatprep.subr.bf16.mxu0 0
        %6852 = vmatpush1.bf16.msra.mxu0 0
        %6853 = vmatprep.subr.bf16.mxu0 0
        %6854 = vmatpush1.bf16.msra.mxu0 0
        %6855 = vmatprep.subr.bf16.mxu0 0
        %6856 = vmatpush1.bf16.msra.mxu0 0
        %6857 = vmatprep.subr.bf16.mxu0 0
        %6858 = vmatpush1.bf16.msra.mxu0 0
        %6859 = vmatprep.subr.bf16.mxu0 0
        %6860 = vmatpush1.bf16.msra.mxu0 0
        %6861 = vmatprep.subr.bf16.mxu0 0
        %6862 = vmatpush1.bf16.msra.mxu0 0
        %6863 = vmatprep.mubr.bf16.mxu0 0
        %6864 = vmatmul.mubr.bf16.gmra.mrb[0].mxu0 %v6781
        %v6865 = vpop.f32.mrb[0].mxu0
        %v6866 = vadd.f32 0.0, %v6865
        %v6867 = vpop.f32.mrb[0].mxu0
        %v6868 = vpop.f32.mrb[0].mxu0
        %v6869 = vpop.f32.mrb[0].mxu0
        %6870 = vdwg.mxu0
        %v6871 = vadd.f32 %v6757, %v6866
        %v6872 = vrot.slane %v6533, 1
        %v6874 = vmax.f32 %v6533, %v6872
        %v6875 = vmax.f32 %v6874, %v6759
        %v6876 = vpack.c.bf16 %v6875, %v6875
        %s6877 = scalar_lea.vmem %s7, 192
        %v6878 = vld [vmem:[%s6877] sm:$0xf]
        %v6879 = vld [vmem:[%s6877 + $0x4] sm:$0xf]
        %v6880 = vld [vmem:[%s6877 + $0x8] sm:$0xf]
        %v6881 = vld [vmem:[%s6877 + $0xc] sm:$0xf]
        %v6882 = vld [vmem:[%s6877 + $0x10] sm:$0xf]
        %v6883 = vld [vmem:[%s6877 + $0x14] sm:$0xf]
        %v6884 = vld [vmem:[%s6877 + $0x18] sm:$0xf]
        %v6885 = vld [vmem:[%s6877 + $0x1c] sm:$0xf]
        %v6886 = vld [vmem:[%s6877 + $0x20] sm:$0xf]
        %v6887 = vld [vmem:[%s6877 + $0x24] sm:$0xf]
        %v6888 = vld [vmem:[%s6877 + $0x28] sm:$0xf]
        %v6889 = vld [vmem:[%s6877 + $0x2c] sm:$0xf]
        %v6890 = vld [vmem:[%s6877 + $0x30] sm:$0xf]
        %v6891 = vld [vmem:[%s6877 + $0x34] sm:$0xf]
        %v6892 = vld [vmem:[%s6877 + $0x38] sm:$0xf]
        %v6893 = vld [vmem:[%s6877 + $0x3c] sm:$0xf]
        %v6895 = vshrl.u32 %v6876, 16
        %v6914 = vunpack.c.l.b16 %v6878
        %v6915 = vunpack.c.l.b16 %v6879
        %v6916 = vunpack.c.l.b16 %v6880
        %v6917 = vunpack.c.l.b16 %v6881
        %v6918 = vunpack.c.l.b16 %v6882
        %v6919 = vunpack.c.l.b16 %v6883
        %v6920 = vunpack.c.l.b16 %v6884
        %v6921 = vunpack.c.l.b16 %v6885
        %v6922 = vunpack.c.l.b16 %v6886
        %v6923 = vunpack.c.l.b16 %v6887
        %v6924 = vunpack.c.l.b16 %v6888
        %v6925 = vunpack.c.l.b16 %v6889
        %v6926 = vunpack.c.l.b16 %v6890
        %v6927 = vunpack.c.l.b16 %v6891
        %v6928 = vunpack.c.l.b16 %v6892
        %v6929 = vunpack.c.l.b16 %v6893
        %v6930 = vpack.c.b16 %v6915, %v6914
        %v6931 = vpack.c.b16 %v6917, %v6916
        %v6932 = vpack.c.b16 %v6919, %v6918
        %v6933 = vpack.c.b16 %v6921, %v6920
        %v6934 = vpack.c.b16 %v6923, %v6922
        %v6935 = vpack.c.b16 %v6925, %v6924
        %v6936 = vpack.c.b16 %v6927, %v6926
        %v6937 = vpack.c.b16 %v6929, %v6928
        %6946 = vmatprep.subr.bf16.mxu0 0
        %6947 = vmatpush1.bf16.msra.mxu0 %v6930
        %6948 = vmatprep.subr.bf16.mxu0 0
        %6949 = vmatpush1.bf16.msra.mxu0 %v6931
        %6950 = vmatprep.subr.bf16.mxu0 0
        %6951 = vmatpush1.bf16.msra.mxu0 %v6932
        %6952 = vmatprep.subr.bf16.mxu0 0
        %6953 = vmatpush1.bf16.msra.mxu0 %v6933
        %6954 = vmatprep.subr.bf16.mxu0 0
        %6955 = vmatpush1.bf16.msra.mxu0 %v6934
        %6956 = vmatprep.subr.bf16.mxu0 0
        %6957 = vmatpush1.bf16.msra.mxu0 %v6935
        %6958 = vmatprep.subr.bf16.mxu0 0
        %6959 = vmatpush1.bf16.msra.mxu0 %v6936
        %6960 = vmatprep.subr.bf16.mxu0 0
        %6961 = vmatpush1.bf16.msra.mxu0 %v6937
        %6962 = vmatprep.subr.bf16.mxu0 0
        %6963 = vmatpush1.bf16.msra.mxu0 0
        %6964 = vmatprep.subr.bf16.mxu0 0
        %6965 = vmatpush1.bf16.msra.mxu0 0
        %6966 = vmatprep.subr.bf16.mxu0 0
        %6967 = vmatpush1.bf16.msra.mxu0 0
        %6968 = vmatprep.subr.bf16.mxu0 0
        %6969 = vmatpush1.bf16.msra.mxu0 0
        %6970 = vmatprep.subr.bf16.mxu0 0
        %6971 = vmatpush1.bf16.msra.mxu0 0
        %6972 = vmatprep.subr.bf16.mxu0 0
        %6973 = vmatpush1.bf16.msra.mxu0 0
        %6974 = vmatprep.subr.bf16.mxu0 0
        %6975 = vmatpush1.bf16.msra.mxu0 0
        %6976 = vmatprep.subr.bf16.mxu0 0
        %6977 = vmatpush1.bf16.msra.mxu0 0
        %6978 = vmatprep.mubr.bf16.mxu0 0
        %6979 = vmatmul.mubr.bf16.gmra.mrb[0].mxu0 %v6895
        %v6980 = vpop.f32.mrb[0].mxu0
        %v6981 = vadd.f32 0.0, %v6980
        %v6982 = vpop.f32.mrb[0].mxu0
        %v6983 = vpop.f32.mrb[0].mxu0
        %v6984 = vpop.f32.mrb[0].mxu0
        %6985 = vdwg.mxu0
        %v6986 = vadd.f32 %v6871, %v6981
        %v6990 = vrot.slane %v6492, 7
        %v6991 = vrot.slane %v6493, 7
        %v6992 = vsel %vm6512, %v6990, %v6991
        %v6993 = vrot.slane %v6494, 7
        %v6994 = vsel %vm6512, %v6991, %v6993
        %v6998 = vmax.f32 %v6490, %v6990
        %v6999 = vmax.f32 %v6491, %v6992
        %v7000 = vmax.f32 %v6492, %v6994
        %v7002 = vrot.slane %v6494, 6
        %v7003 = vrot.slane %v6495, 6
        %v7004 = vsel %vm6524, %v7002, %v7003
        %v7008 = vmax.f32 %v6998, %v7002
        %v7009 = vmax.f32 %v6999, %v7004
        %v7010 = vmax.f32 %v7000, %v7003
        %v7012 = vrot.slane %v7008, 1
        %v7014 = vmax.f32 %v7008, %v7012
        %v7015 = vrot.slane %v7008, 2
        %v7017 = vmax.f32 %v7014, %v7015
        %v7018 = vpack.c.bf16 %v7017, %v7017
        %s7019 = scalar_lea.vmem %s7, 256
        %v7020 = vld [vmem:[%s7019] sm:$0xf]
        %v7021 = vld [vmem:[%s7019 + $0x4] sm:$0xf]
        %v7022 = vld [vmem:[%s7019 + $0x8] sm:$0xf]
        %v7023 = vld [vmem:[%s7019 + $0xc] sm:$0xf]
        %v7024 = vld [vmem:[%s7019 + $0x10] sm:$0xf]
        %v7025 = vld [vmem:[%s7019 + $0x14] sm:$0xf]
        %v7026 = vld [vmem:[%s7019 + $0x18] sm:$0xf]
        %v7027 = vld [vmem:[%s7019 + $0x1c] sm:$0xf]
        %v7028 = vld [vmem:[%s7019 + $0x20] sm:$0xf]
        %v7029 = vld [vmem:[%s7019 + $0x24] sm:$0xf]
        %v7030 = vld [vmem:[%s7019 + $0x28] sm:$0xf]
        %v7031 = vld [vmem:[%s7019 + $0x2c] sm:$0xf]
        %v7032 = vld [vmem:[%s7019 + $0x30] sm:$0xf]
        %v7033 = vld [vmem:[%s7019 + $0x34] sm:$0xf]
        %v7034 = vld [vmem:[%s7019 + $0x38] sm:$0xf]
        %v7035 = vld [vmem:[%s7019 + $0x3c] sm:$0xf]
        %v7037 = vshrl.u32 %v7018, 16
        %v7039 = vrot.slane %v7037, 2
        %v7057 = vunpack.c.l.b16 %v7020
        %v7058 = vunpack.c.l.b16 %v7021
        %v7059 = vunpack.c.l.b16 %v7022
        %v7060 = vunpack.c.l.b16 %v7023
        %v7061 = vunpack.c.l.b16 %v7024
        %v7062 = vunpack.c.l.b16 %v7025
        %v7063 = vunpack.c.l.b16 %v7026
        %v7064 = vunpack.c.l.b16 %v7027
        %v7065 = vunpack.c.l.b16 %v7028
        %v7066 = vunpack.c.l.b16 %v7029
        %v7067 = vunpack.c.l.b16 %v7030
        %v7068 = vunpack.c.l.b16 %v7031
        %v7069 = vunpack.c.l.b16 %v7032
        %v7070 = vunpack.c.l.b16 %v7033
        %v7071 = vunpack.c.l.b16 %v7034
        %v7072 = vunpack.c.l.b16 %v7035
        %v7073 = vpack.c.b16 %v7058, %v7057
        %v7074 = vpack.c.b16 %v7060, %v7059
        %v7075 = vpack.c.b16 %v7062, %v7061
        %v7076 = vpack.c.b16 %v7064, %v7063
        %v7077 = vpack.c.b16 %v7066, %v7065
        %v7078 = vpack.c.b16 %v7068, %v7067
        %v7079 = vpack.c.b16 %v7070, %v7069
        %v7080 = vpack.c.b16 %v7072, %v7071
        %7089 = vmatprep.subr.bf16.mxu0 0
        %7090 = vmatpush1.bf16.msra.mxu0 %v7073
        %7091 = vmatprep.subr.bf16.mxu0 0
        %7092 = vmatpush1.bf16.msra.mxu0 %v7074
        %7093 = vmatprep.subr.bf16.mxu0 0
        %7094 = vmatpush1.bf16.msra.mxu0 %v7075
        %7095 = vmatprep.subr.bf16.mxu0 0
        %7096 = vmatpush1.bf16.msra.mxu0 %v7076
        %7097 = vmatprep.subr.bf16.mxu0 0
        %7098 = vmatpush1.bf16.msra.mxu0 %v7077
        %7099 = vmatprep.subr.bf16.mxu0 0
        %7100 = vmatpush1.bf16.msra.mxu0 %v7078
        %7101 = vmatprep.subr.bf16.mxu0 0
        %7102 = vmatpush1.bf16.msra.mxu0 %v7079
        %7103 = vmatprep.subr.bf16.mxu0 0
        %7104 = vmatpush1.bf16.msra.mxu0 %v7080
        %7105 = vmatprep.subr.bf16.mxu0 0
        %7106 = vmatpush1.bf16.msra.mxu0 0
        %7107 = vmatprep.subr.bf16.mxu0 0
        %7108 = vmatpush1.bf16.msra.mxu0 0
        %7109 = vmatprep.subr.bf16.mxu0 0
        %7110 = vmatpush1.bf16.msra.mxu0 0
        %7111 = vmatprep.subr.bf16.mxu0 0
        %7112 = vmatpush1.bf16.msra.mxu0 0
        %7113 = vmatprep.subr.bf16.mxu0 0
        %7114 = vmatpush1.bf16.msra.mxu0 0
        %7115 = vmatprep.subr.bf16.mxu0 0
        %7116 = vmatpush1.bf16.msra.mxu0 0
        %7117 = vmatprep.subr.bf16.mxu0 0
        %7118 = vmatpush1.bf16.msra.mxu0 0
        %7119 = vmatprep.subr.bf16.mxu0 0
        %7120 = vmatpush1.bf16.msra.mxu0 0
        %7121 = vmatprep.mubr.bf16.mxu0 0
        %7122 = vmatmul.mubr.bf16.gmra.mrb[0].mxu0 %v7039
        %v7123 = vpop.f32.mrb[0].mxu0
        %v7124 = vadd.f32 0.0, %v7123
        %v7125 = vpop.f32.mrb[0].mxu0
        %v7126 = vpop.f32.mrb[0].mxu0
        %v7127 = vpop.f32.mrb[0].mxu0
        %7128 = vdwg.mxu0
        %v7129 = vadd.f32 %v6986, %v7124
        %v7131 = vrot.slane %v7009, 1
        %v7133 = vmax.f32 %v7009, %v7131
        %v7134 = vrot.slane %v7009, 2
        %v7136 = vmax.f32 %v7133, %v7134
        %v7137 = vpack.c.bf16 %v7136, %v7136
        %s7138 = scalar_lea.vmem %s7, 320
        %v7139 = vld [vmem:[%s7138] sm:$0xf]
        %v7140 = vld [vmem:[%s7138 + $0x4] sm:$0xf]
        %v7141 = vld [vmem:[%s7138 + $0x8] sm:$0xf]
        %v7142 = vld [vmem:[%s7138 + $0xc] sm:$0xf]
        %v7143 = vld [vmem:[%s7138 + $0x10] sm:$0xf]
        %v7144 = vld [vmem:[%s7138 + $0x14] sm:$0xf]
        %v7145 = vld [vmem:[%s7138 + $0x18] sm:$0xf]
        %v7146 = vld [vmem:[%s7138 + $0x1c] sm:$0xf]
        %v7147 = vld [vmem:[%s7138 + $0x20] sm:$0xf]
        %v7148 = vld [vmem:[%s7138 + $0x24] sm:$0xf]
        %v7149 = vld [vmem:[%s7138 + $0x28] sm:$0xf]
        %v7150 = vld [vmem:[%s7138 + $0x2c] sm:$0xf]
        %v7151 = vld [vmem:[%s7138 + $0x30] sm:$0xf]
        %v7152 = vld [vmem:[%s7138 + $0x34] sm:$0xf]
        %v7153 = vld [vmem:[%s7138 + $0x38] sm:$0xf]
        %v7154 = vld [vmem:[%s7138 + $0x3c] sm:$0xf]
        %v7171 = vunpack.c.l.b16 %v7139
        %v7172 = vunpack.c.l.b16 %v7140
        %v7173 = vunpack.c.l.b16 %v7141
        %v7174 = vunpack.c.l.b16 %v7142
        %v7175 = vunpack.c.l.b16 %v7143
        %v7176 = vunpack.c.l.b16 %v7144
        %v7177 = vunpack.c.l.b16 %v7145
        %v7178 = vunpack.c.l.b16 %v7146
        %v7179 = vunpack.c.l.b16 %v7147
        %v7180 = vunpack.c.l.b16 %v7148
        %v7181 = vunpack.c.l.b16 %v7149
        %v7182 = vunpack.c.l.b16 %v7150
        %v7183 = vunpack.c.l.b16 %v7151
        %v7184 = vunpack.c.l.b16 %v7152
        %v7185 = vunpack.c.l.b16 %v7153
        %v7186 = vunpack.c.l.b16 %v7154
        %v7187 = vpack.c.b16 %v7172, %v7171
        %v7188 = vpack.c.b16 %v7174, %v7173
        %v7189 = vpack.c.b16 %v7176, %v7175
        %v7190 = vpack.c.b16 %v7178, %v7177
        %v7191 = vpack.c.b16 %v7180, %v7179
        %v7192 = vpack.c.b16 %v7182, %v7181
        %v7193 = vpack.c.b16 %v7184, %v7183
        %v7194 = vpack.c.b16 %v7186, %v7185
        %7203 = vmatprep.subr.bf16.mxu0 0
        %7204 = vmatpush1.bf16.msra.mxu0 %v7187
        %7205 = vmatprep.subr.bf16.mxu0 0
        %7206 = vmatpush1.bf16.msra.mxu0 %v7188
        %7207 = vmatprep.subr.bf16.mxu0 0
        %7208 = vmatpush1.bf16.msra.mxu0 %v7189
        %7209 = vmatprep.subr.bf16.mxu0 0
        %7210 = vmatpush1.bf16.msra.mxu0 %v7190
        %7211 = vmatprep.subr.bf16.mxu0 0
        %7212 = vmatpush1.bf16.msra.mxu0 %v7191
        %7213 = vmatprep.subr.bf16.mxu0 0
        %7214 = vmatpush1.bf16.msra.mxu0 %v7192
        %7215 = vmatprep.subr.bf16.mxu0 0
        %7216 = vmatpush1.bf16.msra.mxu0 %v7193
        %7217 = vmatprep.subr.bf16.mxu0 0
        %7218 = vmatpush1.bf16.msra.mxu0 %v7194
        %7219 = vmatprep.subr.bf16.mxu0 0
        %7220 = vmatpush1.bf16.msra.mxu0 0
        %7221 = vmatprep.subr.bf16.mxu0 0
        %7222 = vmatpush1.bf16.msra.mxu0 0
        %7223 = vmatprep.subr.bf16.mxu0 0
        %7224 = vmatpush1.bf16.msra.mxu0 0
        %7225 = vmatprep.subr.bf16.mxu0 0
        %7226 = vmatpush1.bf16.msra.mxu0 0
        %7227 = vmatprep.subr.bf16.mxu0 0
        %7228 = vmatpush1.bf16.msra.mxu0 0
        %7229 = vmatprep.subr.bf16.mxu0 0
        %7230 = vmatpush1.bf16.msra.mxu0 0
        %7231 = vmatprep.subr.bf16.mxu0 0
        %7232 = vmatpush1.bf16.msra.mxu0 0
        %7233 = vmatprep.subr.bf16.mxu0 0
        %7234 = vmatpush1.bf16.msra.mxu0 0
        %7235 = vmatprep.mubr.bf16.mxu0 0
        %7236 = vmatmul.mubr.bf16.gmra.mrb[0].mxu0 %v7137
        %v7237 = vpop.f32.mrb[0].mxu0
        %v7238 = vadd.f32 0.0, %v7237
        %v7239 = vpop.f32.mrb[0].mxu0
        %v7240 = vpop.f32.mrb[0].mxu0
        %v7241 = vpop.f32.mrb[0].mxu0
        %7242 = vdwg.mxu0
        %v7243 = vadd.f32 %v7129, %v7238
        %s7244 = scalar_lea.vmem %s7, 384
        %v7245 = vld [vmem:[%s7244] sm:$0xf]
        %v7246 = vld [vmem:[%s7244 + $0x4] sm:$0xf]
        %v7247 = vld [vmem:[%s7244 + $0x8] sm:$0xf]
        %v7248 = vld [vmem:[%s7244 + $0xc] sm:$0xf]
        %v7249 = vld [vmem:[%s7244 + $0x10] sm:$0xf]
        %v7250 = vld [vmem:[%s7244 + $0x14] sm:$0xf]
        %v7251 = vld [vmem:[%s7244 + $0x18] sm:$0xf]
        %v7252 = vld [vmem:[%s7244 + $0x1c] sm:$0xf]
        %v7253 = vld [vmem:[%s7244 + $0x20] sm:$0xf]
        %v7254 = vld [vmem:[%s7244 + $0x24] sm:$0xf]
        %v7255 = vld [vmem:[%s7244 + $0x28] sm:$0xf]
        %v7256 = vld [vmem:[%s7244 + $0x2c] sm:$0xf]
        %v7257 = vld [vmem:[%s7244 + $0x30] sm:$0xf]
        %v7258 = vld [vmem:[%s7244 + $0x34] sm:$0xf]
        %v7259 = vld [vmem:[%s7244 + $0x38] sm:$0xf]
        %v7260 = vld [vmem:[%s7244 + $0x3c] sm:$0xf]
        %v7262 = vshrl.u32 %v7137, 16
        %v7264 = vrot.slane %v7262, 1
        %v7282 = vunpack.c.l.b16 %v7245
        %v7283 = vunpack.c.l.b16 %v7246
        %v7284 = vunpack.c.l.b16 %v7247
        %v7285 = vunpack.c.l.b16 %v7248
        %v7286 = vunpack.c.l.b16 %v7249
        %v7287 = vunpack.c.l.b16 %v7250
        %v7288 = vunpack.c.l.b16 %v7251
        %v7289 = vunpack.c.l.b16 %v7252
        %v7290 = vunpack.c.l.b16 %v7253
        %v7291 = vunpack.c.l.b16 %v7254
        %v7292 = vunpack.c.l.b16 %v7255
        %v7293 = vunpack.c.l.b16 %v7256
        %v7294 = vunpack.c.l.b16 %v7257
        %v7295 = vunpack.c.l.b16 %v7258
        %v7296 = vunpack.c.l.b16 %v7259
        %v7297 = vunpack.c.l.b16 %v7260
        %v7298 = vpack.c.b16 %v7283, %v7282
        %v7299 = vpack.c.b16 %v7285, %v7284
        %v7300 = vpack.c.b16 %v7287, %v7286
        %v7301 = vpack.c.b16 %v7289, %v7288
        %v7302 = vpack.c.b16 %v7291, %v7290
        %v7303 = vpack.c.b16 %v7293, %v7292
        %v7304 = vpack.c.b16 %v7295, %v7294
        %v7305 = vpack.c.b16 %v7297, %v7296
        %7314 = vmatprep.subr.bf16.mxu0 0
        %7315 = vmatpush1.bf16.msra.mxu0 %v7298
        %7316 = vmatprep.subr.bf16.mxu0 0
        %7317 = vmatpush1.bf16.msra.mxu0 %v7299
        %7318 = vmatprep.subr.bf16.mxu0 0
        %7319 = vmatpush1.bf16.msra.mxu0 %v7300
        %7320 = vmatprep.subr.bf16.mxu0 0
        %7321 = vmatpush1.bf16.msra.mxu0 %v7301
        %7322 = vmatprep.subr.bf16.mxu0 0
        %7323 = vmatpush1.bf16.msra.mxu0 %v7302
        %7324 = vmatprep.subr.bf16.mxu0 0
        %7325 = vmatpush1.bf16.msra.mxu0 %v7303
        %7326 = vmatprep.subr.bf16.mxu0 0
        %7327 = vmatpush1.bf16.msra.mxu0 %v7304
        %7328 = vmatprep.subr.bf16.mxu0 0
        %7329 = vmatpush1.bf16.msra.mxu0 %v7305
        %7330 = vmatprep.subr.bf16.mxu0 0
        %7331 = vmatpush1.bf16.msra.mxu0 0
        %7332 = vmatprep.subr.bf16.mxu0 0
        %7333 = vmatpush1.bf16.msra.mxu0 0
        %7334 = vmatprep.subr.bf16.mxu0 0
        %7335 = vmatpush1.bf16.msra.mxu0 0
        %7336 = vmatprep.subr.bf16.mxu0 0
        %7337 = vmatpush1.bf16.msra.mxu0 0
        %7338 = vmatprep.subr.bf16.mxu0 0
        %7339 = vmatpush1.bf16.msra.mxu0 0
        %7340 = vmatprep.subr.bf16.mxu0 0
        %7341 = vmatpush1.bf16.msra.mxu0 0
        %7342 = vmatprep.subr.bf16.mxu0 0
        %7343 = vmatpush1.bf16.msra.mxu0 0
        %7344 = vmatprep.subr.bf16.mxu0 0
        %7345 = vmatpush1.bf16.msra.mxu0 0
        %7346 = vmatprep.mubr.bf16.mxu0 0
        %7347 = vmatmul.mubr.bf16.gmra.mrb[0].mxu0 %v7264
        %v7348 = vpop.f32.mrb[0].mxu0
        %v7349 = vadd.f32 0.0, %v7348
        %v7350 = vpop.f32.mrb[0].mxu0
        %v7351 = vpop.f32.mrb[0].mxu0
        %v7352 = vpop.f32.mrb[0].mxu0
        %7353 = vdwg.mxu0
        %v7354 = vadd.f32 %v7243, %v7349
        %v7356 = vrot.slane %v7010, 2
        %v7358 = vmax.f32 %v7133, %v7356
        %v7359 = vpack.c.bf16 %v7358, %v7358
        %s7360 = scalar_lea.vmem %s7, 448
        %v7361 = vld [vmem:[%s7360] sm:$0xf]
        %v7362 = vld [vmem:[%s7360 + $0x4] sm:$0xf]
        %v7363 = vld [vmem:[%s7360 + $0x8] sm:$0xf]
        %v7364 = vld [vmem:[%s7360 + $0xc] sm:$0xf]
        %v7365 = vld [vmem:[%s7360 + $0x10] sm:$0xf]
        %v7366 = vld [vmem:[%s7360 + $0x14] sm:$0xf]
        %v7367 = vld [vmem:[%s7360 + $0x18] sm:$0xf]
        %v7368 = vld [vmem:[%s7360 + $0x1c] sm:$0xf]
        %v7369 = vld [vmem:[%s7360 + $0x20] sm:$0xf]
        %v7370 = vld [vmem:[%s7360 + $0x24] sm:$0xf]
        %v7371 = vld [vmem:[%s7360 + $0x28] sm:$0xf]
        %v7372 = vld [vmem:[%s7360 + $0x2c] sm:$0xf]
        %v7373 = vld [vmem:[%s7360 + $0x30] sm:$0xf]
        %v7374 = vld [vmem:[%s7360 + $0x34] sm:$0xf]
        %v7375 = vld [vmem:[%s7360 + $0x38] sm:$0xf]
        %v7376 = vld [vmem:[%s7360 + $0x3c] sm:$0xf]
        %v7378 = vrot.slane %v7359, 3
        %v7396 = vunpack.c.l.b16 %v7361
        %v7397 = vunpack.c.l.b16 %v7362
        %v7398 = vunpack.c.l.b16 %v7363
        %v7399 = vunpack.c.l.b16 %v7364
        %v7400 = vunpack.c.l.b16 %v7365
        %v7401 = vunpack.c.l.b16 %v7366
        %v7402 = vunpack.c.l.b16 %v7367
        %v7403 = vunpack.c.l.b16 %v7368
        %v7404 = vunpack.c.l.b16 %v7369
        %v7405 = vunpack.c.l.b16 %v7370
        %v7406 = vunpack.c.l.b16 %v7371
        %v7407 = vunpack.c.l.b16 %v7372
        %v7408 = vunpack.c.l.b16 %v7373
        %v7409 = vunpack.c.l.b16 %v7374
        %v7410 = vunpack.c.l.b16 %v7375
        %v7411 = vunpack.c.l.b16 %v7376
        %v7412 = vpack.c.b16 %v7397, %v7396
        %v7413 = vpack.c.b16 %v7399, %v7398
        %v7414 = vpack.c.b16 %v7401, %v7400
        %v7415 = vpack.c.b16 %v7403, %v7402
        %v7416 = vpack.c.b16 %v7405, %v7404
        %v7417 = vpack.c.b16 %v7407, %v7406
        %v7418 = vpack.c.b16 %v7409, %v7408
        %v7419 = vpack.c.b16 %v7411, %v7410
        %7428 = vmatprep.subr.bf16.mxu0 0
        %7429 = vmatpush1.bf16.msra.mxu0 %v7412
        %7430 = vmatprep.subr.bf16.mxu0 0
        %7431 = vmatpush1.bf16.msra.mxu0 %v7413
        %7432 = vmatprep.subr.bf16.mxu0 0
        %7433 = vmatpush1.bf16.msra.mxu0 %v7414
        %7434 = vmatprep.subr.bf16.mxu0 0
        %7435 = vmatpush1.bf16.msra.mxu0 %v7415
        %7436 = vmatprep.subr.bf16.mxu0 0
        %7437 = vmatpush1.bf16.msra.mxu0 %v7416
        %7438 = vmatprep.subr.bf16.mxu0 0
        %7439 = vmatpush1.bf16.msra.mxu0 %v7417
        %7440 = vmatprep.subr.bf16.mxu0 0
        %7441 = vmatpush1.bf16.msra.mxu0 %v7418
        %7442 = vmatprep.subr.bf16.mxu0 0
        %7443 = vmatpush1.bf16.msra.mxu0 %v7419
        %7444 = vmatprep.subr.bf16.mxu0 0
        %7445 = vmatpush1.bf16.msra.mxu0 0
        %7446 = vmatprep.subr.bf16.mxu0 0
        %7447 = vmatpush1.bf16.msra.mxu0 0
        %7448 = vmatprep.subr.bf16.mxu0 0
        %7449 = vmatpush1.bf16.msra.mxu0 0
        %7450 = vmatprep.subr.bf16.mxu0 0
        %7451 = vmatpush1.bf16.msra.mxu0 0
        %7452 = vmatprep.subr.bf16.mxu0 0
        %7453 = vmatpush1.bf16.msra.mxu0 0
        %7454 = vmatprep.subr.bf16.mxu0 0
        %7455 = vmatpush1.bf16.msra.mxu0 0
        %7456 = vmatprep.subr.bf16.mxu0 0
        %7457 = vmatpush1.bf16.msra.mxu0 0
        %7458 = vmatprep.subr.bf16.mxu0 0
        %7459 = vmatpush1.bf16.msra.mxu0 0
        %7460 = vmatprep.mubr.bf16.mxu0 0
        %7461 = vmatmul.mubr.bf16.gmra.mrb[0].mxu0 %v7378
        %v7462 = vpop.f32.mrb[0].mxu0
        %v7463 = vadd.f32 0.0, %v7462
        %v7464 = vpop.f32.mrb[0].mxu0
        %v7465 = vpop.f32.mrb[0].mxu0
        %v7466 = vpop.f32.mrb[0].mxu0
        %7467 = vdwg.mxu0
        %v7468 = vadd.f32 %v7354, %v7463
        %v7471 = vrot.slane %v6498, 7
        %v7472 = vrot.slane %v6499, 7
        %v7473 = vsel %vm6512, %v7471, %v7472
        %v7476 = vmax.f32 %v6496, %v7471
        %v7477 = vmax.f32 %v6497, %v7473
        %v7480 = vrot.slane %v6500, 6
        %v7481 = vrot.slane %v6501, 6
        %v7482 = vsel %vm6524, %v7480, %v7481
        %v7485 = vmax.f32 %v7476, %v7480
        %v7486 = vmax.f32 %v7477, %v7482
        %v7488 = vrot.slane %v7485, 1
        %v7490 = vmax.f32 %v7485, %v7488
        %v7491 = vrot.slane %v7485, 2
        %v7493 = vmax.f32 %v7490, %v7491
        %v7494 = vpack.c.bf16 %v7493, %v7493
        %s7495 = scalar_lea.vmem %s7, 512
        %v7496 = vld [vmem:[%s7495] sm:$0xf]
        %v7497 = vld [vmem:[%s7495 + $0x4] sm:$0xf]
        %v7498 = vld [vmem:[%s7495 + $0x8] sm:$0xf]
        %v7499 = vld [vmem:[%s7495 + $0xc] sm:$0xf]
        %v7500 = vld [vmem:[%s7495 + $0x10] sm:$0xf]
        %v7501 = vld [vmem:[%s7495 + $0x14] sm:$0xf]
        %v7502 = vld [vmem:[%s7495 + $0x18] sm:$0xf]
        %v7503 = vld [vmem:[%s7495 + $0x1c] sm:$0xf]
        %v7504 = vld [vmem:[%s7495 + $0x20] sm:$0xf]
        %v7505 = vld [vmem:[%s7495 + $0x24] sm:$0xf]
        %v7506 = vld [vmem:[%s7495 + $0x28] sm:$0xf]
        %v7507 = vld [vmem:[%s7495 + $0x2c] sm:$0xf]
        %v7508 = vld [vmem:[%s7495 + $0x30] sm:$0xf]
        %v7509 = vld [vmem:[%s7495 + $0x34] sm:$0xf]
        %v7510 = vld [vmem:[%s7495 + $0x38] sm:$0xf]
        %v7511 = vld [vmem:[%s7495 + $0x3c] sm:$0xf]
        %v7513 = vrot.slane %v7494, 1
        %v7531 = vunpack.c.l.b16 %v7496
        %v7532 = vunpack.c.l.b16 %v7497
        %v7533 = vunpack.c.l.b16 %v7498
        %v7534 = vunpack.c.l.b16 %v7499
        %v7535 = vunpack.c.l.b16 %v7500
        %v7536 = vunpack.c.l.b16 %v7501
        %v7537 = vunpack.c.l.b16 %v7502
        %v7538 = vunpack.c.l.b16 %v7503
        %v7539 = vunpack.c.l.b16 %v7504
        %v7540 = vunpack.c.l.b16 %v7505
        %v7541 = vunpack.c.l.b16 %v7506
        %v7542 = vunpack.c.l.b16 %v7507
        %v7543 = vunpack.c.l.b16 %v7508
        %v7544 = vunpack.c.l.b16 %v7509
        %v7545 = vunpack.c.l.b16 %v7510
        %v7546 = vunpack.c.l.b16 %v7511
        %v7547 = vpack.c.b16 %v7532, %v7531
        %v7548 = vpack.c.b16 %v7534, %v7533
        %v7549 = vpack.c.b16 %v7536, %v7535
        %v7550 = vpack.c.b16 %v7538, %v7537
        %v7551 = vpack.c.b16 %v7540, %v7539
        %v7552 = vpack.c.b16 %v7542, %v7541
        %v7553 = vpack.c.b16 %v7544, %v7543
        %v7554 = vpack.c.b16 %v7546, %v7545
        %7563 = vmatprep.subr.bf16.mxu0 0
        %7564 = vmatpush1.bf16.msra.mxu0 %v7547
        %7565 = vmatprep.subr.bf16.mxu0 0
        %7566 = vmatpush1.bf16.msra.mxu0 %v7548
        %7567 = vmatprep.subr.bf16.mxu0 0
        %7568 = vmatpush1.bf16.msra.mxu0 %v7549
        %7569 = vmatprep.subr.bf16.mxu0 0
        %7570 = vmatpush1.bf16.msra.mxu0 %v7550
        %7571 = vmatprep.subr.bf16.mxu0 0
        %7572 = vmatpush1.bf16.msra.mxu0 %v7551
        %7573 = vmatprep.subr.bf16.mxu0 0
        %7574 = vmatpush1.bf16.msra.mxu0 %v7552
        %7575 = vmatprep.subr.bf16.mxu0 0
        %7576 = vmatpush1.bf16.msra.mxu0 %v7553
        %7577 = vmatprep.subr.bf16.mxu0 0
        %7578 = vmatpush1.bf16.msra.mxu0 %v7554
        %7579 = vmatprep.subr.bf16.mxu0 0
        %7580 = vmatpush1.bf16.msra.mxu0 0
        %7581 = vmatprep.subr.bf16.mxu0 0
        %7582 = vmatpush1.bf16.msra.mxu0 0
        %7583 = vmatprep.subr.bf16.mxu0 0
        %7584 = vmatpush1.bf16.msra.mxu0 0
        %7585 = vmatprep.subr.bf16.mxu0 0
        %7586 = vmatpush1.bf16.msra.mxu0 0
        %7587 = vmatprep.subr.bf16.mxu0 0
        %7588 = vmatpush1.bf16.msra.mxu0 0
        %7589 = vmatprep.subr.bf16.mxu0 0
        %7590 = vmatpush1.bf16.msra.mxu0 0
        %7591 = vmatprep.subr.bf16.mxu0 0
        %7592 = vmatpush1.bf16.msra.mxu0 0
        %7593 = vmatprep.subr.bf16.mxu0 0
        %7594 = vmatpush1.bf16.msra.mxu0 0
        %7595 = vmatprep.mubr.bf16.mxu0 0
        %7596 = vmatmul.mubr.bf16.gmra.mrb[0].mxu0 %v7513
        %v7597 = vpop.f32.mrb[0].mxu0
        %v7598 = vadd.f32 0.0, %v7597
        %v7599 = vpop.f32.mrb[0].mxu0
        %v7600 = vpop.f32.mrb[0].mxu0
        %v7601 = vpop.f32.mrb[0].mxu0
        %7602 = vdwg.mxu0
        %v7603 = vadd.f32 %v7468, %v7598
        %s7604 = scalar_lea.vmem %s7, 576
        %v7605 = vld [vmem:[%s7604] sm:$0xf]
        %v7606 = vld [vmem:[%s7604 + $0x4] sm:$0xf]
        %v7607 = vld [vmem:[%s7604 + $0x8] sm:$0xf]
        %v7608 = vld [vmem:[%s7604 + $0xc] sm:$0xf]
        %v7609 = vld [vmem:[%s7604 + $0x10] sm:$0xf]
        %v7610 = vld [vmem:[%s7604 + $0x14] sm:$0xf]
        %v7611 = vld [vmem:[%s7604 + $0x18] sm:$0xf]
        %v7612 = vld [vmem:[%s7604 + $0x1c] sm:$0xf]
        %v7613 = vld [vmem:[%s7604 + $0x20] sm:$0xf]
        %v7614 = vld [vmem:[%s7604 + $0x24] sm:$0xf]
        %v7615 = vld [vmem:[%s7604 + $0x28] sm:$0xf]
        %v7616 = vld [vmem:[%s7604 + $0x2c] sm:$0xf]
        %v7617 = vld [vmem:[%s7604 + $0x30] sm:$0xf]
        %v7618 = vld [vmem:[%s7604 + $0x34] sm:$0xf]
        %v7619 = vld [vmem:[%s7604 + $0x38] sm:$0xf]
        %v7620 = vld [vmem:[%s7604 + $0x3c] sm:$0xf]
        %v7622 = vshrl.u32 %v7494, 16
        %v7624 = vrot.slane %v7622, 2
        %v7642 = vunpack.c.l.b16 %v7605
        %v7643 = vunpack.c.l.b16 %v7606
        %v7644 = vunpack.c.l.b16 %v7607
        %v7645 = vunpack.c.l.b16 %v7608
        %v7646 = vunpack.c.l.b16 %v7609
        %v7647 = vunpack.c.l.b16 %v7610
        %v7648 = vunpack.c.l.b16 %v7611
        %v7649 = vunpack.c.l.b16 %v7612
        %v7650 = vunpack.c.l.b16 %v7613
        %v7651 = vunpack.c.l.b16 %v7614
        %v7652 = vunpack.c.l.b16 %v7615
        %v7653 = vunpack.c.l.b16 %v7616
        %v7654 = vunpack.c.l.b16 %v7617
        %v7655 = vunpack.c.l.b16 %v7618
        %v7656 = vunpack.c.l.b16 %v7619
        %v7657 = vunpack.c.l.b16 %v7620
        %v7658 = vpack.c.b16 %v7643, %v7642
        %v7659 = vpack.c.b16 %v7645, %v7644
        %v7660 = vpack.c.b16 %v7647, %v7646
        %v7661 = vpack.c.b16 %v7649, %v7648
        %v7662 = vpack.c.b16 %v7651, %v7650
        %v7663 = vpack.c.b16 %v7653, %v7652
        %v7664 = vpack.c.b16 %v7655, %v7654
        %v7665 = vpack.c.b16 %v7657, %v7656
        %7674 = vmatprep.subr.bf16.mxu0 0
        %7675 = vmatpush1.bf16.msra.mxu0 %v7658
        %7676 = vmatprep.subr.bf16.mxu0 0
        %7677 = vmatpush1.bf16.msra.mxu0 %v7659
        %7678 = vmatprep.subr.bf16.mxu0 0
        %7679 = vmatpush1.bf16.msra.mxu0 %v7660
        %7680 = vmatprep.subr.bf16.mxu0 0
        %7681 = vmatpush1.bf16.msra.mxu0 %v7661
        %7682 = vmatprep.subr.bf16.mxu0 0
        %7683 = vmatpush1.bf16.msra.mxu0 %v7662
        %7684 = vmatprep.subr.bf16.mxu0 0
        %7685 = vmatpush1.bf16.msra.mxu0 %v7663
        %7686 = vmatprep.subr.bf16.mxu0 0
        %7687 = vmatpush1.bf16.msra.mxu0 %v7664
        %7688 = vmatprep.subr.bf16.mxu0 0
        %7689 = vmatpush1.bf16.msra.mxu0 %v7665
        %7690 = vmatprep.subr.bf16.mxu0 0
        %7691 = vmatpush1.bf16.msra.mxu0 0
        %7692 = vmatprep.subr.bf16.mxu0 0
        %7693 = vmatpush1.bf16.msra.mxu0 0
        %7694 = vmatprep.subr.bf16.mxu0 0
        %7695 = vmatpush1.bf16.msra.mxu0 0
        %7696 = vmatprep.subr.bf16.mxu0 0
        %7697 = vmatpush1.bf16.msra.mxu0 0
        %7698 = vmatprep.subr.bf16.mxu0 0
        %7699 = vmatpush1.bf16.msra.mxu0 0
        %7700 = vmatprep.subr.bf16.mxu0 0
        %7701 = vmatpush1.bf16.msra.mxu0 0
        %7702 = vmatprep.subr.bf16.mxu0 0
        %7703 = vmatpush1.bf16.msra.mxu0 0
        %7704 = vmatprep.subr.bf16.mxu0 0
        %7705 = vmatpush1.bf16.msra.mxu0 0
        %7706 = vmatprep.mubr.bf16.mxu0 0
        %7707 = vmatmul.mubr.bf16.gmra.mrb[0].mxu0 %v7624
        %v7708 = vpop.f32.mrb[0].mxu0
        %v7709 = vadd.f32 0.0, %v7708
        %v7710 = vpop.f32.mrb[0].mxu0
        %v7711 = vpop.f32.mrb[0].mxu0
        %v7712 = vpop.f32.mrb[0].mxu0
        %7713 = vdwg.mxu0
        %v7714 = vadd.f32 %v7603, %v7709
        %v7716 = vrot.slane %v7486, 1
        %v7718 = vmax.f32 %v7486, %v7716
        %v7719 = vrot.slane %v7486, 2
        %v7721 = vmax.f32 %v7718, %v7719
        %v7722 = vpack.c.bf16 %v7721, %v7721
        %s7723 = scalar_lea.vmem %s7, 640
        %v7724 = vld [vmem:[%s7723] sm:$0xf]
        %v7725 = vld [vmem:[%s7723 + $0x4] sm:$0xf]
        %v7726 = vld [vmem:[%s7723 + $0x8] sm:$0xf]
        %v7727 = vld [vmem:[%s7723 + $0xc] sm:$0xf]
        %v7728 = vld [vmem:[%s7723 + $0x10] sm:$0xf]
        %v7729 = vld [vmem:[%s7723 + $0x14] sm:$0xf]
        %v7730 = vld [vmem:[%s7723 + $0x18] sm:$0xf]
        %v7731 = vld [vmem:[%s7723 + $0x1c] sm:$0xf]
        %v7732 = vld [vmem:[%s7723 + $0x20] sm:$0xf]
        %v7733 = vld [vmem:[%s7723 + $0x24] sm:$0xf]
        %v7734 = vld [vmem:[%s7723 + $0x28] sm:$0xf]
        %v7735 = vld [vmem:[%s7723 + $0x2c] sm:$0xf]
        %v7736 = vld [vmem:[%s7723 + $0x30] sm:$0xf]
        %v7737 = vld [vmem:[%s7723 + $0x34] sm:$0xf]
        %v7738 = vld [vmem:[%s7723 + $0x38] sm:$0xf]
        %v7739 = vld [vmem:[%s7723 + $0x3c] sm:$0xf]
        %v7756 = vunpack.c.l.b16 %v7724
        %v7757 = vunpack.c.l.b16 %v7725
        %v7758 = vunpack.c.l.b16 %v7726
        %v7759 = vunpack.c.l.b16 %v7727
        %v7760 = vunpack.c.l.b16 %v7728
        %v7761 = vunpack.c.l.b16 %v7729
        %v7762 = vunpack.c.l.b16 %v7730
        %v7763 = vunpack.c.l.b16 %v7731
        %v7764 = vunpack.c.l.b16 %v7732
        %v7765 = vunpack.c.l.b16 %v7733
        %v7766 = vunpack.c.l.b16 %v7734
        %v7767 = vunpack.c.l.b16 %v7735
        %v7768 = vunpack.c.l.b16 %v7736
        %v7769 = vunpack.c.l.b16 %v7737
        %v7770 = vunpack.c.l.b16 %v7738
        %v7771 = vunpack.c.l.b16 %v7739
        %v7772 = vpack.c.b16 %v7757, %v7756
        %v7773 = vpack.c.b16 %v7759, %v7758
        %v7774 = vpack.c.b16 %v7761, %v7760
        %v7775 = vpack.c.b16 %v7763, %v7762
        %v7776 = vpack.c.b16 %v7765, %v7764
        %v7777 = vpack.c.b16 %v7767, %v7766
        %v7778 = vpack.c.b16 %v7769, %v7768
        %v7779 = vpack.c.b16 %v7771, %v7770
        %7788 = vmatprep.subr.bf16.mxu0 0
        %7789 = vmatpush1.bf16.msra.mxu0 %v7772
        %7790 = vmatprep.subr.bf16.mxu0 0
        %7791 = vmatpush1.bf16.msra.mxu0 %v7773
        %7792 = vmatprep.subr.bf16.mxu0 0
        %7793 = vmatpush1.bf16.msra.mxu0 %v7774
        %7794 = vmatprep.subr.bf16.mxu0 0
        %7795 = vmatpush1.bf16.msra.mxu0 %v7775
        %7796 = vmatprep.subr.bf16.mxu0 0
        %7797 = vmatpush1.bf16.msra.mxu0 %v7776
        %7798 = vmatprep.subr.bf16.mxu0 0
        %7799 = vmatpush1.bf16.msra.mxu0 %v7777
        %7800 = vmatprep.subr.bf16.mxu0 0
        %7801 = vmatpush1.bf16.msra.mxu0 %v7778
        %7802 = vmatprep.subr.bf16.mxu0 0
        %7803 = vmatpush1.bf16.msra.mxu0 %v7779
        %7804 = vmatprep.subr.bf16.mxu0 0
        %7805 = vmatpush1.bf16.msra.mxu0 0
        %7806 = vmatprep.subr.bf16.mxu0 0
        %7807 = vmatpush1.bf16.msra.mxu0 0
        %7808 = vmatprep.subr.bf16.mxu0 0
        %7809 = vmatpush1.bf16.msra.mxu0 0
        %7810 = vmatprep.subr.bf16.mxu0 0
        %7811 = vmatpush1.bf16.msra.mxu0 0
        %7812 = vmatprep.subr.bf16.mxu0 0
        %7813 = vmatpush1.bf16.msra.mxu0 0
        %7814 = vmatprep.subr.bf16.mxu0 0
        %7815 = vmatpush1.bf16.msra.mxu0 0
        %7816 = vmatprep.subr.bf16.mxu0 0
        %7817 = vmatpush1.bf16.msra.mxu0 0
        %7818 = vmatprep.subr.bf16.mxu0 0
        %7819 = vmatpush1.bf16.msra.mxu0 0
        %7820 = vmatprep.mubr.bf16.mxu0 0
        %7821 = vmatmul.mubr.bf16.gmra.mrb[0].mxu0 %v7722
        %v7822 = vpop.f32.mrb[0].mxu0
        %v7823 = vadd.f32 0.0, %v7822
        %v7824 = vpop.f32.mrb[0].mxu0
        %v7825 = vpop.f32.mrb[0].mxu0
        %v7826 = vpop.f32.mrb[0].mxu0
        %7827 = vdwg.mxu0
        %v7828 = vadd.f32 %v7714, %v7823
        %s7829 = scalar_lea.vmem %s7, 704
        %v7830 = vld [vmem:[%s7829] sm:$0xf]
        %v7831 = vld [vmem:[%s7829 + $0x4] sm:$0xf]
        %v7832 = vld [vmem:[%s7829 + $0x8] sm:$0xf]
        %v7833 = vld [vmem:[%s7829 + $0xc] sm:$0xf]
        %v7834 = vld [vmem:[%s7829 + $0x10] sm:$0xf]
        %v7835 = vld [vmem:[%s7829 + $0x14] sm:$0xf]
        %v7836 = vld [vmem:[%s7829 + $0x18] sm:$0xf]
        %v7837 = vld [vmem:[%s7829 + $0x1c] sm:$0xf]
        %v7838 = vld [vmem:[%s7829 + $0x20] sm:$0xf]
        %v7839 = vld [vmem:[%s7829 + $0x24] sm:$0xf]
        %v7840 = vld [vmem:[%s7829 + $0x28] sm:$0xf]
        %v7841 = vld [vmem:[%s7829 + $0x2c] sm:$0xf]
        %v7842 = vld [vmem:[%s7829 + $0x30] sm:$0xf]
        %v7843 = vld [vmem:[%s7829 + $0x34] sm:$0xf]
        %v7844 = vld [vmem:[%s7829 + $0x38] sm:$0xf]
        %v7845 = vld [vmem:[%s7829 + $0x3c] sm:$0xf]
        %v7847 = vshrl.u32 %v7722, 16
        %v7849 = vrot.slane %v7847, 1
        %v7867 = vunpack.c.l.b16 %v7830
        %v7868 = vunpack.c.l.b16 %v7831
        %v7869 = vunpack.c.l.b16 %v7832
        %v7870 = vunpack.c.l.b16 %v7833
        %v7871 = vunpack.c.l.b16 %v7834
        %v7872 = vunpack.c.l.b16 %v7835
        %v7873 = vunpack.c.l.b16 %v7836
        %v7874 = vunpack.c.l.b16 %v7837
        %v7875 = vunpack.c.l.b16 %v7838
        %v7876 = vunpack.c.l.b16 %v7839
        %v7877 = vunpack.c.l.b16 %v7840
        %v7878 = vunpack.c.l.b16 %v7841
        %v7879 = vunpack.c.l.b16 %v7842
        %v7880 = vunpack.c.l.b16 %v7843
        %v7881 = vunpack.c.l.b16 %v7844
        %v7882 = vunpack.c.l.b16 %v7845
        %v7883 = vpack.c.b16 %v7868, %v7867
        %v7884 = vpack.c.b16 %v7870, %v7869
        %v7885 = vpack.c.b16 %v7872, %v7871
        %v7886 = vpack.c.b16 %v7874, %v7873
        %v7887 = vpack.c.b16 %v7876, %v7875
        %v7888 = vpack.c.b16 %v7878, %v7877
        %v7889 = vpack.c.b16 %v7880, %v7879
        %v7890 = vpack.c.b16 %v7882, %v7881
        %7899 = vmatprep.subr.bf16.mxu0 0
        %7900 = vmatpush1.bf16.msra.mxu0 %v7883
        %7901 = vmatprep.subr.bf16.mxu0 0
        %7902 = vmatpush1.bf16.msra.mxu0 %v7884
        %7903 = vmatprep.subr.bf16.mxu0 0
        %7904 = vmatpush1.bf16.msra.mxu0 %v7885
        %7905 = vmatprep.subr.bf16.mxu0 0
        %7906 = vmatpush1.bf16.msra.mxu0 %v7886
        %7907 = vmatprep.subr.bf16.mxu0 0
        %7908 = vmatpush1.bf16.msra.mxu0 %v7887
        %7909 = vmatprep.subr.bf16.mxu0 0
        %7910 = vmatpush1.bf16.msra.mxu0 %v7888
        %7911 = vmatprep.subr.bf16.mxu0 0
        %7912 = vmatpush1.bf16.msra.mxu0 %v7889
        %7913 = vmatprep.subr.bf16.mxu0 0
        %7914 = vmatpush1.bf16.msra.mxu0 %v7890
        %7915 = vmatprep.subr.bf16.mxu0 0
        %7916 = vmatpush1.bf16.msra.mxu0 0
        %7917 = vmatprep.subr.bf16.mxu0 0
        %7918 = vmatpush1.bf16.msra.mxu0 0
        %7919 = vmatprep.subr.bf16.mxu0 0
        %7920 = vmatpush1.bf16.msra.mxu0 0
        %7921 = vmatprep.subr.bf16.mxu0 0
        %7922 = vmatpush1.bf16.msra.mxu0 0
        %7923 = vmatprep.subr.bf16.mxu0 0
        %7924 = vmatpush1.bf16.msra.mxu0 0
        %7925 = vmatprep.subr.bf16.mxu0 0
        %7926 = vmatpush1.bf16.msra.mxu0 0
        %7927 = vmatprep.subr.bf16.mxu0 0
        %7928 = vmatpush1.bf16.msra.mxu0 0
        %7929 = vmatprep.subr.bf16.mxu0 0
        %7930 = vmatpush1.bf16.msra.mxu0 0
        %7931 = vmatprep.mubr.bf16.mxu0 0
        %7932 = vmatmul.mubr.bf16.gmra.mrb[0].mxu0 %v7849
        %v7933 = vpop.f32.mrb[0].mxu0
        %v7934 = vadd.f32 0.0, %v7933
        %v7935 = vpop.f32.mrb[0].mxu0
        %v7936 = vpop.f32.mrb[0].mxu0
        %v7937 = vpop.f32.mrb[0].mxu0
        %7938 = vdwg.mxu0
        %v7939 = vadd.f32 %v7828, %v7934
        %v7943 = vrot.slane %v6503, 7
        %v7944 = vrot.slane %v6504, 7
        %v7945 = vsel %vm6512, %v7943, %v7944
        %v7946 = vrot.slane %v6505, 7
        %v7947 = vsel %vm6512, %v7944, %v7946
        %v7951 = vmax.f32 %v6501, %v7943
        %v7952 = vmax.f32 %v6502, %v7945
        %v7953 = vmax.f32 %v6503, %v7947
        %v7956 = vrot.slane %v6505, 6
        %v7957 = vrot.slane %v6506, 6
        %v7958 = vsel %vm6524, %v7956, %v7957
        %v7959 = vrot.slane %v6507, 6
        %v7960 = vsel %vm6524, %v7957, %v7959
        %v7964 = vmax.f32 %v7951, %v7956
        %v7965 = vmax.f32 %v7952, %v7958
        %v7966 = vmax.f32 %v7953, %v7960
        %v7968 = vrot.slane %v7965, 1
        %v7970 = vmax.f32 %v7964, %v7968
        %v7971 = vrot.slane %v7965, 2
        %v7973 = vmax.f32 %v7970, %v7971
        %v7974 = vpack.c.bf16 %v7973, %v7973
        %s7975 = scalar_lea.vmem %s7, 768
        %v7976 = vld [vmem:[%s7975] sm:$0xf]
        %v7977 = vld [vmem:[%s7975 + $0x4] sm:$0xf]
        %v7978 = vld [vmem:[%s7975 + $0x8] sm:$0xf]
        %v7979 = vld [vmem:[%s7975 + $0xc] sm:$0xf]
        %v7980 = vld [vmem:[%s7975 + $0x10] sm:$0xf]
        %v7981 = vld [vmem:[%s7975 + $0x14] sm:$0xf]
        %v7982 = vld [vmem:[%s7975 + $0x18] sm:$0xf]
        %v7983 = vld [vmem:[%s7975 + $0x1c] sm:$0xf]
        %v7984 = vld [vmem:[%s7975 + $0x20] sm:$0xf]
        %v7985 = vld [vmem:[%s7975 + $0x24] sm:$0xf]
        %v7986 = vld [vmem:[%s7975 + $0x28] sm:$0xf]
        %v7987 = vld [vmem:[%s7975 + $0x2c] sm:$0xf]
        %v7988 = vld [vmem:[%s7975 + $0x30] sm:$0xf]
        %v7989 = vld [vmem:[%s7975 + $0x34] sm:$0xf]
        %v7990 = vld [vmem:[%s7975 + $0x38] sm:$0xf]
        %v7991 = vld [vmem:[%s7975 + $0x3c] sm:$0xf]
        %v7993 = vshrl.u32 %v7974, 16
        %v7995 = vrot.slane %v7993, 3
        %v8013 = vunpack.c.l.b16 %v7976
        %v8014 = vunpack.c.l.b16 %v7977
        %v8015 = vunpack.c.l.b16 %v7978
        %v8016 = vunpack.c.l.b16 %v7979
        %v8017 = vunpack.c.l.b16 %v7980
        %v8018 = vunpack.c.l.b16 %v7981
        %v8019 = vunpack.c.l.b16 %v7982
        %v8020 = vunpack.c.l.b16 %v7983
        %v8021 = vunpack.c.l.b16 %v7984
        %v8022 = vunpack.c.l.b16 %v7985
        %v8023 = vunpack.c.l.b16 %v7986
        %v8024 = vunpack.c.l.b16 %v7987
        %v8025 = vunpack.c.l.b16 %v7988
        %v8026 = vunpack.c.l.b16 %v7989
        %v8027 = vunpack.c.l.b16 %v7990
        %v8028 = vunpack.c.l.b16 %v7991
        %v8029 = vpack.c.b16 %v8014, %v8013
        %v8030 = vpack.c.b16 %v8016, %v8015
        %v8031 = vpack.c.b16 %v8018, %v8017
        %v8032 = vpack.c.b16 %v8020, %v8019
        %v8033 = vpack.c.b16 %v8022, %v8021
        %v8034 = vpack.c.b16 %v8024, %v8023
        %v8035 = vpack.c.b16 %v8026, %v8025
        %v8036 = vpack.c.b16 %v8028, %v8027
        %8045 = vmatprep.subr.bf16.mxu0 0
        %8046 = vmatpush1.bf16.msra.mxu0 %v8029
        %8047 = vmatprep.subr.bf16.mxu0 0
        %8048 = vmatpush1.bf16.msra.mxu0 %v8030
        %8049 = vmatprep.subr.bf16.mxu0 0
        %8050 = vmatpush1.bf16.msra.mxu0 %v8031
        %8051 = vmatprep.subr.bf16.mxu0 0
        %8052 = vmatpush1.bf16.msra.mxu0 %v8032
        %8053 = vmatprep.subr.bf16.mxu0 0
        %8054 = vmatpush1.bf16.msra.mxu0 %v8033
        %8055 = vmatprep.subr.bf16.mxu0 0
        %8056 = vmatpush1.bf16.msra.mxu0 %v8034
        %8057 = vmatprep.subr.bf16.mxu0 0
        %8058 = vmatpush1.bf16.msra.mxu0 %v8035
        %8059 = vmatprep.subr.bf16.mxu0 0
        %8060 = vmatpush1.bf16.msra.mxu0 %v8036
        %8061 = vmatprep.subr.bf16.mxu0 0
        %8062 = vmatpush1.bf16.msra.mxu0 0
        %8063 = vmatprep.subr.bf16.mxu0 0
        %8064 = vmatpush1.bf16.msra.mxu0 0
        %8065 = vmatprep.subr.bf16.mxu0 0
        %8066 = vmatpush1.bf16.msra.mxu0 0
        %8067 = vmatprep.subr.bf16.mxu0 0
        %8068 = vmatpush1.bf16.msra.mxu0 0
        %8069 = vmatprep.subr.bf16.mxu0 0
        %8070 = vmatpush1.bf16.msra.mxu0 0
        %8071 = vmatprep.subr.bf16.mxu0 0
        %8072 = vmatpush1.bf16.msra.mxu0 0
        %8073 = vmatprep.subr.bf16.mxu0 0
        %8074 = vmatpush1.bf16.msra.mxu0 0
        %8075 = vmatprep.subr.bf16.mxu0 0
        %8076 = vmatpush1.bf16.msra.mxu0 0
        %8077 = vmatprep.mubr.bf16.mxu0 0
        %8078 = vmatmul.mubr.bf16.gmra.mrb[0].mxu0 %v7995
        %v8079 = vpop.f32.mrb[0].mxu0
        %v8080 = vadd.f32 0.0, %v8079
        %v8081 = vpop.f32.mrb[0].mxu0
        %v8082 = vpop.f32.mrb[0].mxu0
        %v8083 = vpop.f32.mrb[0].mxu0
        %8084 = vdwg.mxu0
        %v8085 = vadd.f32 %v7939, %v8080
        %v8086 = vmax.f32 %v7965, %v7968
        %v8087 = vmax.f32 %v8086, %v7971
        %v8088 = vpack.c.bf16 %v8087, %v8087
        %s8089 = scalar_lea.vmem %s7, 832
        %v8090 = vld [vmem:[%s8089] sm:$0xf]
        %v8091 = vld [vmem:[%s8089 + $0x4] sm:$0xf]
        %v8092 = vld [vmem:[%s8089 + $0x8] sm:$0xf]
        %v8093 = vld [vmem:[%s8089 + $0xc] sm:$0xf]
        %v8094 = vld [vmem:[%s8089 + $0x10] sm:$0xf]
        %v8095 = vld [vmem:[%s8089 + $0x14] sm:$0xf]
        %v8096 = vld [vmem:[%s8089 + $0x18] sm:$0xf]
        %v8097 = vld [vmem:[%s8089 + $0x1c] sm:$0xf]
        %v8098 = vld [vmem:[%s8089 + $0x20] sm:$0xf]
        %v8099 = vld [vmem:[%s8089 + $0x24] sm:$0xf]
        %v8100 = vld [vmem:[%s8089 + $0x28] sm:$0xf]
        %v8101 = vld [vmem:[%s8089 + $0x2c] sm:$0xf]
        %v8102 = vld [vmem:[%s8089 + $0x30] sm:$0xf]
        %v8103 = vld [vmem:[%s8089 + $0x34] sm:$0xf]
        %v8104 = vld [vmem:[%s8089 + $0x38] sm:$0xf]
        %v8105 = vld [vmem:[%s8089 + $0x3c] sm:$0xf]
        %v8107 = vrot.slane %v8088, 1
        %v8125 = vunpack.c.l.b16 %v8090
        %v8126 = vunpack.c.l.b16 %v8091
        %v8127 = vunpack.c.l.b16 %v8092
        %v8128 = vunpack.c.l.b16 %v8093
        %v8129 = vunpack.c.l.b16 %v8094
        %v8130 = vunpack.c.l.b16 %v8095
        %v8131 = vunpack.c.l.b16 %v8096
        %v8132 = vunpack.c.l.b16 %v8097
        %v8133 = vunpack.c.l.b16 %v8098
        %v8134 = vunpack.c.l.b16 %v8099
        %v8135 = vunpack.c.l.b16 %v8100
        %v8136 = vunpack.c.l.b16 %v8101
        %v8137 = vunpack.c.l.b16 %v8102
        %v8138 = vunpack.c.l.b16 %v8103
        %v8139 = vunpack.c.l.b16 %v8104
        %v8140 = vunpack.c.l.b16 %v8105
        %v8141 = vpack.c.b16 %v8126, %v8125
        %v8142 = vpack.c.b16 %v8128, %v8127
        %v8143 = vpack.c.b16 %v8130, %v8129
        %v8144 = vpack.c.b16 %v8132, %v8131
        %v8145 = vpack.c.b16 %v8134, %v8133
        %v8146 = vpack.c.b16 %v8136, %v8135
        %v8147 = vpack.c.b16 %v8138, %v8137
        %v8148 = vpack.c.b16 %v8140, %v8139
        %8157 = vmatprep.subr.bf16.mxu0 0
        %8158 = vmatpush1.bf16.msra.mxu0 %v8141
        %8159 = vmatprep.subr.bf16.mxu0 0
        %8160 = vmatpush1.bf16.msra.mxu0 %v8142
        %8161 = vmatprep.subr.bf16.mxu0 0
        %8162 = vmatpush1.bf16.msra.mxu0 %v8143
        %8163 = vmatprep.subr.bf16.mxu0 0
        %8164 = vmatpush1.bf16.msra.mxu0 %v8144
        %8165 = vmatprep.subr.bf16.mxu0 0
        %8166 = vmatpush1.bf16.msra.mxu0 %v8145
        %8167 = vmatprep.subr.bf16.mxu0 0
        %8168 = vmatpush1.bf16.msra.mxu0 %v8146
        %8169 = vmatprep.subr.bf16.mxu0 0
        %8170 = vmatpush1.bf16.msra.mxu0 %v8147
        %8171 = vmatprep.subr.bf16.mxu0 0
        %8172 = vmatpush1.bf16.msra.mxu0 %v8148
        %8173 = vmatprep.subr.bf16.mxu0 0
        %8174 = vmatpush1.bf16.msra.mxu0 0
        %8175 = vmatprep.subr.bf16.mxu0 0
        %8176 = vmatpush1.bf16.msra.mxu0 0
        %8177 = vmatprep.subr.bf16.mxu0 0
        %8178 = vmatpush1.bf16.msra.mxu0 0
        %8179 = vmatprep.subr.bf16.mxu0 0
        %8180 = vmatpush1.bf16.msra.mxu0 0
        %8181 = vmatprep.subr.bf16.mxu0 0
        %8182 = vmatpush1.bf16.msra.mxu0 0
        %8183 = vmatprep.subr.bf16.mxu0 0
        %8184 = vmatpush1.bf16.msra.mxu0 0
        %8185 = vmatprep.subr.bf16.mxu0 0
        %8186 = vmatpush1.bf16.msra.mxu0 0
        %8187 = vmatprep.subr.bf16.mxu0 0
        %8188 = vmatpush1.bf16.msra.mxu0 0
        %8189 = vmatprep.mubr.bf16.mxu0 0
        %8190 = vmatmul.mubr.bf16.gmra.mrb[0].mxu0 %v8107
        %v8191 = vpop.f32.mrb[0].mxu0
        %v8192 = vadd.f32 0.0, %v8191
        %v8193 = vpop.f32.mrb[0].mxu0
        %v8194 = vpop.f32.mrb[0].mxu0
        %v8195 = vpop.f32.mrb[0].mxu0
        %8196 = vdwg.mxu0
        %v8197 = vadd.f32 %v8085, %v8192
        %s8198 = scalar_lea.vmem %s7, 896
        %v8199 = vld [vmem:[%s8198] sm:$0xf]
        %v8200 = vld [vmem:[%s8198 + $0x4] sm:$0xf]
        %v8201 = vld [vmem:[%s8198 + $0x8] sm:$0xf]
        %v8202 = vld [vmem:[%s8198 + $0xc] sm:$0xf]
        %v8203 = vld [vmem:[%s8198 + $0x10] sm:$0xf]
        %v8204 = vld [vmem:[%s8198 + $0x14] sm:$0xf]
        %v8205 = vld [vmem:[%s8198 + $0x18] sm:$0xf]
        %v8206 = vld [vmem:[%s8198 + $0x1c] sm:$0xf]
        %v8207 = vld [vmem:[%s8198 + $0x20] sm:$0xf]
        %v8208 = vld [vmem:[%s8198 + $0x24] sm:$0xf]
        %v8209 = vld [vmem:[%s8198 + $0x28] sm:$0xf]
        %v8210 = vld [vmem:[%s8198 + $0x2c] sm:$0xf]
        %v8211 = vld [vmem:[%s8198 + $0x30] sm:$0xf]
        %v8212 = vld [vmem:[%s8198 + $0x34] sm:$0xf]
        %v8213 = vld [vmem:[%s8198 + $0x38] sm:$0xf]
        %v8214 = vld [vmem:[%s8198 + $0x3c] sm:$0xf]
        %v8216 = vshrl.u32 %v8088, 16
        %v8218 = vrot.slane %v8216, 2
        %v8236 = vunpack.c.l.b16 %v8199
        %v8237 = vunpack.c.l.b16 %v8200
        %v8238 = vunpack.c.l.b16 %v8201
        %v8239 = vunpack.c.l.b16 %v8202
        %v8240 = vunpack.c.l.b16 %v8203
        %v8241 = vunpack.c.l.b16 %v8204
        %v8242 = vunpack.c.l.b16 %v8205
        %v8243 = vunpack.c.l.b16 %v8206
        %v8244 = vunpack.c.l.b16 %v8207
        %v8245 = vunpack.c.l.b16 %v8208
        %v8246 = vunpack.c.l.b16 %v8209
        %v8247 = vunpack.c.l.b16 %v8210
        %v8248 = vunpack.c.l.b16 %v8211
        %v8249 = vunpack.c.l.b16 %v8212
        %v8250 = vunpack.c.l.b16 %v8213
        %v8251 = vunpack.c.l.b16 %v8214
        %v8252 = vpack.c.b16 %v8237, %v8236
        %v8253 = vpack.c.b16 %v8239, %v8238
        %v8254 = vpack.c.b16 %v8241, %v8240
        %v8255 = vpack.c.b16 %v8243, %v8242
        %v8256 = vpack.c.b16 %v8245, %v8244
        %v8257 = vpack.c.b16 %v8247, %v8246
        %v8258 = vpack.c.b16 %v8249, %v8248
        %v8259 = vpack.c.b16 %v8251, %v8250
        %8268 = vmatprep.subr.bf16.mxu0 0
        %8269 = vmatpush1.bf16.msra.mxu0 %v8252
        %8270 = vmatprep.subr.bf16.mxu0 0
        %8271 = vmatpush1.bf16.msra.mxu0 %v8253
        %8272 = vmatprep.subr.bf16.mxu0 0
        %8273 = vmatpush1.bf16.msra.mxu0 %v8254
        %8274 = vmatprep.subr.bf16.mxu0 0
        %8275 = vmatpush1.bf16.msra.mxu0 %v8255
        %8276 = vmatprep.subr.bf16.mxu0 0
        %8277 = vmatpush1.bf16.msra.mxu0 %v8256
        %8278 = vmatprep.subr.bf16.mxu0 0
        %8279 = vmatpush1.bf16.msra.mxu0 %v8257
        %8280 = vmatprep.subr.bf16.mxu0 0
        %8281 = vmatpush1.bf16.msra.mxu0 %v8258
        %8282 = vmatprep.subr.bf16.mxu0 0
        %8283 = vmatpush1.bf16.msra.mxu0 %v8259
        %8284 = vmatprep.subr.bf16.mxu0 0
        %8285 = vmatpush1.bf16.msra.mxu0 0
        %8286 = vmatprep.subr.bf16.mxu0 0
        %8287 = vmatpush1.bf16.msra.mxu0 0
        %8288 = vmatprep.subr.bf16.mxu0 0
        %8289 = vmatpush1.bf16.msra.mxu0 0
        %8290 = vmatprep.subr.bf16.mxu0 0
        %8291 = vmatpush1.bf16.msra.mxu0 0
        %8292 = vmatprep.subr.bf16.mxu0 0
        %8293 = vmatpush1.bf16.msra.mxu0 0
        %8294 = vmatprep.subr.bf16.mxu0 0
        %8295 = vmatpush1.bf16.msra.mxu0 0
        %8296 = vmatprep.subr.bf16.mxu0 0
        %8297 = vmatpush1.bf16.msra.mxu0 0
        %8298 = vmatprep.subr.bf16.mxu0 0
        %8299 = vmatpush1.bf16.msra.mxu0 0
        %8300 = vmatprep.mubr.bf16.mxu0 0
        %8301 = vmatmul.mubr.bf16.gmra.mrb[0].mxu0 %v8218
        %v8302 = vpop.f32.mrb[0].mxu0
        %v8303 = vadd.f32 0.0, %v8302
        %v8304 = vpop.f32.mrb[0].mxu0
        %v8305 = vpop.f32.mrb[0].mxu0
        %v8306 = vpop.f32.mrb[0].mxu0
        %8307 = vdwg.mxu0
        %v8308 = vadd.f32 %v8197, %v8303
        %v8310 = vrot.slane %v7966, 1
        %v8312 = vmax.f32 %v7966, %v8310
        %v8313 = vrot.slane %v7966, 2
        %v8315 = vmax.f32 %v8312, %v8313
        %v8316 = vpack.c.bf16 %v8315, %v8315
        %s8317 = scalar_lea.vmem %s7, 960
        %v8318 = vld [vmem:[%s8317] sm:$0xf]
        %v8319 = vld [vmem:[%s8317 + $0x4] sm:$0xf]
        %v8320 = vld [vmem:[%s8317 + $0x8] sm:$0xf]
        %v8321 = vld [vmem:[%s8317 + $0xc] sm:$0xf]
        %v8322 = vld [vmem:[%s8317 + $0x10] sm:$0xf]
        %v8323 = vld [vmem:[%s8317 + $0x14] sm:$0xf]
        %v8324 = vld [vmem:[%s8317 + $0x18] sm:$0xf]
        %v8325 = vld [vmem:[%s8317 + $0x1c] sm:$0xf]
        %v8326 = vld [vmem:[%s8317 + $0x20] sm:$0xf]
        %v8327 = vld [vmem:[%s8317 + $0x24] sm:$0xf]
        %v8328 = vld [vmem:[%s8317 + $0x28] sm:$0xf]
        %v8329 = vld [vmem:[%s8317 + $0x2c] sm:$0xf]
        %v8330 = vld [vmem:[%s8317 + $0x30] sm:$0xf]
        %v8331 = vld [vmem:[%s8317 + $0x34] sm:$0xf]
        %v8332 = vld [vmem:[%s8317 + $0x38] sm:$0xf]
        %v8333 = vld [vmem:[%s8317 + $0x3c] sm:$0xf]
        %v8350 = vunpack.c.l.b16 %v8318
        %v8351 = vunpack.c.l.b16 %v8319
        %v8352 = vunpack.c.l.b16 %v8320
        %v8353 = vunpack.c.l.b16 %v8321
        %v8354 = vunpack.c.l.b16 %v8322
        %v8355 = vunpack.c.l.b16 %v8323
        %v8356 = vunpack.c.l.b16 %v8324
        %v8357 = vunpack.c.l.b16 %v8325
        %v8358 = vunpack.c.l.b16 %v8326
        %v8359 = vunpack.c.l.b16 %v8327
        %v8360 = vunpack.c.l.b16 %v8328
        %v8361 = vunpack.c.l.b16 %v8329
        %v8362 = vunpack.c.l.b16 %v8330
        %v8363 = vunpack.c.l.b16 %v8331
        %v8364 = vunpack.c.l.b16 %v8332
        %v8365 = vunpack.c.l.b16 %v8333
        %v8366 = vpack.c.b16 %v8351, %v8350
        %v8367 = vpack.c.b16 %v8353, %v8352
        %v8368 = vpack.c.b16 %v8355, %v8354
        %v8369 = vpack.c.b16 %v8357, %v8356
        %v8370 = vpack.c.b16 %v8359, %v8358
        %v8371 = vpack.c.b16 %v8361, %v8360
        %v8372 = vpack.c.b16 %v8363, %v8362
        %v8373 = vpack.c.b16 %v8365, %v8364
        %8382 = vmatprep.subr.bf16.mxu0 0
        %8383 = vmatpush1.bf16.msra.mxu0 %v8366
        %8384 = vmatprep.subr.bf16.mxu0 0
        %8385 = vmatpush1.bf16.msra.mxu0 %v8367
        %8386 = vmatprep.subr.bf16.mxu0 0
        %8387 = vmatpush1.bf16.msra.mxu0 %v8368
        %8388 = vmatprep.subr.bf16.mxu0 0
        %8389 = vmatpush1.bf16.msra.mxu0 %v8369
        %8390 = vmatprep.subr.bf16.mxu0 0
        %8391 = vmatpush1.bf16.msra.mxu0 %v8370
        %8392 = vmatprep.subr.bf16.mxu0 0
        %8393 = vmatpush1.bf16.msra.mxu0 %v8371
        %8394 = vmatprep.subr.bf16.mxu0 0
        %8395 = vmatpush1.bf16.msra.mxu0 %v8372
        %8396 = vmatprep.subr.bf16.mxu0 0
        %8397 = vmatpush1.bf16.msra.mxu0 %v8373
        %8398 = vmatprep.subr.bf16.mxu0 0
        %8399 = vmatpush1.bf16.msra.mxu0 0
        %8400 = vmatprep.subr.bf16.mxu0 0
        %8401 = vmatpush1.bf16.msra.mxu0 0
        %8402 = vmatprep.subr.bf16.mxu0 0
        %8403 = vmatpush1.bf16.msra.mxu0 0
        %8404 = vmatprep.subr.bf16.mxu0 0
        %8405 = vmatpush1.bf16.msra.mxu0 0
        %8406 = vmatprep.subr.bf16.mxu0 0
        %8407 = vmatpush1.bf16.msra.mxu0 0
        %8408 = vmatprep.subr.bf16.mxu0 0
        %8409 = vmatpush1.bf16.msra.mxu0 0
        %8410 = vmatprep.subr.bf16.mxu0 0
        %8411 = vmatpush1.bf16.msra.mxu0 0
        %8412 = vmatprep.subr.bf16.mxu0 0
        %8413 = vmatpush1.bf16.msra.mxu0 0
        %8414 = vmatprep.mubr.bf16.mxu0 0
        %8415 = vmatmul.mubr.bf16.gmra.mrb[0].mxu0 %v8316
        %v8416 = vpop.f32.mrb[0].mxu0
        %v8417 = vadd.f32 0.0, %v8416
        %v8418 = vpop.f32.mrb[0].mxu0
        %v8419 = vpop.f32.mrb[0].mxu0
        %v8420 = vpop.f32.mrb[0].mxu0
        %8421 = vdwg.mxu0
        %v8422 = vadd.f32 %v8308, %v8417
        %v8423 = vpack.c.bf16 %v8422, %v8422
        %v8424 = vld [vmem:[%s9] sm:$0xf]
        %v8425 = vld [vmem:[%s9 + $0x4] sm:$0xf]
        %v8426 = vld [vmem:[%s9 + $0x8] sm:$0xf]
        %v8427 = vld [vmem:[%s9 + $0xc] sm:$0xf]
        %v8428 = vld [vmem:[%s9 + $0x10] sm:$0xf]
        %v8429 = vld [vmem:[%s9 + $0x14] sm:$0xf]
        %v8430 = vld [vmem:[%s9 + $0x18] sm:$0xf]
        %v8431 = vld [vmem:[%s9 + $0x1c] sm:$0xf]
        %v8432 = vld [vmem:[%s9 + $0x20] sm:$0xf]
        %v8433 = vld [vmem:[%s9 + $0x24] sm:$0xf]
        %v8434 = vld [vmem:[%s9 + $0x28] sm:$0xf]
        %v8435 = vld [vmem:[%s9 + $0x2c] sm:$0xf]
        %v8436 = vld [vmem:[%s9 + $0x30] sm:$0xf]
        %v8437 = vld [vmem:[%s9 + $0x34] sm:$0xf]
        %v8438 = vld [vmem:[%s9 + $0x38] sm:$0xf]
        %v8439 = vld [vmem:[%s9 + $0x3c] sm:$0xf]
        %v8440 = vld [vmem:[%s10] sm:$0x1]
        %v8457 = vunpack.c.l.b16 %v8424
        %v8458 = vunpack.c.l.b16 %v8425
        %v8459 = vunpack.c.l.b16 %v8426
        %v8460 = vunpack.c.l.b16 %v8427
        %v8461 = vunpack.c.l.b16 %v8428
        %v8462 = vunpack.c.l.b16 %v8429
        %v8463 = vunpack.c.l.b16 %v8430
        %v8464 = vunpack.c.l.b16 %v8431
        %v8465 = vunpack.c.l.b16 %v8432
        %v8466 = vunpack.c.l.b16 %v8433
        %v8467 = vunpack.c.l.b16 %v8434
        %v8468 = vunpack.c.l.b16 %v8435
        %v8469 = vunpack.c.l.b16 %v8436
        %v8470 = vunpack.c.l.b16 %v8437
        %v8471 = vunpack.c.l.b16 %v8438
        %v8472 = vunpack.c.l.b16 %v8439
        %v8473 = vpack.c.b16 %v8458, %v8457
        %v8474 = vpack.c.b16 %v8460, %v8459
        %v8475 = vpack.c.b16 %v8462, %v8461
        %v8476 = vpack.c.b16 %v8464, %v8463
        %v8477 = vpack.c.b16 %v8466, %v8465
        %v8478 = vpack.c.b16 %v8468, %v8467
        %v8479 = vpack.c.b16 %v8470, %v8469
        %v8480 = vpack.c.b16 %v8472, %v8471
        %8489 = vmatprep.subr.bf16.mxu0 0
        %8490 = vmatpush1.bf16.msra.mxu0 %v8473
        %8491 = vmatprep.subr.bf16.mxu0 0
        %8492 = vmatpush1.bf16.msra.mxu0 %v8474
        %8493 = vmatprep.subr.bf16.mxu0 0
        %8494 = vmatpush1.bf16.msra.mxu0 %v8475
        %8495 = vmatprep.subr.bf16.mxu0 0
        %8496 = vmatpush1.bf16.msra.mxu0 %v8476
        %8497 = vmatprep.subr.bf16.mxu0 0
        %8498 = vmatpush1.bf16.msra.mxu0 %v8477
        %8499 = vmatprep.subr.bf16.mxu0 0
        %8500 = vmatpush1.bf16.msra.mxu0 %v8478
        %8501 = vmatprep.subr.bf16.mxu0 0
        %8502 = vmatpush1.bf16.msra.mxu0 %v8479
        %8503 = vmatprep.subr.bf16.mxu0 0
        %8504 = vmatpush1.bf16.msra.mxu0 %v8480
        %8505 = vmatprep.subr.bf16.mxu0 0
        %8506 = vmatpush1.bf16.msra.mxu0 0
        %8507 = vmatprep.subr.bf16.mxu0 0
        %8508 = vmatpush1.bf16.msra.mxu0 0
        %8509 = vmatprep.subr.bf16.mxu0 0
        %8510 = vmatpush1.bf16.msra.mxu0 0
        %8511 = vmatprep.subr.bf16.mxu0 0
        %8512 = vmatpush1.bf16.msra.mxu0 0
        %8513 = vmatprep.subr.bf16.mxu0 0
        %8514 = vmatpush1.bf16.msra.mxu0 0
        %8515 = vmatprep.subr.bf16.mxu0 0
        %8516 = vmatpush1.bf16.msra.mxu0 0
        %8517 = vmatprep.subr.bf16.mxu0 0
        %8518 = vmatpush1.bf16.msra.mxu0 0
        %8519 = vmatprep.subr.bf16.mxu0 0
        %8520 = vmatpush1.bf16.msra.mxu0 0
        %8521 = vmatprep.mubr.bf16.mxu0 0
        %8522 = vmatmul.mubr.bf16.gmra.mrb[0].mxu0 %v8423
        %v8523 = vpop.f32.mrb[0].mxu0
        %v8524 = vadd.f32 %v8440, %v8523
        %v8525 = vpop.f32.mrb[0].mxu0
        %v8526 = vpop.f32.mrb[0].mxu0
        %v8527 = vpop.f32.mrb[0].mxu0
        %8528 = vdwg.mxu0
        %v8529 = vmax.f32 %v8524, 0.0
        %v8530 = vpack.c.bf16 %v8529, %v8529
        %v8531 = vld [vmem:[%s11] sm:$0xf]
        %v8532 = vld [vmem:[%s11 + $0x4] sm:$0xf]
        %v8533 = vld [vmem:[%s11 + $0x8] sm:$0xf]
        %v8534 = vld [vmem:[%s11 + $0xc] sm:$0xf]
        %v8535 = vld [vmem:[%s11 + $0x10] sm:$0xf]
        %v8536 = vld [vmem:[%s11 + $0x14] sm:$0xf]
        %v8537 = vld [vmem:[%s11 + $0x18] sm:$0xf]
        %v8538 = vld [vmem:[%s11 + $0x1c] sm:$0xf]
        %v8539 = vld [vmem:[%s11 + $0x20] sm:$0xf]
        %v8540 = vld [vmem:[%s11 + $0x24] sm:$0xf]
        %v8541 = vld [vmem:[%s11 + $0x28] sm:$0xf]
        %v8542 = vld [vmem:[%s11 + $0x2c] sm:$0xf]
        %v8543 = vld [vmem:[%s11 + $0x30] sm:$0xf]
        %v8544 = vld [vmem:[%s11 + $0x34] sm:$0xf]
        %v8545 = vld [vmem:[%s11 + $0x38] sm:$0xf]
        %v8546 = vld [vmem:[%s11 + $0x3c] sm:$0xf]
        %v8547 = vld [vmem:[%s12] sm:$0x1]
        %v8564 = vunpack.c.l.b16 %v8531
        %v8565 = vunpack.c.l.b16 %v8532
        %v8566 = vunpack.c.l.b16 %v8533
        %v8567 = vunpack.c.l.b16 %v8534
        %v8568 = vunpack.c.l.b16 %v8535
        %v8569 = vunpack.c.l.b16 %v8536
        %v8570 = vunpack.c.l.b16 %v8537
        %v8571 = vunpack.c.l.b16 %v8538
        %v8572 = vunpack.c.l.b16 %v8539
        %v8573 = vunpack.c.l.b16 %v8540
        %v8574 = vunpack.c.l.b16 %v8541
        %v8575 = vunpack.c.l.b16 %v8542
        %v8576 = vunpack.c.l.b16 %v8543
        %v8577 = vunpack.c.l.b16 %v8544
        %v8578 = vunpack.c.l.b16 %v8545
        %v8579 = vunpack.c.l.b16 %v8546
        %v8580 = vpack.c.b16 %v8565, %v8564
        %v8581 = vpack.c.b16 %v8567, %v8566
        %v8582 = vpack.c.b16 %v8569, %v8568
        %v8583 = vpack.c.b16 %v8571, %v8570
        %v8584 = vpack.c.b16 %v8573, %v8572
        %v8585 = vpack.c.b16 %v8575, %v8574
        %v8586 = vpack.c.b16 %v8577, %v8576
        %v8587 = vpack.c.b16 %v8579, %v8578
        %8596 = vmatprep.subr.bf16.mxu0 0
        %8597 = vmatpush1.bf16.msra.mxu0 %v8580
        %8598 = vmatprep.subr.bf16.mxu0 0
        %8599 = vmatpush1.bf16.msra.mxu0 %v8581
        %8600 = vmatprep.subr.bf16.mxu0 0
        %8601 = vmatpush1.bf16.msra.mxu0 %v8582
        %8602 = vmatprep.subr.bf16.mxu0 0
        %8603 = vmatpush1.bf16.msra.mxu0 %v8583
        %8604 = vmatprep.subr.bf16.mxu0 0
        %8605 = vmatpush1.bf16.msra.mxu0 %v8584
        %8606 = vmatprep.subr.bf16.mxu0 0
        %8607 = vmatpush1.bf16.msra.mxu0 %v8585
        %8608 = vmatprep.subr.bf16.mxu0 0
        %8609 = vmatpush1.bf16.msra.mxu0 %v8586
        %8610 = vmatprep.subr.bf16.mxu0 0
        %8611 = vmatpush1.bf16.msra.mxu0 %v8587
        %8612 = vmatprep.subr.bf16.mxu0 0
        %8613 = vmatpush1.bf16.msra.mxu0 0
        %8614 = vmatprep.subr.bf16.mxu0 0
        %8615 = vmatpush1.bf16.msra.mxu0 0
        %8616 = vmatprep.subr.bf16.mxu0 0
        %8617 = vmatpush1.bf16.msra.mxu0 0
        %8618 = vmatprep.subr.bf16.mxu0 0
        %8619 = vmatpush1.bf16.msra.mxu0 0
        %8620 = vmatprep.subr.bf16.mxu0 0
        %8621 = vmatpush1.bf16.msra.mxu0 0
        %8622 = vmatprep.subr.bf16.mxu0 0
        %8623 = vmatpush1.bf16.msra.mxu0 0
        %8624 = vmatprep.subr.bf16.mxu0 0
        %8625 = vmatpush1.bf16.msra.mxu0 0
        %8626 = vmatprep.subr.bf16.mxu0 0
        %8627 = vmatpush1.bf16.msra.mxu0 0
        %8628 = vmatprep.mubr.bf16.mxu0 0
        %8629 = vmatmul.mubr.bf16.gmra.mrb[0].mxu0 %v8530
        %v8630 = vpop.f32.mrb[0].mxu0
        %v8631 = vadd.f32 %v8547, %v8630
        %v8632 = vpop.f32.mrb[0].mxu0
        %v8633 = vpop.f32.mrb[0].mxu0
        %v8634 = vpop.f32.mrb[0].mxu0
        %8635 = vdwg.mxu0
        %8636 = vst [vmem:[%s432] sm:$0x1] %v8631
        %s8637 = sand.u32 %s313, 1
        %s8638 = scalar_lea.sflag [#allocation4], %s8637
        %s8639 = sand.u32 %s313, 1
        %s8640 = scalar_lea.vmem [#allocation3], %s8639
        // Predicated region
        $region73: #{net_forward.1} parent=71 // pred_check
          %p8641 = pneg %p323
        $region74: #{net_forward.1} parent=71 // pred_check_branch
          %8643 = sbr.rel (%p8641) target = $region76
        $region75: #{net_forward.1} parent=71 // pred_region
          %s8645 = ssub.s32 16, 16
          %8646 = vsyncadd %s8638, %s8645
          %s8647 = smul.addr %s27, 16
          %s8648 = scalar_lea.hbm %s13, %s8647
          %s8650 = sshll.u32 %s8640, 4
          %s8651 = int_to_ptr.vmem [resolvable:$true] %s8650
          %8653 = dma.vmem_to_hbm [thread:$0]  %s8651, 16, %s8648, %s8638
        $region76: #{net_forward.1} parent=71 // pred_fallthru
          _
      $region72: #{net_forward.1} parent=5 // pred_fallthru
        _
      %p8654 = scmp.le.s32.totalorder 2, %s22
      // Predicated region
      $region77: #{net_forward.1} parent=5 // pred_check
        %p8655 = pneg %p8654
      $region78: #{net_forward.1} parent=5 // pred_check_branch
        %8657 = sbr.rel (%p8655) target = $region80
      $region79: #{net_forward.1} parent=5 // pred_region
        %s8658 = ssub.s32 %s22, 2
        // Predicated region
        $region81: #{net_forward.1} parent=79 // pred_check
          %p8659 = pneg %p329
        $region82: #{net_forward.1} parent=79 // pred_check_branch
          %8661 = sbr.rel (%p8659) target = $region84
        $region83: #{net_forward.1} parent=79 // pred_region
          %s8662 = sand.u32 %s314, 1
          %s8663 = scalar_lea.sflag [#allocation4], %s8662
          %s8664 = sand.u32 %s314, 1
          %s8665 = scalar_lea.vmem [#allocation3], %s8664
          %8666 = dma.done %s8663, 16
        $region84: #{net_forward.1} parent=79 // pred_fallthru
          _
      $region80: #{net_forward.1} parent=5 // pred_fallthru
        _
    $region6: #{net_forward.1} parent=1 // loop_footer
      %s26 = sadd.s32 1, %s22
    $region7: #{net_forward.1} parent=1 // loop_footer_branch
      %21 = sbr.rel target = $region3
    $region8: #{net_forward.1} parent=1 // loop_exit
      _
    %8667 = vsyncpa [#allocation4], 1
    %s8668 = scalar_lea.sflag [#allocation4], 1
    %8669 = vsyncpa %s8668, 1

</llo_original>
